<compile_context>
chip_gen: v6e
topology: v6e:2x2x1
jax: 0.10.0
libtpu: 0.0.40
codegen_flags: <defaults>
</compile_context>

<pallas_src>
import jax
import jax.numpy as jnp
from jax.experimental import pallas as pl
from jax.experimental.pallas import tpu as pltpu

EPS = 1e-5


def bn_fold(gamma, beta, mean, var):
    """Fold eval-mode BatchNorm into per-channel scale/shift."""
    scale = gamma / jnp.sqrt(var + EPS)
    shift = beta - mean * scale
    return scale, shift


# ----------------------------------------------------------------------------
# Fused ConvBlock kernel (one grid step = one image):
#   x_ref  : (1, H, W, Cin)  f32   running activation
#   s1/t1  : (1, Cin)        f32   BN1 folded scale/shift
#   w1_ref : (Cin, C4)       bf16  1x1 conv weights with BN2 folded in
#   b1_ref : (1, C4)         f32   1x1 conv bias with BN2 folded in
#   w2_ref : (9*C4, G)       bf16  3x3 conv weights, tap-major (dy*3+dx, c)
#   b2_ref : (1, G)          f32
#   o_ref  : (1, H, W, G+Cin) f32  = cat([conv_out, x], channels)
# ----------------------------------------------------------------------------
def _convblock_kernel(x_ref, s1_ref, t1_ref, w1_ref, b1_ref, w2_ref, b2_ref,
                      o_ref):
    _, H, W, Cin = x_ref.shape
    C4 = w1_ref.shape[1]
    G = w2_ref.shape[1]
    HW = H * W

    x = x_ref[...]                                    # (1, H, W, Cin) f32
    x2d = x.reshape(HW, Cin)

    # BN1 + ReLU in f32, then BN2-folded 1x1 conv on the MXU (bf16 operands,
    # f32 accumulation) followed by ReLU.  No per-element BN2 math remains.
    h = jnp.maximum(x2d * s1_ref[...] + t1_ref[...], 0.0)
    a = jnp.dot(h.astype(jnp.bfloat16), w1_ref[...],
                preferred_element_type=jnp.float32) + b1_ref[...]
    a = jnp.maximum(a, 0.0).reshape(H, W, C4)         # (H, W, C4) f32

    # Zero padding (padding=1) built entirely in VMEM / vregs.
    zr = jnp.zeros((1, W, C4), jnp.float32)
    ap = jnp.concatenate([zr, a, zr], axis=0)         # (H+2, W, C4)
    zc = jnp.zeros((H + 2, 1, C4), jnp.float32)
    ap = jnp.concatenate([zc, ap, zc], axis=1)        # (H+2, W+2, C4)

    # im2col: the 9 shifted windows concatenated on the lane (channel) axis
    # -> one deep-K matmul (K = 9*C4) instead of nine shallow K=C4 matmuls.
    cols = [ap[dy:dy + H, dx:dx + W, :].reshape(HW, C4)
            for dy in range(3) for dx in range(3)]
    im2col = jnp.concatenate(cols, axis=-1).astype(jnp.bfloat16)  # (HW, 9*C4)
    y = jnp.dot(im2col, w2_ref[...],
                preferred_element_type=jnp.float32) + b2_ref[...]  # (HW, G)

    # Fused torch.cat((out, x), dim=1): new channels first, one full store.
    o_ref[...] = jnp.concatenate([y.reshape(1, H, W, G), x], axis=-1)


# ----------------------------------------------------------------------------
# One ConvBlock = one pallas_call.
# ----------------------------------------------------------------------------
def conv_block_apply(x, p):
    """x: [N, H, W, Cin] f32 -> [N, H, W, G + Cin] (new channels first)."""
    N, H, W, Cin = x.shape
    s1, t1 = bn_fold(*p["bn1"])
    s2, t2 = bn_fold(*p["bn2"])

    # Fold BN2 (affine, applied before its ReLU) into the 1x1 conv — exact.
    w1f = (p["w1"] * s2[None, :]).astype(jnp.bfloat16)          # (Cin, C4)
    b1f = (p["b1"] * s2 + t2).astype(jnp.float32)               # (C4,)
    C4 = w1f.shape[1]
    w2f = p["w2"].reshape(9 * C4, -1).astype(jnp.bfloat16)      # (9*C4, G)
    G = w2f.shape[1]
    Cout = Cin + G

    # Small per-channel operands use constant index_maps so they stay
    # VMEM-resident across grid steps (no re-DMA / re-broadcast per step).
    const2 = lambda n: (0, 0)

    return pl.pallas_call(
        _convblock_kernel,
        out_shape=jax.ShapeDtypeStruct((N, H, W, Cout), jnp.float32),
        grid=(N,),
        in_specs=[
            pl.BlockSpec((1, H, W, Cin), lambda n: (n, 0, 0, 0)),
            pl.BlockSpec((1, Cin), const2),
            pl.BlockSpec((1, Cin), const2),
            pl.BlockSpec((Cin, C4), const2),
            pl.BlockSpec((1, C4), const2),
            pl.BlockSpec((9 * C4, G), const2),
            pl.BlockSpec((1, G), const2),
        ],
        out_specs=pl.BlockSpec((1, H, W, Cout), lambda n: (n, 0, 0, 0)),
        compiler_params=pltpu.CompilerParams(
            dimension_semantics=("parallel",),
            vmem_limit_bytes=32 * 1024 * 1024),
    )(
        x,
        s1.reshape(1, Cin).astype(jnp.float32),
        t1.reshape(1, Cin).astype(jnp.float32),
        w1f,
        b1f.reshape(1, C4),
        w2f,
        p["b2"].reshape(1, G).astype(jnp.float32),
    )


@jax.jit
def dense_block_forward_nchw(x_nchw, layer_params):
    # NCHW -> NHWC, run all ConvBlocks (concat is fused into each kernel),
    # NHWC -> NCHW.
    x = jnp.transpose(x_nchw, (0, 2, 3, 1))
    for p in layer_params:
        x = conv_block_apply(x, p)
    return jnp.transpose(x, (0, 3, 1, 2))


# ----------------------------------------------------------------------------
# Parameter init (eval-mode BN running stats, deterministic pseudo-random).
# TODO(synk): training-mode BatchNorm (batch statistics / running-stat
# updates) is not implemented; eval-mode affine semantics only.
# ----------------------------------------------------------------------------
def init_dense_block_params(key, in_channels, num_layers, growth_rate):
    params = []
    cin = in_channels
    c4 = 4 * growth_rate
    for _ in range(num_layers):
        keys = jax.random.split(key, 9)
        key = keys[0]
        bn1 = (1.0 + 0.1 * jax.random.normal(keys[1], (cin,), jnp.float32),   # gamma
               0.1 * jax.random.normal(keys[2], (cin,), jnp.float32),         # beta
               0.05 * jax.random.normal(keys[3], (cin,), jnp.float32),        # running_mean
               1.0 + 0.1 * jax.random.uniform(keys[4], (cin,), jnp.float32))  # running_var
        w1 = 0.1 * jax.random.normal(keys[5], (cin, c4), jnp.float32)         # 1x1 conv
        b1 = 0.01 * jax.random.normal(keys[6], (c4,), jnp.float32)
        bn2_keys = jax.random.split(keys[7], 4)
        bn2 = (1.0 + 0.1 * jax.random.normal(bn2_keys[0], (c4,), jnp.float32),
               0.1 * jax.random.normal(bn2_keys[1], (c4,), jnp.float32),
               0.05 * jax.random.normal(bn2_keys[2], (c4,), jnp.float32),
               1.0 + 0.1 * jax.random.uniform(bn2_keys[3], (c4,), jnp.float32))
        w2_keys = jax.random.split(keys[8], 2)
        w2 = 0.1 * jax.random.normal(w2_keys[0], (3, 3, c4, growth_rate),
                                     jnp.float32)                            # 3x3 conv (HWIO)
        b2 = 0.01 * jax.random.normal(w2_keys[1], (growth_rate,), jnp.float32)
        params.append({"bn1": bn1, "w1": w1, "b1": b1,
                       "bn2": bn2, "w2": w2, "b2": b2})
        cin = cin + growth_rate
    return params


if __name__ == "__main__":
    # PyTorch-consistent shapes: x is NCHW [2, 4, 16, 16].
    N, C0, H, W = 2, 4, 16, 16
    num_layers, growth_rate = 3, 4

    key = jax.random.PRNGKey(0)
    k_x, k_p = jax.random.split(key)
    x_nchw = jax.random.normal(k_x, (N, C0, H, W), jnp.float32)
    params = init_dense_block_params(k_p, C0, num_layers, growth_rate)

    y_nchw = dense_block_forward_nchw(x_nchw, params)
    y_nchw = jax.block_until_ready(y_nchw)

    expected_c = C0 + num_layers * growth_rate
    assert y_nchw.shape == (N, expected_c, H, W), y_nchw.shape
    assert bool(jnp.all(jnp.isfinite(y_nchw)))
    print("KERNEL_OK")
</pallas_src>

<mosaic_0001>
module attributes {stable_mosaic.version = 11 : i64} {
  func.func @_convblock_kernel(%arg0: i32, %arg1: memref<1x16x16x4xf32, #tpu.memory_space<vmem>>, %arg2: memref<1x4xf32, #tpu.memory_space<vmem>>, %arg3: memref<1x4xf32, #tpu.memory_space<vmem>>, %arg4: memref<4x16xbf16, #tpu.memory_space<vmem>>, %arg5: memref<1x16xf32, #tpu.memory_space<vmem>>, %arg6: memref<144x4xbf16, #tpu.memory_space<vmem>>, %arg7: memref<1x4xf32, #tpu.memory_space<vmem>>, %arg8: memref<1x16x16x8xf32, #tpu.memory_space<vmem>>) attributes {dimension_semantics = [#tpu.dimension_semantics<parallel>], iteration_bounds = array<i64: 2>, scalar_prefetch = 0 : i64, scratch_operands = 0 : i64, tpu.core_type = #tpu.core_type<tc>, window_params = [{transform_indices = @transform_0, window_bounds = array<i64: 1, 16, 16, 4>}, {pipeline_mode = #tpu.pipeline_mode<synchronous>, transform_indices = @transform_1, window_bounds = array<i64: 1, 4>}, {pipeline_mode = #tpu.pipeline_mode<synchronous>, transform_indices = @transform_2, window_bounds = array<i64: 1, 4>}, {pipeline_mode = #tpu.pipeline_mode<synchronous>, transform_indices = @transform_3, window_bounds = array<i64: 4, 16>}, {pipeline_mode = #tpu.pipeline_mode<synchronous>, transform_indices = @transform_4, window_bounds = array<i64: 1, 16>}, {pipeline_mode = #tpu.pipeline_mode<synchronous>, transform_indices = @transform_5, window_bounds = array<i64: 144, 4>}, {pipeline_mode = #tpu.pipeline_mode<synchronous>, transform_indices = @transform_6, window_bounds = array<i64: 1, 4>}, {transform_indices = @transform_7, window_bounds = array<i64: 1, 16, 16, 8>}]} {
    %c0 = arith.constant 0 : index
    %c0_0 = arith.constant 0 : index
    %c0_1 = arith.constant 0 : index
    %c0_2 = arith.constant 0 : index
    %0 = vector.load %arg1[%c0, %c0_0, %c0_1, %c0_2] : memref<1x16x16x4xf32, #tpu.memory_space<vmem>>, vector<1x16x16x4xf32>
    %1 = vector.shape_cast %0 : vector<1x16x16x4xf32> to vector<256x4xf32>
    %c0_3 = arith.constant 0 : index
    %c0_4 = arith.constant 0 : index
    %2 = vector.load %arg2[%c0_3, %c0_4] : memref<1x4xf32, #tpu.memory_space<vmem>>, vector<1x4xf32>
    %3 = vector.broadcast %2 : vector<1x4xf32> to vector<256x4xf32>
    %4 = arith.mulf %1, %3 : vector<256x4xf32>
    %c0_5 = arith.constant 0 : index
    %c0_6 = arith.constant 0 : index
    %5 = vector.load %arg3[%c0_5, %c0_6] : memref<1x4xf32, #tpu.memory_space<vmem>>, vector<1x4xf32>
    %6 = vector.broadcast %5 : vector<1x4xf32> to vector<256x4xf32>
    %7 = arith.addf %4, %6 : vector<256x4xf32>
    %cst = arith.constant 0.000000e+00 : f32
    %8 = vector.broadcast %cst : f32 to vector<256x4xf32>
    %9 = arith.maximumf %7, %8 : vector<256x4xf32>
    %10 = arith.truncf %9 : vector<256x4xf32> to vector<256x4xbf16>
    %c0_7 = arith.constant 0 : index
    %c0_8 = arith.constant 0 : index
    %11 = vector.load %arg4[%c0_7, %c0_8] : memref<4x16xbf16, #tpu.memory_space<vmem>>, vector<4x16xbf16>
    %cst_9 = arith.constant dense<0.000000e+00> : vector<256x16xf32>
    %12 = tpu.matmul %10, %11, %cst_9 {dimension_numbers = #tpu.dot_dimension_numbers<[1], [0], [0], [1], [0, 0, 1, 1], [], []>} : vector<256x4xbf16>, vector<4x16xbf16>, vector<256x16xf32> -> vector<256x16xf32>
    %c0_10 = arith.constant 0 : index
    %c0_11 = arith.constant 0 : index
    %13 = vector.load %arg5[%c0_10, %c0_11] : memref<1x16xf32, #tpu.memory_space<vmem>>, vector<1x16xf32>
    %14 = vector.broadcast %13 : vector<1x16xf32> to vector<256x16xf32>
    %15 = arith.addf %12, %14 : vector<256x16xf32>
    %cst_12 = arith.constant 0.000000e+00 : f32
    %16 = vector.broadcast %cst_12 : f32 to vector<256x16xf32>
    %17 = arith.maximumf %15, %16 : vector<256x16xf32>
    %18 = vector.shape_cast %17 : vector<256x16xf32> to vector<16x16x16xf32>
    %cst_13 = arith.constant 0.000000e+00 : f32
    %19 = vector.broadcast %cst_13 : f32 to vector<1x16x16xf32>
    %20 = tpu.concatenate %19, %18, %19 in 0 : vector<1x16x16xf32>, vector<16x16x16xf32>, vector<1x16x16xf32> -> vector<18x16x16xf32>
    %cst_14 = arith.constant 0.000000e+00 : f32
    %21 = vector.broadcast %cst_14 : f32 to vector<18x1x16xf32>
    %22 = tpu.concatenate %21, %20, %21 in 1 : vector<18x1x16xf32>, vector<18x16x16xf32>, vector<18x1x16xf32> -> vector<18x18x16xf32>
    %23 = vector.extract_strided_slice %22 {offsets = [0, 0, 0], sizes = [16, 16, 16], strides = [1, 1, 1]} : vector<18x18x16xf32> to vector<16x16x16xf32>
    %24 = vector.shape_cast %23 : vector<16x16x16xf32> to vector<256x16xf32>
    %25 = vector.extract_strided_slice %22 {offsets = [0, 1, 0], sizes = [16, 16, 16], strides = [1, 1, 1]} : vector<18x18x16xf32> to vector<16x16x16xf32>
    %26 = vector.shape_cast %25 : vector<16x16x16xf32> to vector<256x16xf32>
    %27 = vector.extract_strided_slice %22 {offsets = [0, 2, 0], sizes = [16, 16, 16], strides = [1, 1, 1]} : vector<18x18x16xf32> to vector<16x16x16xf32>
    %28 = vector.shape_cast %27 : vector<16x16x16xf32> to vector<256x16xf32>
    %29 = vector.extract_strided_slice %22 {offsets = [1, 0, 0], sizes = [16, 16, 16], strides = [1, 1, 1]} : vector<18x18x16xf32> to vector<16x16x16xf32>
    %30 = vector.shape_cast %29 : vector<16x16x16xf32> to vector<256x16xf32>
    %31 = vector.extract_strided_slice %22 {offsets = [1, 1, 0], sizes = [16, 16, 16], strides = [1, 1, 1]} : vector<18x18x16xf32> to vector<16x16x16xf32>
    %32 = vector.shape_cast %31 : vector<16x16x16xf32> to vector<256x16xf32>
    %33 = vector.extract_strided_slice %22 {offsets = [1, 2, 0], sizes = [16, 16, 16], strides = [1, 1, 1]} : vector<18x18x16xf32> to vector<16x16x16xf32>
    %34 = vector.shape_cast %33 : vector<16x16x16xf32> to vector<256x16xf32>
    %35 = vector.extract_strided_slice %22 {offsets = [2, 0, 0], sizes = [16, 16, 16], strides = [1, 1, 1]} : vector<18x18x16xf32> to vector<16x16x16xf32>
    %36 = vector.shape_cast %35 : vector<16x16x16xf32> to vector<256x16xf32>
    %37 = vector.extract_strided_slice %22 {offsets = [2, 1, 0], sizes = [16, 16, 16], strides = [1, 1, 1]} : vector<18x18x16xf32> to vector<16x16x16xf32>
    %38 = vector.shape_cast %37 : vector<16x16x16xf32> to vector<256x16xf32>
    %39 = vector.extract_strided_slice %22 {offsets = [2, 2, 0], sizes = [16, 16, 16], strides = [1, 1, 1]} : vector<18x18x16xf32> to vector<16x16x16xf32>
    %40 = vector.shape_cast %39 : vector<16x16x16xf32> to vector<256x16xf32>
    %41 = tpu.concatenate %24, %26, %28, %30, %32, %34, %36, %38, %40 in 1 : vector<256x16xf32>, vector<256x16xf32>, vector<256x16xf32>, vector<256x16xf32>, vector<256x16xf32>, vector<256x16xf32>, vector<256x16xf32>, vector<256x16xf32>, vector<256x16xf32> -> vector<256x144xf32>
    %42 = arith.truncf %41 : vector<256x144xf32> to vector<256x144xbf16>
    %c0_15 = arith.constant 0 : index
    %c0_16 = arith.constant 0 : index
    %43 = vector.load %arg6[%c0_15, %c0_16] : memref<144x4xbf16, #tpu.memory_space<vmem>>, vector<144x4xbf16>
    %cst_17 = arith.constant dense<0.000000e+00> : vector<256x4xf32>
    %44 = tpu.matmul %42, %43, %cst_17 {dimension_numbers = #tpu.dot_dimension_numbers<[1], [0], [0], [1], [0, 0, 1, 1], [], []>} : vector<256x144xbf16>, vector<144x4xbf16>, vector<256x4xf32> -> vector<256x4xf32>
    %c0_18 = arith.constant 0 : index
    %c0_19 = arith.constant 0 : index
    %45 = vector.load %arg7[%c0_18, %c0_19] : memref<1x4xf32, #tpu.memory_space<vmem>>, vector<1x4xf32>
    %46 = vector.broadcast %45 : vector<1x4xf32> to vector<256x4xf32>
    %47 = arith.addf %44, %46 : vector<256x4xf32>
    %48 = vector.shape_cast %47 : vector<256x4xf32> to vector<1x16x16x4xf32>
    %49 = tpu.concatenate %48, %0 in 3 : vector<1x16x16x4xf32>, vector<1x16x16x4xf32> -> vector<1x16x16x8xf32>
    %c0_20 = arith.constant 0 : index
    %c0_21 = arith.constant 0 : index
    %c0_22 = arith.constant 0 : index
    %c0_23 = arith.constant 0 : index
    %50 = vector.load %arg8[%c0_20, %c0_21, %c0_22, %c0_23] : memref<1x16x16x8xf32, #tpu.memory_space<vmem>>, vector<1x16x16x8xf32>
    tpu.vector_store %arg8[%c0_20, %c0_21, %c0_22, %c0_23], %49 {strides = array<i32>} : memref<1x16x16x8xf32, #tpu.memory_space<vmem>>, vector<1x16x16x8xf32>,
    return
  }
  func.func @transform_0(%arg0: i32) -> (i32, i32, i32, i32) {
    %c0_i32 = arith.constant 0 : i32
    %c0_i32_0 = arith.constant 0 : i32
    %c0_i32_1 = arith.constant 0 : i32
    %c0_i32_2 = arith.constant 0 : i32
    return %arg0, %c0_i32, %c0_i32_0, %c0_i32_1 : i32, i32, i32, i32
  }
  func.func @transform_1(%arg0: i32) -> (i32, i32) {
    %c0_i32 = arith.constant 0 : i32
    %c0_i32_0 = arith.constant 0 : i32
    %c0_i32_1 = arith.constant 0 : i32
    return %c0_i32, %c0_i32_0 : i32, i32
  }
  func.func @transform_2(%arg0: i32) -> (i32, i32) {
    %c0_i32 = arith.constant 0 : i32
    %c0_i32_0 = arith.constant 0 : i32
    %c0_i32_1 = arith.constant 0 : i32
    return %c0_i32, %c0_i32_0 : i32, i32
  }
  func.func @transform_3(%arg0: i32) -> (i32, i32) {
    %c0_i32 = arith.constant 0 : i32
    %c0_i32_0 = arith.constant 0 : i32
    %c0_i32_1 = arith.constant 0 : i32
    return %c0_i32, %c0_i32_0 : i32, i32
  }
  func.func @transform_4(%arg0: i32) -> (i32, i32) {
    %c0_i32 = arith.constant 0 : i32
    %c0_i32_0 = arith.constant 0 : i32
    %c0_i32_1 = arith.constant 0 : i32
    return %c0_i32, %c0_i32_0 : i32, i32
  }
  func.func @transform_5(%arg0: i32) -> (i32, i32) {
    %c0_i32 = arith.constant 0 : i32
    %c0_i32_0 = arith.constant 0 : i32
    %c0_i32_1 = arith.constant 0 : i32
    return %c0_i32, %c0_i32_0 : i32, i32
  }
  func.func @transform_6(%arg0: i32) -> (i32, i32) {
    %c0_i32 = arith.constant 0 : i32
    %c0_i32_0 = arith.constant 0 : i32
    %c0_i32_1 = arith.constant 0 : i32
    return %c0_i32, %c0_i32_0 : i32, i32
  }
  func.func @transform_7(%arg0: i32) -> (i32, i32, i32, i32) {
    %c0_i32 = arith.constant 0 : i32
    %c0_i32_0 = arith.constant 0 : i32
    %c0_i32_1 = arith.constant 0 : i32
    %c0_i32_2 = arith.constant 0 : i32
    return %arg0, %c0_i32, %c0_i32_0, %c0_i32_1 : i32, i32, i32, i32
  }
}

module attributes {stable_mosaic.version = 11 : i64} {
  func.func @_convblock_kernel(%arg0: i32, %arg1: memref<1x16x16x8xf32, #tpu.memory_space<vmem>>, %arg2: memref<1x8xf32, #tpu.memory_space<vmem>>, %arg3: memref<1x8xf32, #tpu.memory_space<vmem>>, %arg4: memref<8x16xbf16, #tpu.memory_space<vmem>>, %arg5: memref<1x16xf32, #tpu.memory_space<vmem>>, %arg6: memref<144x4xbf16, #tpu.memory_space<vmem>>, %arg7: memref<1x4xf32, #tpu.memory_space<vmem>>, %arg8: memref<1x16x16x12xf32, #tpu.memory_space<vmem>>) attributes {dimension_semantics = [#tpu.dimension_semantics<parallel>], iteration_bounds = array<i64: 2>, scalar_prefetch = 0 : i64, scratch_operands = 0 : i64, tpu.core_type = #tpu.core_type<tc>, window_params = [{transform_indices = @transform_0, window_bounds = array<i64: 1, 16, 16, 8>}, {pipeline_mode = #tpu.pipeline_mode<synchronous>, transform_indices = @transform_1, window_bounds = array<i64: 1, 8>}, {pipeline_mode = #tpu.pipeline_mode<synchronous>, transform_indices = @transform_2, window_bounds = array<i64: 1, 8>}, {pipeline_mode = #tpu.pipeline_mode<synchronous>, transform_indices = @transform_3, window_bounds = array<i64: 8, 16>}, {pipeline_mode = #tpu.pipeline_mode<synchronous>, transform_indices = @transform_4, window_bounds = array<i64: 1, 16>}, {pipeline_mode = #tpu.pipeline_mode<synchronous>, transform_indices = @transform_5, window_bounds = array<i64: 144, 4>}, {pipeline_mode = #tpu.pipeline_mode<synchronous>, transform_indices = @transform_6, window_bounds = array<i64: 1, 4>}, {transform_indices = @transform_7, window_bounds = array<i64: 1, 16, 16, 12>}]} {
    %c0 = arith.constant 0 : index
    %c0_0 = arith.constant 0 : index
    %c0_1 = arith.constant 0 : index
    %c0_2 = arith.constant 0 : index
    %0 = vector.load %arg1[%c0, %c0_0, %c0_1, %c0_2] : memref<1x16x16x8xf32, #tpu.memory_space<vmem>>, vector<1x16x16x8xf32>
    %1 = vector.shape_cast %0 : vector<1x16x16x8xf32> to vector<256x8xf32>
    %c0_3 = arith.constant 0 : index
    %c0_4 = arith.constant 0 : index
    %2 = vector.load %arg2[%c0_3, %c0_4] : memref<1x8xf32, #tpu.memory_space<vmem>>, vector<1x8xf32>
    %3 = vector.broadcast %2 : vector<1x8xf32> to vector<256x8xf32>
    %4 = arith.mulf %1, %3 : vector<256x8xf32>
    %c0_5 = arith.constant 0 : index
    %c0_6 = arith.constant 0 : index
    %5 = vector.load %arg3[%c0_5, %c0_6] : memref<1x8xf32, #tpu.memory_space<vmem>>, vector<1x8xf32>
    %6 = vector.broadcast %5 : vector<1x8xf32> to vector<256x8xf32>
    %7 = arith.addf %4, %6 : vector<256x8xf32>
    %cst = arith.constant 0.000000e+00 : f32
    %8 = vector.broadcast %cst : f32 to vector<256x8xf32>
    %9 = arith.maximumf %7, %8 : vector<256x8xf32>
    %10 = arith.truncf %9 : vector<256x8xf32> to vector<256x8xbf16>
    %c0_7 = arith.constant 0 : index
    %c0_8 = arith.constant 0 : index
    %11 = vector.load %arg4[%c0_7, %c0_8] : memref<8x16xbf16, #tpu.memory_space<vmem>>, vector<8x16xbf16>
    %cst_9 = arith.constant dense<0.000000e+00> : vector<256x16xf32>
    %12 = tpu.matmul %10, %11, %cst_9 {dimension_numbers = #tpu.dot_dimension_numbers<[1], [0], [0], [1], [0, 0, 1, 1], [], []>} : vector<256x8xbf16>, vector<8x16xbf16>, vector<256x16xf32> -> vector<256x16xf32>
    %c0_10 = arith.constant 0 : index
    %c0_11 = arith.constant 0 : index
    %13 = vector.load %arg5[%c0_10, %c0_11] : memref<1x16xf32, #tpu.memory_space<vmem>>, vector<1x16xf32>
    %14 = vector.broadcast %13 : vector<1x16xf32> to vector<256x16xf32>
    %15 = arith.addf %12, %14 : vector<256x16xf32>
    %cst_12 = arith.constant 0.000000e+00 : f32
    %16 = vector.broadcast %cst_12 : f32 to vector<256x16xf32>
    %17 = arith.maximumf %15, %16 : vector<256x16xf32>
    %18 = vector.shape_cast %17 : vector<256x16xf32> to vector<16x16x16xf32>
    %cst_13 = arith.constant 0.000000e+00 : f32
    %19 = vector.broadcast %cst_13 : f32 to vector<1x16x16xf32>
    %20 = tpu.concatenate %19, %18, %19 in 0 : vector<1x16x16xf32>, vector<16x16x16xf32>, vector<1x16x16xf32> -> vector<18x16x16xf32>
    %cst_14 = arith.constant 0.000000e+00 : f32
    %21 = vector.broadcast %cst_14 : f32 to vector<18x1x16xf32>
    %22 = tpu.concatenate %21, %20, %21 in 1 : vector<18x1x16xf32>, vector<18x16x16xf32>, vector<18x1x16xf32> -> vector<18x18x16xf32>
    %23 = vector.extract_strided_slice %22 {offsets = [0, 0, 0], sizes = [16, 16, 16], strides = [1, 1, 1]} : vector<18x18x16xf32> to vector<16x16x16xf32>
    %24 = vector.shape_cast %23 : vector<16x16x16xf32> to vector<256x16xf32>
    %25 = vector.extract_strided_slice %22 {offsets = [0, 1, 0], sizes = [16, 16, 16], strides = [1, 1, 1]} : vector<18x18x16xf32> to vector<16x16x16xf32>
    %26 = vector.shape_cast %25 : vector<16x16x16xf32> to vector<256x16xf32>
    %27 = vector.extract_strided_slice %22 {offsets = [0, 2, 0], sizes = [16, 16, 16], strides = [1, 1, 1]} : vector<18x18x16xf32> to vector<16x16x16xf32>
    %28 = vector.shape_cast %27 : vector<16x16x16xf32> to vector<256x16xf32>
    %29 = vector.extract_strided_slice %22 {offsets = [1, 0, 0], sizes = [16, 16, 16], strides = [1, 1, 1]} : vector<18x18x16xf32> to vector<16x16x16xf32>
    %30 = vector.shape_cast %29 : vector<16x16x16xf32> to vector<256x16xf32>
    %31 = vector.extract_strided_slice %22 {offsets = [1, 1, 0], sizes = [16, 16, 16], strides = [1, 1, 1]} : vector<18x18x16xf32> to vector<16x16x16xf32>
    %32 = vector.shape_cast %31 : vector<16x16x16xf32> to vector<256x16xf32>
    %33 = vector.extract_strided_slice %22 {offsets = [1, 2, 0], sizes = [16, 16, 16], strides = [1, 1, 1]} : vector<18x18x16xf32> to vector<16x16x16xf32>
    %34 = vector.shape_cast %33 : vector<16x16x16xf32> to vector<256x16xf32>
    %35 = vector.extract_strided_slice %22 {offsets = [2, 0, 0], sizes = [16, 16, 16], strides = [1, 1, 1]} : vector<18x18x16xf32> to vector<16x16x16xf32>
    %36 = vector.shape_cast %35 : vector<16x16x16xf32> to vector<256x16xf32>
    %37 = vector.extract_strided_slice %22 {offsets = [2, 1, 0], sizes = [16, 16, 16], strides = [1, 1, 1]} : vector<18x18x16xf32> to vector<16x16x16xf32>
    %38 = vector.shape_cast %37 : vector<16x16x16xf32> to vector<256x16xf32>
    %39 = vector.extract_strided_slice %22 {offsets = [2, 2, 0], sizes = [16, 16, 16], strides = [1, 1, 1]} : vector<18x18x16xf32> to vector<16x16x16xf32>
    %40 = vector.shape_cast %39 : vector<16x16x16xf32> to vector<256x16xf32>
    %41 = tpu.concatenate %24, %26, %28, %30, %32, %34, %36, %38, %40 in 1 : vector<256x16xf32>, vector<256x16xf32>, vector<256x16xf32>, vector<256x16xf32>, vector<256x16xf32>, vector<256x16xf32>, vector<256x16xf32>, vector<256x16xf32>, vector<256x16xf32> -> vector<256x144xf32>
    %42 = arith.truncf %41 : vector<256x144xf32> to vector<256x144xbf16>
    %c0_15 = arith.constant 0 : index
    %c0_16 = arith.constant 0 : index
    %43 = vector.load %arg6[%c0_15, %c0_16] : memref<144x4xbf16, #tpu.memory_space<vmem>>, vector<144x4xbf16>
    %cst_17 = arith.constant dense<0.000000e+00> : vector<256x4xf32>
    %44 = tpu.matmul %42, %43, %cst_17 {dimension_numbers = #tpu.dot_dimension_numbers<[1], [0], [0], [1], [0, 0, 1, 1], [], []>} : vector<256x144xbf16>, vector<144x4xbf16>, vector<256x4xf32> -> vector<256x4xf32>
    %c0_18 = arith.constant 0 : index
    %c0_19 = arith.constant 0 : index
    %45 = vector.load %arg7[%c0_18, %c0_19] : memref<1x4xf32, #tpu.memory_space<vmem>>, vector<1x4xf32>
    %46 = vector.broadcast %45 : vector<1x4xf32> to vector<256x4xf32>
    %47 = arith.addf %44, %46 : vector<256x4xf32>
    %48 = vector.shape_cast %47 : vector<256x4xf32> to vector<1x16x16x4xf32>
    %49 = tpu.concatenate %48, %0 in 3 : vector<1x16x16x4xf32>, vector<1x16x16x8xf32> -> vector<1x16x16x12xf32>
    %c0_20 = arith.constant 0 : index
    %c0_21 = arith.constant 0 : index
    %c0_22 = arith.constant 0 : index
    %c0_23 = arith.constant 0 : index
    %50 = vector.load %arg8[%c0_20, %c0_21, %c0_22, %c0_23] : memref<1x16x16x12xf32, #tpu.memory_space<vmem>>, vector<1x16x16x12xf32>
    tpu.vector_store %arg8[%c0_20, %c0_21, %c0_22, %c0_23], %49 {strides = array<i32>} : memref<1x16x16x12xf32, #tpu.memory_space<vmem>>, vector<1x16x16x12xf32>,
    return
  }
  func.func @transform_0(%arg0: i32) -> (i32, i32, i32, i32) {
    %c0_i32 = arith.constant 0 : i32
    %c0_i32_0 = arith.constant 0 : i32
    %c0_i32_1 = arith.constant 0 : i32
    %c0_i32_2 = arith.constant 0 : i32
    return %arg0, %c0_i32, %c0_i32_0, %c0_i32_1 : i32, i32, i32, i32
  }
  func.func @transform_1(%arg0: i32) -> (i32, i32) {
    %c0_i32 = arith.constant 0 : i32
    %c0_i32_0 = arith.constant 0 : i32
    %c0_i32_1 = arith.constant 0 : i32
    return %c0_i32, %c0_i32_0 : i32, i32
  }
  func.func @transform_2(%arg0: i32) -> (i32, i32) {
    %c0_i32 = arith.constant 0 : i32
    %c0_i32_0 = arith.constant 0 : i32
    %c0_i32_1 = arith.constant 0 : i32
    return %c0_i32, %c0_i32_0 : i32, i32
  }
  func.func @transform_3(%arg0: i32) -> (i32, i32) {
    %c0_i32 = arith.constant 0 : i32
    %c0_i32_0 = arith.constant 0 : i32
    %c0_i32_1 = arith.constant 0 : i32
    return %c0_i32, %c0_i32_0 : i32, i32
  }
  func.func @transform_4(%arg0: i32) -> (i32, i32) {
    %c0_i32 = arith.constant 0 : i32
    %c0_i32_0 = arith.constant 0 : i32
    %c0_i32_1 = arith.constant 0 : i32
    return %c0_i32, %c0_i32_0 : i32, i32
  }
  func.func @transform_5(%arg0: i32) -> (i32, i32) {
    %c0_i32 = arith.constant 0 : i32
    %c0_i32_0 = arith.constant 0 : i32
    %c0_i32_1 = arith.constant 0 : i32
    return %c0_i32, %c0_i32_0 : i32, i32
  }
  func.func @transform_6(%arg0: i32) -> (i32, i32) {
    %c0_i32 = arith.constant 0 : i32
    %c0_i32_0 = arith.constant 0 : i32
    %c0_i32_1 = arith.constant 0 : i32
    return %c0_i32, %c0_i32_0 : i32, i32
  }
  func.func @transform_7(%arg0: i32) -> (i32, i32, i32, i32) {
    %c0_i32 = arith.constant 0 : i32
    %c0_i32_0 = arith.constant 0 : i32
    %c0_i32_1 = arith.constant 0 : i32
    %c0_i32_2 = arith.constant 0 : i32
    return %arg0, %c0_i32, %c0_i32_0, %c0_i32_1 : i32, i32, i32, i32
  }
}

module attributes {stable_mosaic.version = 11 : i64} {
  func.func @_convblock_kernel(%arg0: i32, %arg1: memref<1x16x16x12xf32, #tpu.memory_space<vmem>>, %arg2: memref<1x12xf32, #tpu.memory_space<vmem>>, %arg3: memref<1x12xf32, #tpu.memory_space<vmem>>, %arg4: memref<12x16xbf16, #tpu.memory_space<vmem>>, %arg5: memref<1x16xf32, #tpu.memory_space<vmem>>, %arg6: memref<144x4xbf16, #tpu.memory_space<vmem>>, %arg7: memref<1x4xf32, #tpu.memory_space<vmem>>, %arg8: memref<1x16x16x16xf32, #tpu.memory_space<vmem>>) attributes {dimension_semantics = [#tpu.dimension_semantics<parallel>], iteration_bounds = array<i64: 2>, scalar_prefetch = 0 : i64, scratch_operands = 0 : i64, tpu.core_type = #tpu.core_type<tc>, window_params = [{transform_indices = @transform_0, window_bounds = array<i64: 1, 16, 16, 12>}, {pipeline_mode = #tpu.pipeline_mode<synchronous>, transform_indices = @transform_1, window_bounds = array<i64: 1, 12>}, {pipeline_mode = #tpu.pipeline_mode<synchronous>, transform_indices = @transform_2, window_bounds = array<i64: 1, 12>}, {pipeline_mode = #tpu.pipeline_mode<synchronous>, transform_indices = @transform_3, window_bounds = array<i64: 12, 16>}, {pipeline_mode = #tpu.pipeline_mode<synchronous>, transform_indices = @transform_4, window_bounds = array<i64: 1, 16>}, {pipeline_mode = #tpu.pipeline_mode<synchronous>, transform_indices = @transform_5, window_bounds = array<i64: 144, 4>}, {pipeline_mode = #tpu.pipeline_mode<synchronous>, transform_indices = @transform_6, window_bounds = array<i64: 1, 4>}, {transform_indices = @transform_7, window_bounds = array<i64: 1, 16, 16, 16>}]} {
    %c0 = arith.constant 0 : index
    %c0_0 = arith.constant 0 : index
    %c0_1 = arith.constant 0 : index
    %c0_2 = arith.constant 0 : index
    %0 = vector.load %arg1[%c0, %c0_0, %c0_1, %c0_2] : memref<1x16x16x12xf32, #tpu.memory_space<vmem>>, vector<1x16x16x12xf32>
    %1 = vector.shape_cast %0 : vector<1x16x16x12xf32> to vector<256x12xf32>
    %c0_3 = arith.constant 0 : index
    %c0_4 = arith.constant 0 : index
    %2 = vector.load %arg2[%c0_3, %c0_4] : memref<1x12xf32, #tpu.memory_space<vmem>>, vector<1x12xf32>
    %3 = vector.broadcast %2 : vector<1x12xf32> to vector<256x12xf32>
    %4 = arith.mulf %1, %3 : vector<256x12xf32>
    %c0_5 = arith.constant 0 : index
    %c0_6 = arith.constant 0 : index
    %5 = vector.load %arg3[%c0_5, %c0_6] : memref<1x12xf32, #tpu.memory_space<vmem>>, vector<1x12xf32>
    %6 = vector.broadcast %5 : vector<1x12xf32> to vector<256x12xf32>
    %7 = arith.addf %4, %6 : vector<256x12xf32>
    %cst = arith.constant 0.000000e+00 : f32
    %8 = vector.broadcast %cst : f32 to vector<256x12xf32>
    %9 = arith.maximumf %7, %8 : vector<256x12xf32>
    %10 = arith.truncf %9 : vector<256x12xf32> to vector<256x12xbf16>
    %c0_7 = arith.constant 0 : index
    %c0_8 = arith.constant 0 : index
    %11 = vector.load %arg4[%c0_7, %c0_8] : memref<12x16xbf16, #tpu.memory_space<vmem>>, vector<12x16xbf16>
    %cst_9 = arith.constant dense<0.000000e+00> : vector<256x16xf32>
    %12 = tpu.matmul %10, %11, %cst_9 {dimension_numbers = #tpu.dot_dimension_numbers<[1], [0], [0], [1], [0, 0, 1, 1], [], []>} : vector<256x12xbf16>, vector<12x16xbf16>, vector<256x16xf32> -> vector<256x16xf32>
    %c0_10 = arith.constant 0 : index
    %c0_11 = arith.constant 0 : index
    %13 = vector.load %arg5[%c0_10, %c0_11] : memref<1x16xf32, #tpu.memory_space<vmem>>, vector<1x16xf32>
    %14 = vector.broadcast %13 : vector<1x16xf32> to vector<256x16xf32>
    %15 = arith.addf %12, %14 : vector<256x16xf32>
    %cst_12 = arith.constant 0.000000e+00 : f32
    %16 = vector.broadcast %cst_12 : f32 to vector<256x16xf32>
    %17 = arith.maximumf %15, %16 : vector<256x16xf32>
    %18 = vector.shape_cast %17 : vector<256x16xf32> to vector<16x16x16xf32>
    %cst_13 = arith.constant 0.000000e+00 : f32
    %19 = vector.broadcast %cst_13 : f32 to vector<1x16x16xf32>
    %20 = tpu.concatenate %19, %18, %19 in 0 : vector<1x16x16xf32>, vector<16x16x16xf32>, vector<1x16x16xf32> -> vector<18x16x16xf32>
    %cst_14 = arith.constant 0.000000e+00 : f32
    %21 = vector.broadcast %cst_14 : f32 to vector<18x1x16xf32>
    %22 = tpu.concatenate %21, %20, %21 in 1 : vector<18x1x16xf32>, vector<18x16x16xf32>, vector<18x1x16xf32> -> vector<18x18x16xf32>
    %23 = vector.extract_strided_slice %22 {offsets = [0, 0, 0], sizes = [16, 16, 16], strides = [1, 1, 1]} : vector<18x18x16xf32> to vector<16x16x16xf32>
    %24 = vector.shape_cast %23 : vector<16x16x16xf32> to vector<256x16xf32>
    %25 = vector.extract_strided_slice %22 {offsets = [0, 1, 0], sizes = [16, 16, 16], strides = [1, 1, 1]} : vector<18x18x16xf32> to vector<16x16x16xf32>
    %26 = vector.shape_cast %25 : vector<16x16x16xf32> to vector<256x16xf32>
    %27 = vector.extract_strided_slice %22 {offsets = [0, 2, 0], sizes = [16, 16, 16], strides = [1, 1, 1]} : vector<18x18x16xf32> to vector<16x16x16xf32>
    %28 = vector.shape_cast %27 : vector<16x16x16xf32> to vector<256x16xf32>
    %29 = vector.extract_strided_slice %22 {offsets = [1, 0, 0], sizes = [16, 16, 16], strides = [1, 1, 1]} : vector<18x18x16xf32> to vector<16x16x16xf32>
    %30 = vector.shape_cast %29 : vector<16x16x16xf32> to vector<256x16xf32>
    %31 = vector.extract_strided_slice %22 {offsets = [1, 1, 0], sizes = [16, 16, 16], strides = [1, 1, 1]} : vector<18x18x16xf32> to vector<16x16x16xf32>
    %32 = vector.shape_cast %31 : vector<16x16x16xf32> to vector<256x16xf32>
    %33 = vector.extract_strided_slice %22 {offsets = [1, 2, 0], sizes = [16, 16, 16], strides = [1, 1, 1]} : vector<18x18x16xf32> to vector<16x16x16xf32>
    %34 = vector.shape_cast %33 : vector<16x16x16xf32> to vector<256x16xf32>
    %35 = vector.extract_strided_slice %22 {offsets = [2, 0, 0], sizes = [16, 16, 16], strides = [1, 1, 1]} : vector<18x18x16xf32> to vector<16x16x16xf32>
    %36 = vector.shape_cast %35 : vector<16x16x16xf32> to vector<256x16xf32>
    %37 = vector.extract_strided_slice %22 {offsets = [2, 1, 0], sizes = [16, 16, 16], strides = [1, 1, 1]} : vector<18x18x16xf32> to vector<16x16x16xf32>
    %38 = vector.shape_cast %37 : vector<16x16x16xf32> to vector<256x16xf32>
    %39 = vector.extract_strided_slice %22 {offsets = [2, 2, 0], sizes = [16, 16, 16], strides = [1, 1, 1]} : vector<18x18x16xf32> to vector<16x16x16xf32>
    %40 = vector.shape_cast %39 : vector<16x16x16xf32> to vector<256x16xf32>
    %41 = tpu.concatenate %24, %26, %28, %30, %32, %34, %36, %38, %40 in 1 : vector<256x16xf32>, vector<256x16xf32>, vector<256x16xf32>, vector<256x16xf32>, vector<256x16xf32>, vector<256x16xf32>, vector<256x16xf32>, vector<256x16xf32>, vector<256x16xf32> -> vector<256x144xf32>
    %42 = arith.truncf %41 : vector<256x144xf32> to vector<256x144xbf16>
    %c0_15 = arith.constant 0 : index
    %c0_16 = arith.constant 0 : index
    %43 = vector.load %arg6[%c0_15, %c0_16] : memref<144x4xbf16, #tpu.memory_space<vmem>>, vector<144x4xbf16>
    %cst_17 = arith.constant dense<0.000000e+00> : vector<256x4xf32>
    %44 = tpu.matmul %42, %43, %cst_17 {dimension_numbers = #tpu.dot_dimension_numbers<[1], [0], [0], [1], [0, 0, 1, 1], [], []>} : vector<256x144xbf16>, vector<144x4xbf16>, vector<256x4xf32> -> vector<256x4xf32>
    %c0_18 = arith.constant 0 : index
    %c0_19 = arith.constant 0 : index
    %45 = vector.load %arg7[%c0_18, %c0_19] : memref<1x4xf32, #tpu.memory_space<vmem>>, vector<1x4xf32>
    %46 = vector.broadcast %45 : vector<1x4xf32> to vector<256x4xf32>
    %47 = arith.addf %44, %46 : vector<256x4xf32>
    %48 = vector.shape_cast %47 : vector<256x4xf32> to vector<1x16x16x4xf32>
    %49 = tpu.concatenate %48, %0 in 3 : vector<1x16x16x4xf32>, vector<1x16x16x12xf32> -> vector<1x16x16x16xf32>
    %c0_20 = arith.constant 0 : index
    %c0_21 = arith.constant 0 : index
    %c0_22 = arith.constant 0 : index
    %c0_23 = arith.constant 0 : index
    %50 = vector.load %arg8[%c0_20, %c0_21, %c0_22, %c0_23] : memref<1x16x16x16xf32, #tpu.memory_space<vmem>>, vector<1x16x16x16xf32>
    tpu.vector_store %arg8[%c0_20, %c0_21, %c0_22, %c0_23], %49 {strides = array<i32>} : memref<1x16x16x16xf32, #tpu.memory_space<vmem>>, vector<1x16x16x16xf32>,
    return
  }
  func.func @transform_0(%arg0: i32) -> (i32, i32, i32, i32) {
    %c0_i32 = arith.constant 0 : i32
    %c0_i32_0 = arith.constant 0 : i32
    %c0_i32_1 = arith.constant 0 : i32
    %c0_i32_2 = arith.constant 0 : i32
    return %arg0, %c0_i32, %c0_i32_0, %c0_i32_1 : i32, i32, i32, i32
  }
  func.func @transform_1(%arg0: i32) -> (i32, i32) {
    %c0_i32 = arith.constant 0 : i32
    %c0_i32_0 = arith.constant 0 : i32
    %c0_i32_1 = arith.constant 0 : i32
    return %c0_i32, %c0_i32_0 : i32, i32
  }
  func.func @transform_2(%arg0: i32) -> (i32, i32) {
    %c0_i32 = arith.constant 0 : i32
    %c0_i32_0 = arith.constant 0 : i32
    %c0_i32_1 = arith.constant 0 : i32
    return %c0_i32, %c0_i32_0 : i32, i32
  }
  func.func @transform_3(%arg0: i32) -> (i32, i32) {
    %c0_i32 = arith.constant 0 : i32
    %c0_i32_0 = arith.constant 0 : i32
    %c0_i32_1 = arith.constant 0 : i32
    return %c0_i32, %c0_i32_0 : i32, i32
  }
  func.func @transform_4(%arg0: i32) -> (i32, i32) {
    %c0_i32 = arith.constant 0 : i32
    %c0_i32_0 = arith.constant 0 : i32
    %c0_i32_1 = arith.constant 0 : i32
    return %c0_i32, %c0_i32_0 : i32, i32
  }
  func.func @transform_5(%arg0: i32) -> (i32, i32) {
    %c0_i32 = arith.constant 0 : i32
    %c0_i32_0 = arith.constant 0 : i32
    %c0_i32_1 = arith.constant 0 : i32
    return %c0_i32, %c0_i32_0 : i32, i32
  }
  func.func @transform_6(%arg0: i32) -> (i32, i32) {
    %c0_i32 = arith.constant 0 : i32
    %c0_i32_0 = arith.constant 0 : i32
    %c0_i32_1 = arith.constant 0 : i32
    return %c0_i32, %c0_i32_0 : i32, i32
  }
  func.func @transform_7(%arg0: i32) -> (i32, i32, i32, i32) {
    %c0_i32 = arith.constant 0 : i32
    %c0_i32_0 = arith.constant 0 : i32
    %c0_i32_1 = arith.constant 0 : i32
    %c0_i32_2 = arith.constant 0 : i32
    return %arg0, %c0_i32, %c0_i32_0, %c0_i32_1 : i32, i32, i32, i32
  }
}

</mosaic_0001>

<llo_original>
// kernel: dense_block_forward_nchw.3
$region0: #{dense_block_forward_nchw.3}
  #allocation0 [shape = 'u32[]', space=smem, size = 0x4, offset = 0x4, fixed_abs, tag = 'smem constant byte address 0x4 - core index']
  #allocation1 [shape = 'u32[144,128]{1,0:T(1,128)}', space=vmem, size = 0x12000, scoped, tag = 'internal scratch']
  %s0 = inlined_call_operand.vmem [shape: f32[2,16,16,4], index: 0, kind: input, shape index: {}]
  %s1 = inlined_call_operand.vmem [shape: f32[1,4], index: 1, kind: input, shape index: {}]
  %s2 = inlined_call_operand.vmem [shape: f32[1,4], index: 2, kind: input, shape index: {}]
  %s3 = inlined_call_operand.vmem [shape: bf16[4,16], index: 3, kind: input, shape index: {}]
  %s4 = inlined_call_operand.vmem [shape: f32[1,16], index: 4, kind: input, shape index: {}]
  %s5 = inlined_call_operand.vmem [shape: bf16[144,4], index: 5, kind: input, shape index: {}]
  %s6 = inlined_call_operand.vmem [shape: f32[1,4], index: 6, kind: input, shape index: {}]
  %s7 = inlined_call_operand.vmem [shape: f32[2,16,16,8], index: 7, kind: output, shape index: {}]
  %s8 = sld [smem:[#allocation0]]
  $region61: #{dense_block_forward_nchw.3} parent=0
    _
  %s10 = ssub.s32 1, %s8
  %s11 = scalar_select 0, %s10, %s8
  loop: start=0, step=1, limit=4
  $region2: #{dense_block_forward_nchw.3} parent=0 // loop_pre_header
    _
  $region3: #{dense_block_forward_nchw.3} parent=0 // loop_header
    %s13 = sphi 0, %s17
    %p14 = scmp.ge.s32.totalorder %s13, 4
    %s23 = sphi 0, %s25
    %s26 = sphi 0, %s23
    %s27 = sphi 0, %s26
    %s43 = sphi 0, %s27
    %s47 = sphi 0, %s47
    %s49 = sphi 0, %s47
    %s50 = sphi 0, %s49
    %s64 = sphi 0, %s50
    %s68 = sphi 0, %s68
    %s70 = sphi 0, %s68
    %s71 = sphi 0, %s70
    %s85 = sphi 0, %s71
    %s89 = sphi 0, %s89
    %s91 = sphi 0, %s89
    %s92 = sphi 0, %s91
    %s106 = sphi 0, %s92
    %s110 = sphi 0, %s110
    %s112 = sphi 0, %s110
    %s113 = sphi 0, %s112
    %s127 = sphi 0, %s113
    %s131 = sphi 0, %s131
    %s133 = sphi 0, %s131
    %s134 = sphi 0, %s133
    %s148 = sphi 0, %s134
    %s152 = sphi 0, %s152
    %s154 = sphi 0, %s152
    %s155 = sphi 0, %s154
    %s169 = sphi 0, %s155
    %s175 = sphi 0, %s177
    %s178 = sphi 0, %s175
    %s179 = sphi 0, %s178
    %s195 = sphi 0, %s179
  $region4: #{dense_block_forward_nchw.3} parent=0 // loop_header_branch
    %16 = sbr.rel (%p14) target = $region8
  $region5: #{dense_block_forward_nchw.3} parent=0 // loop_body
    %s18 = ssub.s32 %s13, 1
    %s19 = ssub.s32 %s13, 2
    %s20 = sadd.s32 %s13, 1
    %s21 = ssub.s32 %s13, %s20
    %p22 = scmp.eq.s32.totalorder %s21, 0
    %s24 = sadd.s32 %s23, 1
    %s25 = scalar_select %p22, %s23, %s24
    %p28 = pneg %p22
    %p29 = scmp.eq.s32.totalorder %s13, 1
    %p30 = por %p28, %p29
    %p31 = scmp.ne.s32.totalorder %s23, %s26
    %p32 = scmp.eq.s32.totalorder %s13, 0
    %p33 = por %p31, %p32
    %p34 = scmp.ne.s32.totalorder %s23, %s26
    %p35 = scmp.eq.s32.totalorder %s18, 1
    %p36 = por %p34, %p35
    %p37 = scmp.ne.s32.totalorder %s26, %s27
    %p38 = scmp.eq.s32.totalorder %s18, 0
    %p39 = por %p37, %p38
    %p40 = scmp.ne.s32.totalorder %s26, %s27
    %p41 = scmp.eq.s32.totalorder %s19, 1
    %p42 = por %p40, %p41
    %p44 = scmp.ne.s32.totalorder %s27, %s43
    %p45 = scmp.eq.s32.totalorder %s19, 0
    %p46 = por %p44, %p45
    %s48 = sadd.s32 %s47, 1
    %p51 = scmp.eq.s32.totalorder %s13, 1
    %p52 = scmp.ne.s32.totalorder %s47, %s49
    %p53 = scmp.eq.s32.totalorder %s13, 0
    %p54 = por %p52, %p53
    %p55 = scmp.ne.s32.totalorder %s47, %s49
    %p56 = scmp.eq.s32.totalorder %s18, 1
    %p57 = por %p55, %p56
    %p58 = scmp.ne.s32.totalorder %s49, %s50
    %p59 = scmp.eq.s32.totalorder %s18, 0
    %p60 = por %p58, %p59
    %p61 = scmp.ne.s32.totalorder %s49, %s50
    %p62 = scmp.eq.s32.totalorder %s19, 1
    %p63 = por %p61, %p62
    %p65 = scmp.ne.s32.totalorder %s50, %s64
    %p66 = scmp.eq.s32.totalorder %s19, 0
    %p67 = por %p65, %p66
    %s69 = sadd.s32 %s68, 1
    %p72 = scmp.eq.s32.totalorder %s13, 1
    %p73 = scmp.ne.s32.totalorder %s68, %s70
    %p74 = scmp.eq.s32.totalorder %s13, 0
    %p75 = por %p73, %p74
    %p76 = scmp.ne.s32.totalorder %s68, %s70
    %p77 = scmp.eq.s32.totalorder %s18, 1
    %p78 = por %p76, %p77
    %p79 = scmp.ne.s32.totalorder %s70, %s71
    %p80 = scmp.eq.s32.totalorder %s18, 0
    %p81 = por %p79, %p80
    %p82 = scmp.ne.s32.totalorder %s70, %s71
    %p83 = scmp.eq.s32.totalorder %s19, 1
    %p84 = por %p82, %p83
    %p86 = scmp.ne.s32.totalorder %s71, %s85
    %p87 = scmp.eq.s32.totalorder %s19, 0
    %p88 = por %p86, %p87
    %s90 = sadd.s32 %s89, 1
    %p93 = scmp.eq.s32.totalorder %s13, 1
    %p94 = scmp.ne.s32.totalorder %s89, %s91
    %p95 = scmp.eq.s32.totalorder %s13, 0
    %p96 = por %p94, %p95
    %p97 = scmp.ne.s32.totalorder %s89, %s91
    %p98 = scmp.eq.s32.totalorder %s18, 1
    %p99 = por %p97, %p98
    %p100 = scmp.ne.s32.totalorder %s91, %s92
    %p101 = scmp.eq.s32.totalorder %s18, 0
    %p102 = por %p100, %p101
    %p103 = scmp.ne.s32.totalorder %s91, %s92
    %p104 = scmp.eq.s32.totalorder %s19, 1
    %p105 = por %p103, %p104
    %p107 = scmp.ne.s32.totalorder %s92, %s106
    %p108 = scmp.eq.s32.totalorder %s19, 0
    %p109 = por %p107, %p108
    %s111 = sadd.s32 %s110, 1
    %p114 = scmp.eq.s32.totalorder %s13, 1
    %p115 = scmp.ne.s32.totalorder %s110, %s112
    %p116 = scmp.eq.s32.totalorder %s13, 0
    %p117 = por %p115, %p116
    %p118 = scmp.ne.s32.totalorder %s110, %s112
    %p119 = scmp.eq.s32.totalorder %s18, 1
    %p120 = por %p118, %p119
    %p121 = scmp.ne.s32.totalorder %s112, %s113
    %p122 = scmp.eq.s32.totalorder %s18, 0
    %p123 = por %p121, %p122
    %p124 = scmp.ne.s32.totalorder %s112, %s113
    %p125 = scmp.eq.s32.totalorder %s19, 1
    %p126 = por %p124, %p125
    %p128 = scmp.ne.s32.totalorder %s113, %s127
    %p129 = scmp.eq.s32.totalorder %s19, 0
    %p130 = por %p128, %p129
    %s132 = sadd.s32 %s131, 1
    %p135 = scmp.eq.s32.totalorder %s13, 1
    %p136 = scmp.ne.s32.totalorder %s131, %s133
    %p137 = scmp.eq.s32.totalorder %s13, 0
    %p138 = por %p136, %p137
    %p139 = scmp.ne.s32.totalorder %s131, %s133
    %p140 = scmp.eq.s32.totalorder %s18, 1
    %p141 = por %p139, %p140
    %p142 = scmp.ne.s32.totalorder %s133, %s134
    %p143 = scmp.eq.s32.totalorder %s18, 0
    %p144 = por %p142, %p143
    %p145 = scmp.ne.s32.totalorder %s133, %s134
    %p146 = scmp.eq.s32.totalorder %s19, 1
    %p147 = por %p145, %p146
    %p149 = scmp.ne.s32.totalorder %s134, %s148
    %p150 = scmp.eq.s32.totalorder %s19, 0
    %p151 = por %p149, %p150
    %s153 = sadd.s32 %s152, 1
    %p156 = scmp.eq.s32.totalorder %s13, 1
    %p157 = scmp.ne.s32.totalorder %s152, %s154
    %p158 = scmp.eq.s32.totalorder %s13, 0
    %p159 = por %p157, %p158
    %p160 = scmp.ne.s32.totalorder %s152, %s154
    %p161 = scmp.eq.s32.totalorder %s18, 1
    %p162 = por %p160, %p161
    %p163 = scmp.ne.s32.totalorder %s154, %s155
    %p164 = scmp.eq.s32.totalorder %s18, 0
    %p165 = por %p163, %p164
    %p166 = scmp.ne.s32.totalorder %s154, %s155
    %p167 = scmp.eq.s32.totalorder %s19, 1
    %p168 = por %p166, %p167
    %p170 = scmp.ne.s32.totalorder %s155, %s169
    %p171 = scmp.eq.s32.totalorder %s19, 0
    %p172 = por %p170, %p171
    %s173 = ssub.s32 %s13, %s20
    %p174 = scmp.eq.s32.totalorder %s173, 0
    %s176 = sadd.s32 %s175, 1
    %s177 = scalar_select %p174, %s175, %s176
    %p180 = pneg %p174
    %p181 = scmp.eq.s32.totalorder %s13, 1
    %p182 = por %p180, %p181
    %p183 = scmp.ne.s32.totalorder %s175, %s178
    %p184 = scmp.eq.s32.totalorder %s13, 0
    %p185 = por %p183, %p184
    %p186 = scmp.ne.s32.totalorder %s175, %s178
    %p187 = scmp.eq.s32.totalorder %s18, 1
    %p188 = por %p186, %p187
    %p189 = scmp.ne.s32.totalorder %s178, %s179
    %p190 = scmp.eq.s32.totalorder %s18, 0
    %p191 = por %p189, %p190
    %p192 = scmp.ne.s32.totalorder %s178, %s179
    %p193 = scmp.eq.s32.totalorder %s19, 1
    %p194 = por %p192, %p193
    %p196 = scmp.ne.s32.totalorder %s179, %s195
    %p197 = scmp.eq.s32.totalorder %s19, 0
    %p198 = por %p196, %p197
    %p199 = scmp.le.s32.totalorder 1, %s13
    %p200 = scmp.lt.s32.totalorder %s13, 3
    %p201 = pnand %p199, %p200
    %p202 = pneg %p201
    // Predicated region
    $region9: #{dense_block_forward_nchw.3} parent=5 // pred_check
      _
    $region10: #{dense_block_forward_nchw.3} parent=5 // pred_check_branch
      %204 = sbr.rel (%p201) target = $region12
    $region11: #{dense_block_forward_nchw.3} parent=5 // pred_region
      %s205 = ssub.s32 %s13, 1
      // Predicated region
      $region13: #{dense_block_forward_nchw.3} parent=11 // pred_check
        %p206 = pneg %p60
      $region14: #{dense_block_forward_nchw.3} parent=11 // pred_check_branch
        %208 = sbr.rel (%p206) target = $region16
      $region15: #{dense_block_forward_nchw.3} parent=11 // pred_region
        _
      $region16: #{dense_block_forward_nchw.3} parent=11 // pred_fallthru
        _
      // Predicated region
      $region17: #{dense_block_forward_nchw.3} parent=11 // pred_check
        %p209 = pneg %p81
      $region18: #{dense_block_forward_nchw.3} parent=11 // pred_check_branch
        %211 = sbr.rel (%p209) target = $region20
      $region19: #{dense_block_forward_nchw.3} parent=11 // pred_region
        _
      $region20: #{dense_block_forward_nchw.3} parent=11 // pred_fallthru
        _
      // Predicated region
      $region21: #{dense_block_forward_nchw.3} parent=11 // pred_check
        %p212 = pneg %p102
      $region22: #{dense_block_forward_nchw.3} parent=11 // pred_check_branch
        %214 = sbr.rel (%p212) target = $region24
      $region23: #{dense_block_forward_nchw.3} parent=11 // pred_region
        _
      $region24: #{dense_block_forward_nchw.3} parent=11 // pred_fallthru
        _
      // Predicated region
      $region25: #{dense_block_forward_nchw.3} parent=11 // pred_check
        %p215 = pneg %p123
      $region26: #{dense_block_forward_nchw.3} parent=11 // pred_check_branch
        %217 = sbr.rel (%p215) target = $region28
      $region27: #{dense_block_forward_nchw.3} parent=11 // pred_region
        _
      $region28: #{dense_block_forward_nchw.3} parent=11 // pred_fallthru
        _
      // Predicated region
      $region29: #{dense_block_forward_nchw.3} parent=11 // pred_check
        %p218 = pneg %p144
      $region30: #{dense_block_forward_nchw.3} parent=11 // pred_check_branch
        %220 = sbr.rel (%p218) target = $region32
      $region31: #{dense_block_forward_nchw.3} parent=11 // pred_region
        _
      $region32: #{dense_block_forward_nchw.3} parent=11 // pred_fallthru
        _
      // Predicated region
      $region33: #{dense_block_forward_nchw.3} parent=11 // pred_check
        %p221 = pneg %p165
      $region34: #{dense_block_forward_nchw.3} parent=11 // pred_check_branch
        %223 = sbr.rel (%p221) target = $region36
      $region35: #{dense_block_forward_nchw.3} parent=11 // pred_region
        _
      $region36: #{dense_block_forward_nchw.3} parent=11 // pred_fallthru
        _
    $region12: #{dense_block_forward_nchw.3} parent=5 // pred_fallthru
      _
    %p224 = scmp.lt.s32.totalorder %s13, 2
    // Predicated region
    $region37: #{dense_block_forward_nchw.3} parent=5 // pred_check
      %p225 = pneg %p224
    $region38: #{dense_block_forward_nchw.3} parent=5 // pred_check_branch
      %227 = sbr.rel (%p225) target = $region40
    $region39: #{dense_block_forward_nchw.3} parent=5 // pred_region
      // Predicated region
      $region41: #{dense_block_forward_nchw.3} parent=39 // pred_check
        %p228 = pneg %p33
      $region42: #{dense_block_forward_nchw.3} parent=39 // pred_check_branch
        %230 = sbr.rel (%p228) target = $region44
      $region43: #{dense_block_forward_nchw.3} parent=39 // pred_region
        %p231 = scmp.lt.s32.totalorder %s13, 1
        %s232 = scalar_select %p231, %s13, 1
        %s233 = smul.addr %s232, 32
        %s234 = smul.addr %s233, 8
        %s235 = scalar_lea.vmem %s0, %s234
      $region44: #{dense_block_forward_nchw.3} parent=39 // pred_fallthru
        _
    $region40: #{dense_block_forward_nchw.3} parent=5 // pred_fallthru
      _
    %p236 = scmp.le.s32.totalorder 1, %s13
    %p237 = scmp.lt.s32.totalorder %s13, 3
    %p238 = pnand %p236, %p237
    %p239 = pneg %p238
    // Predicated region
    $region45: #{dense_block_forward_nchw.3} parent=5 // pred_check
      _
    $region46: #{dense_block_forward_nchw.3} parent=5 // pred_check_branch
      %241 = sbr.rel (%p238) target = $region48
    $region47: #{dense_block_forward_nchw.3} parent=5 // pred_region
      %s242 = ssub.s32 %s13, 1
      %p243 = scmp.lt.s32.totalorder %s18, 1
      %s244 = scalar_select %p243, %s18, 1
      %s245 = smul.addr %s244, 32
      %s246 = smul.addr %s245, 8
      %s247 = scalar_lea.vmem %s0, %s246
      %p248 = pneg %p39
      %p249 = pneg %p36
      %p250 = pneg %p60
      %p251 = pneg %p57
      %p252 = pneg %p81
      %p253 = pneg %p78
      %p254 = pneg %p102
      %p255 = pneg %p99
      %p256 = pneg %p123
      %p257 = pneg %p120
      %p258 = pneg %p144
      %p259 = pneg %p141
      %p260 = pneg %p165
      %p261 = pneg %p162
      %p262 = pneg %p191
      %p263 = pneg %p188
      %p264 = scmp.lt.s32.totalorder %s18, 1
      %s265 = scalar_select %p264, %s18, 1
      %s266 = smul.addr %s265, 32
      %s267 = smul.addr %s266, 8
      %s268 = scalar_lea.vmem %s7, %s267
      %p269 = scmp.lt.s32.totalorder %s18, 1
      %s270 = scalar_select %p269, %s18, 1
      %s271 = smul.addr %s270, 32
      %s272 = smul.addr %s271, 8
      %s273 = scalar_lea.vmem %s0, %s272
      %p274 = scmp.lt.s32.totalorder %s18, 1
      %s275 = scalar_select %p274, %s18, 1
      %s276 = smul.addr %s275, 32
      %s277 = smul.addr %s276, 8
      %s278 = scalar_lea.vmem %s7, %s277
      %v280 = vld [vmem:[%s273] sm:$0xff]
      %v281 = vld [vmem:[%s273 + $0x8] sm:$0xff]
      %v282 = vld [vmem:[%s273 + $0x10] sm:$0xff]
      %v283 = vld [vmem:[%s273 + $0x18] sm:$0xff]
      %v284 = vld [vmem:[%s273 + $0x20] sm:$0xff]
      %v285 = vld [vmem:[%s273 + $0x28] sm:$0xff]
      %v286 = vld [vmem:[%s273 + $0x30] sm:$0xff]
      %v287 = vld [vmem:[%s273 + $0x38] sm:$0xff]
      %v288 = vld [vmem:[%s273 + $0x40] sm:$0xff]
      %v289 = vld [vmem:[%s273 + $0x48] sm:$0xff]
      %v290 = vld [vmem:[%s273 + $0x50] sm:$0xff]
      %v291 = vld [vmem:[%s273 + $0x58] sm:$0xff]
      %v292 = vld [vmem:[%s273 + $0x60] sm:$0xff]
      %v293 = vld [vmem:[%s273 + $0x68] sm:$0xff]
      %v294 = vld [vmem:[%s273 + $0x70] sm:$0xff]
      %v295 = vld [vmem:[%s273 + $0x78] sm:$0xff]
      %v296 = vld [vmem:[%s273 + $0x80] sm:$0xff]
      %v297 = vld [vmem:[%s273 + $0x88] sm:$0xff]
      %v298 = vld [vmem:[%s273 + $0x90] sm:$0xff]
      %v299 = vld [vmem:[%s273 + $0x98] sm:$0xff]
      %v300 = vld [vmem:[%s273 + $0xa0] sm:$0xff]
      %v301 = vld [vmem:[%s273 + $0xa8] sm:$0xff]
      %v302 = vld [vmem:[%s273 + $0xb0] sm:$0xff]
      %v303 = vld [vmem:[%s273 + $0xb8] sm:$0xff]
      %v304 = vld [vmem:[%s273 + $0xc0] sm:$0xff]
      %v305 = vld [vmem:[%s273 + $0xc8] sm:$0xff]
      %v306 = vld [vmem:[%s273 + $0xd0] sm:$0xff]
      %v307 = vld [vmem:[%s273 + $0xd8] sm:$0xff]
      %v308 = vld [vmem:[%s273 + $0xe0] sm:$0xff]
      %v309 = vld [vmem:[%s273 + $0xe8] sm:$0xff]
      %v310 = vld [vmem:[%s273 + $0xf0] sm:$0xff]
      %v311 = vld [vmem:[%s273 + $0xf8] sm:$0xff]
      %v312 = vld [vmem:[%s1] sm:$0x1]
      %v314 = vlaneseq
      %v315 = vshrl.u32 %v314, 7
      %v316 = vsub.s32 0, %v315
      %v317 = vrot.slane %v312, %v316
      %v319 = vmul.f32 %v280, %v317
      %v320 = vmul.f32 %v281, %v317
      %v321 = vmul.f32 %v282, %v317
      %v322 = vmul.f32 %v283, %v317
      %v323 = vmul.f32 %v284, %v317
      %v324 = vmul.f32 %v285, %v317
      %v325 = vmul.f32 %v286, %v317
      %v326 = vmul.f32 %v287, %v317
      %v327 = vmul.f32 %v288, %v317
      %v328 = vmul.f32 %v289, %v317
      %v329 = vmul.f32 %v290, %v317
      %v330 = vmul.f32 %v291, %v317
      %v331 = vmul.f32 %v292, %v317
      %v332 = vmul.f32 %v293, %v317
      %v333 = vmul.f32 %v294, %v317
      %v334 = vmul.f32 %v295, %v317
      %v335 = vmul.f32 %v296, %v317
      %v336 = vmul.f32 %v297, %v317
      %v337 = vmul.f32 %v298, %v317
      %v338 = vmul.f32 %v299, %v317
      %v339 = vmul.f32 %v300, %v317
      %v340 = vmul.f32 %v301, %v317
      %v341 = vmul.f32 %v302, %v317
      %v342 = vmul.f32 %v303, %v317
      %v343 = vmul.f32 %v304, %v317
      %v344 = vmul.f32 %v305, %v317
      %v345 = vmul.f32 %v306, %v317
      %v346 = vmul.f32 %v307, %v317
      %v347 = vmul.f32 %v308, %v317
      %v348 = vmul.f32 %v309, %v317
      %v349 = vmul.f32 %v310, %v317
      %v350 = vmul.f32 %v311, %v317
      %v351 = vld [vmem:[%s2] sm:$0x1]
      %v353 = vlaneseq
      %v354 = vshrl.u32 %v353, 7
      %v355 = vsub.s32 0, %v354
      %v356 = vrot.slane %v351, %v355
      %v358 = vadd.f32 %v319, %v356
      %v359 = vadd.f32 %v320, %v356
      %v360 = vadd.f32 %v321, %v356
      %v361 = vadd.f32 %v322, %v356
      %v362 = vadd.f32 %v323, %v356
      %v363 = vadd.f32 %v324, %v356
      %v364 = vadd.f32 %v325, %v356
      %v365 = vadd.f32 %v326, %v356
      %v366 = vadd.f32 %v327, %v356
      %v367 = vadd.f32 %v328, %v356
      %v368 = vadd.f32 %v329, %v356
      %v369 = vadd.f32 %v330, %v356
      %v370 = vadd.f32 %v331, %v356
      %v371 = vadd.f32 %v332, %v356
      %v372 = vadd.f32 %v333, %v356
      %v373 = vadd.f32 %v334, %v356
      %v374 = vadd.f32 %v335, %v356
      %v375 = vadd.f32 %v336, %v356
      %v376 = vadd.f32 %v337, %v356
      %v377 = vadd.f32 %v338, %v356
      %v378 = vadd.f32 %v339, %v356
      %v379 = vadd.f32 %v340, %v356
      %v380 = vadd.f32 %v341, %v356
      %v381 = vadd.f32 %v342, %v356
      %v382 = vadd.f32 %v343, %v356
      %v383 = vadd.f32 %v344, %v356
      %v384 = vadd.f32 %v345, %v356
      %v385 = vadd.f32 %v346, %v356
      %v386 = vadd.f32 %v347, %v356
      %v387 = vadd.f32 %v348, %v356
      %v388 = vadd.f32 %v349, %v356
      %v389 = vadd.f32 %v350, %v356
      %v390 = vmax.f32 %v358, 0.0
      %v391 = vmax.f32 %v359, 0.0
      %v392 = vmax.f32 %v360, 0.0
      %v393 = vmax.f32 %v361, 0.0
      %v394 = vmax.f32 %v362, 0.0
      %v395 = vmax.f32 %v363, 0.0
      %v396 = vmax.f32 %v364, 0.0
      %v397 = vmax.f32 %v365, 0.0
      %v398 = vmax.f32 %v366, 0.0
      %v399 = vmax.f32 %v367, 0.0
      %v400 = vmax.f32 %v368, 0.0
      %v401 = vmax.f32 %v369, 0.0
      %v402 = vmax.f32 %v370, 0.0
      %v403 = vmax.f32 %v371, 0.0
      %v404 = vmax.f32 %v372, 0.0
      %v405 = vmax.f32 %v373, 0.0
      %v406 = vmax.f32 %v374, 0.0
      %v407 = vmax.f32 %v375, 0.0
      %v408 = vmax.f32 %v376, 0.0
      %v409 = vmax.f32 %v377, 0.0
      %v410 = vmax.f32 %v378, 0.0
      %v411 = vmax.f32 %v379, 0.0
      %v412 = vmax.f32 %v380, 0.0
      %v413 = vmax.f32 %v381, 0.0
      %v414 = vmax.f32 %v382, 0.0
      %v415 = vmax.f32 %v383, 0.0
      %v416 = vmax.f32 %v384, 0.0
      %v417 = vmax.f32 %v385, 0.0
      %v418 = vmax.f32 %v386, 0.0
      %v419 = vmax.f32 %v387, 0.0
      %v420 = vmax.f32 %v388, 0.0
      %v421 = vmax.f32 %v389, 0.0
      %v422 = vpack.c.bf16 %v391, %v390
      %v423 = vpack.c.bf16 %v393, %v392
      %v424 = vpack.c.bf16 %v395, %v394
      %v425 = vpack.c.bf16 %v397, %v396
      %v426 = vpack.c.bf16 %v399, %v398
      %v427 = vpack.c.bf16 %v401, %v400
      %v428 = vpack.c.bf16 %v403, %v402
      %v429 = vpack.c.bf16 %v405, %v404
      %v430 = vpack.c.bf16 %v407, %v406
      %v431 = vpack.c.bf16 %v409, %v408
      %v432 = vpack.c.bf16 %v411, %v410
      %v433 = vpack.c.bf16 %v413, %v412
      %v434 = vpack.c.bf16 %v415, %v414
      %v435 = vpack.c.bf16 %v417, %v416
      %v436 = vpack.c.bf16 %v419, %v418
      %v437 = vpack.c.bf16 %v421, %v420
      %v438 = vld [vmem:[%s3] sm:$0x3]
      %v439 = vld [vmem:[%s4] sm:$0x1]
      %v441 = vlaneseq
      %v442 = vshrl.u32 %v441, 7
      %v443 = vsub.s32 0, %v442
      %v444 = vrot.slane %v439, %v443
      %vm446 = vcmask 31744
      %v448 = vsel %vm446, %v422, 0
      %v451 = vsel %vm446, %v423, 0
      %v454 = vsel %vm446, %v424, 0
      %v457 = vsel %vm446, %v425, 0
      %v460 = vsel %vm446, %v426, 0
      %v463 = vsel %vm446, %v427, 0
      %v466 = vsel %vm446, %v428, 0
      %v469 = vsel %vm446, %v429, 0
      %v472 = vsel %vm446, %v430, 0
      %v475 = vsel %vm446, %v431, 0
      %v478 = vsel %vm446, %v432, 0
      %v481 = vsel %vm446, %v433, 0
      %v484 = vsel %vm446, %v434, 0
      %v487 = vsel %vm446, %v435, 0
      %v490 = vsel %vm446, %v436, 0
      %v493 = vsel %vm446, %v437, 0
      %vm495 = vcmask 1041408
      %v497 = vsel %vm495, %v438, 0
      %499 = vmatprep.subr.bf16.mxu0 0
      %500 = vmatpush1.bf16.msra.mxu0 0
      %501 = vmatprep.subr.bf16.mxu0 0
      %502 = vmatpush1.bf16.msra.mxu0 0
      %503 = vmatprep.subr.bf16.mxu0 0
      %504 = vmatpush1.bf16.msra.mxu0 0
      %505 = vmatprep.subr.bf16.mxu0 0
      %506 = vmatpush1.bf16.msra.mxu0 0
      %507 = vmatprep.subr.bf16.mxu0 0
      %508 = vmatpush1.bf16.msra.mxu0 0
      %509 = vmatprep.subr.bf16.mxu0 0
      %510 = vmatpush1.bf16.msra.mxu0 0
      %511 = vmatprep.subr.bf16.mxu0 0
      %512 = vmatpush1.bf16.msra.mxu0 0
      %513 = vmatprep.subr.bf16.mxu0 0
      %514 = vmatpush1.bf16.msra.mxu0 %v497
      %515 = vmatprep.subr.bf16.mxu0 0
      %516 = vmatpush2.bf16.msra.mxu0 0
      %517 = vmatprep.subr.bf16.mxu0 0
      %518 = vmatpush2.bf16.msra.mxu0 0
      %519 = vmatprep.subr.bf16.mxu0 0
      %520 = vmatpush2.bf16.msra.mxu0 0
      %521 = vmatprep.subr.bf16.mxu0 0
      %522 = vmatpush2.bf16.msra.mxu0 0
      %523 = vmatprep.subr.bf16.mxu0 0
      %524 = vmatpush2.bf16.msra.mxu0 0
      %525 = vmatprep.subr.bf16.mxu0 0
      %526 = vmatpush2.bf16.msra.mxu0 0
      %527 = vmatprep.subr.bf16.mxu0 0
      %528 = vmatpush2.bf16.msra.mxu0 0
      %529 = vmatprep.subr.bf16.mxu0 0
      %530 = vmatpush2.bf16.msra.mxu0 0
      %531 = vmatprep.mubr.bf16.mxu0 0
      %532 = vmatmul.mubr.bf16.gmra.mxu0 %v448
      %v533 = vpop.f32.mrf.mxu0
      %v534 = vadd.f32 %v444, %v533
      %v535 = vpop.f32.mrf.mxu0
      %v536 = vpop.f32.mrf.mxu0
      %v537 = vadd.f32 %v444, %v536
      %v538 = vpop.f32.mrf.mxu0
      %539 = vmatprep.mubr.bf16.mxu0 0
      %540 = vmatmul.mubr.bf16.gmra.mxu0 %v451
      %v541 = vpop.f32.mrf.mxu0
      %v542 = vadd.f32 %v444, %v541
      %v543 = vpop.f32.mrf.mxu0
      %v544 = vpop.f32.mrf.mxu0
      %v545 = vadd.f32 %v444, %v544
      %v546 = vpop.f32.mrf.mxu0
      %547 = vmatprep.mubr.bf16.mxu0 0
      %548 = vmatmul.mubr.bf16.gmra.mxu0 %v454
      %v549 = vpop.f32.mrf.mxu0
      %v550 = vadd.f32 %v444, %v549
      %v551 = vpop.f32.mrf.mxu0
      %v552 = vpop.f32.mrf.mxu0
      %v553 = vadd.f32 %v444, %v552
      %v554 = vpop.f32.mrf.mxu0
      %555 = vmatprep.mubr.bf16.mxu0 0
      %556 = vmatmul.mubr.bf16.gmra.mxu0 %v457
      %v557 = vpop.f32.mrf.mxu0
      %v558 = vadd.f32 %v444, %v557
      %v559 = vpop.f32.mrf.mxu0
      %v560 = vpop.f32.mrf.mxu0
      %v561 = vadd.f32 %v444, %v560
      %v562 = vpop.f32.mrf.mxu0
      %563 = vmatprep.mubr.bf16.mxu0 0
      %564 = vmatmul.mubr.bf16.gmra.mxu0 %v460
      %v565 = vpop.f32.mrf.mxu0
      %v566 = vadd.f32 %v444, %v565
      %v567 = vpop.f32.mrf.mxu0
      %v568 = vpop.f32.mrf.mxu0
      %v569 = vadd.f32 %v444, %v568
      %v570 = vpop.f32.mrf.mxu0
      %571 = vmatprep.mubr.bf16.mxu0 0
      %572 = vmatmul.mubr.bf16.gmra.mxu0 %v463
      %v573 = vpop.f32.mrf.mxu0
      %v574 = vadd.f32 %v444, %v573
      %v575 = vpop.f32.mrf.mxu0
      %v576 = vpop.f32.mrf.mxu0
      %v577 = vadd.f32 %v444, %v576
      %v578 = vpop.f32.mrf.mxu0
      %579 = vmatprep.mubr.bf16.mxu0 0
      %580 = vmatmul.mubr.bf16.gmra.mxu0 %v466
      %v581 = vpop.f32.mrf.mxu0
      %v582 = vadd.f32 %v444, %v581
      %v583 = vpop.f32.mrf.mxu0
      %v584 = vpop.f32.mrf.mxu0
      %v585 = vadd.f32 %v444, %v584
      %v586 = vpop.f32.mrf.mxu0
      %587 = vmatprep.mubr.bf16.mxu0 0
      %588 = vmatmul.mubr.bf16.gmra.mxu0 %v469
      %v589 = vpop.f32.mrf.mxu0
      %v590 = vadd.f32 %v444, %v589
      %v591 = vpop.f32.mrf.mxu0
      %v592 = vpop.f32.mrf.mxu0
      %v593 = vadd.f32 %v444, %v592
      %v594 = vpop.f32.mrf.mxu0
      %595 = vmatprep.mubr.bf16.mxu0 0
      %596 = vmatmul.mubr.bf16.gmra.mxu0 %v472
      %v597 = vpop.f32.mrf.mxu0
      %v598 = vadd.f32 %v444, %v597
      %v599 = vpop.f32.mrf.mxu0
      %v600 = vpop.f32.mrf.mxu0
      %v601 = vadd.f32 %v444, %v600
      %v602 = vpop.f32.mrf.mxu0
      %603 = vmatprep.mubr.bf16.mxu0 0
      %604 = vmatmul.mubr.bf16.gmra.mxu0 %v475
      %v605 = vpop.f32.mrf.mxu0
      %v606 = vadd.f32 %v444, %v605
      %v607 = vpop.f32.mrf.mxu0
      %v608 = vpop.f32.mrf.mxu0
      %v609 = vadd.f32 %v444, %v608
      %v610 = vpop.f32.mrf.mxu0
      %611 = vmatprep.mubr.bf16.mxu0 0
      %612 = vmatmul.mubr.bf16.gmra.mxu0 %v478
      %v613 = vpop.f32.mrf.mxu0
      %v614 = vadd.f32 %v444, %v613
      %v615 = vpop.f32.mrf.mxu0
      %v616 = vpop.f32.mrf.mxu0
      %v617 = vadd.f32 %v444, %v616
      %v618 = vpop.f32.mrf.mxu0
      %619 = vmatprep.mubr.bf16.mxu0 0
      %620 = vmatmul.mubr.bf16.gmra.mxu0 %v481
      %v621 = vpop.f32.mrf.mxu0
      %v622 = vadd.f32 %v444, %v621
      %v623 = vpop.f32.mrf.mxu0
      %v624 = vpop.f32.mrf.mxu0
      %v625 = vadd.f32 %v444, %v624
      %v626 = vpop.f32.mrf.mxu0
      %627 = vmatprep.mubr.bf16.mxu0 0
      %628 = vmatmul.mubr.bf16.gmra.mxu0 %v484
      %v629 = vpop.f32.mrf.mxu0
      %v630 = vadd.f32 %v444, %v629
      %v631 = vpop.f32.mrf.mxu0
      %v632 = vpop.f32.mrf.mxu0
      %v633 = vadd.f32 %v444, %v632
      %v634 = vpop.f32.mrf.mxu0
      %635 = vmatprep.mubr.bf16.mxu0 0
      %636 = vmatmul.mubr.bf16.gmra.mxu0 %v487
      %v637 = vpop.f32.mrf.mxu0
      %v638 = vadd.f32 %v444, %v637
      %v639 = vpop.f32.mrf.mxu0
      %v640 = vpop.f32.mrf.mxu0
      %v641 = vadd.f32 %v444, %v640
      %v642 = vpop.f32.mrf.mxu0
      %643 = vmatprep.mubr.bf16.mxu0 0
      %644 = vmatmul.mubr.bf16.gmra.mxu0 %v490
      %v645 = vpop.f32.mrf.mxu0
      %v646 = vadd.f32 %v444, %v645
      %v647 = vpop.f32.mrf.mxu0
      %v648 = vpop.f32.mrf.mxu0
      %v649 = vadd.f32 %v444, %v648
      %v650 = vpop.f32.mrf.mxu0
      %651 = vmatprep.mubr.bf16.mxu0 0
      %652 = vmatmul.mubr.bf16.gmra.mxu0 %v493
      %v653 = vpop.f32.mrf.mxu0
      %v654 = vadd.f32 %v444, %v653
      %v655 = vpop.f32.mrf.mxu0
      %v656 = vpop.f32.mrf.mxu0
      %v657 = vadd.f32 %v444, %v656
      %v658 = vpop.f32.mrf.mxu0
      %659 = vdwg.mxu0
      %v660 = vmax.f32 %v534, 0.0
      %v661 = vmax.f32 %v537, 0.0
      %v662 = vmax.f32 %v542, 0.0
      %v663 = vmax.f32 %v545, 0.0
      %v664 = vmax.f32 %v550, 0.0
      %v665 = vmax.f32 %v553, 0.0
      %v666 = vmax.f32 %v558, 0.0
      %v667 = vmax.f32 %v561, 0.0
      %v668 = vmax.f32 %v566, 0.0
      %v669 = vmax.f32 %v569, 0.0
      %v670 = vmax.f32 %v574, 0.0
      %v671 = vmax.f32 %v577, 0.0
      %v672 = vmax.f32 %v582, 0.0
      %v673 = vmax.f32 %v585, 0.0
      %v674 = vmax.f32 %v590, 0.0
      %v675 = vmax.f32 %v593, 0.0
      %v676 = vmax.f32 %v598, 0.0
      %v677 = vmax.f32 %v601, 0.0
      %v678 = vmax.f32 %v606, 0.0
      %v679 = vmax.f32 %v609, 0.0
      %v680 = vmax.f32 %v614, 0.0
      %v681 = vmax.f32 %v617, 0.0
      %v682 = vmax.f32 %v622, 0.0
      %v683 = vmax.f32 %v625, 0.0
      %v684 = vmax.f32 %v630, 0.0
      %v685 = vmax.f32 %v633, 0.0
      %v686 = vmax.f32 %v638, 0.0
      %v687 = vmax.f32 %v641, 0.0
      %v688 = vmax.f32 %v646, 0.0
      %v689 = vmax.f32 %v649, 0.0
      %v690 = vmax.f32 %v654, 0.0
      %v691 = vmax.f32 %v657, 0.0
      %vm725 = vcmask 1040384
      %v726 = vrot.slane 0.0, 7
      %v727 = vsel %vm725, %v726, %v726
      %v728 = vrot.slane %v660, 7
      %v729 = vrot.slane %v661, 7
      %v730 = vsel %vm725, %v728, %v729
      %v731 = vrot.slane %v662, 7
      %v732 = vrot.slane %v663, 7
      %v733 = vsel %vm725, %v731, %v732
      %v734 = vrot.slane %v664, 7
      %v735 = vrot.slane %v665, 7
      %v736 = vsel %vm725, %v734, %v735
      %v737 = vrot.slane %v666, 7
      %v738 = vrot.slane %v667, 7
      %v739 = vsel %vm725, %v737, %v738
      %v740 = vrot.slane %v668, 7
      %v741 = vrot.slane %v669, 7
      %v742 = vsel %vm725, %v740, %v741
      %v743 = vrot.slane %v670, 7
      %v744 = vrot.slane %v671, 7
      %v745 = vsel %vm725, %v743, %v744
      %v746 = vrot.slane %v672, 7
      %v747 = vrot.slane %v673, 7
      %v748 = vsel %vm725, %v746, %v747
      %v749 = vrot.slane %v674, 7
      %v750 = vrot.slane %v675, 7
      %v751 = vsel %vm725, %v749, %v750
      %v752 = vrot.slane %v676, 7
      %v753 = vrot.slane %v677, 7
      %v754 = vsel %vm725, %v752, %v753
      %v755 = vrot.slane %v678, 7
      %v756 = vrot.slane %v679, 7
      %v757 = vsel %vm725, %v755, %v756
      %v758 = vrot.slane %v680, 7
      %v759 = vrot.slane %v681, 7
      %v760 = vsel %vm725, %v758, %v759
      %v761 = vrot.slane %v682, 7
      %v762 = vrot.slane %v683, 7
      %v763 = vsel %vm725, %v761, %v762
      %v764 = vrot.slane %v684, 7
      %v765 = vrot.slane %v685, 7
      %v766 = vsel %vm725, %v764, %v765
      %v767 = vrot.slane %v686, 7
      %v768 = vrot.slane %v687, 7
      %v769 = vsel %vm725, %v767, %v768
      %v770 = vrot.slane %v688, 7
      %v771 = vrot.slane %v689, 7
      %v772 = vsel %vm725, %v770, %v771
      %v773 = vrot.slane %v690, 7
      %v774 = vrot.slane %v691, 7
      %v775 = vsel %vm725, %v773, %v774
      %v825 = vsel %vm725, 0.0, %v726
      %v826 = vsel %vm725, 0.0, %v728
      %v827 = vsel %vm725, 0.0, %v731
      %v828 = vsel %vm725, 0.0, %v734
      %v829 = vsel %vm725, 0.0, %v737
      %v830 = vsel %vm725, 0.0, %v740
      %v831 = vsel %vm725, 0.0, %v743
      %v832 = vsel %vm725, 0.0, %v746
      %v833 = vsel %vm725, 0.0, %v749
      %v834 = vsel %vm725, 0.0, %v752
      %v835 = vsel %vm725, 0.0, %v755
      %v836 = vsel %vm725, 0.0, %v758
      %v837 = vsel %vm725, 0.0, %v761
      %v838 = vsel %vm725, 0.0, %v764
      %v839 = vsel %vm725, 0.0, %v767
      %v840 = vsel %vm725, 0.0, %v770
      %v841 = vsel %vm725, 0.0, %v773
      %v842 = vsel %vm725, %v726, 0.0
      %v843 = vsel %vm725, %v729, 0.0
      %v844 = vsel %vm725, %v732, 0.0
      %v845 = vsel %vm725, %v735, 0.0
      %v846 = vsel %vm725, %v738, 0.0
      %v847 = vsel %vm725, %v741, 0.0
      %v848 = vsel %vm725, %v744, 0.0
      %v849 = vsel %vm725, %v747, 0.0
      %v850 = vsel %vm725, %v750, 0.0
      %v851 = vsel %vm725, %v753, 0.0
      %v852 = vsel %vm725, %v756, 0.0
      %v853 = vsel %vm725, %v759, 0.0
      %v854 = vsel %vm725, %v762, 0.0
      %v855 = vsel %vm725, %v765, 0.0
      %v856 = vsel %vm725, %v768, 0.0
      %v857 = vsel %vm725, %v771, 0.0
      %v858 = vsel %vm725, %v774, 0.0
      %vm891 = vcmask 1046528
      %v892 = vrot.slane %v825, 1
      %v893 = vrot.slane %v727, 1
      %v894 = vsel %vm891, %v892, %v893
      %v895 = vrot.slane %v842, 1
      %v896 = vsel %vm891, %v893, %v895
      %v897 = vrot.slane %v826, 1
      %v898 = vrot.slane %v730, 1
      %v899 = vsel %vm891, %v897, %v898
      %v900 = vrot.slane %v843, 1
      %v901 = vsel %vm891, %v898, %v900
      %v902 = vrot.slane %v827, 1
      %v903 = vrot.slane %v733, 1
      %v904 = vsel %vm891, %v902, %v903
      %v905 = vrot.slane %v844, 1
      %v906 = vsel %vm891, %v903, %v905
      %v907 = vrot.slane %v828, 1
      %v908 = vrot.slane %v736, 1
      %v909 = vsel %vm891, %v907, %v908
      %v910 = vrot.slane %v845, 1
      %v911 = vsel %vm891, %v908, %v910
      %v912 = vrot.slane %v829, 1
      %v913 = vrot.slane %v739, 1
      %v914 = vsel %vm891, %v912, %v913
      %v915 = vrot.slane %v846, 1
      %v916 = vsel %vm891, %v913, %v915
      %v917 = vrot.slane %v830, 1
      %v918 = vrot.slane %v742, 1
      %v919 = vsel %vm891, %v917, %v918
      %v920 = vrot.slane %v847, 1
      %v921 = vsel %vm891, %v918, %v920
      %v922 = vrot.slane %v831, 1
      %v923 = vrot.slane %v745, 1
      %v924 = vsel %vm891, %v922, %v923
      %v925 = vrot.slane %v848, 1
      %v926 = vsel %vm891, %v923, %v925
      %v927 = vrot.slane %v832, 1
      %v928 = vrot.slane %v748, 1
      %v929 = vsel %vm891, %v927, %v928
      %v930 = vrot.slane %v849, 1
      %v931 = vsel %vm891, %v928, %v930
      %v932 = vrot.slane %v833, 1
      %v933 = vrot.slane %v751, 1
      %v934 = vsel %vm891, %v932, %v933
      %v935 = vrot.slane %v850, 1
      %v936 = vsel %vm891, %v933, %v935
      %v937 = vrot.slane %v834, 1
      %v938 = vrot.slane %v754, 1
      %v939 = vsel %vm891, %v937, %v938
      %v940 = vrot.slane %v851, 1
      %v941 = vsel %vm891, %v938, %v940
      %v942 = vrot.slane %v835, 1
      %v943 = vrot.slane %v757, 1
      %v944 = vsel %vm891, %v942, %v943
      %v945 = vrot.slane %v852, 1
      %v946 = vsel %vm891, %v943, %v945
      %v947 = vrot.slane %v836, 1
      %v948 = vrot.slane %v760, 1
      %v949 = vsel %vm891, %v947, %v948
      %v950 = vrot.slane %v853, 1
      %v951 = vsel %vm891, %v948, %v950
      %v952 = vrot.slane %v837, 1
      %v953 = vrot.slane %v763, 1
      %v954 = vsel %vm891, %v952, %v953
      %v955 = vrot.slane %v854, 1
      %v956 = vsel %vm891, %v953, %v955
      %v957 = vrot.slane %v838, 1
      %v958 = vrot.slane %v766, 1
      %v959 = vsel %vm891, %v957, %v958
      %v960 = vrot.slane %v855, 1
      %v961 = vsel %vm891, %v958, %v960
      %v962 = vrot.slane %v839, 1
      %v963 = vrot.slane %v769, 1
      %v964 = vsel %vm891, %v962, %v963
      %v965 = vrot.slane %v856, 1
      %v966 = vsel %vm891, %v963, %v965
      %v967 = vrot.slane %v840, 1
      %v968 = vrot.slane %v772, 1
      %v969 = vsel %vm891, %v967, %v968
      %v970 = vrot.slane %v857, 1
      %v971 = vsel %vm891, %v968, %v970
      %vm972 = vcmask 1045504
      %v973 = vrot.slane %v825, 2
      %v974 = vrot.slane %v727, 2
      %v975 = vsel %vm972, %v973, %v974
      %v976 = vrot.slane %v842, 2
      %v977 = vsel %vm972, %v974, %v976
      %v978 = vrot.slane %v826, 2
      %v979 = vrot.slane %v730, 2
      %v980 = vsel %vm972, %v978, %v979
      %v981 = vrot.slane %v843, 2
      %v982 = vsel %vm972, %v979, %v981
      %v983 = vrot.slane %v827, 2
      %v984 = vrot.slane %v733, 2
      %v985 = vsel %vm972, %v983, %v984
      %v986 = vrot.slane %v844, 2
      %v987 = vsel %vm972, %v984, %v986
      %v988 = vrot.slane %v828, 2
      %v989 = vrot.slane %v736, 2
      %v990 = vsel %vm972, %v988, %v989
      %v991 = vrot.slane %v845, 2
      %v992 = vsel %vm972, %v989, %v991
      %v993 = vrot.slane %v829, 2
      %v994 = vrot.slane %v739, 2
      %v995 = vsel %vm972, %v993, %v994
      %v996 = vrot.slane %v846, 2
      %v997 = vsel %vm972, %v994, %v996
      %v998 = vrot.slane %v830, 2
      %v999 = vrot.slane %v742, 2
      %v1000 = vsel %vm972, %v998, %v999
      %v1001 = vrot.slane %v847, 2
      %v1002 = vsel %vm972, %v999, %v1001
      %v1003 = vrot.slane %v831, 2
      %v1004 = vrot.slane %v745, 2
      %v1005 = vsel %vm972, %v1003, %v1004
      %v1006 = vrot.slane %v848, 2
      %v1007 = vsel %vm972, %v1004, %v1006
      %v1008 = vrot.slane %v832, 2
      %v1009 = vrot.slane %v748, 2
      %v1010 = vsel %vm972, %v1008, %v1009
      %v1011 = vrot.slane %v849, 2
      %v1012 = vsel %vm972, %v1009, %v1011
      %v1013 = vrot.slane %v833, 2
      %v1014 = vrot.slane %v751, 2
      %v1015 = vsel %vm972, %v1013, %v1014
      %v1016 = vrot.slane %v850, 2
      %v1017 = vsel %vm972, %v1014, %v1016
      %v1018 = vrot.slane %v834, 2
      %v1019 = vrot.slane %v754, 2
      %v1020 = vsel %vm972, %v1018, %v1019
      %v1021 = vrot.slane %v851, 2
      %v1022 = vsel %vm972, %v1019, %v1021
      %v1023 = vrot.slane %v835, 2
      %v1024 = vrot.slane %v757, 2
      %v1025 = vsel %vm972, %v1023, %v1024
      %v1026 = vrot.slane %v852, 2
      %v1027 = vsel %vm972, %v1024, %v1026
      %v1028 = vrot.slane %v836, 2
      %v1029 = vrot.slane %v760, 2
      %v1030 = vsel %vm972, %v1028, %v1029
      %v1031 = vrot.slane %v853, 2
      %v1032 = vsel %vm972, %v1029, %v1031
      %v1033 = vrot.slane %v837, 2
      %v1034 = vrot.slane %v763, 2
      %v1035 = vsel %vm972, %v1033, %v1034
      %v1036 = vrot.slane %v854, 2
      %v1037 = vsel %vm972, %v1034, %v1036
      %v1038 = vrot.slane %v838, 2
      %v1039 = vrot.slane %v766, 2
      %v1040 = vsel %vm972, %v1038, %v1039
      %v1041 = vrot.slane %v855, 2
      %v1042 = vsel %vm972, %v1039, %v1041
      %v1043 = vrot.slane %v839, 2
      %v1044 = vrot.slane %v769, 2
      %v1045 = vsel %vm972, %v1043, %v1044
      %v1046 = vrot.slane %v856, 2
      %v1047 = vsel %vm972, %v1044, %v1046
      %v1048 = vrot.slane %v840, 2
      %v1049 = vrot.slane %v772, 2
      %v1050 = vsel %vm972, %v1048, %v1049
      %v1051 = vrot.slane %v857, 2
      %v1052 = vsel %vm972, %v1049, %v1051
      %v1055 = vrot.slane %v841, 1
      %v1056 = vrot.slane %v775, 1
      %v1057 = vsel %vm891, %v1055, %v1056
      %v1058 = vrot.slane %v858, 1
      %v1059 = vsel %vm891, %v1056, %v1058
      %v1060 = vrot.slane %v841, 2
      %v1061 = vrot.slane %v775, 2
      %v1062 = vsel %vm972, %v1060, %v1061
      %v1063 = vrot.slane %v858, 2
      %v1064 = vsel %vm972, %v1061, %v1063
      %1097 = vrot.lane.b32.xlu0 %v894, 16
      %v1098 = vpop.permute.xlu0 %1097
      %1099 = vrot.lane.b32.xlu0 %v896, 16
      %v1100 = vpop.permute.xlu0 %1099
      %1101 = vrot.lane.b32.xlu0 %v899, 16
      %v1102 = vpop.permute.xlu0 %1101
      %1103 = vrot.lane.b32.xlu0 %v901, 16
      %v1104 = vpop.permute.xlu0 %1103
      %1105 = vrot.lane.b32.xlu0 %v904, 16
      %v1106 = vpop.permute.xlu0 %1105
      %1107 = vrot.lane.b32.xlu0 %v906, 16
      %v1108 = vpop.permute.xlu0 %1107
      %1109 = vrot.lane.b32.xlu0 %v909, 16
      %v1110 = vpop.permute.xlu0 %1109
      %1111 = vrot.lane.b32.xlu0 %v911, 16
      %v1112 = vpop.permute.xlu0 %1111
      %1113 = vrot.lane.b32.xlu0 %v914, 16
      %v1114 = vpop.permute.xlu0 %1113
      %1115 = vrot.lane.b32.xlu0 %v916, 16
      %v1116 = vpop.permute.xlu0 %1115
      %1117 = vrot.lane.b32.xlu0 %v919, 16
      %v1118 = vpop.permute.xlu0 %1117
      %1119 = vrot.lane.b32.xlu0 %v921, 16
      %v1120 = vpop.permute.xlu0 %1119
      %1121 = vrot.lane.b32.xlu0 %v924, 16
      %v1122 = vpop.permute.xlu0 %1121
      %1123 = vrot.lane.b32.xlu0 %v926, 16
      %v1124 = vpop.permute.xlu0 %1123
      %1125 = vrot.lane.b32.xlu0 %v929, 16
      %v1126 = vpop.permute.xlu0 %1125
      %1127 = vrot.lane.b32.xlu0 %v931, 16
      %v1128 = vpop.permute.xlu0 %1127
      %1129 = vrot.lane.b32.xlu0 %v934, 16
      %v1130 = vpop.permute.xlu0 %1129
      %1131 = vrot.lane.b32.xlu0 %v936, 16
      %v1132 = vpop.permute.xlu0 %1131
      %1133 = vrot.lane.b32.xlu0 %v939, 16
      %v1134 = vpop.permute.xlu0 %1133
      %1135 = vrot.lane.b32.xlu0 %v941, 16
      %v1136 = vpop.permute.xlu0 %1135
      %1137 = vrot.lane.b32.xlu0 %v944, 16
      %v1138 = vpop.permute.xlu0 %1137
      %1139 = vrot.lane.b32.xlu0 %v946, 16
      %v1140 = vpop.permute.xlu0 %1139
      %1141 = vrot.lane.b32.xlu0 %v949, 16
      %v1142 = vpop.permute.xlu0 %1141
      %1143 = vrot.lane.b32.xlu0 %v951, 16
      %v1144 = vpop.permute.xlu0 %1143
      %1145 = vrot.lane.b32.xlu0 %v954, 16
      %v1146 = vpop.permute.xlu0 %1145
      %1147 = vrot.lane.b32.xlu0 %v956, 16
      %v1148 = vpop.permute.xlu0 %1147
      %1149 = vrot.lane.b32.xlu0 %v959, 16
      %v1150 = vpop.permute.xlu0 %1149
      %1151 = vrot.lane.b32.xlu0 %v961, 16
      %v1152 = vpop.permute.xlu0 %1151
      %1153 = vrot.lane.b32.xlu0 %v964, 16
      %v1154 = vpop.permute.xlu0 %1153
      %1155 = vrot.lane.b32.xlu0 %v966, 16
      %v1156 = vpop.permute.xlu0 %1155
      %1157 = vrot.lane.b32.xlu0 %v969, 16
      %v1158 = vpop.permute.xlu0 %1157
      %1159 = vrot.lane.b32.xlu0 %v971, 16
      %v1160 = vpop.permute.xlu0 %1159
      %1193 = vrot.lane.b32.xlu0 %v975, 32
      %v1194 = vpop.permute.xlu0 %1193
      %1195 = vrot.lane.b32.xlu0 %v977, 32
      %v1196 = vpop.permute.xlu0 %1195
      %1197 = vrot.lane.b32.xlu0 %v980, 32
      %v1198 = vpop.permute.xlu0 %1197
      %1199 = vrot.lane.b32.xlu0 %v982, 32
      %v1200 = vpop.permute.xlu0 %1199
      %1201 = vrot.lane.b32.xlu0 %v985, 32
      %v1202 = vpop.permute.xlu0 %1201
      %1203 = vrot.lane.b32.xlu0 %v987, 32
      %v1204 = vpop.permute.xlu0 %1203
      %1205 = vrot.lane.b32.xlu0 %v990, 32
      %v1206 = vpop.permute.xlu0 %1205
      %1207 = vrot.lane.b32.xlu0 %v992, 32
      %v1208 = vpop.permute.xlu0 %1207
      %1209 = vrot.lane.b32.xlu0 %v995, 32
      %v1210 = vpop.permute.xlu0 %1209
      %1211 = vrot.lane.b32.xlu0 %v997, 32
      %v1212 = vpop.permute.xlu0 %1211
      %1213 = vrot.lane.b32.xlu0 %v1000, 32
      %v1214 = vpop.permute.xlu0 %1213
      %1215 = vrot.lane.b32.xlu0 %v1002, 32
      %v1216 = vpop.permute.xlu0 %1215
      %1217 = vrot.lane.b32.xlu0 %v1005, 32
      %v1218 = vpop.permute.xlu0 %1217
      %1219 = vrot.lane.b32.xlu0 %v1007, 32
      %v1220 = vpop.permute.xlu0 %1219
      %1221 = vrot.lane.b32.xlu0 %v1010, 32
      %v1222 = vpop.permute.xlu0 %1221
      %1223 = vrot.lane.b32.xlu0 %v1012, 32
      %v1224 = vpop.permute.xlu0 %1223
      %1225 = vrot.lane.b32.xlu0 %v1015, 32
      %v1226 = vpop.permute.xlu0 %1225
      %1227 = vrot.lane.b32.xlu0 %v1017, 32
      %v1228 = vpop.permute.xlu0 %1227
      %1229 = vrot.lane.b32.xlu0 %v1020, 32
      %v1230 = vpop.permute.xlu0 %1229
      %1231 = vrot.lane.b32.xlu0 %v1022, 32
      %v1232 = vpop.permute.xlu0 %1231
      %1233 = vrot.lane.b32.xlu0 %v1025, 32
      %v1234 = vpop.permute.xlu0 %1233
      %1235 = vrot.lane.b32.xlu0 %v1027, 32
      %v1236 = vpop.permute.xlu0 %1235
      %1237 = vrot.lane.b32.xlu0 %v1030, 32
      %v1238 = vpop.permute.xlu0 %1237
      %1239 = vrot.lane.b32.xlu0 %v1032, 32
      %v1240 = vpop.permute.xlu0 %1239
      %1241 = vrot.lane.b32.xlu0 %v1035, 32
      %v1242 = vpop.permute.xlu0 %1241
      %1243 = vrot.lane.b32.xlu0 %v1037, 32
      %v1244 = vpop.permute.xlu0 %1243
      %1245 = vrot.lane.b32.xlu0 %v1040, 32
      %v1246 = vpop.permute.xlu0 %1245
      %1247 = vrot.lane.b32.xlu0 %v1042, 32
      %v1248 = vpop.permute.xlu0 %1247
      %1249 = vrot.lane.b32.xlu0 %v1045, 32
      %v1250 = vpop.permute.xlu0 %1249
      %1251 = vrot.lane.b32.xlu0 %v1047, 32
      %v1252 = vpop.permute.xlu0 %1251
      %1253 = vrot.lane.b32.xlu0 %v1050, 32
      %v1254 = vpop.permute.xlu0 %1253
      %1255 = vrot.lane.b32.xlu0 %v1052, 32
      %v1256 = vpop.permute.xlu0 %1255
      %1289 = vrot.lane.b32.xlu0 %v826, 48
      %v1290 = vpop.permute.xlu0 %1289
      %1291 = vrot.lane.b32.xlu0 %v730, 48
      %v1292 = vpop.permute.xlu0 %1291
      %1293 = vrot.lane.b32.xlu0 %v827, 48
      %v1294 = vpop.permute.xlu0 %1293
      %1295 = vrot.lane.b32.xlu0 %v733, 48
      %v1296 = vpop.permute.xlu0 %1295
      %1297 = vrot.lane.b32.xlu0 %v828, 48
      %v1298 = vpop.permute.xlu0 %1297
      %1299 = vrot.lane.b32.xlu0 %v736, 48
      %v1300 = vpop.permute.xlu0 %1299
      %1301 = vrot.lane.b32.xlu0 %v829, 48
      %v1302 = vpop.permute.xlu0 %1301
      %1303 = vrot.lane.b32.xlu0 %v739, 48
      %v1304 = vpop.permute.xlu0 %1303
      %1305 = vrot.lane.b32.xlu0 %v830, 48
      %v1306 = vpop.permute.xlu0 %1305
      %1307 = vrot.lane.b32.xlu0 %v742, 48
      %v1308 = vpop.permute.xlu0 %1307
      %1309 = vrot.lane.b32.xlu0 %v831, 48
      %v1310 = vpop.permute.xlu0 %1309
      %1311 = vrot.lane.b32.xlu0 %v745, 48
      %v1312 = vpop.permute.xlu0 %1311
      %1313 = vrot.lane.b32.xlu0 %v832, 48
      %v1314 = vpop.permute.xlu0 %1313
      %1315 = vrot.lane.b32.xlu0 %v748, 48
      %v1316 = vpop.permute.xlu0 %1315
      %1317 = vrot.lane.b32.xlu0 %v833, 48
      %v1318 = vpop.permute.xlu0 %1317
      %1319 = vrot.lane.b32.xlu0 %v751, 48
      %v1320 = vpop.permute.xlu0 %1319
      %1321 = vrot.lane.b32.xlu0 %v834, 48
      %v1322 = vpop.permute.xlu0 %1321
      %1323 = vrot.lane.b32.xlu0 %v754, 48
      %v1324 = vpop.permute.xlu0 %1323
      %1325 = vrot.lane.b32.xlu0 %v835, 48
      %v1326 = vpop.permute.xlu0 %1325
      %1327 = vrot.lane.b32.xlu0 %v757, 48
      %v1328 = vpop.permute.xlu0 %1327
      %1329 = vrot.lane.b32.xlu0 %v836, 48
      %v1330 = vpop.permute.xlu0 %1329
      %1331 = vrot.lane.b32.xlu0 %v760, 48
      %v1332 = vpop.permute.xlu0 %1331
      %1333 = vrot.lane.b32.xlu0 %v837, 48
      %v1334 = vpop.permute.xlu0 %1333
      %1335 = vrot.lane.b32.xlu0 %v763, 48
      %v1336 = vpop.permute.xlu0 %1335
      %1337 = vrot.lane.b32.xlu0 %v838, 48
      %v1338 = vpop.permute.xlu0 %1337
      %1339 = vrot.lane.b32.xlu0 %v766, 48
      %v1340 = vpop.permute.xlu0 %1339
      %1341 = vrot.lane.b32.xlu0 %v839, 48
      %v1342 = vpop.permute.xlu0 %1341
      %1343 = vrot.lane.b32.xlu0 %v769, 48
      %v1344 = vpop.permute.xlu0 %1343
      %1345 = vrot.lane.b32.xlu0 %v840, 48
      %v1346 = vpop.permute.xlu0 %1345
      %1347 = vrot.lane.b32.xlu0 %v772, 48
      %v1348 = vpop.permute.xlu0 %1347
      %1349 = vrot.lane.b32.xlu0 %v841, 48
      %v1350 = vpop.permute.xlu0 %1349
      %1351 = vrot.lane.b32.xlu0 %v775, 48
      %v1352 = vpop.permute.xlu0 %1351
      %1385 = vrot.lane.b32.xlu0 %v899, 64
      %v1386 = vpop.permute.xlu0 %1385
      %1387 = vrot.lane.b32.xlu0 %v901, 64
      %v1388 = vpop.permute.xlu0 %1387
      %1389 = vrot.lane.b32.xlu0 %v904, 64
      %v1390 = vpop.permute.xlu0 %1389
      %1391 = vrot.lane.b32.xlu0 %v906, 64
      %v1392 = vpop.permute.xlu0 %1391
      %1393 = vrot.lane.b32.xlu0 %v909, 64
      %v1394 = vpop.permute.xlu0 %1393
      %1395 = vrot.lane.b32.xlu0 %v911, 64
      %v1396 = vpop.permute.xlu0 %1395
      %1397 = vrot.lane.b32.xlu0 %v914, 64
      %v1398 = vpop.permute.xlu0 %1397
      %1399 = vrot.lane.b32.xlu0 %v916, 64
      %v1400 = vpop.permute.xlu0 %1399
      %1401 = vrot.lane.b32.xlu0 %v919, 64
      %v1402 = vpop.permute.xlu0 %1401
      %1403 = vrot.lane.b32.xlu0 %v921, 64
      %v1404 = vpop.permute.xlu0 %1403
      %1405 = vrot.lane.b32.xlu0 %v924, 64
      %v1406 = vpop.permute.xlu0 %1405
      %1407 = vrot.lane.b32.xlu0 %v926, 64
      %v1408 = vpop.permute.xlu0 %1407
      %1409 = vrot.lane.b32.xlu0 %v929, 64
      %v1410 = vpop.permute.xlu0 %1409
      %1411 = vrot.lane.b32.xlu0 %v931, 64
      %v1412 = vpop.permute.xlu0 %1411
      %1413 = vrot.lane.b32.xlu0 %v934, 64
      %v1414 = vpop.permute.xlu0 %1413
      %1415 = vrot.lane.b32.xlu0 %v936, 64
      %v1416 = vpop.permute.xlu0 %1415
      %1417 = vrot.lane.b32.xlu0 %v939, 64
      %v1418 = vpop.permute.xlu0 %1417
      %1419 = vrot.lane.b32.xlu0 %v941, 64
      %v1420 = vpop.permute.xlu0 %1419
      %1421 = vrot.lane.b32.xlu0 %v944, 64
      %v1422 = vpop.permute.xlu0 %1421
      %1423 = vrot.lane.b32.xlu0 %v946, 64
      %v1424 = vpop.permute.xlu0 %1423
      %1425 = vrot.lane.b32.xlu0 %v949, 64
      %v1426 = vpop.permute.xlu0 %1425
      %1427 = vrot.lane.b32.xlu0 %v951, 64
      %v1428 = vpop.permute.xlu0 %1427
      %1429 = vrot.lane.b32.xlu0 %v954, 64
      %v1430 = vpop.permute.xlu0 %1429
      %1431 = vrot.lane.b32.xlu0 %v956, 64
      %v1432 = vpop.permute.xlu0 %1431
      %1433 = vrot.lane.b32.xlu0 %v959, 64
      %v1434 = vpop.permute.xlu0 %1433
      %1435 = vrot.lane.b32.xlu0 %v961, 64
      %v1436 = vpop.permute.xlu0 %1435
      %1437 = vrot.lane.b32.xlu0 %v964, 64
      %v1438 = vpop.permute.xlu0 %1437
      %1439 = vrot.lane.b32.xlu0 %v966, 64
      %v1440 = vpop.permute.xlu0 %1439
      %1441 = vrot.lane.b32.xlu0 %v969, 64
      %v1442 = vpop.permute.xlu0 %1441
      %1443 = vrot.lane.b32.xlu0 %v971, 64
      %v1444 = vpop.permute.xlu0 %1443
      %1445 = vrot.lane.b32.xlu0 %v1057, 64
      %v1446 = vpop.permute.xlu0 %1445
      %1447 = vrot.lane.b32.xlu0 %v1059, 64
      %v1448 = vpop.permute.xlu0 %1447
      %1481 = vrot.lane.b32.xlu0 %v980, 80
      %v1482 = vpop.permute.xlu0 %1481
      %1483 = vrot.lane.b32.xlu0 %v982, 80
      %v1484 = vpop.permute.xlu0 %1483
      %1485 = vrot.lane.b32.xlu0 %v985, 80
      %v1486 = vpop.permute.xlu0 %1485
      %1487 = vrot.lane.b32.xlu0 %v987, 80
      %v1488 = vpop.permute.xlu0 %1487
      %1489 = vrot.lane.b32.xlu0 %v990, 80
      %v1490 = vpop.permute.xlu0 %1489
      %1491 = vrot.lane.b32.xlu0 %v992, 80
      %v1492 = vpop.permute.xlu0 %1491
      %1493 = vrot.lane.b32.xlu0 %v995, 80
      %v1494 = vpop.permute.xlu0 %1493
      %1495 = vrot.lane.b32.xlu0 %v997, 80
      %v1496 = vpop.permute.xlu0 %1495
      %1497 = vrot.lane.b32.xlu0 %v1000, 80
      %v1498 = vpop.permute.xlu0 %1497
      %1499 = vrot.lane.b32.xlu0 %v1002, 80
      %v1500 = vpop.permute.xlu0 %1499
      %1501 = vrot.lane.b32.xlu0 %v1005, 80
      %v1502 = vpop.permute.xlu0 %1501
      %1503 = vrot.lane.b32.xlu0 %v1007, 80
      %v1504 = vpop.permute.xlu0 %1503
      %1505 = vrot.lane.b32.xlu0 %v1010, 80
      %v1506 = vpop.permute.xlu0 %1505
      %1507 = vrot.lane.b32.xlu0 %v1012, 80
      %v1508 = vpop.permute.xlu0 %1507
      %1509 = vrot.lane.b32.xlu0 %v1015, 80
      %v1510 = vpop.permute.xlu0 %1509
      %1511 = vrot.lane.b32.xlu0 %v1017, 80
      %v1512 = vpop.permute.xlu0 %1511
      %1513 = vrot.lane.b32.xlu0 %v1020, 80
      %v1514 = vpop.permute.xlu0 %1513
      %1515 = vrot.lane.b32.xlu0 %v1022, 80
      %v1516 = vpop.permute.xlu0 %1515
      %1517 = vrot.lane.b32.xlu0 %v1025, 80
      %v1518 = vpop.permute.xlu0 %1517
      %1519 = vrot.lane.b32.xlu0 %v1027, 80
      %v1520 = vpop.permute.xlu0 %1519
      %1521 = vrot.lane.b32.xlu0 %v1030, 80
      %v1522 = vpop.permute.xlu0 %1521
      %1523 = vrot.lane.b32.xlu0 %v1032, 80
      %v1524 = vpop.permute.xlu0 %1523
      %1525 = vrot.lane.b32.xlu0 %v1035, 80
      %v1526 = vpop.permute.xlu0 %1525
      %1527 = vrot.lane.b32.xlu0 %v1037, 80
      %v1528 = vpop.permute.xlu0 %1527
      %1529 = vrot.lane.b32.xlu0 %v1040, 80
      %v1530 = vpop.permute.xlu0 %1529
      %1531 = vrot.lane.b32.xlu0 %v1042, 80
      %v1532 = vpop.permute.xlu0 %1531
      %1533 = vrot.lane.b32.xlu0 %v1045, 80
      %v1534 = vpop.permute.xlu0 %1533
      %1535 = vrot.lane.b32.xlu0 %v1047, 80
      %v1536 = vpop.permute.xlu0 %1535
      %1537 = vrot.lane.b32.xlu0 %v1050, 80
      %v1538 = vpop.permute.xlu0 %1537
      %1539 = vrot.lane.b32.xlu0 %v1052, 80
      %v1540 = vpop.permute.xlu0 %1539
      %1541 = vrot.lane.b32.xlu0 %v1062, 80
      %v1542 = vpop.permute.xlu0 %1541
      %1543 = vrot.lane.b32.xlu0 %v1064, 80
      %v1544 = vpop.permute.xlu0 %1543
      %1577 = vrot.lane.b32.xlu0 %v827, 96
      %v1578 = vpop.permute.xlu0 %1577
      %1579 = vrot.lane.b32.xlu0 %v733, 96
      %v1580 = vpop.permute.xlu0 %1579
      %1581 = vrot.lane.b32.xlu0 %v828, 96
      %v1582 = vpop.permute.xlu0 %1581
      %1583 = vrot.lane.b32.xlu0 %v736, 96
      %v1584 = vpop.permute.xlu0 %1583
      %1585 = vrot.lane.b32.xlu0 %v829, 96
      %v1586 = vpop.permute.xlu0 %1585
      %1587 = vrot.lane.b32.xlu0 %v739, 96
      %v1588 = vpop.permute.xlu0 %1587
      %1589 = vrot.lane.b32.xlu0 %v830, 96
      %v1590 = vpop.permute.xlu0 %1589
      %1591 = vrot.lane.b32.xlu0 %v742, 96
      %v1592 = vpop.permute.xlu0 %1591
      %1593 = vrot.lane.b32.xlu0 %v831, 96
      %v1594 = vpop.permute.xlu0 %1593
      %1595 = vrot.lane.b32.xlu0 %v745, 96
      %v1596 = vpop.permute.xlu0 %1595
      %1597 = vrot.lane.b32.xlu0 %v832, 96
      %v1598 = vpop.permute.xlu0 %1597
      %1599 = vrot.lane.b32.xlu0 %v748, 96
      %v1600 = vpop.permute.xlu0 %1599
      %1601 = vrot.lane.b32.xlu0 %v833, 96
      %v1602 = vpop.permute.xlu0 %1601
      %1603 = vrot.lane.b32.xlu0 %v751, 96
      %v1604 = vpop.permute.xlu0 %1603
      %1605 = vrot.lane.b32.xlu0 %v834, 96
      %v1606 = vpop.permute.xlu0 %1605
      %1607 = vrot.lane.b32.xlu0 %v754, 96
      %v1608 = vpop.permute.xlu0 %1607
      %1609 = vrot.lane.b32.xlu0 %v835, 96
      %v1610 = vpop.permute.xlu0 %1609
      %1611 = vrot.lane.b32.xlu0 %v757, 96
      %v1612 = vpop.permute.xlu0 %1611
      %1613 = vrot.lane.b32.xlu0 %v836, 96
      %v1614 = vpop.permute.xlu0 %1613
      %1615 = vrot.lane.b32.xlu0 %v760, 96
      %v1616 = vpop.permute.xlu0 %1615
      %1617 = vrot.lane.b32.xlu0 %v837, 96
      %v1618 = vpop.permute.xlu0 %1617
      %1619 = vrot.lane.b32.xlu0 %v763, 96
      %v1620 = vpop.permute.xlu0 %1619
      %1621 = vrot.lane.b32.xlu0 %v838, 96
      %v1622 = vpop.permute.xlu0 %1621
      %1623 = vrot.lane.b32.xlu0 %v766, 96
      %v1624 = vpop.permute.xlu0 %1623
      %1625 = vrot.lane.b32.xlu0 %v839, 96
      %v1626 = vpop.permute.xlu0 %1625
      %1627 = vrot.lane.b32.xlu0 %v769, 96
      %v1628 = vpop.permute.xlu0 %1627
      %1629 = vrot.lane.b32.xlu0 %v840, 96
      %v1630 = vpop.permute.xlu0 %1629
      %1631 = vrot.lane.b32.xlu0 %v772, 96
      %v1632 = vpop.permute.xlu0 %1631
      %1633 = vrot.lane.b32.xlu0 %v841, 96
      %v1634 = vpop.permute.xlu0 %1633
      %1635 = vrot.lane.b32.xlu0 %v775, 96
      %v1636 = vpop.permute.xlu0 %1635
      %1637 = vrot.lane.b32.xlu0 %v825, 96
      %v1638 = vpop.permute.xlu0 %1637
      %1639 = vrot.lane.b32.xlu0 %v727, 96
      %v1640 = vpop.permute.xlu0 %1639
      %1673 = vrot.lane.b32.xlu0 %v904, 112
      %v1674 = vpop.permute.xlu0 %1673
      %1675 = vrot.lane.b32.xlu0 %v906, 112
      %v1676 = vpop.permute.xlu0 %1675
      %1677 = vrot.lane.b32.xlu0 %v909, 112
      %v1678 = vpop.permute.xlu0 %1677
      %1679 = vrot.lane.b32.xlu0 %v911, 112
      %v1680 = vpop.permute.xlu0 %1679
      %1681 = vrot.lane.b32.xlu0 %v914, 112
      %v1682 = vpop.permute.xlu0 %1681
      %1683 = vrot.lane.b32.xlu0 %v916, 112
      %v1684 = vpop.permute.xlu0 %1683
      %1685 = vrot.lane.b32.xlu0 %v919, 112
      %v1686 = vpop.permute.xlu0 %1685
      %1687 = vrot.lane.b32.xlu0 %v921, 112
      %v1688 = vpop.permute.xlu0 %1687
      %1689 = vrot.lane.b32.xlu0 %v924, 112
      %v1690 = vpop.permute.xlu0 %1689
      %1691 = vrot.lane.b32.xlu0 %v926, 112
      %v1692 = vpop.permute.xlu0 %1691
      %1693 = vrot.lane.b32.xlu0 %v929, 112
      %v1694 = vpop.permute.xlu0 %1693
      %1695 = vrot.lane.b32.xlu0 %v931, 112
      %v1696 = vpop.permute.xlu0 %1695
      %1697 = vrot.lane.b32.xlu0 %v934, 112
      %v1698 = vpop.permute.xlu0 %1697
      %1699 = vrot.lane.b32.xlu0 %v936, 112
      %v1700 = vpop.permute.xlu0 %1699
      %1701 = vrot.lane.b32.xlu0 %v939, 112
      %v1702 = vpop.permute.xlu0 %1701
      %1703 = vrot.lane.b32.xlu0 %v941, 112
      %v1704 = vpop.permute.xlu0 %1703
      %1705 = vrot.lane.b32.xlu0 %v944, 112
      %v1706 = vpop.permute.xlu0 %1705
      %1707 = vrot.lane.b32.xlu0 %v946, 112
      %v1708 = vpop.permute.xlu0 %1707
      %1709 = vrot.lane.b32.xlu0 %v949, 112
      %v1710 = vpop.permute.xlu0 %1709
      %1711 = vrot.lane.b32.xlu0 %v951, 112
      %v1712 = vpop.permute.xlu0 %1711
      %1713 = vrot.lane.b32.xlu0 %v954, 112
      %v1714 = vpop.permute.xlu0 %1713
      %1715 = vrot.lane.b32.xlu0 %v956, 112
      %v1716 = vpop.permute.xlu0 %1715
      %1717 = vrot.lane.b32.xlu0 %v959, 112
      %v1718 = vpop.permute.xlu0 %1717
      %1719 = vrot.lane.b32.xlu0 %v961, 112
      %v1720 = vpop.permute.xlu0 %1719
      %1721 = vrot.lane.b32.xlu0 %v964, 112
      %v1722 = vpop.permute.xlu0 %1721
      %1723 = vrot.lane.b32.xlu0 %v966, 112
      %v1724 = vpop.permute.xlu0 %1723
      %1725 = vrot.lane.b32.xlu0 %v969, 112
      %v1726 = vpop.permute.xlu0 %1725
      %1727 = vrot.lane.b32.xlu0 %v971, 112
      %v1728 = vpop.permute.xlu0 %1727
      %1729 = vrot.lane.b32.xlu0 %v1057, 112
      %v1730 = vpop.permute.xlu0 %1729
      %1731 = vrot.lane.b32.xlu0 %v1059, 112
      %v1732 = vpop.permute.xlu0 %1731
      %1733 = vrot.lane.b32.xlu0 %v894, 112
      %v1734 = vpop.permute.xlu0 %1733
      %1735 = vrot.lane.b32.xlu0 %v896, 112
      %v1736 = vpop.permute.xlu0 %1735
      %vm1769 = vcmask 130048
      %v1770 = vsel %vm1769, %v825, %v1098
      %v1771 = vsel %vm1769, %v727, %v1100
      %v1772 = vsel %vm1769, %v826, %v1102
      %v1773 = vsel %vm1769, %v730, %v1104
      %v1774 = vsel %vm1769, %v827, %v1106
      %v1775 = vsel %vm1769, %v733, %v1108
      %v1776 = vsel %vm1769, %v828, %v1110
      %v1777 = vsel %vm1769, %v736, %v1112
      %v1778 = vsel %vm1769, %v829, %v1114
      %v1779 = vsel %vm1769, %v739, %v1116
      %v1780 = vsel %vm1769, %v830, %v1118
      %v1781 = vsel %vm1769, %v742, %v1120
      %v1782 = vsel %vm1769, %v831, %v1122
      %v1783 = vsel %vm1769, %v745, %v1124
      %v1784 = vsel %vm1769, %v832, %v1126
      %v1785 = vsel %vm1769, %v748, %v1128
      %v1786 = vsel %vm1769, %v833, %v1130
      %v1787 = vsel %vm1769, %v751, %v1132
      %v1788 = vsel %vm1769, %v834, %v1134
      %v1789 = vsel %vm1769, %v754, %v1136
      %v1790 = vsel %vm1769, %v835, %v1138
      %v1791 = vsel %vm1769, %v757, %v1140
      %v1792 = vsel %vm1769, %v836, %v1142
      %v1793 = vsel %vm1769, %v760, %v1144
      %v1794 = vsel %vm1769, %v837, %v1146
      %v1795 = vsel %vm1769, %v763, %v1148
      %v1796 = vsel %vm1769, %v838, %v1150
      %v1797 = vsel %vm1769, %v766, %v1152
      %v1798 = vsel %vm1769, %v839, %v1154
      %v1799 = vsel %vm1769, %v769, %v1156
      %v1800 = vsel %vm1769, %v840, %v1158
      %v1801 = vsel %vm1769, %v772, %v1160
      %vm1802 = vcmask 261120
      %v1803 = vsel %vm1802, %v1770, %v1194
      %v1804 = vsel %vm1802, %v1771, %v1196
      %v1805 = vsel %vm1802, %v1772, %v1198
      %v1806 = vsel %vm1802, %v1773, %v1200
      %v1807 = vsel %vm1802, %v1774, %v1202
      %v1808 = vsel %vm1802, %v1775, %v1204
      %v1809 = vsel %vm1802, %v1776, %v1206
      %v1810 = vsel %vm1802, %v1777, %v1208
      %v1811 = vsel %vm1802, %v1778, %v1210
      %v1812 = vsel %vm1802, %v1779, %v1212
      %v1813 = vsel %vm1802, %v1780, %v1214
      %v1814 = vsel %vm1802, %v1781, %v1216
      %v1815 = vsel %vm1802, %v1782, %v1218
      %v1816 = vsel %vm1802, %v1783, %v1220
      %v1817 = vsel %vm1802, %v1784, %v1222
      %v1818 = vsel %vm1802, %v1785, %v1224
      %v1819 = vsel %vm1802, %v1786, %v1226
      %v1820 = vsel %vm1802, %v1787, %v1228
      %v1821 = vsel %vm1802, %v1788, %v1230
      %v1822 = vsel %vm1802, %v1789, %v1232
      %v1823 = vsel %vm1802, %v1790, %v1234
      %v1824 = vsel %vm1802, %v1791, %v1236
      %v1825 = vsel %vm1802, %v1792, %v1238
      %v1826 = vsel %vm1802, %v1793, %v1240
      %v1827 = vsel %vm1802, %v1794, %v1242
      %v1828 = vsel %vm1802, %v1795, %v1244
      %v1829 = vsel %vm1802, %v1796, %v1246
      %v1830 = vsel %vm1802, %v1797, %v1248
      %v1831 = vsel %vm1802, %v1798, %v1250
      %v1832 = vsel %vm1802, %v1799, %v1252
      %v1833 = vsel %vm1802, %v1800, %v1254
      %v1834 = vsel %vm1802, %v1801, %v1256
      %vm1835 = vcmask 392192
      %v1836 = vsel %vm1835, %v1803, %v1290
      %v1837 = vsel %vm1835, %v1804, %v1292
      %v1838 = vsel %vm1835, %v1805, %v1294
      %v1839 = vsel %vm1835, %v1806, %v1296
      %v1840 = vsel %vm1835, %v1807, %v1298
      %v1841 = vsel %vm1835, %v1808, %v1300
      %v1842 = vsel %vm1835, %v1809, %v1302
      %v1843 = vsel %vm1835, %v1810, %v1304
      %v1844 = vsel %vm1835, %v1811, %v1306
      %v1845 = vsel %vm1835, %v1812, %v1308
      %v1846 = vsel %vm1835, %v1813, %v1310
      %v1847 = vsel %vm1835, %v1814, %v1312
      %v1848 = vsel %vm1835, %v1815, %v1314
      %v1849 = vsel %vm1835, %v1816, %v1316
      %v1850 = vsel %vm1835, %v1817, %v1318
      %v1851 = vsel %vm1835, %v1818, %v1320
      %v1852 = vsel %vm1835, %v1819, %v1322
      %v1853 = vsel %vm1835, %v1820, %v1324
      %v1854 = vsel %vm1835, %v1821, %v1326
      %v1855 = vsel %vm1835, %v1822, %v1328
      %v1856 = vsel %vm1835, %v1823, %v1330
      %v1857 = vsel %vm1835, %v1824, %v1332
      %v1858 = vsel %vm1835, %v1825, %v1334
      %v1859 = vsel %vm1835, %v1826, %v1336
      %v1860 = vsel %vm1835, %v1827, %v1338
      %v1861 = vsel %vm1835, %v1828, %v1340
      %v1862 = vsel %vm1835, %v1829, %v1342
      %v1863 = vsel %vm1835, %v1830, %v1344
      %v1864 = vsel %vm1835, %v1831, %v1346
      %v1865 = vsel %vm1835, %v1832, %v1348
      %v1866 = vsel %vm1835, %v1833, %v1350
      %v1867 = vsel %vm1835, %v1834, %v1352
      %vm1868 = vcmask 523264
      %v1869 = vsel %vm1868, %v1836, %v1386
      %v1870 = vsel %vm1868, %v1837, %v1388
      %v1871 = vsel %vm1868, %v1838, %v1390
      %v1872 = vsel %vm1868, %v1839, %v1392
      %v1873 = vsel %vm1868, %v1840, %v1394
      %v1874 = vsel %vm1868, %v1841, %v1396
      %v1875 = vsel %vm1868, %v1842, %v1398
      %v1876 = vsel %vm1868, %v1843, %v1400
      %v1877 = vsel %vm1868, %v1844, %v1402
      %v1878 = vsel %vm1868, %v1845, %v1404
      %v1879 = vsel %vm1868, %v1846, %v1406
      %v1880 = vsel %vm1868, %v1847, %v1408
      %v1881 = vsel %vm1868, %v1848, %v1410
      %v1882 = vsel %vm1868, %v1849, %v1412
      %v1883 = vsel %vm1868, %v1850, %v1414
      %v1884 = vsel %vm1868, %v1851, %v1416
      %v1885 = vsel %vm1868, %v1852, %v1418
      %v1886 = vsel %vm1868, %v1853, %v1420
      %v1887 = vsel %vm1868, %v1854, %v1422
      %v1888 = vsel %vm1868, %v1855, %v1424
      %v1889 = vsel %vm1868, %v1856, %v1426
      %v1890 = vsel %vm1868, %v1857, %v1428
      %v1891 = vsel %vm1868, %v1858, %v1430
      %v1892 = vsel %vm1868, %v1859, %v1432
      %v1893 = vsel %vm1868, %v1860, %v1434
      %v1894 = vsel %vm1868, %v1861, %v1436
      %v1895 = vsel %vm1868, %v1862, %v1438
      %v1896 = vsel %vm1868, %v1863, %v1440
      %v1897 = vsel %vm1868, %v1864, %v1442
      %v1898 = vsel %vm1868, %v1865, %v1444
      %v1899 = vsel %vm1868, %v1866, %v1446
      %v1900 = vsel %vm1868, %v1867, %v1448
      %vm1901 = vcmask 654336
      %v1902 = vsel %vm1901, %v1869, %v1482
      %v1903 = vsel %vm1901, %v1870, %v1484
      %v1904 = vsel %vm1901, %v1871, %v1486
      %v1905 = vsel %vm1901, %v1872, %v1488
      %v1906 = vsel %vm1901, %v1873, %v1490
      %v1907 = vsel %vm1901, %v1874, %v1492
      %v1908 = vsel %vm1901, %v1875, %v1494
      %v1909 = vsel %vm1901, %v1876, %v1496
      %v1910 = vsel %vm1901, %v1877, %v1498
      %v1911 = vsel %vm1901, %v1878, %v1500
      %v1912 = vsel %vm1901, %v1879, %v1502
      %v1913 = vsel %vm1901, %v1880, %v1504
      %v1914 = vsel %vm1901, %v1881, %v1506
      %v1915 = vsel %vm1901, %v1882, %v1508
      %v1916 = vsel %vm1901, %v1883, %v1510
      %v1917 = vsel %vm1901, %v1884, %v1512
      %v1918 = vsel %vm1901, %v1885, %v1514
      %v1919 = vsel %vm1901, %v1886, %v1516
      %v1920 = vsel %vm1901, %v1887, %v1518
      %v1921 = vsel %vm1901, %v1888, %v1520
      %v1922 = vsel %vm1901, %v1889, %v1522
      %v1923 = vsel %vm1901, %v1890, %v1524
      %v1924 = vsel %vm1901, %v1891, %v1526
      %v1925 = vsel %vm1901, %v1892, %v1528
      %v1926 = vsel %vm1901, %v1893, %v1530
      %v1927 = vsel %vm1901, %v1894, %v1532
      %v1928 = vsel %vm1901, %v1895, %v1534
      %v1929 = vsel %vm1901, %v1896, %v1536
      %v1930 = vsel %vm1901, %v1897, %v1538
      %v1931 = vsel %vm1901, %v1898, %v1540
      %v1932 = vsel %vm1901, %v1899, %v1542
      %v1933 = vsel %vm1901, %v1900, %v1544
      %vm1934 = vcmask 785408
      %v1935 = vsel %vm1934, %v1902, %v1578
      %v1936 = vsel %vm1934, %v1903, %v1580
      %v1937 = vsel %vm1934, %v1904, %v1582
      %v1938 = vsel %vm1934, %v1905, %v1584
      %v1939 = vsel %vm1934, %v1906, %v1586
      %v1940 = vsel %vm1934, %v1907, %v1588
      %v1941 = vsel %vm1934, %v1908, %v1590
      %v1942 = vsel %vm1934, %v1909, %v1592
      %v1943 = vsel %vm1934, %v1910, %v1594
      %v1944 = vsel %vm1934, %v1911, %v1596
      %v1945 = vsel %vm1934, %v1912, %v1598
      %v1946 = vsel %vm1934, %v1913, %v1600
      %v1947 = vsel %vm1934, %v1914, %v1602
      %v1948 = vsel %vm1934, %v1915, %v1604
      %v1949 = vsel %vm1934, %v1916, %v1606
      %v1950 = vsel %vm1934, %v1917, %v1608
      %v1951 = vsel %vm1934, %v1918, %v1610
      %v1952 = vsel %vm1934, %v1919, %v1612
      %v1953 = vsel %vm1934, %v1920, %v1614
      %v1954 = vsel %vm1934, %v1921, %v1616
      %v1955 = vsel %vm1934, %v1922, %v1618
      %v1956 = vsel %vm1934, %v1923, %v1620
      %v1957 = vsel %vm1934, %v1924, %v1622
      %v1958 = vsel %vm1934, %v1925, %v1624
      %v1959 = vsel %vm1934, %v1926, %v1626
      %v1960 = vsel %vm1934, %v1927, %v1628
      %v1961 = vsel %vm1934, %v1928, %v1630
      %v1962 = vsel %vm1934, %v1929, %v1632
      %v1963 = vsel %vm1934, %v1930, %v1634
      %v1964 = vsel %vm1934, %v1931, %v1636
      %v1965 = vsel %vm1934, %v1932, %v1638
      %v1966 = vsel %vm1934, %v1933, %v1640
      %vm1967 = vcmask 916480
      %v1968 = vsel %vm1967, %v1935, %v1674
      %v1969 = vsel %vm1967, %v1936, %v1676
      %v1970 = vsel %vm1967, %v1937, %v1678
      %v1971 = vsel %vm1967, %v1938, %v1680
      %v1972 = vsel %vm1967, %v1939, %v1682
      %v1973 = vsel %vm1967, %v1940, %v1684
      %v1974 = vsel %vm1967, %v1941, %v1686
      %v1975 = vsel %vm1967, %v1942, %v1688
      %v1976 = vsel %vm1967, %v1943, %v1690
      %v1977 = vsel %vm1967, %v1944, %v1692
      %v1978 = vsel %vm1967, %v1945, %v1694
      %v1979 = vsel %vm1967, %v1946, %v1696
      %v1980 = vsel %vm1967, %v1947, %v1698
      %v1981 = vsel %vm1967, %v1948, %v1700
      %v1982 = vsel %vm1967, %v1949, %v1702
      %v1983 = vsel %vm1967, %v1950, %v1704
      %v1984 = vsel %vm1967, %v1951, %v1706
      %v1985 = vsel %vm1967, %v1952, %v1708
      %v1986 = vsel %vm1967, %v1953, %v1710
      %v1987 = vsel %vm1967, %v1954, %v1712
      %v1988 = vsel %vm1967, %v1955, %v1714
      %v1989 = vsel %vm1967, %v1956, %v1716
      %v1990 = vsel %vm1967, %v1957, %v1718
      %v1991 = vsel %vm1967, %v1958, %v1720
      %v1992 = vsel %vm1967, %v1959, %v1722
      %v1993 = vsel %vm1967, %v1960, %v1724
      %v1994 = vsel %vm1967, %v1961, %v1726
      %v1995 = vsel %vm1967, %v1962, %v1728
      %v1996 = vsel %vm1967, %v1963, %v1730
      %v1997 = vsel %vm1967, %v1964, %v1732
      %v1998 = vsel %vm1967, %v1965, %v1734
      %v1999 = vsel %vm1967, %v1966, %v1736
      %v2000 = vpack.c.bf16 %v1969, %v1968
      %v2001 = vpack.c.bf16 %v987, %v985
      %v2002 = vpack.c.bf16 %v1971, %v1970
      %v2003 = vpack.c.bf16 %v992, %v990
      %v2004 = vpack.c.bf16 %v1973, %v1972
      %v2005 = vpack.c.bf16 %v997, %v995
      %v2006 = vpack.c.bf16 %v1975, %v1974
      %v2007 = vpack.c.bf16 %v1002, %v1000
      %v2008 = vpack.c.bf16 %v1977, %v1976
      %v2009 = vpack.c.bf16 %v1007, %v1005
      %v2010 = vpack.c.bf16 %v1979, %v1978
      %v2011 = vpack.c.bf16 %v1012, %v1010
      %v2012 = vpack.c.bf16 %v1981, %v1980
      %v2013 = vpack.c.bf16 %v1017, %v1015
      %v2014 = vpack.c.bf16 %v1983, %v1982
      %v2015 = vpack.c.bf16 %v1022, %v1020
      %v2016 = vpack.c.bf16 %v1985, %v1984
      %v2017 = vpack.c.bf16 %v1027, %v1025
      %v2018 = vpack.c.bf16 %v1987, %v1986
      %v2019 = vpack.c.bf16 %v1032, %v1030
      %v2020 = vpack.c.bf16 %v1989, %v1988
      %v2021 = vpack.c.bf16 %v1037, %v1035
      %v2022 = vpack.c.bf16 %v1991, %v1990
      %v2023 = vpack.c.bf16 %v1042, %v1040
      %v2024 = vpack.c.bf16 %v1993, %v1992
      %v2025 = vpack.c.bf16 %v1047, %v1045
      %v2026 = vpack.c.bf16 %v1995, %v1994
      %v2027 = vpack.c.bf16 %v1052, %v1050
      %v2028 = vpack.c.bf16 %v1997, %v1996
      %v2029 = vpack.c.bf16 %v1064, %v1062
      %v2030 = vpack.c.bf16 %v1999, %v1998
      %v2031 = vpack.c.bf16 %v977, %v975
      %v2032 = vld [vmem:[%s5] sm:$0xf]
      %v2033 = vld [vmem:[%s5 + $0x4] sm:$0xf]
      %v2034 = vld [vmem:[%s5 + $0x8] sm:$0xf]
      %v2035 = vld [vmem:[%s5 + $0xc] sm:$0xf]
      %v2036 = vld [vmem:[%s5 + $0x10] sm:$0xf]
      %v2037 = vld [vmem:[%s5 + $0x14] sm:$0xf]
      %v2038 = vld [vmem:[%s5 + $0x18] sm:$0xf]
      %v2039 = vld [vmem:[%s5 + $0x1c] sm:$0xf]
      %v2040 = vld [vmem:[%s5 + $0x20] sm:$0xf]
      %v2041 = vld [vmem:[%s5 + $0x24] sm:$0xf]
      %v2042 = vld [vmem:[%s5 + $0x28] sm:$0xf]
      %v2043 = vld [vmem:[%s5 + $0x2c] sm:$0xf]
      %v2044 = vld [vmem:[%s5 + $0x30] sm:$0xf]
      %v2045 = vld [vmem:[%s5 + $0x34] sm:$0xf]
      %v2046 = vld [vmem:[%s5 + $0x38] sm:$0xf]
      %v2047 = vld [vmem:[%s5 + $0x3c] sm:$0xf]
      %v2048 = vld [vmem:[%s5 + $0x40] sm:$0xf]
      %v2049 = vld [vmem:[%s5 + $0x44] sm:$0xf]
      %v2050 = vld [vmem:[%s6] sm:$0x1]
      %v2052 = vlaneseq
      %v2053 = vshrl.u32 %v2052, 7
      %v2054 = vsub.s32 0, %v2053
      %v2055 = vrot.slane %v2050, %v2054
      %v2075 = vunpack.c.l.b16 %v2032
      %v2076 = vunpack.c.l.b16 %v2033
      %v2077 = vunpack.c.l.b16 %v2034
      %v2078 = vunpack.c.l.b16 %v2035
      %v2079 = vunpack.c.l.b16 %v2036
      %v2080 = vunpack.c.l.b16 %v2037
      %v2081 = vunpack.c.l.b16 %v2038
      %v2082 = vunpack.c.l.b16 %v2039
      %v2083 = vunpack.c.l.b16 %v2040
      %v2084 = vunpack.c.l.b16 %v2041
      %v2085 = vunpack.c.l.b16 %v2042
      %v2086 = vunpack.c.l.b16 %v2043
      %v2087 = vunpack.c.l.b16 %v2044
      %v2088 = vunpack.c.l.b16 %v2045
      %v2089 = vunpack.c.l.b16 %v2046
      %v2090 = vunpack.c.l.b16 %v2047
      %v2091 = vunpack.c.l.b16 %v2048
      %v2092 = vunpack.c.l.b16 %v2049
      %v2093 = vpack.c.b16 %v2076, %v2075
      %v2094 = vpack.c.b16 %v2078, %v2077
      %v2095 = vpack.c.b16 %v2080, %v2079
      %v2096 = vpack.c.b16 %v2082, %v2081
      %v2097 = vpack.c.b16 %v2084, %v2083
      %v2098 = vpack.c.b16 %v2086, %v2085
      %v2099 = vpack.c.b16 %v2088, %v2087
      %v2100 = vpack.c.b16 %v2090, %v2089
      %v2101 = vpack.c.b16 %v2092, %v2091
      %v2112 = vsel %vm1769, %v2001, 0
      %v2115 = vsel %vm1769, %v2003, 0
      %v2118 = vsel %vm1769, %v2005, 0
      %v2121 = vsel %vm1769, %v2007, 0
      %v2124 = vsel %vm1769, %v2009, 0
      %v2127 = vsel %vm1769, %v2011, 0
      %v2130 = vsel %vm1769, %v2013, 0
      %v2133 = vsel %vm1769, %v2015, 0
      %v2136 = vsel %vm1769, %v2017, 0
      %v2139 = vsel %vm1769, %v2019, 0
      %v2142 = vsel %vm1769, %v2021, 0
      %v2145 = vsel %vm1769, %v2023, 0
      %v2148 = vsel %vm1769, %v2025, 0
      %v2151 = vsel %vm1769, %v2027, 0
      %v2154 = vsel %vm1769, %v2029, 0
      %v2157 = vsel %vm1769, %v2031, 0
      %2159 = vmatprep.subr.bf16.mxu0 0
      %2160 = vmatpush1.bf16.msra.mxu0 %v2100
      %2161 = vmatprep.subr.bf16.mxu0 0
      %2162 = vmatpush1.bf16.msra.mxu0 %v2099
      %2163 = vmatprep.subr.bf16.mxu0 0
      %2164 = vmatpush1.bf16.msra.mxu0 %v2098
      %2165 = vmatprep.subr.bf16.mxu0 0
      %2166 = vmatpush1.bf16.msra.mxu0 %v2097
      %2167 = vmatprep.subr.bf16.mxu0 0
      %2168 = vmatpush1.bf16.msra.mxu0 %v2096
      %2169 = vmatprep.subr.bf16.mxu0 0
      %2170 = vmatpush1.bf16.msra.mxu0 %v2095
      %2171 = vmatprep.subr.bf16.mxu0 0
      %2172 = vmatpush1.bf16.msra.mxu0 %v2094
      %2173 = vmatprep.subr.bf16.mxu0 0
      %2174 = vmatpush1.bf16.msra.mxu0 %v2093
      %2175 = vmatprep.subr.bf16.mxu0 0
      %2176 = vmatpush2.bf16.msra.mxu0 0
      %2177 = vmatprep.subr.bf16.mxu0 0
      %2178 = vmatpush2.bf16.msra.mxu0 0
      %2179 = vmatprep.subr.bf16.mxu0 0
      %2180 = vmatpush2.bf16.msra.mxu0 0
      %2181 = vmatprep.subr.bf16.mxu0 0
      %2182 = vmatpush2.bf16.msra.mxu0 0
      %2183 = vmatprep.subr.bf16.mxu0 0
      %2184 = vmatpush2.bf16.msra.mxu0 0
      %2185 = vmatprep.subr.bf16.mxu0 0
      %2186 = vmatpush2.bf16.msra.mxu0 0
      %2187 = vmatprep.subr.bf16.mxu0 0
      %2188 = vmatpush2.bf16.msra.mxu0 0
      %2189 = vmatprep.subr.bf16.mxu0 0
      %2190 = vmatpush2.bf16.msra.mxu0 %v2101
      %2191 = vmatprep.mubr.bf16.mxu0 %v2112
      %2192 = vmatmul.mubr.bf16.gmra.mxu0 %v2000
      %v2193 = vpop.f32.mrf.mxu0
      %v2194 = vadd.f32 %v2055, %v2193
      %v2195 = vpop.f32.mrf.mxu0
      %v2196 = vpop.f32.mrf.mxu0
      %v2197 = vadd.f32 %v2055, %v2196
      %v2198 = vpop.f32.mrf.mxu0
      %2199 = vmatprep.mubr.bf16.mxu0 %v2115
      %2200 = vmatmul.mubr.bf16.gmra.mxu0 %v2002
      %v2201 = vpop.f32.mrf.mxu0
      %v2202 = vadd.f32 %v2055, %v2201
      %v2203 = vpop.f32.mrf.mxu0
      %v2204 = vpop.f32.mrf.mxu0
      %v2205 = vadd.f32 %v2055, %v2204
      %v2206 = vpop.f32.mrf.mxu0
      %2207 = vmatprep.mubr.bf16.mxu0 %v2118
      %2208 = vmatmul.mubr.bf16.gmra.mxu0 %v2004
      %v2209 = vpop.f32.mrf.mxu0
      %v2210 = vadd.f32 %v2055, %v2209
      %v2211 = vpop.f32.mrf.mxu0
      %v2212 = vpop.f32.mrf.mxu0
      %v2213 = vadd.f32 %v2055, %v2212
      %v2214 = vpop.f32.mrf.mxu0
      %2215 = vmatprep.mubr.bf16.mxu0 %v2121
      %2216 = vmatmul.mubr.bf16.gmra.mxu0 %v2006
      %v2217 = vpop.f32.mrf.mxu0
      %v2218 = vadd.f32 %v2055, %v2217
      %v2219 = vpop.f32.mrf.mxu0
      %v2220 = vpop.f32.mrf.mxu0
      %v2221 = vadd.f32 %v2055, %v2220
      %v2222 = vpop.f32.mrf.mxu0
      %2223 = vmatprep.mubr.bf16.mxu0 %v2124
      %2224 = vmatmul.mubr.bf16.gmra.mxu0 %v2008
      %v2225 = vpop.f32.mrf.mxu0
      %v2226 = vadd.f32 %v2055, %v2225
      %v2227 = vpop.f32.mrf.mxu0
      %v2228 = vpop.f32.mrf.mxu0
      %v2229 = vadd.f32 %v2055, %v2228
      %v2230 = vpop.f32.mrf.mxu0
      %2231 = vmatprep.mubr.bf16.mxu0 %v2127
      %2232 = vmatmul.mubr.bf16.gmra.mxu0 %v2010
      %v2233 = vpop.f32.mrf.mxu0
      %v2234 = vadd.f32 %v2055, %v2233
      %v2235 = vpop.f32.mrf.mxu0
      %v2236 = vpop.f32.mrf.mxu0
      %v2237 = vadd.f32 %v2055, %v2236
      %v2238 = vpop.f32.mrf.mxu0
      %2239 = vmatprep.mubr.bf16.mxu0 %v2130
      %2240 = vmatmul.mubr.bf16.gmra.mxu0 %v2012
      %v2241 = vpop.f32.mrf.mxu0
      %v2242 = vadd.f32 %v2055, %v2241
      %v2243 = vpop.f32.mrf.mxu0
      %v2244 = vpop.f32.mrf.mxu0
      %v2245 = vadd.f32 %v2055, %v2244
      %v2246 = vpop.f32.mrf.mxu0
      %2247 = vmatprep.mubr.bf16.mxu0 %v2133
      %2248 = vmatmul.mubr.bf16.gmra.mxu0 %v2014
      %v2249 = vpop.f32.mrf.mxu0
      %v2250 = vadd.f32 %v2055, %v2249
      %v2251 = vpop.f32.mrf.mxu0
      %v2252 = vpop.f32.mrf.mxu0
      %v2253 = vadd.f32 %v2055, %v2252
      %v2254 = vpop.f32.mrf.mxu0
      %2255 = vmatprep.mubr.bf16.mxu0 %v2136
      %2256 = vmatmul.mubr.bf16.gmra.mxu0 %v2016
      %v2257 = vpop.f32.mrf.mxu0
      %v2258 = vadd.f32 %v2055, %v2257
      %v2259 = vpop.f32.mrf.mxu0
      %v2260 = vpop.f32.mrf.mxu0
      %v2261 = vadd.f32 %v2055, %v2260
      %v2262 = vpop.f32.mrf.mxu0
      %2263 = vmatprep.mubr.bf16.mxu0 %v2139
      %2264 = vmatmul.mubr.bf16.gmra.mxu0 %v2018
      %v2265 = vpop.f32.mrf.mxu0
      %v2266 = vadd.f32 %v2055, %v2265
      %v2267 = vpop.f32.mrf.mxu0
      %v2268 = vpop.f32.mrf.mxu0
      %v2269 = vadd.f32 %v2055, %v2268
      %v2270 = vpop.f32.mrf.mxu0
      %2271 = vmatprep.mubr.bf16.mxu0 %v2142
      %2272 = vmatmul.mubr.bf16.gmra.mxu0 %v2020
      %v2273 = vpop.f32.mrf.mxu0
      %v2274 = vadd.f32 %v2055, %v2273
      %v2275 = vpop.f32.mrf.mxu0
      %v2276 = vpop.f32.mrf.mxu0
      %v2277 = vadd.f32 %v2055, %v2276
      %v2278 = vpop.f32.mrf.mxu0
      %2279 = vmatprep.mubr.bf16.mxu0 %v2145
      %2280 = vmatmul.mubr.bf16.gmra.mxu0 %v2022
      %v2281 = vpop.f32.mrf.mxu0
      %v2282 = vadd.f32 %v2055, %v2281
      %v2283 = vpop.f32.mrf.mxu0
      %v2284 = vpop.f32.mrf.mxu0
      %v2285 = vadd.f32 %v2055, %v2284
      %v2286 = vpop.f32.mrf.mxu0
      %2287 = vmatprep.mubr.bf16.mxu0 %v2148
      %2288 = vmatmul.mubr.bf16.gmra.mxu0 %v2024
      %v2289 = vpop.f32.mrf.mxu0
      %v2290 = vadd.f32 %v2055, %v2289
      %v2291 = vpop.f32.mrf.mxu0
      %v2292 = vpop.f32.mrf.mxu0
      %v2293 = vadd.f32 %v2055, %v2292
      %v2294 = vpop.f32.mrf.mxu0
      %2295 = vmatprep.mubr.bf16.mxu0 %v2151
      %2296 = vmatmul.mubr.bf16.gmra.mxu0 %v2026
      %v2297 = vpop.f32.mrf.mxu0
      %v2298 = vadd.f32 %v2055, %v2297
      %v2299 = vpop.f32.mrf.mxu0
      %v2300 = vpop.f32.mrf.mxu0
      %v2301 = vadd.f32 %v2055, %v2300
      %v2302 = vpop.f32.mrf.mxu0
      %2303 = vmatprep.mubr.bf16.mxu0 %v2154
      %2304 = vmatmul.mubr.bf16.gmra.mxu0 %v2028
      %v2305 = vpop.f32.mrf.mxu0
      %v2306 = vadd.f32 %v2055, %v2305
      %v2307 = vpop.f32.mrf.mxu0
      %v2308 = vpop.f32.mrf.mxu0
      %v2309 = vadd.f32 %v2055, %v2308
      %v2310 = vpop.f32.mrf.mxu0
      %2311 = vmatprep.mubr.bf16.mxu0 %v2157
      %2312 = vmatmul.mubr.bf16.gmra.mxu0 %v2030
      %v2313 = vpop.f32.mrf.mxu0
      %v2314 = vadd.f32 %v2055, %v2313
      %v2315 = vpop.f32.mrf.mxu0
      %v2316 = vpop.f32.mrf.mxu0
      %v2317 = vadd.f32 %v2055, %v2316
      %v2318 = vpop.f32.mrf.mxu0
      %2319 = vdwg.mxu0
      %2352 = vrot.lane.b32.xlu0 %v280, 4
      %v2353 = vpop.permute.xlu0 %2352
      %2354 = vrot.lane.b32.xlu0 %v281, 4
      %v2355 = vpop.permute.xlu0 %2354
      %2356 = vrot.lane.b32.xlu0 %v282, 4
      %v2357 = vpop.permute.xlu0 %2356
      %2358 = vrot.lane.b32.xlu0 %v283, 4
      %v2359 = vpop.permute.xlu0 %2358
      %2360 = vrot.lane.b32.xlu0 %v284, 4
      %v2361 = vpop.permute.xlu0 %2360
      %2362 = vrot.lane.b32.xlu0 %v285, 4
      %v2363 = vpop.permute.xlu0 %2362
      %2364 = vrot.lane.b32.xlu0 %v286, 4
      %v2365 = vpop.permute.xlu0 %2364
      %2366 = vrot.lane.b32.xlu0 %v287, 4
      %v2367 = vpop.permute.xlu0 %2366
      %2368 = vrot.lane.b32.xlu0 %v288, 4
      %v2369 = vpop.permute.xlu0 %2368
      %2370 = vrot.lane.b32.xlu0 %v289, 4
      %v2371 = vpop.permute.xlu0 %2370
      %2372 = vrot.lane.b32.xlu0 %v290, 4
      %v2373 = vpop.permute.xlu0 %2372
      %2374 = vrot.lane.b32.xlu0 %v291, 4
      %v2375 = vpop.permute.xlu0 %2374
      %2376 = vrot.lane.b32.xlu0 %v292, 4
      %v2377 = vpop.permute.xlu0 %2376
      %2378 = vrot.lane.b32.xlu0 %v293, 4
      %v2379 = vpop.permute.xlu0 %2378
      %2380 = vrot.lane.b32.xlu0 %v294, 4
      %v2381 = vpop.permute.xlu0 %2380
      %2382 = vrot.lane.b32.xlu0 %v295, 4
      %v2383 = vpop.permute.xlu0 %2382
      %2384 = vrot.lane.b32.xlu0 %v296, 4
      %v2385 = vpop.permute.xlu0 %2384
      %2386 = vrot.lane.b32.xlu0 %v297, 4
      %v2387 = vpop.permute.xlu0 %2386
      %2388 = vrot.lane.b32.xlu0 %v298, 4
      %v2389 = vpop.permute.xlu0 %2388
      %2390 = vrot.lane.b32.xlu0 %v299, 4
      %v2391 = vpop.permute.xlu0 %2390
      %2392 = vrot.lane.b32.xlu0 %v300, 4
      %v2393 = vpop.permute.xlu0 %2392
      %2394 = vrot.lane.b32.xlu0 %v301, 4
      %v2395 = vpop.permute.xlu0 %2394
      %2396 = vrot.lane.b32.xlu0 %v302, 4
      %v2397 = vpop.permute.xlu0 %2396
      %2398 = vrot.lane.b32.xlu0 %v303, 4
      %v2399 = vpop.permute.xlu0 %2398
      %2400 = vrot.lane.b32.xlu0 %v304, 4
      %v2401 = vpop.permute.xlu0 %2400
      %2402 = vrot.lane.b32.xlu0 %v305, 4
      %v2403 = vpop.permute.xlu0 %2402
      %2404 = vrot.lane.b32.xlu0 %v306, 4
      %v2405 = vpop.permute.xlu0 %2404
      %2406 = vrot.lane.b32.xlu0 %v307, 4
      %v2407 = vpop.permute.xlu0 %2406
      %2408 = vrot.lane.b32.xlu0 %v308, 4
      %v2409 = vpop.permute.xlu0 %2408
      %2410 = vrot.lane.b32.xlu0 %v309, 4
      %v2411 = vpop.permute.xlu0 %2410
      %2412 = vrot.lane.b32.xlu0 %v310, 4
      %v2413 = vpop.permute.xlu0 %2412
      %2414 = vrot.lane.b32.xlu0 %v311, 4
      %v2415 = vpop.permute.xlu0 %2414
      %v2448 = vsel %vm446, %v2194, %v2353
      %v2449 = vsel %vm446, %v2197, %v2355
      %v2450 = vsel %vm446, %v2202, %v2357
      %v2451 = vsel %vm446, %v2205, %v2359
      %v2452 = vsel %vm446, %v2210, %v2361
      %v2453 = vsel %vm446, %v2213, %v2363
      %v2454 = vsel %vm446, %v2218, %v2365
      %v2455 = vsel %vm446, %v2221, %v2367
      %v2456 = vsel %vm446, %v2226, %v2369
      %v2457 = vsel %vm446, %v2229, %v2371
      %v2458 = vsel %vm446, %v2234, %v2373
      %v2459 = vsel %vm446, %v2237, %v2375
      %v2460 = vsel %vm446, %v2242, %v2377
      %v2461 = vsel %vm446, %v2245, %v2379
      %v2462 = vsel %vm446, %v2250, %v2381
      %v2463 = vsel %vm446, %v2253, %v2383
      %v2464 = vsel %vm446, %v2258, %v2385
      %v2465 = vsel %vm446, %v2261, %v2387
      %v2466 = vsel %vm446, %v2266, %v2389
      %v2467 = vsel %vm446, %v2269, %v2391
      %v2468 = vsel %vm446, %v2274, %v2393
      %v2469 = vsel %vm446, %v2277, %v2395
      %v2470 = vsel %vm446, %v2282, %v2397
      %v2471 = vsel %vm446, %v2285, %v2399
      %v2472 = vsel %vm446, %v2290, %v2401
      %v2473 = vsel %vm446, %v2293, %v2403
      %v2474 = vsel %vm446, %v2298, %v2405
      %v2475 = vsel %vm446, %v2301, %v2407
      %v2476 = vsel %vm446, %v2306, %v2409
      %v2477 = vsel %vm446, %v2309, %v2411
      %v2478 = vsel %vm446, %v2314, %v2413
      %v2479 = vsel %vm446, %v2317, %v2415
      %vm2480 = vcmask 64512
      %2481 = vst.msk [vmem:[%s278] sm:$0xff] %vm2480, %v2448
      %2482 = vst.msk [vmem:[%s278 + $0x8] sm:$0xff] %vm2480, %v2449
      %2483 = vst.msk [vmem:[%s278 + $0x10] sm:$0xff] %vm2480, %v2450
      %2484 = vst.msk [vmem:[%s278 + $0x18] sm:$0xff] %vm2480, %v2451
      %2485 = vst.msk [vmem:[%s278 + $0x20] sm:$0xff] %vm2480, %v2452
      %2486 = vst.msk [vmem:[%s278 + $0x28] sm:$0xff] %vm2480, %v2453
      %2487 = vst.msk [vmem:[%s278 + $0x30] sm:$0xff] %vm2480, %v2454
      %2488 = vst.msk [vmem:[%s278 + $0x38] sm:$0xff] %vm2480, %v2455
      %2489 = vst.msk [vmem:[%s278 + $0x40] sm:$0xff] %vm2480, %v2456
      %2490 = vst.msk [vmem:[%s278 + $0x48] sm:$0xff] %vm2480, %v2457
      %2491 = vst.msk [vmem:[%s278 + $0x50] sm:$0xff] %vm2480, %v2458
      %2492 = vst.msk [vmem:[%s278 + $0x58] sm:$0xff] %vm2480, %v2459
      %2493 = vst.msk [vmem:[%s278 + $0x60] sm:$0xff] %vm2480, %v2460
      %2494 = vst.msk [vmem:[%s278 + $0x68] sm:$0xff] %vm2480, %v2461
      %2495 = vst.msk [vmem:[%s278 + $0x70] sm:$0xff] %vm2480, %v2462
      %2496 = vst.msk [vmem:[%s278 + $0x78] sm:$0xff] %vm2480, %v2463
      %2497 = vst.msk [vmem:[%s278 + $0x80] sm:$0xff] %vm2480, %v2464
      %2498 = vst.msk [vmem:[%s278 + $0x88] sm:$0xff] %vm2480, %v2465
      %2499 = vst.msk [vmem:[%s278 + $0x90] sm:$0xff] %vm2480, %v2466
      %2500 = vst.msk [vmem:[%s278 + $0x98] sm:$0xff] %vm2480, %v2467
      %2501 = vst.msk [vmem:[%s278 + $0xa0] sm:$0xff] %vm2480, %v2468
      %2502 = vst.msk [vmem:[%s278 + $0xa8] sm:$0xff] %vm2480, %v2469
      %2503 = vst.msk [vmem:[%s278 + $0xb0] sm:$0xff] %vm2480, %v2470
      %2504 = vst.msk [vmem:[%s278 + $0xb8] sm:$0xff] %vm2480, %v2471
      %2505 = vst.msk [vmem:[%s278 + $0xc0] sm:$0xff] %vm2480, %v2472
      %2506 = vst.msk [vmem:[%s278 + $0xc8] sm:$0xff] %vm2480, %v2473
      %2507 = vst.msk [vmem:[%s278 + $0xd0] sm:$0xff] %vm2480, %v2474
      %2508 = vst.msk [vmem:[%s278 + $0xd8] sm:$0xff] %vm2480, %v2475
      %2509 = vst.msk [vmem:[%s278 + $0xe0] sm:$0xff] %vm2480, %v2476
      %2510 = vst.msk [vmem:[%s278 + $0xe8] sm:$0xff] %vm2480, %v2477
      %2511 = vst.msk [vmem:[%s278 + $0xf0] sm:$0xff] %vm2480, %v2478
      %2512 = vst.msk [vmem:[%s278 + $0xf8] sm:$0xff] %vm2480, %v2479
      %p2513 = scmp.lt.s32.totalorder %s18, 1
      %s2514 = scalar_select %p2513, %s18, 1
      %s2515 = smul.addr %s2514, 32
      %s2516 = smul.addr %s2515, 8
      %s2517 = scalar_lea.vmem %s7, %s2516
      // Predicated region
      $region49: #{dense_block_forward_nchw.3} parent=47 // pred_check
        %p2518 = pneg %p188
      $region50: #{dense_block_forward_nchw.3} parent=47 // pred_check_branch
        %2520 = sbr.rel (%p2518) target = $region52
      $region51: #{dense_block_forward_nchw.3} parent=47 // pred_region
        _
      $region52: #{dense_block_forward_nchw.3} parent=47 // pred_fallthru
        _
    $region48: #{dense_block_forward_nchw.3} parent=5 // pred_fallthru
      _
    %p2521 = scmp.le.s32.totalorder 2, %s13
    // Predicated region
    $region53: #{dense_block_forward_nchw.3} parent=5 // pred_check
      %p2522 = pneg %p2521
    $region54: #{dense_block_forward_nchw.3} parent=5 // pred_check_branch
      %2524 = sbr.rel (%p2522) target = $region56
    $region55: #{dense_block_forward_nchw.3} parent=5 // pred_region
      %s2525 = ssub.s32 %s13, 2
      // Predicated region
      $region57: #{dense_block_forward_nchw.3} parent=55 // pred_check
        %p2526 = pneg %p194
      $region58: #{dense_block_forward_nchw.3} parent=55 // pred_check_branch
        %2528 = sbr.rel (%p2526) target = $region60
      $region59: #{dense_block_forward_nchw.3} parent=55 // pred_region
        %p2529 = scmp.lt.s32.totalorder %s19, 1
        %s2530 = scalar_select %p2529, %s19, 1
        %s2531 = smul.addr %s2530, 32
        %s2532 = smul.addr %s2531, 8
        %s2533 = scalar_lea.vmem %s7, %s2532
      $region60: #{dense_block_forward_nchw.3} parent=55 // pred_fallthru
        _
    $region56: #{dense_block_forward_nchw.3} parent=5 // pred_fallthru
      _
  $region6: #{dense_block_forward_nchw.3} parent=0 // loop_footer
    %s17 = sadd.s32 1, %s13
  $region7: #{dense_block_forward_nchw.3} parent=0 // loop_footer_branch
    %12 = sbr.rel target = $region3
  $region8: #{dense_block_forward_nchw.3} parent=0 // loop_exit
    _

// kernel: dense_block_forward_nchw.4
$region0: #{dense_block_forward_nchw.4}
  #allocation0 [shape = 'u32[]', space=smem, size = 0x4, offset = 0x4, fixed_abs, tag = 'smem constant byte address 0x4 - core index']
  #allocation1 [shape = 'u32[144,128]{1,0:T(1,128)}', space=vmem, size = 0x12000, scoped, tag = 'internal scratch']
  %s0 = inlined_call_operand.vmem [shape: f32[2,16,16,8], index: 0, kind: input, shape index: {}]
  %s1 = inlined_call_operand.vmem [shape: f32[1,8], index: 1, kind: input, shape index: {}]
  %s2 = inlined_call_operand.vmem [shape: f32[1,8], index: 2, kind: input, shape index: {}]
  %s3 = inlined_call_operand.vmem [shape: bf16[8,16], index: 3, kind: input, shape index: {}]
  %s4 = inlined_call_operand.vmem [shape: f32[1,16], index: 4, kind: input, shape index: {}]
  %s5 = inlined_call_operand.vmem [shape: bf16[144,4], index: 5, kind: input, shape index: {}]
  %s6 = inlined_call_operand.vmem [shape: f32[1,4], index: 6, kind: input, shape index: {}]
  %s7 = inlined_call_operand.vmem [shape: f32[2,16,16,12], index: 7, kind: output, shape index: {}]
  %s8 = sld [smem:[#allocation0]]
  $region61: #{dense_block_forward_nchw.4} parent=0
    _
  %s10 = ssub.s32 1, %s8
  %s11 = scalar_select 0, %s10, %s8
  loop: start=0, step=1, limit=4
  $region2: #{dense_block_forward_nchw.4} parent=0 // loop_pre_header
    _
  $region3: #{dense_block_forward_nchw.4} parent=0 // loop_header
    %s13 = sphi 0, %s17
    %p14 = scmp.ge.s32.totalorder %s13, 4
    %s23 = sphi 0, %s25
    %s26 = sphi 0, %s23
    %s27 = sphi 0, %s26
    %s43 = sphi 0, %s27
    %s47 = sphi 0, %s47
    %s49 = sphi 0, %s47
    %s50 = sphi 0, %s49
    %s64 = sphi 0, %s50
    %s68 = sphi 0, %s68
    %s70 = sphi 0, %s68
    %s71 = sphi 0, %s70
    %s85 = sphi 0, %s71
    %s89 = sphi 0, %s89
    %s91 = sphi 0, %s89
    %s92 = sphi 0, %s91
    %s106 = sphi 0, %s92
    %s110 = sphi 0, %s110
    %s112 = sphi 0, %s110
    %s113 = sphi 0, %s112
    %s127 = sphi 0, %s113
    %s131 = sphi 0, %s131
    %s133 = sphi 0, %s131
    %s134 = sphi 0, %s133
    %s148 = sphi 0, %s134
    %s152 = sphi 0, %s152
    %s154 = sphi 0, %s152
    %s155 = sphi 0, %s154
    %s169 = sphi 0, %s155
    %s175 = sphi 0, %s177
    %s178 = sphi 0, %s175
    %s179 = sphi 0, %s178
    %s195 = sphi 0, %s179
  $region4: #{dense_block_forward_nchw.4} parent=0 // loop_header_branch
    %16 = sbr.rel (%p14) target = $region8
  $region5: #{dense_block_forward_nchw.4} parent=0 // loop_body
    %s18 = ssub.s32 %s13, 1
    %s19 = ssub.s32 %s13, 2
    %s20 = sadd.s32 %s13, 1
    %s21 = ssub.s32 %s13, %s20
    %p22 = scmp.eq.s32.totalorder %s21, 0
    %s24 = sadd.s32 %s23, 1
    %s25 = scalar_select %p22, %s23, %s24
    %p28 = pneg %p22
    %p29 = scmp.eq.s32.totalorder %s13, 1
    %p30 = por %p28, %p29
    %p31 = scmp.ne.s32.totalorder %s23, %s26
    %p32 = scmp.eq.s32.totalorder %s13, 0
    %p33 = por %p31, %p32
    %p34 = scmp.ne.s32.totalorder %s23, %s26
    %p35 = scmp.eq.s32.totalorder %s18, 1
    %p36 = por %p34, %p35
    %p37 = scmp.ne.s32.totalorder %s26, %s27
    %p38 = scmp.eq.s32.totalorder %s18, 0
    %p39 = por %p37, %p38
    %p40 = scmp.ne.s32.totalorder %s26, %s27
    %p41 = scmp.eq.s32.totalorder %s19, 1
    %p42 = por %p40, %p41
    %p44 = scmp.ne.s32.totalorder %s27, %s43
    %p45 = scmp.eq.s32.totalorder %s19, 0
    %p46 = por %p44, %p45
    %s48 = sadd.s32 %s47, 1
    %p51 = scmp.eq.s32.totalorder %s13, 1
    %p52 = scmp.ne.s32.totalorder %s47, %s49
    %p53 = scmp.eq.s32.totalorder %s13, 0
    %p54 = por %p52, %p53
    %p55 = scmp.ne.s32.totalorder %s47, %s49
    %p56 = scmp.eq.s32.totalorder %s18, 1
    %p57 = por %p55, %p56
    %p58 = scmp.ne.s32.totalorder %s49, %s50
    %p59 = scmp.eq.s32.totalorder %s18, 0
    %p60 = por %p58, %p59
    %p61 = scmp.ne.s32.totalorder %s49, %s50
    %p62 = scmp.eq.s32.totalorder %s19, 1
    %p63 = por %p61, %p62
    %p65 = scmp.ne.s32.totalorder %s50, %s64
    %p66 = scmp.eq.s32.totalorder %s19, 0
    %p67 = por %p65, %p66
    %s69 = sadd.s32 %s68, 1
    %p72 = scmp.eq.s32.totalorder %s13, 1
    %p73 = scmp.ne.s32.totalorder %s68, %s70
    %p74 = scmp.eq.s32.totalorder %s13, 0
    %p75 = por %p73, %p74
    %p76 = scmp.ne.s32.totalorder %s68, %s70
    %p77 = scmp.eq.s32.totalorder %s18, 1
    %p78 = por %p76, %p77
    %p79 = scmp.ne.s32.totalorder %s70, %s71
    %p80 = scmp.eq.s32.totalorder %s18, 0
    %p81 = por %p79, %p80
    %p82 = scmp.ne.s32.totalorder %s70, %s71
    %p83 = scmp.eq.s32.totalorder %s19, 1
    %p84 = por %p82, %p83
    %p86 = scmp.ne.s32.totalorder %s71, %s85
    %p87 = scmp.eq.s32.totalorder %s19, 0
    %p88 = por %p86, %p87
    %s90 = sadd.s32 %s89, 1
    %p93 = scmp.eq.s32.totalorder %s13, 1
    %p94 = scmp.ne.s32.totalorder %s89, %s91
    %p95 = scmp.eq.s32.totalorder %s13, 0
    %p96 = por %p94, %p95
    %p97 = scmp.ne.s32.totalorder %s89, %s91
    %p98 = scmp.eq.s32.totalorder %s18, 1
    %p99 = por %p97, %p98
    %p100 = scmp.ne.s32.totalorder %s91, %s92
    %p101 = scmp.eq.s32.totalorder %s18, 0
    %p102 = por %p100, %p101
    %p103 = scmp.ne.s32.totalorder %s91, %s92
    %p104 = scmp.eq.s32.totalorder %s19, 1
    %p105 = por %p103, %p104
    %p107 = scmp.ne.s32.totalorder %s92, %s106
    %p108 = scmp.eq.s32.totalorder %s19, 0
    %p109 = por %p107, %p108
    %s111 = sadd.s32 %s110, 1
    %p114 = scmp.eq.s32.totalorder %s13, 1
    %p115 = scmp.ne.s32.totalorder %s110, %s112
    %p116 = scmp.eq.s32.totalorder %s13, 0
    %p117 = por %p115, %p116
    %p118 = scmp.ne.s32.totalorder %s110, %s112
    %p119 = scmp.eq.s32.totalorder %s18, 1
    %p120 = por %p118, %p119
    %p121 = scmp.ne.s32.totalorder %s112, %s113
    %p122 = scmp.eq.s32.totalorder %s18, 0
    %p123 = por %p121, %p122
    %p124 = scmp.ne.s32.totalorder %s112, %s113
    %p125 = scmp.eq.s32.totalorder %s19, 1
    %p126 = por %p124, %p125
    %p128 = scmp.ne.s32.totalorder %s113, %s127
    %p129 = scmp.eq.s32.totalorder %s19, 0
    %p130 = por %p128, %p129
    %s132 = sadd.s32 %s131, 1
    %p135 = scmp.eq.s32.totalorder %s13, 1
    %p136 = scmp.ne.s32.totalorder %s131, %s133
    %p137 = scmp.eq.s32.totalorder %s13, 0
    %p138 = por %p136, %p137
    %p139 = scmp.ne.s32.totalorder %s131, %s133
    %p140 = scmp.eq.s32.totalorder %s18, 1
    %p141 = por %p139, %p140
    %p142 = scmp.ne.s32.totalorder %s133, %s134
    %p143 = scmp.eq.s32.totalorder %s18, 0
    %p144 = por %p142, %p143
    %p145 = scmp.ne.s32.totalorder %s133, %s134
    %p146 = scmp.eq.s32.totalorder %s19, 1
    %p147 = por %p145, %p146
    %p149 = scmp.ne.s32.totalorder %s134, %s148
    %p150 = scmp.eq.s32.totalorder %s19, 0
    %p151 = por %p149, %p150
    %s153 = sadd.s32 %s152, 1
    %p156 = scmp.eq.s32.totalorder %s13, 1
    %p157 = scmp.ne.s32.totalorder %s152, %s154
    %p158 = scmp.eq.s32.totalorder %s13, 0
    %p159 = por %p157, %p158
    %p160 = scmp.ne.s32.totalorder %s152, %s154
    %p161 = scmp.eq.s32.totalorder %s18, 1
    %p162 = por %p160, %p161
    %p163 = scmp.ne.s32.totalorder %s154, %s155
    %p164 = scmp.eq.s32.totalorder %s18, 0
    %p165 = por %p163, %p164
    %p166 = scmp.ne.s32.totalorder %s154, %s155
    %p167 = scmp.eq.s32.totalorder %s19, 1
    %p168 = por %p166, %p167
    %p170 = scmp.ne.s32.totalorder %s155, %s169
    %p171 = scmp.eq.s32.totalorder %s19, 0
    %p172 = por %p170, %p171
    %s173 = ssub.s32 %s13, %s20
    %p174 = scmp.eq.s32.totalorder %s173, 0
    %s176 = sadd.s32 %s175, 1
    %s177 = scalar_select %p174, %s175, %s176
    %p180 = pneg %p174
    %p181 = scmp.eq.s32.totalorder %s13, 1
    %p182 = por %p180, %p181
    %p183 = scmp.ne.s32.totalorder %s175, %s178
    %p184 = scmp.eq.s32.totalorder %s13, 0
    %p185 = por %p183, %p184
    %p186 = scmp.ne.s32.totalorder %s175, %s178
    %p187 = scmp.eq.s32.totalorder %s18, 1
    %p188 = por %p186, %p187
    %p189 = scmp.ne.s32.totalorder %s178, %s179
    %p190 = scmp.eq.s32.totalorder %s18, 0
    %p191 = por %p189, %p190
    %p192 = scmp.ne.s32.totalorder %s178, %s179
    %p193 = scmp.eq.s32.totalorder %s19, 1
    %p194 = por %p192, %p193
    %p196 = scmp.ne.s32.totalorder %s179, %s195
    %p197 = scmp.eq.s32.totalorder %s19, 0
    %p198 = por %p196, %p197
    %p199 = scmp.le.s32.totalorder 1, %s13
    %p200 = scmp.lt.s32.totalorder %s13, 3
    %p201 = pnand %p199, %p200
    %p202 = pneg %p201
    // Predicated region
    $region9: #{dense_block_forward_nchw.4} parent=5 // pred_check
      _
    $region10: #{dense_block_forward_nchw.4} parent=5 // pred_check_branch
      %204 = sbr.rel (%p201) target = $region12
    $region11: #{dense_block_forward_nchw.4} parent=5 // pred_region
      %s205 = ssub.s32 %s13, 1
      // Predicated region
      $region13: #{dense_block_forward_nchw.4} parent=11 // pred_check
        %p206 = pneg %p60
      $region14: #{dense_block_forward_nchw.4} parent=11 // pred_check_branch
        %208 = sbr.rel (%p206) target = $region16
      $region15: #{dense_block_forward_nchw.4} parent=11 // pred_region
        _
      $region16: #{dense_block_forward_nchw.4} parent=11 // pred_fallthru
        _
      // Predicated region
      $region17: #{dense_block_forward_nchw.4} parent=11 // pred_check
        %p209 = pneg %p81
      $region18: #{dense_block_forward_nchw.4} parent=11 // pred_check_branch
        %211 = sbr.rel (%p209) target = $region20
      $region19: #{dense_block_forward_nchw.4} parent=11 // pred_region
        _
      $region20: #{dense_block_forward_nchw.4} parent=11 // pred_fallthru
        _
      // Predicated region
      $region21: #{dense_block_forward_nchw.4} parent=11 // pred_check
        %p212 = pneg %p102
      $region22: #{dense_block_forward_nchw.4} parent=11 // pred_check_branch
        %214 = sbr.rel (%p212) target = $region24
      $region23: #{dense_block_forward_nchw.4} parent=11 // pred_region
        _
      $region24: #{dense_block_forward_nchw.4} parent=11 // pred_fallthru
        _
      // Predicated region
      $region25: #{dense_block_forward_nchw.4} parent=11 // pred_check
        %p215 = pneg %p123
      $region26: #{dense_block_forward_nchw.4} parent=11 // pred_check_branch
        %217 = sbr.rel (%p215) target = $region28
      $region27: #{dense_block_forward_nchw.4} parent=11 // pred_region
        _
      $region28: #{dense_block_forward_nchw.4} parent=11 // pred_fallthru
        _
      // Predicated region
      $region29: #{dense_block_forward_nchw.4} parent=11 // pred_check
        %p218 = pneg %p144
      $region30: #{dense_block_forward_nchw.4} parent=11 // pred_check_branch
        %220 = sbr.rel (%p218) target = $region32
      $region31: #{dense_block_forward_nchw.4} parent=11 // pred_region
        _
      $region32: #{dense_block_forward_nchw.4} parent=11 // pred_fallthru
        _
      // Predicated region
      $region33: #{dense_block_forward_nchw.4} parent=11 // pred_check
        %p221 = pneg %p165
      $region34: #{dense_block_forward_nchw.4} parent=11 // pred_check_branch
        %223 = sbr.rel (%p221) target = $region36
      $region35: #{dense_block_forward_nchw.4} parent=11 // pred_region
        _
      $region36: #{dense_block_forward_nchw.4} parent=11 // pred_fallthru
        _
    $region12: #{dense_block_forward_nchw.4} parent=5 // pred_fallthru
      _
    %p224 = scmp.lt.s32.totalorder %s13, 2
    // Predicated region
    $region37: #{dense_block_forward_nchw.4} parent=5 // pred_check
      %p225 = pneg %p224
    $region38: #{dense_block_forward_nchw.4} parent=5 // pred_check_branch
      %227 = sbr.rel (%p225) target = $region40
    $region39: #{dense_block_forward_nchw.4} parent=5 // pred_region
      // Predicated region
      $region41: #{dense_block_forward_nchw.4} parent=39 // pred_check
        %p228 = pneg %p33
      $region42: #{dense_block_forward_nchw.4} parent=39 // pred_check_branch
        %230 = sbr.rel (%p228) target = $region44
      $region43: #{dense_block_forward_nchw.4} parent=39 // pred_region
        %p231 = scmp.lt.s32.totalorder %s13, 1
        %s232 = scalar_select %p231, %s13, 1
        %s233 = smul.addr %s232, 32
        %s234 = smul.addr %s233, 8
        %s235 = scalar_lea.vmem %s0, %s234
      $region44: #{dense_block_forward_nchw.4} parent=39 // pred_fallthru
        _
    $region40: #{dense_block_forward_nchw.4} parent=5 // pred_fallthru
      _
    %p236 = scmp.le.s32.totalorder 1, %s13
    %p237 = scmp.lt.s32.totalorder %s13, 3
    %p238 = pnand %p236, %p237
    %p239 = pneg %p238
    // Predicated region
    $region45: #{dense_block_forward_nchw.4} parent=5 // pred_check
      _
    $region46: #{dense_block_forward_nchw.4} parent=5 // pred_check_branch
      %241 = sbr.rel (%p238) target = $region48
    $region47: #{dense_block_forward_nchw.4} parent=5 // pred_region
      %s242 = ssub.s32 %s13, 1
      %p243 = scmp.lt.s32.totalorder %s18, 1
      %s244 = scalar_select %p243, %s18, 1
      %s245 = smul.addr %s244, 32
      %s246 = smul.addr %s245, 8
      %s247 = scalar_lea.vmem %s0, %s246
      %p248 = pneg %p39
      %p249 = pneg %p36
      %p250 = pneg %p60
      %p251 = pneg %p57
      %p252 = pneg %p81
      %p253 = pneg %p78
      %p254 = pneg %p102
      %p255 = pneg %p99
      %p256 = pneg %p123
      %p257 = pneg %p120
      %p258 = pneg %p144
      %p259 = pneg %p141
      %p260 = pneg %p165
      %p261 = pneg %p162
      %p262 = pneg %p191
      %p263 = pneg %p188
      %p264 = scmp.lt.s32.totalorder %s18, 1
      %s265 = scalar_select %p264, %s18, 1
      %s266 = smul.addr %s265, 32
      %s267 = smul.addr %s266, 8
      %s268 = scalar_lea.vmem %s7, %s267
      %p269 = scmp.lt.s32.totalorder %s18, 1
      %s270 = scalar_select %p269, %s18, 1
      %s271 = smul.addr %s270, 32
      %s272 = smul.addr %s271, 8
      %s273 = scalar_lea.vmem %s0, %s272
      %p274 = scmp.lt.s32.totalorder %s18, 1
      %s275 = scalar_select %p274, %s18, 1
      %s276 = smul.addr %s275, 32
      %s277 = smul.addr %s276, 8
      %s278 = scalar_lea.vmem %s7, %s277
      %v280 = vld [vmem:[%s273] sm:$0xff]
      %v281 = vld [vmem:[%s273 + $0x8] sm:$0xff]
      %v282 = vld [vmem:[%s273 + $0x10] sm:$0xff]
      %v283 = vld [vmem:[%s273 + $0x18] sm:$0xff]
      %v284 = vld [vmem:[%s273 + $0x20] sm:$0xff]
      %v285 = vld [vmem:[%s273 + $0x28] sm:$0xff]
      %v286 = vld [vmem:[%s273 + $0x30] sm:$0xff]
      %v287 = vld [vmem:[%s273 + $0x38] sm:$0xff]
      %v288 = vld [vmem:[%s273 + $0x40] sm:$0xff]
      %v289 = vld [vmem:[%s273 + $0x48] sm:$0xff]
      %v290 = vld [vmem:[%s273 + $0x50] sm:$0xff]
      %v291 = vld [vmem:[%s273 + $0x58] sm:$0xff]
      %v292 = vld [vmem:[%s273 + $0x60] sm:$0xff]
      %v293 = vld [vmem:[%s273 + $0x68] sm:$0xff]
      %v294 = vld [vmem:[%s273 + $0x70] sm:$0xff]
      %v295 = vld [vmem:[%s273 + $0x78] sm:$0xff]
      %v296 = vld [vmem:[%s273 + $0x80] sm:$0xff]
      %v297 = vld [vmem:[%s273 + $0x88] sm:$0xff]
      %v298 = vld [vmem:[%s273 + $0x90] sm:$0xff]
      %v299 = vld [vmem:[%s273 + $0x98] sm:$0xff]
      %v300 = vld [vmem:[%s273 + $0xa0] sm:$0xff]
      %v301 = vld [vmem:[%s273 + $0xa8] sm:$0xff]
      %v302 = vld [vmem:[%s273 + $0xb0] sm:$0xff]
      %v303 = vld [vmem:[%s273 + $0xb8] sm:$0xff]
      %v304 = vld [vmem:[%s273 + $0xc0] sm:$0xff]
      %v305 = vld [vmem:[%s273 + $0xc8] sm:$0xff]
      %v306 = vld [vmem:[%s273 + $0xd0] sm:$0xff]
      %v307 = vld [vmem:[%s273 + $0xd8] sm:$0xff]
      %v308 = vld [vmem:[%s273 + $0xe0] sm:$0xff]
      %v309 = vld [vmem:[%s273 + $0xe8] sm:$0xff]
      %v310 = vld [vmem:[%s273 + $0xf0] sm:$0xff]
      %v311 = vld [vmem:[%s273 + $0xf8] sm:$0xff]
      %v312 = vld [vmem:[%s1] sm:$0x1]
      %v314 = vlaneseq
      %v315 = vshrl.u32 %v314, 7
      %v316 = vsub.s32 0, %v315
      %v317 = vrot.slane %v312, %v316
      %v319 = vmul.f32 %v280, %v317
      %v320 = vmul.f32 %v281, %v317
      %v321 = vmul.f32 %v282, %v317
      %v322 = vmul.f32 %v283, %v317
      %v323 = vmul.f32 %v284, %v317
      %v324 = vmul.f32 %v285, %v317
      %v325 = vmul.f32 %v286, %v317
      %v326 = vmul.f32 %v287, %v317
      %v327 = vmul.f32 %v288, %v317
      %v328 = vmul.f32 %v289, %v317
      %v329 = vmul.f32 %v290, %v317
      %v330 = vmul.f32 %v291, %v317
      %v331 = vmul.f32 %v292, %v317
      %v332 = vmul.f32 %v293, %v317
      %v333 = vmul.f32 %v294, %v317
      %v334 = vmul.f32 %v295, %v317
      %v335 = vmul.f32 %v296, %v317
      %v336 = vmul.f32 %v297, %v317
      %v337 = vmul.f32 %v298, %v317
      %v338 = vmul.f32 %v299, %v317
      %v339 = vmul.f32 %v300, %v317
      %v340 = vmul.f32 %v301, %v317
      %v341 = vmul.f32 %v302, %v317
      %v342 = vmul.f32 %v303, %v317
      %v343 = vmul.f32 %v304, %v317
      %v344 = vmul.f32 %v305, %v317
      %v345 = vmul.f32 %v306, %v317
      %v346 = vmul.f32 %v307, %v317
      %v347 = vmul.f32 %v308, %v317
      %v348 = vmul.f32 %v309, %v317
      %v349 = vmul.f32 %v310, %v317
      %v350 = vmul.f32 %v311, %v317
      %v351 = vld [vmem:[%s2] sm:$0x1]
      %v353 = vlaneseq
      %v354 = vshrl.u32 %v353, 7
      %v355 = vsub.s32 0, %v354
      %v356 = vrot.slane %v351, %v355
      %v358 = vadd.f32 %v319, %v356
      %v359 = vadd.f32 %v320, %v356
      %v360 = vadd.f32 %v321, %v356
      %v361 = vadd.f32 %v322, %v356
      %v362 = vadd.f32 %v323, %v356
      %v363 = vadd.f32 %v324, %v356
      %v364 = vadd.f32 %v325, %v356
      %v365 = vadd.f32 %v326, %v356
      %v366 = vadd.f32 %v327, %v356
      %v367 = vadd.f32 %v328, %v356
      %v368 = vadd.f32 %v329, %v356
      %v369 = vadd.f32 %v330, %v356
      %v370 = vadd.f32 %v331, %v356
      %v371 = vadd.f32 %v332, %v356
      %v372 = vadd.f32 %v333, %v356
      %v373 = vadd.f32 %v334, %v356
      %v374 = vadd.f32 %v335, %v356
      %v375 = vadd.f32 %v336, %v356
      %v376 = vadd.f32 %v337, %v356
      %v377 = vadd.f32 %v338, %v356
      %v378 = vadd.f32 %v339, %v356
      %v379 = vadd.f32 %v340, %v356
      %v380 = vadd.f32 %v341, %v356
      %v381 = vadd.f32 %v342, %v356
      %v382 = vadd.f32 %v343, %v356
      %v383 = vadd.f32 %v344, %v356
      %v384 = vadd.f32 %v345, %v356
      %v385 = vadd.f32 %v346, %v356
      %v386 = vadd.f32 %v347, %v356
      %v387 = vadd.f32 %v348, %v356
      %v388 = vadd.f32 %v349, %v356
      %v389 = vadd.f32 %v350, %v356
      %v390 = vmax.f32 %v358, 0.0
      %v391 = vmax.f32 %v359, 0.0
      %v392 = vmax.f32 %v360, 0.0
      %v393 = vmax.f32 %v361, 0.0
      %v394 = vmax.f32 %v362, 0.0
      %v395 = vmax.f32 %v363, 0.0
      %v396 = vmax.f32 %v364, 0.0
      %v397 = vmax.f32 %v365, 0.0
      %v398 = vmax.f32 %v366, 0.0
      %v399 = vmax.f32 %v367, 0.0
      %v400 = vmax.f32 %v368, 0.0
      %v401 = vmax.f32 %v369, 0.0
      %v402 = vmax.f32 %v370, 0.0
      %v403 = vmax.f32 %v371, 0.0
      %v404 = vmax.f32 %v372, 0.0
      %v405 = vmax.f32 %v373, 0.0
      %v406 = vmax.f32 %v374, 0.0
      %v407 = vmax.f32 %v375, 0.0
      %v408 = vmax.f32 %v376, 0.0
      %v409 = vmax.f32 %v377, 0.0
      %v410 = vmax.f32 %v378, 0.0
      %v411 = vmax.f32 %v379, 0.0
      %v412 = vmax.f32 %v380, 0.0
      %v413 = vmax.f32 %v381, 0.0
      %v414 = vmax.f32 %v382, 0.0
      %v415 = vmax.f32 %v383, 0.0
      %v416 = vmax.f32 %v384, 0.0
      %v417 = vmax.f32 %v385, 0.0
      %v418 = vmax.f32 %v386, 0.0
      %v419 = vmax.f32 %v387, 0.0
      %v420 = vmax.f32 %v388, 0.0
      %v421 = vmax.f32 %v389, 0.0
      %v422 = vpack.c.bf16 %v391, %v390
      %v423 = vpack.c.bf16 %v393, %v392
      %v424 = vpack.c.bf16 %v395, %v394
      %v425 = vpack.c.bf16 %v397, %v396
      %v426 = vpack.c.bf16 %v399, %v398
      %v427 = vpack.c.bf16 %v401, %v400
      %v428 = vpack.c.bf16 %v403, %v402
      %v429 = vpack.c.bf16 %v405, %v404
      %v430 = vpack.c.bf16 %v407, %v406
      %v431 = vpack.c.bf16 %v409, %v408
      %v432 = vpack.c.bf16 %v411, %v410
      %v433 = vpack.c.bf16 %v413, %v412
      %v434 = vpack.c.bf16 %v415, %v414
      %v435 = vpack.c.bf16 %v417, %v416
      %v436 = vpack.c.bf16 %v419, %v418
      %v437 = vpack.c.bf16 %v421, %v420
      %v438 = vld [vmem:[%s3] sm:$0xf]
      %v439 = vld [vmem:[%s4] sm:$0x1]
      %v441 = vlaneseq
      %v442 = vshrl.u32 %v441, 7
      %v443 = vsub.s32 0, %v442
      %v444 = vrot.slane %v439, %v443
      %vm446 = vcmask 64512
      %v448 = vsel %vm446, %v422, 0
      %v451 = vsel %vm446, %v423, 0
      %v454 = vsel %vm446, %v424, 0
      %v457 = vsel %vm446, %v425, 0
      %v460 = vsel %vm446, %v426, 0
      %v463 = vsel %vm446, %v427, 0
      %v466 = vsel %vm446, %v428, 0
      %v469 = vsel %vm446, %v429, 0
      %v472 = vsel %vm446, %v430, 0
      %v475 = vsel %vm446, %v431, 0
      %v478 = vsel %vm446, %v432, 0
      %v481 = vsel %vm446, %v433, 0
      %v484 = vsel %vm446, %v434, 0
      %v487 = vsel %vm446, %v435, 0
      %v490 = vsel %vm446, %v436, 0
      %v493 = vsel %vm446, %v437, 0
      %vm495 = vcmask 1043456
      %v497 = vsel %vm495, %v438, 0
      %499 = vmatprep.subr.bf16.mxu0 0
      %500 = vmatpush1.bf16.msra.mxu0 0
      %501 = vmatprep.subr.bf16.mxu0 0
      %502 = vmatpush1.bf16.msra.mxu0 0
      %503 = vmatprep.subr.bf16.mxu0 0
      %504 = vmatpush1.bf16.msra.mxu0 0
      %505 = vmatprep.subr.bf16.mxu0 0
      %506 = vmatpush1.bf16.msra.mxu0 0
      %507 = vmatprep.subr.bf16.mxu0 0
      %508 = vmatpush1.bf16.msra.mxu0 0
      %509 = vmatprep.subr.bf16.mxu0 0
      %510 = vmatpush1.bf16.msra.mxu0 0
      %511 = vmatprep.subr.bf16.mxu0 0
      %512 = vmatpush1.bf16.msra.mxu0 0
      %513 = vmatprep.subr.bf16.mxu0 0
      %514 = vmatpush1.bf16.msra.mxu0 %v497
      %515 = vmatprep.subr.bf16.mxu0 0
      %516 = vmatpush2.bf16.msra.mxu0 0
      %517 = vmatprep.subr.bf16.mxu0 0
      %518 = vmatpush2.bf16.msra.mxu0 0
      %519 = vmatprep.subr.bf16.mxu0 0
      %520 = vmatpush2.bf16.msra.mxu0 0
      %521 = vmatprep.subr.bf16.mxu0 0
      %522 = vmatpush2.bf16.msra.mxu0 0
      %523 = vmatprep.subr.bf16.mxu0 0
      %524 = vmatpush2.bf16.msra.mxu0 0
      %525 = vmatprep.subr.bf16.mxu0 0
      %526 = vmatpush2.bf16.msra.mxu0 0
      %527 = vmatprep.subr.bf16.mxu0 0
      %528 = vmatpush2.bf16.msra.mxu0 0
      %529 = vmatprep.subr.bf16.mxu0 0
      %530 = vmatpush2.bf16.msra.mxu0 0
      %531 = vmatprep.mubr.bf16.mxu0 0
      %532 = vmatmul.mubr.bf16.gmra.mxu0 %v448
      %v533 = vpop.f32.mrf.mxu0
      %v534 = vadd.f32 %v444, %v533
      %v535 = vpop.f32.mrf.mxu0
      %v536 = vpop.f32.mrf.mxu0
      %v537 = vadd.f32 %v444, %v536
      %v538 = vpop.f32.mrf.mxu0
      %539 = vmatprep.mubr.bf16.mxu0 0
      %540 = vmatmul.mubr.bf16.gmra.mxu0 %v451
      %v541 = vpop.f32.mrf.mxu0
      %v542 = vadd.f32 %v444, %v541
      %v543 = vpop.f32.mrf.mxu0
      %v544 = vpop.f32.mrf.mxu0
      %v545 = vadd.f32 %v444, %v544
      %v546 = vpop.f32.mrf.mxu0
      %547 = vmatprep.mubr.bf16.mxu0 0
      %548 = vmatmul.mubr.bf16.gmra.mxu0 %v454
      %v549 = vpop.f32.mrf.mxu0
      %v550 = vadd.f32 %v444, %v549
      %v551 = vpop.f32.mrf.mxu0
      %v552 = vpop.f32.mrf.mxu0
      %v553 = vadd.f32 %v444, %v552
      %v554 = vpop.f32.mrf.mxu0
      %555 = vmatprep.mubr.bf16.mxu0 0
      %556 = vmatmul.mubr.bf16.gmra.mxu0 %v457
      %v557 = vpop.f32.mrf.mxu0
      %v558 = vadd.f32 %v444, %v557
      %v559 = vpop.f32.mrf.mxu0
      %v560 = vpop.f32.mrf.mxu0
      %v561 = vadd.f32 %v444, %v560
      %v562 = vpop.f32.mrf.mxu0
      %563 = vmatprep.mubr.bf16.mxu0 0
      %564 = vmatmul.mubr.bf16.gmra.mxu0 %v460
      %v565 = vpop.f32.mrf.mxu0
      %v566 = vadd.f32 %v444, %v565
      %v567 = vpop.f32.mrf.mxu0
      %v568 = vpop.f32.mrf.mxu0
      %v569 = vadd.f32 %v444, %v568
      %v570 = vpop.f32.mrf.mxu0
      %571 = vmatprep.mubr.bf16.mxu0 0
      %572 = vmatmul.mubr.bf16.gmra.mxu0 %v463
      %v573 = vpop.f32.mrf.mxu0
      %v574 = vadd.f32 %v444, %v573
      %v575 = vpop.f32.mrf.mxu0
      %v576 = vpop.f32.mrf.mxu0
      %v577 = vadd.f32 %v444, %v576
      %v578 = vpop.f32.mrf.mxu0
      %579 = vmatprep.mubr.bf16.mxu0 0
      %580 = vmatmul.mubr.bf16.gmra.mxu0 %v466
      %v581 = vpop.f32.mrf.mxu0
      %v582 = vadd.f32 %v444, %v581
      %v583 = vpop.f32.mrf.mxu0
      %v584 = vpop.f32.mrf.mxu0
      %v585 = vadd.f32 %v444, %v584
      %v586 = vpop.f32.mrf.mxu0
      %587 = vmatprep.mubr.bf16.mxu0 0
      %588 = vmatmul.mubr.bf16.gmra.mxu0 %v469
      %v589 = vpop.f32.mrf.mxu0
      %v590 = vadd.f32 %v444, %v589
      %v591 = vpop.f32.mrf.mxu0
      %v592 = vpop.f32.mrf.mxu0
      %v593 = vadd.f32 %v444, %v592
      %v594 = vpop.f32.mrf.mxu0
      %595 = vmatprep.mubr.bf16.mxu0 0
      %596 = vmatmul.mubr.bf16.gmra.mxu0 %v472
      %v597 = vpop.f32.mrf.mxu0
      %v598 = vadd.f32 %v444, %v597
      %v599 = vpop.f32.mrf.mxu0
      %v600 = vpop.f32.mrf.mxu0
      %v601 = vadd.f32 %v444, %v600
      %v602 = vpop.f32.mrf.mxu0
      %603 = vmatprep.mubr.bf16.mxu0 0
      %604 = vmatmul.mubr.bf16.gmra.mxu0 %v475
      %v605 = vpop.f32.mrf.mxu0
      %v606 = vadd.f32 %v444, %v605
      %v607 = vpop.f32.mrf.mxu0
      %v608 = vpop.f32.mrf.mxu0
      %v609 = vadd.f32 %v444, %v608
      %v610 = vpop.f32.mrf.mxu0
      %611 = vmatprep.mubr.bf16.mxu0 0
      %612 = vmatmul.mubr.bf16.gmra.mxu0 %v478
      %v613 = vpop.f32.mrf.mxu0
      %v614 = vadd.f32 %v444, %v613
      %v615 = vpop.f32.mrf.mxu0
      %v616 = vpop.f32.mrf.mxu0
      %v617 = vadd.f32 %v444, %v616
      %v618 = vpop.f32.mrf.mxu0
      %619 = vmatprep.mubr.bf16.mxu0 0
      %620 = vmatmul.mubr.bf16.gmra.mxu0 %v481
      %v621 = vpop.f32.mrf.mxu0
      %v622 = vadd.f32 %v444, %v621
      %v623 = vpop.f32.mrf.mxu0
      %v624 = vpop.f32.mrf.mxu0
      %v625 = vadd.f32 %v444, %v624
      %v626 = vpop.f32.mrf.mxu0
      %627 = vmatprep.mubr.bf16.mxu0 0
      %628 = vmatmul.mubr.bf16.gmra.mxu0 %v484
      %v629 = vpop.f32.mrf.mxu0
      %v630 = vadd.f32 %v444, %v629
      %v631 = vpop.f32.mrf.mxu0
      %v632 = vpop.f32.mrf.mxu0
      %v633 = vadd.f32 %v444, %v632
      %v634 = vpop.f32.mrf.mxu0
      %635 = vmatprep.mubr.bf16.mxu0 0
      %636 = vmatmul.mubr.bf16.gmra.mxu0 %v487
      %v637 = vpop.f32.mrf.mxu0
      %v638 = vadd.f32 %v444, %v637
      %v639 = vpop.f32.mrf.mxu0
      %v640 = vpop.f32.mrf.mxu0
      %v641 = vadd.f32 %v444, %v640
      %v642 = vpop.f32.mrf.mxu0
      %643 = vmatprep.mubr.bf16.mxu0 0
      %644 = vmatmul.mubr.bf16.gmra.mxu0 %v490
      %v645 = vpop.f32.mrf.mxu0
      %v646 = vadd.f32 %v444, %v645
      %v647 = vpop.f32.mrf.mxu0
      %v648 = vpop.f32.mrf.mxu0
      %v649 = vadd.f32 %v444, %v648
      %v650 = vpop.f32.mrf.mxu0
      %651 = vmatprep.mubr.bf16.mxu0 0
      %652 = vmatmul.mubr.bf16.gmra.mxu0 %v493
      %v653 = vpop.f32.mrf.mxu0
      %v654 = vadd.f32 %v444, %v653
      %v655 = vpop.f32.mrf.mxu0
      %v656 = vpop.f32.mrf.mxu0
      %v657 = vadd.f32 %v444, %v656
      %v658 = vpop.f32.mrf.mxu0
      %659 = vdwg.mxu0
      %v660 = vmax.f32 %v534, 0.0
      %v661 = vmax.f32 %v537, 0.0
      %v662 = vmax.f32 %v542, 0.0
      %v663 = vmax.f32 %v545, 0.0
      %v664 = vmax.f32 %v550, 0.0
      %v665 = vmax.f32 %v553, 0.0
      %v666 = vmax.f32 %v558, 0.0
      %v667 = vmax.f32 %v561, 0.0
      %v668 = vmax.f32 %v566, 0.0
      %v669 = vmax.f32 %v569, 0.0
      %v670 = vmax.f32 %v574, 0.0
      %v671 = vmax.f32 %v577, 0.0
      %v672 = vmax.f32 %v582, 0.0
      %v673 = vmax.f32 %v585, 0.0
      %v674 = vmax.f32 %v590, 0.0
      %v675 = vmax.f32 %v593, 0.0
      %v676 = vmax.f32 %v598, 0.0
      %v677 = vmax.f32 %v601, 0.0
      %v678 = vmax.f32 %v606, 0.0
      %v679 = vmax.f32 %v609, 0.0
      %v680 = vmax.f32 %v614, 0.0
      %v681 = vmax.f32 %v617, 0.0
      %v682 = vmax.f32 %v622, 0.0
      %v683 = vmax.f32 %v625, 0.0
      %v684 = vmax.f32 %v630, 0.0
      %v685 = vmax.f32 %v633, 0.0
      %v686 = vmax.f32 %v638, 0.0
      %v687 = vmax.f32 %v641, 0.0
      %v688 = vmax.f32 %v646, 0.0
      %v689 = vmax.f32 %v649, 0.0
      %v690 = vmax.f32 %v654, 0.0
      %v691 = vmax.f32 %v657, 0.0
      %vm725 = vcmask 1040384
      %v726 = vrot.slane 0.0, 7
      %v727 = vsel %vm725, %v726, %v726
      %v728 = vrot.slane %v660, 7
      %v729 = vrot.slane %v661, 7
      %v730 = vsel %vm725, %v728, %v729
      %v731 = vrot.slane %v662, 7
      %v732 = vrot.slane %v663, 7
      %v733 = vsel %vm725, %v731, %v732
      %v734 = vrot.slane %v664, 7
      %v735 = vrot.slane %v665, 7
      %v736 = vsel %vm725, %v734, %v735
      %v737 = vrot.slane %v666, 7
      %v738 = vrot.slane %v667, 7
      %v739 = vsel %vm725, %v737, %v738
      %v740 = vrot.slane %v668, 7
      %v741 = vrot.slane %v669, 7
      %v742 = vsel %vm725, %v740, %v741
      %v743 = vrot.slane %v670, 7
      %v744 = vrot.slane %v671, 7
      %v745 = vsel %vm725, %v743, %v744
      %v746 = vrot.slane %v672, 7
      %v747 = vrot.slane %v673, 7
      %v748 = vsel %vm725, %v746, %v747
      %v749 = vrot.slane %v674, 7
      %v750 = vrot.slane %v675, 7
      %v751 = vsel %vm725, %v749, %v750
      %v752 = vrot.slane %v676, 7
      %v753 = vrot.slane %v677, 7
      %v754 = vsel %vm725, %v752, %v753
      %v755 = vrot.slane %v678, 7
      %v756 = vrot.slane %v679, 7
      %v757 = vsel %vm725, %v755, %v756
      %v758 = vrot.slane %v680, 7
      %v759 = vrot.slane %v681, 7
      %v760 = vsel %vm725, %v758, %v759
      %v761 = vrot.slane %v682, 7
      %v762 = vrot.slane %v683, 7
      %v763 = vsel %vm725, %v761, %v762
      %v764 = vrot.slane %v684, 7
      %v765 = vrot.slane %v685, 7
      %v766 = vsel %vm725, %v764, %v765
      %v767 = vrot.slane %v686, 7
      %v768 = vrot.slane %v687, 7
      %v769 = vsel %vm725, %v767, %v768
      %v770 = vrot.slane %v688, 7
      %v771 = vrot.slane %v689, 7
      %v772 = vsel %vm725, %v770, %v771
      %v773 = vrot.slane %v690, 7
      %v774 = vrot.slane %v691, 7
      %v775 = vsel %vm725, %v773, %v774
      %v825 = vsel %vm725, 0.0, %v726
      %v826 = vsel %vm725, 0.0, %v728
      %v827 = vsel %vm725, 0.0, %v731
      %v828 = vsel %vm725, 0.0, %v734
      %v829 = vsel %vm725, 0.0, %v737
      %v830 = vsel %vm725, 0.0, %v740
      %v831 = vsel %vm725, 0.0, %v743
      %v832 = vsel %vm725, 0.0, %v746
      %v833 = vsel %vm725, 0.0, %v749
      %v834 = vsel %vm725, 0.0, %v752
      %v835 = vsel %vm725, 0.0, %v755
      %v836 = vsel %vm725, 0.0, %v758
      %v837 = vsel %vm725, 0.0, %v761
      %v838 = vsel %vm725, 0.0, %v764
      %v839 = vsel %vm725, 0.0, %v767
      %v840 = vsel %vm725, 0.0, %v770
      %v841 = vsel %vm725, 0.0, %v773
      %v842 = vsel %vm725, %v726, 0.0
      %v843 = vsel %vm725, %v729, 0.0
      %v844 = vsel %vm725, %v732, 0.0
      %v845 = vsel %vm725, %v735, 0.0
      %v846 = vsel %vm725, %v738, 0.0
      %v847 = vsel %vm725, %v741, 0.0
      %v848 = vsel %vm725, %v744, 0.0
      %v849 = vsel %vm725, %v747, 0.0
      %v850 = vsel %vm725, %v750, 0.0
      %v851 = vsel %vm725, %v753, 0.0
      %v852 = vsel %vm725, %v756, 0.0
      %v853 = vsel %vm725, %v759, 0.0
      %v854 = vsel %vm725, %v762, 0.0
      %v855 = vsel %vm725, %v765, 0.0
      %v856 = vsel %vm725, %v768, 0.0
      %v857 = vsel %vm725, %v771, 0.0
      %v858 = vsel %vm725, %v774, 0.0
      %vm891 = vcmask 1046528
      %v892 = vrot.slane %v825, 1
      %v893 = vrot.slane %v727, 1
      %v894 = vsel %vm891, %v892, %v893
      %v895 = vrot.slane %v842, 1
      %v896 = vsel %vm891, %v893, %v895
      %v897 = vrot.slane %v826, 1
      %v898 = vrot.slane %v730, 1
      %v899 = vsel %vm891, %v897, %v898
      %v900 = vrot.slane %v843, 1
      %v901 = vsel %vm891, %v898, %v900
      %v902 = vrot.slane %v827, 1
      %v903 = vrot.slane %v733, 1
      %v904 = vsel %vm891, %v902, %v903
      %v905 = vrot.slane %v844, 1
      %v906 = vsel %vm891, %v903, %v905
      %v907 = vrot.slane %v828, 1
      %v908 = vrot.slane %v736, 1
      %v909 = vsel %vm891, %v907, %v908
      %v910 = vrot.slane %v845, 1
      %v911 = vsel %vm891, %v908, %v910
      %v912 = vrot.slane %v829, 1
      %v913 = vrot.slane %v739, 1
      %v914 = vsel %vm891, %v912, %v913
      %v915 = vrot.slane %v846, 1
      %v916 = vsel %vm891, %v913, %v915
      %v917 = vrot.slane %v830, 1
      %v918 = vrot.slane %v742, 1
      %v919 = vsel %vm891, %v917, %v918
      %v920 = vrot.slane %v847, 1
      %v921 = vsel %vm891, %v918, %v920
      %v922 = vrot.slane %v831, 1
      %v923 = vrot.slane %v745, 1
      %v924 = vsel %vm891, %v922, %v923
      %v925 = vrot.slane %v848, 1
      %v926 = vsel %vm891, %v923, %v925
      %v927 = vrot.slane %v832, 1
      %v928 = vrot.slane %v748, 1
      %v929 = vsel %vm891, %v927, %v928
      %v930 = vrot.slane %v849, 1
      %v931 = vsel %vm891, %v928, %v930
      %v932 = vrot.slane %v833, 1
      %v933 = vrot.slane %v751, 1
      %v934 = vsel %vm891, %v932, %v933
      %v935 = vrot.slane %v850, 1
      %v936 = vsel %vm891, %v933, %v935
      %v937 = vrot.slane %v834, 1
      %v938 = vrot.slane %v754, 1
      %v939 = vsel %vm891, %v937, %v938
      %v940 = vrot.slane %v851, 1
      %v941 = vsel %vm891, %v938, %v940
      %v942 = vrot.slane %v835, 1
      %v943 = vrot.slane %v757, 1
      %v944 = vsel %vm891, %v942, %v943
      %v945 = vrot.slane %v852, 1
      %v946 = vsel %vm891, %v943, %v945
      %v947 = vrot.slane %v836, 1
      %v948 = vrot.slane %v760, 1
      %v949 = vsel %vm891, %v947, %v948
      %v950 = vrot.slane %v853, 1
      %v951 = vsel %vm891, %v948, %v950
      %v952 = vrot.slane %v837, 1
      %v953 = vrot.slane %v763, 1
      %v954 = vsel %vm891, %v952, %v953
      %v955 = vrot.slane %v854, 1
      %v956 = vsel %vm891, %v953, %v955
      %v957 = vrot.slane %v838, 1
      %v958 = vrot.slane %v766, 1
      %v959 = vsel %vm891, %v957, %v958
      %v960 = vrot.slane %v855, 1
      %v961 = vsel %vm891, %v958, %v960
      %v962 = vrot.slane %v839, 1
      %v963 = vrot.slane %v769, 1
      %v964 = vsel %vm891, %v962, %v963
      %v965 = vrot.slane %v856, 1
      %v966 = vsel %vm891, %v963, %v965
      %v967 = vrot.slane %v840, 1
      %v968 = vrot.slane %v772, 1
      %v969 = vsel %vm891, %v967, %v968
      %v970 = vrot.slane %v857, 1
      %v971 = vsel %vm891, %v968, %v970
      %vm972 = vcmask 1045504
      %v973 = vrot.slane %v825, 2
      %v974 = vrot.slane %v727, 2
      %v975 = vsel %vm972, %v973, %v974
      %v976 = vrot.slane %v842, 2
      %v977 = vsel %vm972, %v974, %v976
      %v978 = vrot.slane %v826, 2
      %v979 = vrot.slane %v730, 2
      %v980 = vsel %vm972, %v978, %v979
      %v981 = vrot.slane %v843, 2
      %v982 = vsel %vm972, %v979, %v981
      %v983 = vrot.slane %v827, 2
      %v984 = vrot.slane %v733, 2
      %v985 = vsel %vm972, %v983, %v984
      %v986 = vrot.slane %v844, 2
      %v987 = vsel %vm972, %v984, %v986
      %v988 = vrot.slane %v828, 2
      %v989 = vrot.slane %v736, 2
      %v990 = vsel %vm972, %v988, %v989
      %v991 = vrot.slane %v845, 2
      %v992 = vsel %vm972, %v989, %v991
      %v993 = vrot.slane %v829, 2
      %v994 = vrot.slane %v739, 2
      %v995 = vsel %vm972, %v993, %v994
      %v996 = vrot.slane %v846, 2
      %v997 = vsel %vm972, %v994, %v996
      %v998 = vrot.slane %v830, 2
      %v999 = vrot.slane %v742, 2
      %v1000 = vsel %vm972, %v998, %v999
      %v1001 = vrot.slane %v847, 2
      %v1002 = vsel %vm972, %v999, %v1001
      %v1003 = vrot.slane %v831, 2
      %v1004 = vrot.slane %v745, 2
      %v1005 = vsel %vm972, %v1003, %v1004
      %v1006 = vrot.slane %v848, 2
      %v1007 = vsel %vm972, %v1004, %v1006
      %v1008 = vrot.slane %v832, 2
      %v1009 = vrot.slane %v748, 2
      %v1010 = vsel %vm972, %v1008, %v1009
      %v1011 = vrot.slane %v849, 2
      %v1012 = vsel %vm972, %v1009, %v1011
      %v1013 = vrot.slane %v833, 2
      %v1014 = vrot.slane %v751, 2
      %v1015 = vsel %vm972, %v1013, %v1014
      %v1016 = vrot.slane %v850, 2
      %v1017 = vsel %vm972, %v1014, %v1016
      %v1018 = vrot.slane %v834, 2
      %v1019 = vrot.slane %v754, 2
      %v1020 = vsel %vm972, %v1018, %v1019
      %v1021 = vrot.slane %v851, 2
      %v1022 = vsel %vm972, %v1019, %v1021
      %v1023 = vrot.slane %v835, 2
      %v1024 = vrot.slane %v757, 2
      %v1025 = vsel %vm972, %v1023, %v1024
      %v1026 = vrot.slane %v852, 2
      %v1027 = vsel %vm972, %v1024, %v1026
      %v1028 = vrot.slane %v836, 2
      %v1029 = vrot.slane %v760, 2
      %v1030 = vsel %vm972, %v1028, %v1029
      %v1031 = vrot.slane %v853, 2
      %v1032 = vsel %vm972, %v1029, %v1031
      %v1033 = vrot.slane %v837, 2
      %v1034 = vrot.slane %v763, 2
      %v1035 = vsel %vm972, %v1033, %v1034
      %v1036 = vrot.slane %v854, 2
      %v1037 = vsel %vm972, %v1034, %v1036
      %v1038 = vrot.slane %v838, 2
      %v1039 = vrot.slane %v766, 2
      %v1040 = vsel %vm972, %v1038, %v1039
      %v1041 = vrot.slane %v855, 2
      %v1042 = vsel %vm972, %v1039, %v1041
      %v1043 = vrot.slane %v839, 2
      %v1044 = vrot.slane %v769, 2
      %v1045 = vsel %vm972, %v1043, %v1044
      %v1046 = vrot.slane %v856, 2
      %v1047 = vsel %vm972, %v1044, %v1046
      %v1048 = vrot.slane %v840, 2
      %v1049 = vrot.slane %v772, 2
      %v1050 = vsel %vm972, %v1048, %v1049
      %v1051 = vrot.slane %v857, 2
      %v1052 = vsel %vm972, %v1049, %v1051
      %v1055 = vrot.slane %v841, 1
      %v1056 = vrot.slane %v775, 1
      %v1057 = vsel %vm891, %v1055, %v1056
      %v1058 = vrot.slane %v858, 1
      %v1059 = vsel %vm891, %v1056, %v1058
      %v1060 = vrot.slane %v841, 2
      %v1061 = vrot.slane %v775, 2
      %v1062 = vsel %vm972, %v1060, %v1061
      %v1063 = vrot.slane %v858, 2
      %v1064 = vsel %vm972, %v1061, %v1063
      %1097 = vrot.lane.b32.xlu0 %v894, 16
      %v1098 = vpop.permute.xlu0 %1097
      %1099 = vrot.lane.b32.xlu0 %v896, 16
      %v1100 = vpop.permute.xlu0 %1099
      %1101 = vrot.lane.b32.xlu0 %v899, 16
      %v1102 = vpop.permute.xlu0 %1101
      %1103 = vrot.lane.b32.xlu0 %v901, 16
      %v1104 = vpop.permute.xlu0 %1103
      %1105 = vrot.lane.b32.xlu0 %v904, 16
      %v1106 = vpop.permute.xlu0 %1105
      %1107 = vrot.lane.b32.xlu0 %v906, 16
      %v1108 = vpop.permute.xlu0 %1107
      %1109 = vrot.lane.b32.xlu0 %v909, 16
      %v1110 = vpop.permute.xlu0 %1109
      %1111 = vrot.lane.b32.xlu0 %v911, 16
      %v1112 = vpop.permute.xlu0 %1111
      %1113 = vrot.lane.b32.xlu0 %v914, 16
      %v1114 = vpop.permute.xlu0 %1113
      %1115 = vrot.lane.b32.xlu0 %v916, 16
      %v1116 = vpop.permute.xlu0 %1115
      %1117 = vrot.lane.b32.xlu0 %v919, 16
      %v1118 = vpop.permute.xlu0 %1117
      %1119 = vrot.lane.b32.xlu0 %v921, 16
      %v1120 = vpop.permute.xlu0 %1119
      %1121 = vrot.lane.b32.xlu0 %v924, 16
      %v1122 = vpop.permute.xlu0 %1121
      %1123 = vrot.lane.b32.xlu0 %v926, 16
      %v1124 = vpop.permute.xlu0 %1123
      %1125 = vrot.lane.b32.xlu0 %v929, 16
      %v1126 = vpop.permute.xlu0 %1125
      %1127 = vrot.lane.b32.xlu0 %v931, 16
      %v1128 = vpop.permute.xlu0 %1127
      %1129 = vrot.lane.b32.xlu0 %v934, 16
      %v1130 = vpop.permute.xlu0 %1129
      %1131 = vrot.lane.b32.xlu0 %v936, 16
      %v1132 = vpop.permute.xlu0 %1131
      %1133 = vrot.lane.b32.xlu0 %v939, 16
      %v1134 = vpop.permute.xlu0 %1133
      %1135 = vrot.lane.b32.xlu0 %v941, 16
      %v1136 = vpop.permute.xlu0 %1135
      %1137 = vrot.lane.b32.xlu0 %v944, 16
      %v1138 = vpop.permute.xlu0 %1137
      %1139 = vrot.lane.b32.xlu0 %v946, 16
      %v1140 = vpop.permute.xlu0 %1139
      %1141 = vrot.lane.b32.xlu0 %v949, 16
      %v1142 = vpop.permute.xlu0 %1141
      %1143 = vrot.lane.b32.xlu0 %v951, 16
      %v1144 = vpop.permute.xlu0 %1143
      %1145 = vrot.lane.b32.xlu0 %v954, 16
      %v1146 = vpop.permute.xlu0 %1145
      %1147 = vrot.lane.b32.xlu0 %v956, 16
      %v1148 = vpop.permute.xlu0 %1147
      %1149 = vrot.lane.b32.xlu0 %v959, 16
      %v1150 = vpop.permute.xlu0 %1149
      %1151 = vrot.lane.b32.xlu0 %v961, 16
      %v1152 = vpop.permute.xlu0 %1151
      %1153 = vrot.lane.b32.xlu0 %v964, 16
      %v1154 = vpop.permute.xlu0 %1153
      %1155 = vrot.lane.b32.xlu0 %v966, 16
      %v1156 = vpop.permute.xlu0 %1155
      %1157 = vrot.lane.b32.xlu0 %v969, 16
      %v1158 = vpop.permute.xlu0 %1157
      %1159 = vrot.lane.b32.xlu0 %v971, 16
      %v1160 = vpop.permute.xlu0 %1159
      %1193 = vrot.lane.b32.xlu0 %v975, 32
      %v1194 = vpop.permute.xlu0 %1193
      %1195 = vrot.lane.b32.xlu0 %v977, 32
      %v1196 = vpop.permute.xlu0 %1195
      %1197 = vrot.lane.b32.xlu0 %v980, 32
      %v1198 = vpop.permute.xlu0 %1197
      %1199 = vrot.lane.b32.xlu0 %v982, 32
      %v1200 = vpop.permute.xlu0 %1199
      %1201 = vrot.lane.b32.xlu0 %v985, 32
      %v1202 = vpop.permute.xlu0 %1201
      %1203 = vrot.lane.b32.xlu0 %v987, 32
      %v1204 = vpop.permute.xlu0 %1203
      %1205 = vrot.lane.b32.xlu0 %v990, 32
      %v1206 = vpop.permute.xlu0 %1205
      %1207 = vrot.lane.b32.xlu0 %v992, 32
      %v1208 = vpop.permute.xlu0 %1207
      %1209 = vrot.lane.b32.xlu0 %v995, 32
      %v1210 = vpop.permute.xlu0 %1209
      %1211 = vrot.lane.b32.xlu0 %v997, 32
      %v1212 = vpop.permute.xlu0 %1211
      %1213 = vrot.lane.b32.xlu0 %v1000, 32
      %v1214 = vpop.permute.xlu0 %1213
      %1215 = vrot.lane.b32.xlu0 %v1002, 32
      %v1216 = vpop.permute.xlu0 %1215
      %1217 = vrot.lane.b32.xlu0 %v1005, 32
      %v1218 = vpop.permute.xlu0 %1217
      %1219 = vrot.lane.b32.xlu0 %v1007, 32
      %v1220 = vpop.permute.xlu0 %1219
      %1221 = vrot.lane.b32.xlu0 %v1010, 32
      %v1222 = vpop.permute.xlu0 %1221
      %1223 = vrot.lane.b32.xlu0 %v1012, 32
      %v1224 = vpop.permute.xlu0 %1223
      %1225 = vrot.lane.b32.xlu0 %v1015, 32
      %v1226 = vpop.permute.xlu0 %1225
      %1227 = vrot.lane.b32.xlu0 %v1017, 32
      %v1228 = vpop.permute.xlu0 %1227
      %1229 = vrot.lane.b32.xlu0 %v1020, 32
      %v1230 = vpop.permute.xlu0 %1229
      %1231 = vrot.lane.b32.xlu0 %v1022, 32
      %v1232 = vpop.permute.xlu0 %1231
      %1233 = vrot.lane.b32.xlu0 %v1025, 32
      %v1234 = vpop.permute.xlu0 %1233
      %1235 = vrot.lane.b32.xlu0 %v1027, 32
      %v1236 = vpop.permute.xlu0 %1235
      %1237 = vrot.lane.b32.xlu0 %v1030, 32
      %v1238 = vpop.permute.xlu0 %1237
      %1239 = vrot.lane.b32.xlu0 %v1032, 32
      %v1240 = vpop.permute.xlu0 %1239
      %1241 = vrot.lane.b32.xlu0 %v1035, 32
      %v1242 = vpop.permute.xlu0 %1241
      %1243 = vrot.lane.b32.xlu0 %v1037, 32
      %v1244 = vpop.permute.xlu0 %1243
      %1245 = vrot.lane.b32.xlu0 %v1040, 32
      %v1246 = vpop.permute.xlu0 %1245
      %1247 = vrot.lane.b32.xlu0 %v1042, 32
      %v1248 = vpop.permute.xlu0 %1247
      %1249 = vrot.lane.b32.xlu0 %v1045, 32
      %v1250 = vpop.permute.xlu0 %1249
      %1251 = vrot.lane.b32.xlu0 %v1047, 32
      %v1252 = vpop.permute.xlu0 %1251
      %1253 = vrot.lane.b32.xlu0 %v1050, 32
      %v1254 = vpop.permute.xlu0 %1253
      %1255 = vrot.lane.b32.xlu0 %v1052, 32
      %v1256 = vpop.permute.xlu0 %1255
      %1289 = vrot.lane.b32.xlu0 %v826, 48
      %v1290 = vpop.permute.xlu0 %1289
      %1291 = vrot.lane.b32.xlu0 %v730, 48
      %v1292 = vpop.permute.xlu0 %1291
      %1293 = vrot.lane.b32.xlu0 %v827, 48
      %v1294 = vpop.permute.xlu0 %1293
      %1295 = vrot.lane.b32.xlu0 %v733, 48
      %v1296 = vpop.permute.xlu0 %1295
      %1297 = vrot.lane.b32.xlu0 %v828, 48
      %v1298 = vpop.permute.xlu0 %1297
      %1299 = vrot.lane.b32.xlu0 %v736, 48
      %v1300 = vpop.permute.xlu0 %1299
      %1301 = vrot.lane.b32.xlu0 %v829, 48
      %v1302 = vpop.permute.xlu0 %1301
      %1303 = vrot.lane.b32.xlu0 %v739, 48
      %v1304 = vpop.permute.xlu0 %1303
      %1305 = vrot.lane.b32.xlu0 %v830, 48
      %v1306 = vpop.permute.xlu0 %1305
      %1307 = vrot.lane.b32.xlu0 %v742, 48
      %v1308 = vpop.permute.xlu0 %1307
      %1309 = vrot.lane.b32.xlu0 %v831, 48
      %v1310 = vpop.permute.xlu0 %1309
      %1311 = vrot.lane.b32.xlu0 %v745, 48
      %v1312 = vpop.permute.xlu0 %1311
      %1313 = vrot.lane.b32.xlu0 %v832, 48
      %v1314 = vpop.permute.xlu0 %1313
      %1315 = vrot.lane.b32.xlu0 %v748, 48
      %v1316 = vpop.permute.xlu0 %1315
      %1317 = vrot.lane.b32.xlu0 %v833, 48
      %v1318 = vpop.permute.xlu0 %1317
      %1319 = vrot.lane.b32.xlu0 %v751, 48
      %v1320 = vpop.permute.xlu0 %1319
      %1321 = vrot.lane.b32.xlu0 %v834, 48
      %v1322 = vpop.permute.xlu0 %1321
      %1323 = vrot.lane.b32.xlu0 %v754, 48
      %v1324 = vpop.permute.xlu0 %1323
      %1325 = vrot.lane.b32.xlu0 %v835, 48
      %v1326 = vpop.permute.xlu0 %1325
      %1327 = vrot.lane.b32.xlu0 %v757, 48
      %v1328 = vpop.permute.xlu0 %1327
      %1329 = vrot.lane.b32.xlu0 %v836, 48
      %v1330 = vpop.permute.xlu0 %1329
      %1331 = vrot.lane.b32.xlu0 %v760, 48
      %v1332 = vpop.permute.xlu0 %1331
      %1333 = vrot.lane.b32.xlu0 %v837, 48
      %v1334 = vpop.permute.xlu0 %1333
      %1335 = vrot.lane.b32.xlu0 %v763, 48
      %v1336 = vpop.permute.xlu0 %1335
      %1337 = vrot.lane.b32.xlu0 %v838, 48
      %v1338 = vpop.permute.xlu0 %1337
      %1339 = vrot.lane.b32.xlu0 %v766, 48
      %v1340 = vpop.permute.xlu0 %1339
      %1341 = vrot.lane.b32.xlu0 %v839, 48
      %v1342 = vpop.permute.xlu0 %1341
      %1343 = vrot.lane.b32.xlu0 %v769, 48
      %v1344 = vpop.permute.xlu0 %1343
      %1345 = vrot.lane.b32.xlu0 %v840, 48
      %v1346 = vpop.permute.xlu0 %1345
      %1347 = vrot.lane.b32.xlu0 %v772, 48
      %v1348 = vpop.permute.xlu0 %1347
      %1349 = vrot.lane.b32.xlu0 %v841, 48
      %v1350 = vpop.permute.xlu0 %1349
      %1351 = vrot.lane.b32.xlu0 %v775, 48
      %v1352 = vpop.permute.xlu0 %1351
      %1385 = vrot.lane.b32.xlu0 %v899, 64
      %v1386 = vpop.permute.xlu0 %1385
      %1387 = vrot.lane.b32.xlu0 %v901, 64
      %v1388 = vpop.permute.xlu0 %1387
      %1389 = vrot.lane.b32.xlu0 %v904, 64
      %v1390 = vpop.permute.xlu0 %1389
      %1391 = vrot.lane.b32.xlu0 %v906, 64
      %v1392 = vpop.permute.xlu0 %1391
      %1393 = vrot.lane.b32.xlu0 %v909, 64
      %v1394 = vpop.permute.xlu0 %1393
      %1395 = vrot.lane.b32.xlu0 %v911, 64
      %v1396 = vpop.permute.xlu0 %1395
      %1397 = vrot.lane.b32.xlu0 %v914, 64
      %v1398 = vpop.permute.xlu0 %1397
      %1399 = vrot.lane.b32.xlu0 %v916, 64
      %v1400 = vpop.permute.xlu0 %1399
      %1401 = vrot.lane.b32.xlu0 %v919, 64
      %v1402 = vpop.permute.xlu0 %1401
      %1403 = vrot.lane.b32.xlu0 %v921, 64
      %v1404 = vpop.permute.xlu0 %1403
      %1405 = vrot.lane.b32.xlu0 %v924, 64
      %v1406 = vpop.permute.xlu0 %1405
      %1407 = vrot.lane.b32.xlu0 %v926, 64
      %v1408 = vpop.permute.xlu0 %1407
      %1409 = vrot.lane.b32.xlu0 %v929, 64
      %v1410 = vpop.permute.xlu0 %1409
      %1411 = vrot.lane.b32.xlu0 %v931, 64
      %v1412 = vpop.permute.xlu0 %1411
      %1413 = vrot.lane.b32.xlu0 %v934, 64
      %v1414 = vpop.permute.xlu0 %1413
      %1415 = vrot.lane.b32.xlu0 %v936, 64
      %v1416 = vpop.permute.xlu0 %1415
      %1417 = vrot.lane.b32.xlu0 %v939, 64
      %v1418 = vpop.permute.xlu0 %1417
      %1419 = vrot.lane.b32.xlu0 %v941, 64
      %v1420 = vpop.permute.xlu0 %1419
      %1421 = vrot.lane.b32.xlu0 %v944, 64
      %v1422 = vpop.permute.xlu0 %1421
      %1423 = vrot.lane.b32.xlu0 %v946, 64
      %v1424 = vpop.permute.xlu0 %1423
      %1425 = vrot.lane.b32.xlu0 %v949, 64
      %v1426 = vpop.permute.xlu0 %1425
      %1427 = vrot.lane.b32.xlu0 %v951, 64
      %v1428 = vpop.permute.xlu0 %1427
      %1429 = vrot.lane.b32.xlu0 %v954, 64
      %v1430 = vpop.permute.xlu0 %1429
      %1431 = vrot.lane.b32.xlu0 %v956, 64
      %v1432 = vpop.permute.xlu0 %1431
      %1433 = vrot.lane.b32.xlu0 %v959, 64
      %v1434 = vpop.permute.xlu0 %1433
      %1435 = vrot.lane.b32.xlu0 %v961, 64
      %v1436 = vpop.permute.xlu0 %1435
      %1437 = vrot.lane.b32.xlu0 %v964, 64
      %v1438 = vpop.permute.xlu0 %1437
      %1439 = vrot.lane.b32.xlu0 %v966, 64
      %v1440 = vpop.permute.xlu0 %1439
      %1441 = vrot.lane.b32.xlu0 %v969, 64
      %v1442 = vpop.permute.xlu0 %1441
      %1443 = vrot.lane.b32.xlu0 %v971, 64
      %v1444 = vpop.permute.xlu0 %1443
      %1445 = vrot.lane.b32.xlu0 %v1057, 64
      %v1446 = vpop.permute.xlu0 %1445
      %1447 = vrot.lane.b32.xlu0 %v1059, 64
      %v1448 = vpop.permute.xlu0 %1447
      %1481 = vrot.lane.b32.xlu0 %v980, 80
      %v1482 = vpop.permute.xlu0 %1481
      %1483 = vrot.lane.b32.xlu0 %v982, 80
      %v1484 = vpop.permute.xlu0 %1483
      %1485 = vrot.lane.b32.xlu0 %v985, 80
      %v1486 = vpop.permute.xlu0 %1485
      %1487 = vrot.lane.b32.xlu0 %v987, 80
      %v1488 = vpop.permute.xlu0 %1487
      %1489 = vrot.lane.b32.xlu0 %v990, 80
      %v1490 = vpop.permute.xlu0 %1489
      %1491 = vrot.lane.b32.xlu0 %v992, 80
      %v1492 = vpop.permute.xlu0 %1491
      %1493 = vrot.lane.b32.xlu0 %v995, 80
      %v1494 = vpop.permute.xlu0 %1493
      %1495 = vrot.lane.b32.xlu0 %v997, 80
      %v1496 = vpop.permute.xlu0 %1495
      %1497 = vrot.lane.b32.xlu0 %v1000, 80
      %v1498 = vpop.permute.xlu0 %1497
      %1499 = vrot.lane.b32.xlu0 %v1002, 80
      %v1500 = vpop.permute.xlu0 %1499
      %1501 = vrot.lane.b32.xlu0 %v1005, 80
      %v1502 = vpop.permute.xlu0 %1501
      %1503 = vrot.lane.b32.xlu0 %v1007, 80
      %v1504 = vpop.permute.xlu0 %1503
      %1505 = vrot.lane.b32.xlu0 %v1010, 80
      %v1506 = vpop.permute.xlu0 %1505
      %1507 = vrot.lane.b32.xlu0 %v1012, 80
      %v1508 = vpop.permute.xlu0 %1507
      %1509 = vrot.lane.b32.xlu0 %v1015, 80
      %v1510 = vpop.permute.xlu0 %1509
      %1511 = vrot.lane.b32.xlu0 %v1017, 80
      %v1512 = vpop.permute.xlu0 %1511
      %1513 = vrot.lane.b32.xlu0 %v1020, 80
      %v1514 = vpop.permute.xlu0 %1513
      %1515 = vrot.lane.b32.xlu0 %v1022, 80
      %v1516 = vpop.permute.xlu0 %1515
      %1517 = vrot.lane.b32.xlu0 %v1025, 80
      %v1518 = vpop.permute.xlu0 %1517
      %1519 = vrot.lane.b32.xlu0 %v1027, 80
      %v1520 = vpop.permute.xlu0 %1519
      %1521 = vrot.lane.b32.xlu0 %v1030, 80
      %v1522 = vpop.permute.xlu0 %1521
      %1523 = vrot.lane.b32.xlu0 %v1032, 80
      %v1524 = vpop.permute.xlu0 %1523
      %1525 = vrot.lane.b32.xlu0 %v1035, 80
      %v1526 = vpop.permute.xlu0 %1525
      %1527 = vrot.lane.b32.xlu0 %v1037, 80
      %v1528 = vpop.permute.xlu0 %1527
      %1529 = vrot.lane.b32.xlu0 %v1040, 80
      %v1530 = vpop.permute.xlu0 %1529
      %1531 = vrot.lane.b32.xlu0 %v1042, 80
      %v1532 = vpop.permute.xlu0 %1531
      %1533 = vrot.lane.b32.xlu0 %v1045, 80
      %v1534 = vpop.permute.xlu0 %1533
      %1535 = vrot.lane.b32.xlu0 %v1047, 80
      %v1536 = vpop.permute.xlu0 %1535
      %1537 = vrot.lane.b32.xlu0 %v1050, 80
      %v1538 = vpop.permute.xlu0 %1537
      %1539 = vrot.lane.b32.xlu0 %v1052, 80
      %v1540 = vpop.permute.xlu0 %1539
      %1541 = vrot.lane.b32.xlu0 %v1062, 80
      %v1542 = vpop.permute.xlu0 %1541
      %1543 = vrot.lane.b32.xlu0 %v1064, 80
      %v1544 = vpop.permute.xlu0 %1543
      %1577 = vrot.lane.b32.xlu0 %v827, 96
      %v1578 = vpop.permute.xlu0 %1577
      %1579 = vrot.lane.b32.xlu0 %v733, 96
      %v1580 = vpop.permute.xlu0 %1579
      %1581 = vrot.lane.b32.xlu0 %v828, 96
      %v1582 = vpop.permute.xlu0 %1581
      %1583 = vrot.lane.b32.xlu0 %v736, 96
      %v1584 = vpop.permute.xlu0 %1583
      %1585 = vrot.lane.b32.xlu0 %v829, 96
      %v1586 = vpop.permute.xlu0 %1585
      %1587 = vrot.lane.b32.xlu0 %v739, 96
      %v1588 = vpop.permute.xlu0 %1587
      %1589 = vrot.lane.b32.xlu0 %v830, 96
      %v1590 = vpop.permute.xlu0 %1589
      %1591 = vrot.lane.b32.xlu0 %v742, 96
      %v1592 = vpop.permute.xlu0 %1591
      %1593 = vrot.lane.b32.xlu0 %v831, 96
      %v1594 = vpop.permute.xlu0 %1593
      %1595 = vrot.lane.b32.xlu0 %v745, 96
      %v1596 = vpop.permute.xlu0 %1595
      %1597 = vrot.lane.b32.xlu0 %v832, 96
      %v1598 = vpop.permute.xlu0 %1597
      %1599 = vrot.lane.b32.xlu0 %v748, 96
      %v1600 = vpop.permute.xlu0 %1599
      %1601 = vrot.lane.b32.xlu0 %v833, 96
      %v1602 = vpop.permute.xlu0 %1601
      %1603 = vrot.lane.b32.xlu0 %v751, 96
      %v1604 = vpop.permute.xlu0 %1603
      %1605 = vrot.lane.b32.xlu0 %v834, 96
      %v1606 = vpop.permute.xlu0 %1605
      %1607 = vrot.lane.b32.xlu0 %v754, 96
      %v1608 = vpop.permute.xlu0 %1607
      %1609 = vrot.lane.b32.xlu0 %v835, 96
      %v1610 = vpop.permute.xlu0 %1609
      %1611 = vrot.lane.b32.xlu0 %v757, 96
      %v1612 = vpop.permute.xlu0 %1611
      %1613 = vrot.lane.b32.xlu0 %v836, 96
      %v1614 = vpop.permute.xlu0 %1613
      %1615 = vrot.lane.b32.xlu0 %v760, 96
      %v1616 = vpop.permute.xlu0 %1615
      %1617 = vrot.lane.b32.xlu0 %v837, 96
      %v1618 = vpop.permute.xlu0 %1617
      %1619 = vrot.lane.b32.xlu0 %v763, 96
      %v1620 = vpop.permute.xlu0 %1619
      %1621 = vrot.lane.b32.xlu0 %v838, 96
      %v1622 = vpop.permute.xlu0 %1621
      %1623 = vrot.lane.b32.xlu0 %v766, 96
      %v1624 = vpop.permute.xlu0 %1623
      %1625 = vrot.lane.b32.xlu0 %v839, 96
      %v1626 = vpop.permute.xlu0 %1625
      %1627 = vrot.lane.b32.xlu0 %v769, 96
      %v1628 = vpop.permute.xlu0 %1627
      %1629 = vrot.lane.b32.xlu0 %v840, 96
      %v1630 = vpop.permute.xlu0 %1629
      %1631 = vrot.lane.b32.xlu0 %v772, 96
      %v1632 = vpop.permute.xlu0 %1631
      %1633 = vrot.lane.b32.xlu0 %v841, 96
      %v1634 = vpop.permute.xlu0 %1633
      %1635 = vrot.lane.b32.xlu0 %v775, 96
      %v1636 = vpop.permute.xlu0 %1635
      %1637 = vrot.lane.b32.xlu0 %v825, 96
      %v1638 = vpop.permute.xlu0 %1637
      %1639 = vrot.lane.b32.xlu0 %v727, 96
      %v1640 = vpop.permute.xlu0 %1639
      %1673 = vrot.lane.b32.xlu0 %v904, 112
      %v1674 = vpop.permute.xlu0 %1673
      %1675 = vrot.lane.b32.xlu0 %v906, 112
      %v1676 = vpop.permute.xlu0 %1675
      %1677 = vrot.lane.b32.xlu0 %v909, 112
      %v1678 = vpop.permute.xlu0 %1677
      %1679 = vrot.lane.b32.xlu0 %v911, 112
      %v1680 = vpop.permute.xlu0 %1679
      %1681 = vrot.lane.b32.xlu0 %v914, 112
      %v1682 = vpop.permute.xlu0 %1681
      %1683 = vrot.lane.b32.xlu0 %v916, 112
      %v1684 = vpop.permute.xlu0 %1683
      %1685 = vrot.lane.b32.xlu0 %v919, 112
      %v1686 = vpop.permute.xlu0 %1685
      %1687 = vrot.lane.b32.xlu0 %v921, 112
      %v1688 = vpop.permute.xlu0 %1687
      %1689 = vrot.lane.b32.xlu0 %v924, 112
      %v1690 = vpop.permute.xlu0 %1689
      %1691 = vrot.lane.b32.xlu0 %v926, 112
      %v1692 = vpop.permute.xlu0 %1691
      %1693 = vrot.lane.b32.xlu0 %v929, 112
      %v1694 = vpop.permute.xlu0 %1693
      %1695 = vrot.lane.b32.xlu0 %v931, 112
      %v1696 = vpop.permute.xlu0 %1695
      %1697 = vrot.lane.b32.xlu0 %v934, 112
      %v1698 = vpop.permute.xlu0 %1697
      %1699 = vrot.lane.b32.xlu0 %v936, 112
      %v1700 = vpop.permute.xlu0 %1699
      %1701 = vrot.lane.b32.xlu0 %v939, 112
      %v1702 = vpop.permute.xlu0 %1701
      %1703 = vrot.lane.b32.xlu0 %v941, 112
      %v1704 = vpop.permute.xlu0 %1703
      %1705 = vrot.lane.b32.xlu0 %v944, 112
      %v1706 = vpop.permute.xlu0 %1705
      %1707 = vrot.lane.b32.xlu0 %v946, 112
      %v1708 = vpop.permute.xlu0 %1707
      %1709 = vrot.lane.b32.xlu0 %v949, 112
      %v1710 = vpop.permute.xlu0 %1709
      %1711 = vrot.lane.b32.xlu0 %v951, 112
      %v1712 = vpop.permute.xlu0 %1711
      %1713 = vrot.lane.b32.xlu0 %v954, 112
      %v1714 = vpop.permute.xlu0 %1713
      %1715 = vrot.lane.b32.xlu0 %v956, 112
      %v1716 = vpop.permute.xlu0 %1715
      %1717 = vrot.lane.b32.xlu0 %v959, 112
      %v1718 = vpop.permute.xlu0 %1717
      %1719 = vrot.lane.b32.xlu0 %v961, 112
      %v1720 = vpop.permute.xlu0 %1719
      %1721 = vrot.lane.b32.xlu0 %v964, 112
      %v1722 = vpop.permute.xlu0 %1721
      %1723 = vrot.lane.b32.xlu0 %v966, 112
      %v1724 = vpop.permute.xlu0 %1723
      %1725 = vrot.lane.b32.xlu0 %v969, 112
      %v1726 = vpop.permute.xlu0 %1725
      %1727 = vrot.lane.b32.xlu0 %v971, 112
      %v1728 = vpop.permute.xlu0 %1727
      %1729 = vrot.lane.b32.xlu0 %v1057, 112
      %v1730 = vpop.permute.xlu0 %1729
      %1731 = vrot.lane.b32.xlu0 %v1059, 112
      %v1732 = vpop.permute.xlu0 %1731
      %1733 = vrot.lane.b32.xlu0 %v894, 112
      %v1734 = vpop.permute.xlu0 %1733
      %1735 = vrot.lane.b32.xlu0 %v896, 112
      %v1736 = vpop.permute.xlu0 %1735
      %vm1769 = vcmask 130048
      %v1770 = vsel %vm1769, %v825, %v1098
      %v1771 = vsel %vm1769, %v727, %v1100
      %v1772 = vsel %vm1769, %v826, %v1102
      %v1773 = vsel %vm1769, %v730, %v1104
      %v1774 = vsel %vm1769, %v827, %v1106
      %v1775 = vsel %vm1769, %v733, %v1108
      %v1776 = vsel %vm1769, %v828, %v1110
      %v1777 = vsel %vm1769, %v736, %v1112
      %v1778 = vsel %vm1769, %v829, %v1114
      %v1779 = vsel %vm1769, %v739, %v1116
      %v1780 = vsel %vm1769, %v830, %v1118
      %v1781 = vsel %vm1769, %v742, %v1120
      %v1782 = vsel %vm1769, %v831, %v1122
      %v1783 = vsel %vm1769, %v745, %v1124
      %v1784 = vsel %vm1769, %v832, %v1126
      %v1785 = vsel %vm1769, %v748, %v1128
      %v1786 = vsel %vm1769, %v833, %v1130
      %v1787 = vsel %vm1769, %v751, %v1132
      %v1788 = vsel %vm1769, %v834, %v1134
      %v1789 = vsel %vm1769, %v754, %v1136
      %v1790 = vsel %vm1769, %v835, %v1138
      %v1791 = vsel %vm1769, %v757, %v1140
      %v1792 = vsel %vm1769, %v836, %v1142
      %v1793 = vsel %vm1769, %v760, %v1144
      %v1794 = vsel %vm1769, %v837, %v1146
      %v1795 = vsel %vm1769, %v763, %v1148
      %v1796 = vsel %vm1769, %v838, %v1150
      %v1797 = vsel %vm1769, %v766, %v1152
      %v1798 = vsel %vm1769, %v839, %v1154
      %v1799 = vsel %vm1769, %v769, %v1156
      %v1800 = vsel %vm1769, %v840, %v1158
      %v1801 = vsel %vm1769, %v772, %v1160
      %vm1802 = vcmask 261120
      %v1803 = vsel %vm1802, %v1770, %v1194
      %v1804 = vsel %vm1802, %v1771, %v1196
      %v1805 = vsel %vm1802, %v1772, %v1198
      %v1806 = vsel %vm1802, %v1773, %v1200
      %v1807 = vsel %vm1802, %v1774, %v1202
      %v1808 = vsel %vm1802, %v1775, %v1204
      %v1809 = vsel %vm1802, %v1776, %v1206
      %v1810 = vsel %vm1802, %v1777, %v1208
      %v1811 = vsel %vm1802, %v1778, %v1210
      %v1812 = vsel %vm1802, %v1779, %v1212
      %v1813 = vsel %vm1802, %v1780, %v1214
      %v1814 = vsel %vm1802, %v1781, %v1216
      %v1815 = vsel %vm1802, %v1782, %v1218
      %v1816 = vsel %vm1802, %v1783, %v1220
      %v1817 = vsel %vm1802, %v1784, %v1222
      %v1818 = vsel %vm1802, %v1785, %v1224
      %v1819 = vsel %vm1802, %v1786, %v1226
      %v1820 = vsel %vm1802, %v1787, %v1228
      %v1821 = vsel %vm1802, %v1788, %v1230
      %v1822 = vsel %vm1802, %v1789, %v1232
      %v1823 = vsel %vm1802, %v1790, %v1234
      %v1824 = vsel %vm1802, %v1791, %v1236
      %v1825 = vsel %vm1802, %v1792, %v1238
      %v1826 = vsel %vm1802, %v1793, %v1240
      %v1827 = vsel %vm1802, %v1794, %v1242
      %v1828 = vsel %vm1802, %v1795, %v1244
      %v1829 = vsel %vm1802, %v1796, %v1246
      %v1830 = vsel %vm1802, %v1797, %v1248
      %v1831 = vsel %vm1802, %v1798, %v1250
      %v1832 = vsel %vm1802, %v1799, %v1252
      %v1833 = vsel %vm1802, %v1800, %v1254
      %v1834 = vsel %vm1802, %v1801, %v1256
      %vm1835 = vcmask 392192
      %v1836 = vsel %vm1835, %v1803, %v1290
      %v1837 = vsel %vm1835, %v1804, %v1292
      %v1838 = vsel %vm1835, %v1805, %v1294
      %v1839 = vsel %vm1835, %v1806, %v1296
      %v1840 = vsel %vm1835, %v1807, %v1298
      %v1841 = vsel %vm1835, %v1808, %v1300
      %v1842 = vsel %vm1835, %v1809, %v1302
      %v1843 = vsel %vm1835, %v1810, %v1304
      %v1844 = vsel %vm1835, %v1811, %v1306
      %v1845 = vsel %vm1835, %v1812, %v1308
      %v1846 = vsel %vm1835, %v1813, %v1310
      %v1847 = vsel %vm1835, %v1814, %v1312
      %v1848 = vsel %vm1835, %v1815, %v1314
      %v1849 = vsel %vm1835, %v1816, %v1316
      %v1850 = vsel %vm1835, %v1817, %v1318
      %v1851 = vsel %vm1835, %v1818, %v1320
      %v1852 = vsel %vm1835, %v1819, %v1322
      %v1853 = vsel %vm1835, %v1820, %v1324
      %v1854 = vsel %vm1835, %v1821, %v1326
      %v1855 = vsel %vm1835, %v1822, %v1328
      %v1856 = vsel %vm1835, %v1823, %v1330
      %v1857 = vsel %vm1835, %v1824, %v1332
      %v1858 = vsel %vm1835, %v1825, %v1334
      %v1859 = vsel %vm1835, %v1826, %v1336
      %v1860 = vsel %vm1835, %v1827, %v1338
      %v1861 = vsel %vm1835, %v1828, %v1340
      %v1862 = vsel %vm1835, %v1829, %v1342
      %v1863 = vsel %vm1835, %v1830, %v1344
      %v1864 = vsel %vm1835, %v1831, %v1346
      %v1865 = vsel %vm1835, %v1832, %v1348
      %v1866 = vsel %vm1835, %v1833, %v1350
      %v1867 = vsel %vm1835, %v1834, %v1352
      %vm1868 = vcmask 523264
      %v1869 = vsel %vm1868, %v1836, %v1386
      %v1870 = vsel %vm1868, %v1837, %v1388
      %v1871 = vsel %vm1868, %v1838, %v1390
      %v1872 = vsel %vm1868, %v1839, %v1392
      %v1873 = vsel %vm1868, %v1840, %v1394
      %v1874 = vsel %vm1868, %v1841, %v1396
      %v1875 = vsel %vm1868, %v1842, %v1398
      %v1876 = vsel %vm1868, %v1843, %v1400
      %v1877 = vsel %vm1868, %v1844, %v1402
      %v1878 = vsel %vm1868, %v1845, %v1404
      %v1879 = vsel %vm1868, %v1846, %v1406
      %v1880 = vsel %vm1868, %v1847, %v1408
      %v1881 = vsel %vm1868, %v1848, %v1410
      %v1882 = vsel %vm1868, %v1849, %v1412
      %v1883 = vsel %vm1868, %v1850, %v1414
      %v1884 = vsel %vm1868, %v1851, %v1416
      %v1885 = vsel %vm1868, %v1852, %v1418
      %v1886 = vsel %vm1868, %v1853, %v1420
      %v1887 = vsel %vm1868, %v1854, %v1422
      %v1888 = vsel %vm1868, %v1855, %v1424
      %v1889 = vsel %vm1868, %v1856, %v1426
      %v1890 = vsel %vm1868, %v1857, %v1428
      %v1891 = vsel %vm1868, %v1858, %v1430
      %v1892 = vsel %vm1868, %v1859, %v1432
      %v1893 = vsel %vm1868, %v1860, %v1434
      %v1894 = vsel %vm1868, %v1861, %v1436
      %v1895 = vsel %vm1868, %v1862, %v1438
      %v1896 = vsel %vm1868, %v1863, %v1440
      %v1897 = vsel %vm1868, %v1864, %v1442
      %v1898 = vsel %vm1868, %v1865, %v1444
      %v1899 = vsel %vm1868, %v1866, %v1446
      %v1900 = vsel %vm1868, %v1867, %v1448
      %vm1901 = vcmask 654336
      %v1902 = vsel %vm1901, %v1869, %v1482
      %v1903 = vsel %vm1901, %v1870, %v1484
      %v1904 = vsel %vm1901, %v1871, %v1486
      %v1905 = vsel %vm1901, %v1872, %v1488
      %v1906 = vsel %vm1901, %v1873, %v1490
      %v1907 = vsel %vm1901, %v1874, %v1492
      %v1908 = vsel %vm1901, %v1875, %v1494
      %v1909 = vsel %vm1901, %v1876, %v1496
      %v1910 = vsel %vm1901, %v1877, %v1498
      %v1911 = vsel %vm1901, %v1878, %v1500
      %v1912 = vsel %vm1901, %v1879, %v1502
      %v1913 = vsel %vm1901, %v1880, %v1504
      %v1914 = vsel %vm1901, %v1881, %v1506
      %v1915 = vsel %vm1901, %v1882, %v1508
      %v1916 = vsel %vm1901, %v1883, %v1510
      %v1917 = vsel %vm1901, %v1884, %v1512
      %v1918 = vsel %vm1901, %v1885, %v1514
      %v1919 = vsel %vm1901, %v1886, %v1516
      %v1920 = vsel %vm1901, %v1887, %v1518
      %v1921 = vsel %vm1901, %v1888, %v1520
      %v1922 = vsel %vm1901, %v1889, %v1522
      %v1923 = vsel %vm1901, %v1890, %v1524
      %v1924 = vsel %vm1901, %v1891, %v1526
      %v1925 = vsel %vm1901, %v1892, %v1528
      %v1926 = vsel %vm1901, %v1893, %v1530
      %v1927 = vsel %vm1901, %v1894, %v1532
      %v1928 = vsel %vm1901, %v1895, %v1534
      %v1929 = vsel %vm1901, %v1896, %v1536
      %v1930 = vsel %vm1901, %v1897, %v1538
      %v1931 = vsel %vm1901, %v1898, %v1540
      %v1932 = vsel %vm1901, %v1899, %v1542
      %v1933 = vsel %vm1901, %v1900, %v1544
      %vm1934 = vcmask 785408
      %v1935 = vsel %vm1934, %v1902, %v1578
      %v1936 = vsel %vm1934, %v1903, %v1580
      %v1937 = vsel %vm1934, %v1904, %v1582
      %v1938 = vsel %vm1934, %v1905, %v1584
      %v1939 = vsel %vm1934, %v1906, %v1586
      %v1940 = vsel %vm1934, %v1907, %v1588
      %v1941 = vsel %vm1934, %v1908, %v1590
      %v1942 = vsel %vm1934, %v1909, %v1592
      %v1943 = vsel %vm1934, %v1910, %v1594
      %v1944 = vsel %vm1934, %v1911, %v1596
      %v1945 = vsel %vm1934, %v1912, %v1598
      %v1946 = vsel %vm1934, %v1913, %v1600
      %v1947 = vsel %vm1934, %v1914, %v1602
      %v1948 = vsel %vm1934, %v1915, %v1604
      %v1949 = vsel %vm1934, %v1916, %v1606
      %v1950 = vsel %vm1934, %v1917, %v1608
      %v1951 = vsel %vm1934, %v1918, %v1610
      %v1952 = vsel %vm1934, %v1919, %v1612
      %v1953 = vsel %vm1934, %v1920, %v1614
      %v1954 = vsel %vm1934, %v1921, %v1616
      %v1955 = vsel %vm1934, %v1922, %v1618
      %v1956 = vsel %vm1934, %v1923, %v1620
      %v1957 = vsel %vm1934, %v1924, %v1622
      %v1958 = vsel %vm1934, %v1925, %v1624
      %v1959 = vsel %vm1934, %v1926, %v1626
      %v1960 = vsel %vm1934, %v1927, %v1628
      %v1961 = vsel %vm1934, %v1928, %v1630
      %v1962 = vsel %vm1934, %v1929, %v1632
      %v1963 = vsel %vm1934, %v1930, %v1634
      %v1964 = vsel %vm1934, %v1931, %v1636
      %v1965 = vsel %vm1934, %v1932, %v1638
      %v1966 = vsel %vm1934, %v1933, %v1640
      %vm1967 = vcmask 916480
      %v1968 = vsel %vm1967, %v1935, %v1674
      %v1969 = vsel %vm1967, %v1936, %v1676
      %v1970 = vsel %vm1967, %v1937, %v1678
      %v1971 = vsel %vm1967, %v1938, %v1680
      %v1972 = vsel %vm1967, %v1939, %v1682
      %v1973 = vsel %vm1967, %v1940, %v1684
      %v1974 = vsel %vm1967, %v1941, %v1686
      %v1975 = vsel %vm1967, %v1942, %v1688
      %v1976 = vsel %vm1967, %v1943, %v1690
      %v1977 = vsel %vm1967, %v1944, %v1692
      %v1978 = vsel %vm1967, %v1945, %v1694
      %v1979 = vsel %vm1967, %v1946, %v1696
      %v1980 = vsel %vm1967, %v1947, %v1698
      %v1981 = vsel %vm1967, %v1948, %v1700
      %v1982 = vsel %vm1967, %v1949, %v1702
      %v1983 = vsel %vm1967, %v1950, %v1704
      %v1984 = vsel %vm1967, %v1951, %v1706
      %v1985 = vsel %vm1967, %v1952, %v1708
      %v1986 = vsel %vm1967, %v1953, %v1710
      %v1987 = vsel %vm1967, %v1954, %v1712
      %v1988 = vsel %vm1967, %v1955, %v1714
      %v1989 = vsel %vm1967, %v1956, %v1716
      %v1990 = vsel %vm1967, %v1957, %v1718
      %v1991 = vsel %vm1967, %v1958, %v1720
      %v1992 = vsel %vm1967, %v1959, %v1722
      %v1993 = vsel %vm1967, %v1960, %v1724
      %v1994 = vsel %vm1967, %v1961, %v1726
      %v1995 = vsel %vm1967, %v1962, %v1728
      %v1996 = vsel %vm1967, %v1963, %v1730
      %v1997 = vsel %vm1967, %v1964, %v1732
      %v1998 = vsel %vm1967, %v1965, %v1734
      %v1999 = vsel %vm1967, %v1966, %v1736
      %v2000 = vpack.c.bf16 %v1969, %v1968
      %v2001 = vpack.c.bf16 %v987, %v985
      %v2002 = vpack.c.bf16 %v1971, %v1970
      %v2003 = vpack.c.bf16 %v992, %v990
      %v2004 = vpack.c.bf16 %v1973, %v1972
      %v2005 = vpack.c.bf16 %v997, %v995
      %v2006 = vpack.c.bf16 %v1975, %v1974
      %v2007 = vpack.c.bf16 %v1002, %v1000
      %v2008 = vpack.c.bf16 %v1977, %v1976
      %v2009 = vpack.c.bf16 %v1007, %v1005
      %v2010 = vpack.c.bf16 %v1979, %v1978
      %v2011 = vpack.c.bf16 %v1012, %v1010
      %v2012 = vpack.c.bf16 %v1981, %v1980
      %v2013 = vpack.c.bf16 %v1017, %v1015
      %v2014 = vpack.c.bf16 %v1983, %v1982
      %v2015 = vpack.c.bf16 %v1022, %v1020
      %v2016 = vpack.c.bf16 %v1985, %v1984
      %v2017 = vpack.c.bf16 %v1027, %v1025
      %v2018 = vpack.c.bf16 %v1987, %v1986
      %v2019 = vpack.c.bf16 %v1032, %v1030
      %v2020 = vpack.c.bf16 %v1989, %v1988
      %v2021 = vpack.c.bf16 %v1037, %v1035
      %v2022 = vpack.c.bf16 %v1991, %v1990
      %v2023 = vpack.c.bf16 %v1042, %v1040
      %v2024 = vpack.c.bf16 %v1993, %v1992
      %v2025 = vpack.c.bf16 %v1047, %v1045
      %v2026 = vpack.c.bf16 %v1995, %v1994
      %v2027 = vpack.c.bf16 %v1052, %v1050
      %v2028 = vpack.c.bf16 %v1997, %v1996
      %v2029 = vpack.c.bf16 %v1064, %v1062
      %v2030 = vpack.c.bf16 %v1999, %v1998
      %v2031 = vpack.c.bf16 %v977, %v975
      %v2032 = vld [vmem:[%s5] sm:$0xf]
      %v2033 = vld [vmem:[%s5 + $0x4] sm:$0xf]
      %v2034 = vld [vmem:[%s5 + $0x8] sm:$0xf]
      %v2035 = vld [vmem:[%s5 + $0xc] sm:$0xf]
      %v2036 = vld [vmem:[%s5 + $0x10] sm:$0xf]
      %v2037 = vld [vmem:[%s5 + $0x14] sm:$0xf]
      %v2038 = vld [vmem:[%s5 + $0x18] sm:$0xf]
      %v2039 = vld [vmem:[%s5 + $0x1c] sm:$0xf]
      %v2040 = vld [vmem:[%s5 + $0x20] sm:$0xf]
      %v2041 = vld [vmem:[%s5 + $0x24] sm:$0xf]
      %v2042 = vld [vmem:[%s5 + $0x28] sm:$0xf]
      %v2043 = vld [vmem:[%s5 + $0x2c] sm:$0xf]
      %v2044 = vld [vmem:[%s5 + $0x30] sm:$0xf]
      %v2045 = vld [vmem:[%s5 + $0x34] sm:$0xf]
      %v2046 = vld [vmem:[%s5 + $0x38] sm:$0xf]
      %v2047 = vld [vmem:[%s5 + $0x3c] sm:$0xf]
      %v2048 = vld [vmem:[%s5 + $0x40] sm:$0xf]
      %v2049 = vld [vmem:[%s5 + $0x44] sm:$0xf]
      %v2050 = vld [vmem:[%s6] sm:$0x1]
      %v2052 = vlaneseq
      %v2053 = vshrl.u32 %v2052, 7
      %v2054 = vsub.s32 0, %v2053
      %v2055 = vrot.slane %v2050, %v2054
      %v2075 = vunpack.c.l.b16 %v2032
      %v2076 = vunpack.c.l.b16 %v2033
      %v2077 = vunpack.c.l.b16 %v2034
      %v2078 = vunpack.c.l.b16 %v2035
      %v2079 = vunpack.c.l.b16 %v2036
      %v2080 = vunpack.c.l.b16 %v2037
      %v2081 = vunpack.c.l.b16 %v2038
      %v2082 = vunpack.c.l.b16 %v2039
      %v2083 = vunpack.c.l.b16 %v2040
      %v2084 = vunpack.c.l.b16 %v2041
      %v2085 = vunpack.c.l.b16 %v2042
      %v2086 = vunpack.c.l.b16 %v2043
      %v2087 = vunpack.c.l.b16 %v2044
      %v2088 = vunpack.c.l.b16 %v2045
      %v2089 = vunpack.c.l.b16 %v2046
      %v2090 = vunpack.c.l.b16 %v2047
      %v2091 = vunpack.c.l.b16 %v2048
      %v2092 = vunpack.c.l.b16 %v2049
      %v2093 = vpack.c.b16 %v2076, %v2075
      %v2094 = vpack.c.b16 %v2078, %v2077
      %v2095 = vpack.c.b16 %v2080, %v2079
      %v2096 = vpack.c.b16 %v2082, %v2081
      %v2097 = vpack.c.b16 %v2084, %v2083
      %v2098 = vpack.c.b16 %v2086, %v2085
      %v2099 = vpack.c.b16 %v2088, %v2087
      %v2100 = vpack.c.b16 %v2090, %v2089
      %v2101 = vpack.c.b16 %v2092, %v2091
      %v2112 = vsel %vm1769, %v2001, 0
      %v2115 = vsel %vm1769, %v2003, 0
      %v2118 = vsel %vm1769, %v2005, 0
      %v2121 = vsel %vm1769, %v2007, 0
      %v2124 = vsel %vm1769, %v2009, 0
      %v2127 = vsel %vm1769, %v2011, 0
      %v2130 = vsel %vm1769, %v2013, 0
      %v2133 = vsel %vm1769, %v2015, 0
      %v2136 = vsel %vm1769, %v2017, 0
      %v2139 = vsel %vm1769, %v2019, 0
      %v2142 = vsel %vm1769, %v2021, 0
      %v2145 = vsel %vm1769, %v2023, 0
      %v2148 = vsel %vm1769, %v2025, 0
      %v2151 = vsel %vm1769, %v2027, 0
      %v2154 = vsel %vm1769, %v2029, 0
      %v2157 = vsel %vm1769, %v2031, 0
      %2159 = vmatprep.subr.bf16.mxu0 0
      %2160 = vmatpush1.bf16.msra.mxu0 %v2100
      %2161 = vmatprep.subr.bf16.mxu0 0
      %2162 = vmatpush1.bf16.msra.mxu0 %v2099
      %2163 = vmatprep.subr.bf16.mxu0 0
      %2164 = vmatpush1.bf16.msra.mxu0 %v2098
      %2165 = vmatprep.subr.bf16.mxu0 0
      %2166 = vmatpush1.bf16.msra.mxu0 %v2097
      %2167 = vmatprep.subr.bf16.mxu0 0
      %2168 = vmatpush1.bf16.msra.mxu0 %v2096
      %2169 = vmatprep.subr.bf16.mxu0 0
      %2170 = vmatpush1.bf16.msra.mxu0 %v2095
      %2171 = vmatprep.subr.bf16.mxu0 0
      %2172 = vmatpush1.bf16.msra.mxu0 %v2094
      %2173 = vmatprep.subr.bf16.mxu0 0
      %2174 = vmatpush1.bf16.msra.mxu0 %v2093
      %2175 = vmatprep.subr.bf16.mxu0 0
      %2176 = vmatpush2.bf16.msra.mxu0 0
      %2177 = vmatprep.subr.bf16.mxu0 0
      %2178 = vmatpush2.bf16.msra.mxu0 0
      %2179 = vmatprep.subr.bf16.mxu0 0
      %2180 = vmatpush2.bf16.msra.mxu0 0
      %2181 = vmatprep.subr.bf16.mxu0 0
      %2182 = vmatpush2.bf16.msra.mxu0 0
      %2183 = vmatprep.subr.bf16.mxu0 0
      %2184 = vmatpush2.bf16.msra.mxu0 0
      %2185 = vmatprep.subr.bf16.mxu0 0
      %2186 = vmatpush2.bf16.msra.mxu0 0
      %2187 = vmatprep.subr.bf16.mxu0 0
      %2188 = vmatpush2.bf16.msra.mxu0 0
      %2189 = vmatprep.subr.bf16.mxu0 0
      %2190 = vmatpush2.bf16.msra.mxu0 %v2101
      %2191 = vmatprep.mubr.bf16.mxu0 %v2112
      %2192 = vmatmul.mubr.bf16.gmra.mxu0 %v2000
      %v2193 = vpop.f32.mrf.mxu0
      %v2194 = vadd.f32 %v2055, %v2193
      %v2195 = vpop.f32.mrf.mxu0
      %v2196 = vpop.f32.mrf.mxu0
      %v2197 = vadd.f32 %v2055, %v2196
      %v2198 = vpop.f32.mrf.mxu0
      %2199 = vmatprep.mubr.bf16.mxu0 %v2115
      %2200 = vmatmul.mubr.bf16.gmra.mxu0 %v2002
      %v2201 = vpop.f32.mrf.mxu0
      %v2202 = vadd.f32 %v2055, %v2201
      %v2203 = vpop.f32.mrf.mxu0
      %v2204 = vpop.f32.mrf.mxu0
      %v2205 = vadd.f32 %v2055, %v2204
      %v2206 = vpop.f32.mrf.mxu0
      %2207 = vmatprep.mubr.bf16.mxu0 %v2118
      %2208 = vmatmul.mubr.bf16.gmra.mxu0 %v2004
      %v2209 = vpop.f32.mrf.mxu0
      %v2210 = vadd.f32 %v2055, %v2209
      %v2211 = vpop.f32.mrf.mxu0
      %v2212 = vpop.f32.mrf.mxu0
      %v2213 = vadd.f32 %v2055, %v2212
      %v2214 = vpop.f32.mrf.mxu0
      %2215 = vmatprep.mubr.bf16.mxu0 %v2121
      %2216 = vmatmul.mubr.bf16.gmra.mxu0 %v2006
      %v2217 = vpop.f32.mrf.mxu0
      %v2218 = vadd.f32 %v2055, %v2217
      %v2219 = vpop.f32.mrf.mxu0
      %v2220 = vpop.f32.mrf.mxu0
      %v2221 = vadd.f32 %v2055, %v2220
      %v2222 = vpop.f32.mrf.mxu0
      %2223 = vmatprep.mubr.bf16.mxu0 %v2124
      %2224 = vmatmul.mubr.bf16.gmra.mxu0 %v2008
      %v2225 = vpop.f32.mrf.mxu0
      %v2226 = vadd.f32 %v2055, %v2225
      %v2227 = vpop.f32.mrf.mxu0
      %v2228 = vpop.f32.mrf.mxu0
      %v2229 = vadd.f32 %v2055, %v2228
      %v2230 = vpop.f32.mrf.mxu0
      %2231 = vmatprep.mubr.bf16.mxu0 %v2127
      %2232 = vmatmul.mubr.bf16.gmra.mxu0 %v2010
      %v2233 = vpop.f32.mrf.mxu0
      %v2234 = vadd.f32 %v2055, %v2233
      %v2235 = vpop.f32.mrf.mxu0
      %v2236 = vpop.f32.mrf.mxu0
      %v2237 = vadd.f32 %v2055, %v2236
      %v2238 = vpop.f32.mrf.mxu0
      %2239 = vmatprep.mubr.bf16.mxu0 %v2130
      %2240 = vmatmul.mubr.bf16.gmra.mxu0 %v2012
      %v2241 = vpop.f32.mrf.mxu0
      %v2242 = vadd.f32 %v2055, %v2241
      %v2243 = vpop.f32.mrf.mxu0
      %v2244 = vpop.f32.mrf.mxu0
      %v2245 = vadd.f32 %v2055, %v2244
      %v2246 = vpop.f32.mrf.mxu0
      %2247 = vmatprep.mubr.bf16.mxu0 %v2133
      %2248 = vmatmul.mubr.bf16.gmra.mxu0 %v2014
      %v2249 = vpop.f32.mrf.mxu0
      %v2250 = vadd.f32 %v2055, %v2249
      %v2251 = vpop.f32.mrf.mxu0
      %v2252 = vpop.f32.mrf.mxu0
      %v2253 = vadd.f32 %v2055, %v2252
      %v2254 = vpop.f32.mrf.mxu0
      %2255 = vmatprep.mubr.bf16.mxu0 %v2136
      %2256 = vmatmul.mubr.bf16.gmra.mxu0 %v2016
      %v2257 = vpop.f32.mrf.mxu0
      %v2258 = vadd.f32 %v2055, %v2257
      %v2259 = vpop.f32.mrf.mxu0
      %v2260 = vpop.f32.mrf.mxu0
      %v2261 = vadd.f32 %v2055, %v2260
      %v2262 = vpop.f32.mrf.mxu0
      %2263 = vmatprep.mubr.bf16.mxu0 %v2139
      %2264 = vmatmul.mubr.bf16.gmra.mxu0 %v2018
      %v2265 = vpop.f32.mrf.mxu0
      %v2266 = vadd.f32 %v2055, %v2265
      %v2267 = vpop.f32.mrf.mxu0
      %v2268 = vpop.f32.mrf.mxu0
      %v2269 = vadd.f32 %v2055, %v2268
      %v2270 = vpop.f32.mrf.mxu0
      %2271 = vmatprep.mubr.bf16.mxu0 %v2142
      %2272 = vmatmul.mubr.bf16.gmra.mxu0 %v2020
      %v2273 = vpop.f32.mrf.mxu0
      %v2274 = vadd.f32 %v2055, %v2273
      %v2275 = vpop.f32.mrf.mxu0
      %v2276 = vpop.f32.mrf.mxu0
      %v2277 = vadd.f32 %v2055, %v2276
      %v2278 = vpop.f32.mrf.mxu0
      %2279 = vmatprep.mubr.bf16.mxu0 %v2145
      %2280 = vmatmul.mubr.bf16.gmra.mxu0 %v2022
      %v2281 = vpop.f32.mrf.mxu0
      %v2282 = vadd.f32 %v2055, %v2281
      %v2283 = vpop.f32.mrf.mxu0
      %v2284 = vpop.f32.mrf.mxu0
      %v2285 = vadd.f32 %v2055, %v2284
      %v2286 = vpop.f32.mrf.mxu0
      %2287 = vmatprep.mubr.bf16.mxu0 %v2148
      %2288 = vmatmul.mubr.bf16.gmra.mxu0 %v2024
      %v2289 = vpop.f32.mrf.mxu0
      %v2290 = vadd.f32 %v2055, %v2289
      %v2291 = vpop.f32.mrf.mxu0
      %v2292 = vpop.f32.mrf.mxu0
      %v2293 = vadd.f32 %v2055, %v2292
      %v2294 = vpop.f32.mrf.mxu0
      %2295 = vmatprep.mubr.bf16.mxu0 %v2151
      %2296 = vmatmul.mubr.bf16.gmra.mxu0 %v2026
      %v2297 = vpop.f32.mrf.mxu0
      %v2298 = vadd.f32 %v2055, %v2297
      %v2299 = vpop.f32.mrf.mxu0
      %v2300 = vpop.f32.mrf.mxu0
      %v2301 = vadd.f32 %v2055, %v2300
      %v2302 = vpop.f32.mrf.mxu0
      %2303 = vmatprep.mubr.bf16.mxu0 %v2154
      %2304 = vmatmul.mubr.bf16.gmra.mxu0 %v2028
      %v2305 = vpop.f32.mrf.mxu0
      %v2306 = vadd.f32 %v2055, %v2305
      %v2307 = vpop.f32.mrf.mxu0
      %v2308 = vpop.f32.mrf.mxu0
      %v2309 = vadd.f32 %v2055, %v2308
      %v2310 = vpop.f32.mrf.mxu0
      %2311 = vmatprep.mubr.bf16.mxu0 %v2157
      %2312 = vmatmul.mubr.bf16.gmra.mxu0 %v2030
      %v2313 = vpop.f32.mrf.mxu0
      %v2314 = vadd.f32 %v2055, %v2313
      %v2315 = vpop.f32.mrf.mxu0
      %v2316 = vpop.f32.mrf.mxu0
      %v2317 = vadd.f32 %v2055, %v2316
      %v2318 = vpop.f32.mrf.mxu0
      %2319 = vdwg.mxu0
      %2352 = vrot.lane.b32.xlu0 %v280, 4
      %v2353 = vpop.permute.xlu0 %2352
      %2354 = vrot.lane.b32.xlu0 %v281, 4
      %v2355 = vpop.permute.xlu0 %2354
      %2356 = vrot.lane.b32.xlu0 %v282, 4
      %v2357 = vpop.permute.xlu0 %2356
      %2358 = vrot.lane.b32.xlu0 %v283, 4
      %v2359 = vpop.permute.xlu0 %2358
      %2360 = vrot.lane.b32.xlu0 %v284, 4
      %v2361 = vpop.permute.xlu0 %2360
      %2362 = vrot.lane.b32.xlu0 %v285, 4
      %v2363 = vpop.permute.xlu0 %2362
      %2364 = vrot.lane.b32.xlu0 %v286, 4
      %v2365 = vpop.permute.xlu0 %2364
      %2366 = vrot.lane.b32.xlu0 %v287, 4
      %v2367 = vpop.permute.xlu0 %2366
      %2368 = vrot.lane.b32.xlu0 %v288, 4
      %v2369 = vpop.permute.xlu0 %2368
      %2370 = vrot.lane.b32.xlu0 %v289, 4
      %v2371 = vpop.permute.xlu0 %2370
      %2372 = vrot.lane.b32.xlu0 %v290, 4
      %v2373 = vpop.permute.xlu0 %2372
      %2374 = vrot.lane.b32.xlu0 %v291, 4
      %v2375 = vpop.permute.xlu0 %2374
      %2376 = vrot.lane.b32.xlu0 %v292, 4
      %v2377 = vpop.permute.xlu0 %2376
      %2378 = vrot.lane.b32.xlu0 %v293, 4
      %v2379 = vpop.permute.xlu0 %2378
      %2380 = vrot.lane.b32.xlu0 %v294, 4
      %v2381 = vpop.permute.xlu0 %2380
      %2382 = vrot.lane.b32.xlu0 %v295, 4
      %v2383 = vpop.permute.xlu0 %2382
      %2384 = vrot.lane.b32.xlu0 %v296, 4
      %v2385 = vpop.permute.xlu0 %2384
      %2386 = vrot.lane.b32.xlu0 %v297, 4
      %v2387 = vpop.permute.xlu0 %2386
      %2388 = vrot.lane.b32.xlu0 %v298, 4
      %v2389 = vpop.permute.xlu0 %2388
      %2390 = vrot.lane.b32.xlu0 %v299, 4
      %v2391 = vpop.permute.xlu0 %2390
      %2392 = vrot.lane.b32.xlu0 %v300, 4
      %v2393 = vpop.permute.xlu0 %2392
      %2394 = vrot.lane.b32.xlu0 %v301, 4
      %v2395 = vpop.permute.xlu0 %2394
      %2396 = vrot.lane.b32.xlu0 %v302, 4
      %v2397 = vpop.permute.xlu0 %2396
      %2398 = vrot.lane.b32.xlu0 %v303, 4
      %v2399 = vpop.permute.xlu0 %2398
      %2400 = vrot.lane.b32.xlu0 %v304, 4
      %v2401 = vpop.permute.xlu0 %2400
      %2402 = vrot.lane.b32.xlu0 %v305, 4
      %v2403 = vpop.permute.xlu0 %2402
      %2404 = vrot.lane.b32.xlu0 %v306, 4
      %v2405 = vpop.permute.xlu0 %2404
      %2406 = vrot.lane.b32.xlu0 %v307, 4
      %v2407 = vpop.permute.xlu0 %2406
      %2408 = vrot.lane.b32.xlu0 %v308, 4
      %v2409 = vpop.permute.xlu0 %2408
      %2410 = vrot.lane.b32.xlu0 %v309, 4
      %v2411 = vpop.permute.xlu0 %2410
      %2412 = vrot.lane.b32.xlu0 %v310, 4
      %v2413 = vpop.permute.xlu0 %2412
      %2414 = vrot.lane.b32.xlu0 %v311, 4
      %v2415 = vpop.permute.xlu0 %2414
      %vm2448 = vcmask 31744
      %v2449 = vsel %vm2448, %v2194, %v2353
      %v2450 = vsel %vm2448, %v2197, %v2355
      %v2451 = vsel %vm2448, %v2202, %v2357
      %v2452 = vsel %vm2448, %v2205, %v2359
      %v2453 = vsel %vm2448, %v2210, %v2361
      %v2454 = vsel %vm2448, %v2213, %v2363
      %v2455 = vsel %vm2448, %v2218, %v2365
      %v2456 = vsel %vm2448, %v2221, %v2367
      %v2457 = vsel %vm2448, %v2226, %v2369
      %v2458 = vsel %vm2448, %v2229, %v2371
      %v2459 = vsel %vm2448, %v2234, %v2373
      %v2460 = vsel %vm2448, %v2237, %v2375
      %v2461 = vsel %vm2448, %v2242, %v2377
      %v2462 = vsel %vm2448, %v2245, %v2379
      %v2463 = vsel %vm2448, %v2250, %v2381
      %v2464 = vsel %vm2448, %v2253, %v2383
      %v2465 = vsel %vm2448, %v2258, %v2385
      %v2466 = vsel %vm2448, %v2261, %v2387
      %v2467 = vsel %vm2448, %v2266, %v2389
      %v2468 = vsel %vm2448, %v2269, %v2391
      %v2469 = vsel %vm2448, %v2274, %v2393
      %v2470 = vsel %vm2448, %v2277, %v2395
      %v2471 = vsel %vm2448, %v2282, %v2397
      %v2472 = vsel %vm2448, %v2285, %v2399
      %v2473 = vsel %vm2448, %v2290, %v2401
      %v2474 = vsel %vm2448, %v2293, %v2403
      %v2475 = vsel %vm2448, %v2298, %v2405
      %v2476 = vsel %vm2448, %v2301, %v2407
      %v2477 = vsel %vm2448, %v2306, %v2409
      %v2478 = vsel %vm2448, %v2309, %v2411
      %v2479 = vsel %vm2448, %v2314, %v2413
      %v2480 = vsel %vm2448, %v2317, %v2415
      %vm2481 = vcmask 97280
      %2482 = vst.msk [vmem:[%s278] sm:$0xff] %vm2481, %v2449
      %2483 = vst.msk [vmem:[%s278 + $0x8] sm:$0xff] %vm2481, %v2450
      %2484 = vst.msk [vmem:[%s278 + $0x10] sm:$0xff] %vm2481, %v2451
      %2485 = vst.msk [vmem:[%s278 + $0x18] sm:$0xff] %vm2481, %v2452
      %2486 = vst.msk [vmem:[%s278 + $0x20] sm:$0xff] %vm2481, %v2453
      %2487 = vst.msk [vmem:[%s278 + $0x28] sm:$0xff] %vm2481, %v2454
      %2488 = vst.msk [vmem:[%s278 + $0x30] sm:$0xff] %vm2481, %v2455
      %2489 = vst.msk [vmem:[%s278 + $0x38] sm:$0xff] %vm2481, %v2456
      %2490 = vst.msk [vmem:[%s278 + $0x40] sm:$0xff] %vm2481, %v2457
      %2491 = vst.msk [vmem:[%s278 + $0x48] sm:$0xff] %vm2481, %v2458
      %2492 = vst.msk [vmem:[%s278 + $0x50] sm:$0xff] %vm2481, %v2459
      %2493 = vst.msk [vmem:[%s278 + $0x58] sm:$0xff] %vm2481, %v2460
      %2494 = vst.msk [vmem:[%s278 + $0x60] sm:$0xff] %vm2481, %v2461
      %2495 = vst.msk [vmem:[%s278 + $0x68] sm:$0xff] %vm2481, %v2462
      %2496 = vst.msk [vmem:[%s278 + $0x70] sm:$0xff] %vm2481, %v2463
      %2497 = vst.msk [vmem:[%s278 + $0x78] sm:$0xff] %vm2481, %v2464
      %2498 = vst.msk [vmem:[%s278 + $0x80] sm:$0xff] %vm2481, %v2465
      %2499 = vst.msk [vmem:[%s278 + $0x88] sm:$0xff] %vm2481, %v2466
      %2500 = vst.msk [vmem:[%s278 + $0x90] sm:$0xff] %vm2481, %v2467
      %2501 = vst.msk [vmem:[%s278 + $0x98] sm:$0xff] %vm2481, %v2468
      %2502 = vst.msk [vmem:[%s278 + $0xa0] sm:$0xff] %vm2481, %v2469
      %2503 = vst.msk [vmem:[%s278 + $0xa8] sm:$0xff] %vm2481, %v2470
      %2504 = vst.msk [vmem:[%s278 + $0xb0] sm:$0xff] %vm2481, %v2471
      %2505 = vst.msk [vmem:[%s278 + $0xb8] sm:$0xff] %vm2481, %v2472
      %2506 = vst.msk [vmem:[%s278 + $0xc0] sm:$0xff] %vm2481, %v2473
      %2507 = vst.msk [vmem:[%s278 + $0xc8] sm:$0xff] %vm2481, %v2474
      %2508 = vst.msk [vmem:[%s278 + $0xd0] sm:$0xff] %vm2481, %v2475
      %2509 = vst.msk [vmem:[%s278 + $0xd8] sm:$0xff] %vm2481, %v2476
      %2510 = vst.msk [vmem:[%s278 + $0xe0] sm:$0xff] %vm2481, %v2477
      %2511 = vst.msk [vmem:[%s278 + $0xe8] sm:$0xff] %vm2481, %v2478
      %2512 = vst.msk [vmem:[%s278 + $0xf0] sm:$0xff] %vm2481, %v2479
      %2513 = vst.msk [vmem:[%s278 + $0xf8] sm:$0xff] %vm2481, %v2480
      %p2514 = scmp.lt.s32.totalorder %s18, 1
      %s2515 = scalar_select %p2514, %s18, 1
      %s2516 = smul.addr %s2515, 32
      %s2517 = smul.addr %s2516, 8
      %s2518 = scalar_lea.vmem %s7, %s2517
      // Predicated region
      $region49: #{dense_block_forward_nchw.4} parent=47 // pred_check
        %p2519 = pneg %p188
      $region50: #{dense_block_forward_nchw.4} parent=47 // pred_check_branch
        %2521 = sbr.rel (%p2519) target = $region52
      $region51: #{dense_block_forward_nchw.4} parent=47 // pred_region
        _
      $region52: #{dense_block_forward_nchw.4} parent=47 // pred_fallthru
        _
    $region48: #{dense_block_forward_nchw.4} parent=5 // pred_fallthru
      _
    %p2522 = scmp.le.s32.totalorder 2, %s13
    // Predicated region
    $region53: #{dense_block_forward_nchw.4} parent=5 // pred_check
      %p2523 = pneg %p2522
    $region54: #{dense_block_forward_nchw.4} parent=5 // pred_check_branch
      %2525 = sbr.rel (%p2523) target = $region56
    $region55: #{dense_block_forward_nchw.4} parent=5 // pred_region
      %s2526 = ssub.s32 %s13, 2
      // Predicated region
      $region57: #{dense_block_forward_nchw.4} parent=55 // pred_check
        %p2527 = pneg %p194
      $region58: #{dense_block_forward_nchw.4} parent=55 // pred_check_branch
        %2529 = sbr.rel (%p2527) target = $region60
      $region59: #{dense_block_forward_nchw.4} parent=55 // pred_region
        %p2530 = scmp.lt.s32.totalorder %s19, 1
        %s2531 = scalar_select %p2530, %s19, 1
        %s2532 = smul.addr %s2531, 32
        %s2533 = smul.addr %s2532, 8
        %s2534 = scalar_lea.vmem %s7, %s2533
      $region60: #{dense_block_forward_nchw.4} parent=55 // pred_fallthru
        _
    $region56: #{dense_block_forward_nchw.4} parent=5 // pred_fallthru
      _
  $region6: #{dense_block_forward_nchw.4} parent=0 // loop_footer
    %s17 = sadd.s32 1, %s13
  $region7: #{dense_block_forward_nchw.4} parent=0 // loop_footer_branch
    %12 = sbr.rel target = $region3
  $region8: #{dense_block_forward_nchw.4} parent=0 // loop_exit
    _

// kernel: dense_block_forward_nchw.5
$region0: #{dense_block_forward_nchw.5}
  #allocation0 [shape = 'u32[]', space=smem, size = 0x4, offset = 0x4, fixed_abs, tag = 'smem constant byte address 0x4 - core index']
  #allocation1 [shape = 'u32[144,128]{1,0:T(1,128)}', space=vmem, size = 0x12000, scoped, tag = 'internal scratch']
  %s0 = inlined_call_operand.vmem [shape: f32[2,16,16,12], index: 0, kind: input, shape index: {}]
  %s1 = inlined_call_operand.vmem [shape: f32[1,12], index: 1, kind: input, shape index: {}]
  %s2 = inlined_call_operand.vmem [shape: f32[1,12], index: 2, kind: input, shape index: {}]
  %s3 = inlined_call_operand.vmem [shape: bf16[12,16], index: 3, kind: input, shape index: {}]
  %s4 = inlined_call_operand.vmem [shape: f32[1,16], index: 4, kind: input, shape index: {}]
  %s5 = inlined_call_operand.vmem [shape: bf16[144,4], index: 5, kind: input, shape index: {}]
  %s6 = inlined_call_operand.vmem [shape: f32[1,4], index: 6, kind: input, shape index: {}]
  %s7 = inlined_call_operand.vmem [shape: f32[2,16,16,16], index: 7, kind: output, shape index: {}]
  %s8 = sld [smem:[#allocation0]]
  $region61: #{dense_block_forward_nchw.5} parent=0
    _
  %s10 = ssub.s32 1, %s8
  %s11 = scalar_select 0, %s10, %s8
  loop: start=0, step=1, limit=4
  $region2: #{dense_block_forward_nchw.5} parent=0 // loop_pre_header
    _
  $region3: #{dense_block_forward_nchw.5} parent=0 // loop_header
    %s13 = sphi 0, %s17
    %p14 = scmp.ge.s32.totalorder %s13, 4
    %s23 = sphi 0, %s25
    %s26 = sphi 0, %s23
    %s27 = sphi 0, %s26
    %s43 = sphi 0, %s27
    %s47 = sphi 0, %s47
    %s49 = sphi 0, %s47
    %s50 = sphi 0, %s49
    %s64 = sphi 0, %s50
    %s68 = sphi 0, %s68
    %s70 = sphi 0, %s68
    %s71 = sphi 0, %s70
    %s85 = sphi 0, %s71
    %s89 = sphi 0, %s89
    %s91 = sphi 0, %s89
    %s92 = sphi 0, %s91
    %s106 = sphi 0, %s92
    %s110 = sphi 0, %s110
    %s112 = sphi 0, %s110
    %s113 = sphi 0, %s112
    %s127 = sphi 0, %s113
    %s131 = sphi 0, %s131
    %s133 = sphi 0, %s131
    %s134 = sphi 0, %s133
    %s148 = sphi 0, %s134
    %s152 = sphi 0, %s152
    %s154 = sphi 0, %s152
    %s155 = sphi 0, %s154
    %s169 = sphi 0, %s155
    %s175 = sphi 0, %s177
    %s178 = sphi 0, %s175
    %s179 = sphi 0, %s178
    %s195 = sphi 0, %s179
  $region4: #{dense_block_forward_nchw.5} parent=0 // loop_header_branch
    %16 = sbr.rel (%p14) target = $region8
  $region5: #{dense_block_forward_nchw.5} parent=0 // loop_body
    %s18 = ssub.s32 %s13, 1
    %s19 = ssub.s32 %s13, 2
    %s20 = sadd.s32 %s13, 1
    %s21 = ssub.s32 %s13, %s20
    %p22 = scmp.eq.s32.totalorder %s21, 0
    %s24 = sadd.s32 %s23, 1
    %s25 = scalar_select %p22, %s23, %s24
    %p28 = pneg %p22
    %p29 = scmp.eq.s32.totalorder %s13, 1
    %p30 = por %p28, %p29
    %p31 = scmp.ne.s32.totalorder %s23, %s26
    %p32 = scmp.eq.s32.totalorder %s13, 0
    %p33 = por %p31, %p32
    %p34 = scmp.ne.s32.totalorder %s23, %s26
    %p35 = scmp.eq.s32.totalorder %s18, 1
    %p36 = por %p34, %p35
    %p37 = scmp.ne.s32.totalorder %s26, %s27
    %p38 = scmp.eq.s32.totalorder %s18, 0
    %p39 = por %p37, %p38
    %p40 = scmp.ne.s32.totalorder %s26, %s27
    %p41 = scmp.eq.s32.totalorder %s19, 1
    %p42 = por %p40, %p41
    %p44 = scmp.ne.s32.totalorder %s27, %s43
    %p45 = scmp.eq.s32.totalorder %s19, 0
    %p46 = por %p44, %p45
    %s48 = sadd.s32 %s47, 1
    %p51 = scmp.eq.s32.totalorder %s13, 1
    %p52 = scmp.ne.s32.totalorder %s47, %s49
    %p53 = scmp.eq.s32.totalorder %s13, 0
    %p54 = por %p52, %p53
    %p55 = scmp.ne.s32.totalorder %s47, %s49
    %p56 = scmp.eq.s32.totalorder %s18, 1
    %p57 = por %p55, %p56
    %p58 = scmp.ne.s32.totalorder %s49, %s50
    %p59 = scmp.eq.s32.totalorder %s18, 0
    %p60 = por %p58, %p59
    %p61 = scmp.ne.s32.totalorder %s49, %s50
    %p62 = scmp.eq.s32.totalorder %s19, 1
    %p63 = por %p61, %p62
    %p65 = scmp.ne.s32.totalorder %s50, %s64
    %p66 = scmp.eq.s32.totalorder %s19, 0
    %p67 = por %p65, %p66
    %s69 = sadd.s32 %s68, 1
    %p72 = scmp.eq.s32.totalorder %s13, 1
    %p73 = scmp.ne.s32.totalorder %s68, %s70
    %p74 = scmp.eq.s32.totalorder %s13, 0
    %p75 = por %p73, %p74
    %p76 = scmp.ne.s32.totalorder %s68, %s70
    %p77 = scmp.eq.s32.totalorder %s18, 1
    %p78 = por %p76, %p77
    %p79 = scmp.ne.s32.totalorder %s70, %s71
    %p80 = scmp.eq.s32.totalorder %s18, 0
    %p81 = por %p79, %p80
    %p82 = scmp.ne.s32.totalorder %s70, %s71
    %p83 = scmp.eq.s32.totalorder %s19, 1
    %p84 = por %p82, %p83
    %p86 = scmp.ne.s32.totalorder %s71, %s85
    %p87 = scmp.eq.s32.totalorder %s19, 0
    %p88 = por %p86, %p87
    %s90 = sadd.s32 %s89, 1
    %p93 = scmp.eq.s32.totalorder %s13, 1
    %p94 = scmp.ne.s32.totalorder %s89, %s91
    %p95 = scmp.eq.s32.totalorder %s13, 0
    %p96 = por %p94, %p95
    %p97 = scmp.ne.s32.totalorder %s89, %s91
    %p98 = scmp.eq.s32.totalorder %s18, 1
    %p99 = por %p97, %p98
    %p100 = scmp.ne.s32.totalorder %s91, %s92
    %p101 = scmp.eq.s32.totalorder %s18, 0
    %p102 = por %p100, %p101
    %p103 = scmp.ne.s32.totalorder %s91, %s92
    %p104 = scmp.eq.s32.totalorder %s19, 1
    %p105 = por %p103, %p104
    %p107 = scmp.ne.s32.totalorder %s92, %s106
    %p108 = scmp.eq.s32.totalorder %s19, 0
    %p109 = por %p107, %p108
    %s111 = sadd.s32 %s110, 1
    %p114 = scmp.eq.s32.totalorder %s13, 1
    %p115 = scmp.ne.s32.totalorder %s110, %s112
    %p116 = scmp.eq.s32.totalorder %s13, 0
    %p117 = por %p115, %p116
    %p118 = scmp.ne.s32.totalorder %s110, %s112
    %p119 = scmp.eq.s32.totalorder %s18, 1
    %p120 = por %p118, %p119
    %p121 = scmp.ne.s32.totalorder %s112, %s113
    %p122 = scmp.eq.s32.totalorder %s18, 0
    %p123 = por %p121, %p122
    %p124 = scmp.ne.s32.totalorder %s112, %s113
    %p125 = scmp.eq.s32.totalorder %s19, 1
    %p126 = por %p124, %p125
    %p128 = scmp.ne.s32.totalorder %s113, %s127
    %p129 = scmp.eq.s32.totalorder %s19, 0
    %p130 = por %p128, %p129
    %s132 = sadd.s32 %s131, 1
    %p135 = scmp.eq.s32.totalorder %s13, 1
    %p136 = scmp.ne.s32.totalorder %s131, %s133
    %p137 = scmp.eq.s32.totalorder %s13, 0
    %p138 = por %p136, %p137
    %p139 = scmp.ne.s32.totalorder %s131, %s133
    %p140 = scmp.eq.s32.totalorder %s18, 1
    %p141 = por %p139, %p140
    %p142 = scmp.ne.s32.totalorder %s133, %s134
    %p143 = scmp.eq.s32.totalorder %s18, 0
    %p144 = por %p142, %p143
    %p145 = scmp.ne.s32.totalorder %s133, %s134
    %p146 = scmp.eq.s32.totalorder %s19, 1
    %p147 = por %p145, %p146
    %p149 = scmp.ne.s32.totalorder %s134, %s148
    %p150 = scmp.eq.s32.totalorder %s19, 0
    %p151 = por %p149, %p150
    %s153 = sadd.s32 %s152, 1
    %p156 = scmp.eq.s32.totalorder %s13, 1
    %p157 = scmp.ne.s32.totalorder %s152, %s154
    %p158 = scmp.eq.s32.totalorder %s13, 0
    %p159 = por %p157, %p158
    %p160 = scmp.ne.s32.totalorder %s152, %s154
    %p161 = scmp.eq.s32.totalorder %s18, 1
    %p162 = por %p160, %p161
    %p163 = scmp.ne.s32.totalorder %s154, %s155
    %p164 = scmp.eq.s32.totalorder %s18, 0
    %p165 = por %p163, %p164
    %p166 = scmp.ne.s32.totalorder %s154, %s155
    %p167 = scmp.eq.s32.totalorder %s19, 1
    %p168 = por %p166, %p167
    %p170 = scmp.ne.s32.totalorder %s155, %s169
    %p171 = scmp.eq.s32.totalorder %s19, 0
    %p172 = por %p170, %p171
    %s173 = ssub.s32 %s13, %s20
    %p174 = scmp.eq.s32.totalorder %s173, 0
    %s176 = sadd.s32 %s175, 1
    %s177 = scalar_select %p174, %s175, %s176
    %p180 = pneg %p174
    %p181 = scmp.eq.s32.totalorder %s13, 1
    %p182 = por %p180, %p181
    %p183 = scmp.ne.s32.totalorder %s175, %s178
    %p184 = scmp.eq.s32.totalorder %s13, 0
    %p185 = por %p183, %p184
    %p186 = scmp.ne.s32.totalorder %s175, %s178
    %p187 = scmp.eq.s32.totalorder %s18, 1
    %p188 = por %p186, %p187
    %p189 = scmp.ne.s32.totalorder %s178, %s179
    %p190 = scmp.eq.s32.totalorder %s18, 0
    %p191 = por %p189, %p190
    %p192 = scmp.ne.s32.totalorder %s178, %s179
    %p193 = scmp.eq.s32.totalorder %s19, 1
    %p194 = por %p192, %p193
    %p196 = scmp.ne.s32.totalorder %s179, %s195
    %p197 = scmp.eq.s32.totalorder %s19, 0
    %p198 = por %p196, %p197
    %p199 = scmp.le.s32.totalorder 1, %s13
    %p200 = scmp.lt.s32.totalorder %s13, 3
    %p201 = pnand %p199, %p200
    %p202 = pneg %p201
    // Predicated region
    $region9: #{dense_block_forward_nchw.5} parent=5 // pred_check
      _
    $region10: #{dense_block_forward_nchw.5} parent=5 // pred_check_branch
      %204 = sbr.rel (%p201) target = $region12
    $region11: #{dense_block_forward_nchw.5} parent=5 // pred_region
      %s205 = ssub.s32 %s13, 1
      // Predicated region
      $region13: #{dense_block_forward_nchw.5} parent=11 // pred_check
        %p206 = pneg %p60
      $region14: #{dense_block_forward_nchw.5} parent=11 // pred_check_branch
        %208 = sbr.rel (%p206) target = $region16
      $region15: #{dense_block_forward_nchw.5} parent=11 // pred_region
        _
      $region16: #{dense_block_forward_nchw.5} parent=11 // pred_fallthru
        _
      // Predicated region
      $region17: #{dense_block_forward_nchw.5} parent=11 // pred_check
        %p209 = pneg %p81
      $region18: #{dense_block_forward_nchw.5} parent=11 // pred_check_branch
        %211 = sbr.rel (%p209) target = $region20
      $region19: #{dense_block_forward_nchw.5} parent=11 // pred_region
        _
      $region20: #{dense_block_forward_nchw.5} parent=11 // pred_fallthru
        _
      // Predicated region
      $region21: #{dense_block_forward_nchw.5} parent=11 // pred_check
        %p212 = pneg %p102
      $region22: #{dense_block_forward_nchw.5} parent=11 // pred_check_branch
        %214 = sbr.rel (%p212) target = $region24
      $region23: #{dense_block_forward_nchw.5} parent=11 // pred_region
        _
      $region24: #{dense_block_forward_nchw.5} parent=11 // pred_fallthru
        _
      // Predicated region
      $region25: #{dense_block_forward_nchw.5} parent=11 // pred_check
        %p215 = pneg %p123
      $region26: #{dense_block_forward_nchw.5} parent=11 // pred_check_branch
        %217 = sbr.rel (%p215) target = $region28
      $region27: #{dense_block_forward_nchw.5} parent=11 // pred_region
        _
      $region28: #{dense_block_forward_nchw.5} parent=11 // pred_fallthru
        _
      // Predicated region
      $region29: #{dense_block_forward_nchw.5} parent=11 // pred_check
        %p218 = pneg %p144
      $region30: #{dense_block_forward_nchw.5} parent=11 // pred_check_branch
        %220 = sbr.rel (%p218) target = $region32
      $region31: #{dense_block_forward_nchw.5} parent=11 // pred_region
        _
      $region32: #{dense_block_forward_nchw.5} parent=11 // pred_fallthru
        _
      // Predicated region
      $region33: #{dense_block_forward_nchw.5} parent=11 // pred_check
        %p221 = pneg %p165
      $region34: #{dense_block_forward_nchw.5} parent=11 // pred_check_branch
        %223 = sbr.rel (%p221) target = $region36
      $region35: #{dense_block_forward_nchw.5} parent=11 // pred_region
        _
      $region36: #{dense_block_forward_nchw.5} parent=11 // pred_fallthru
        _
    $region12: #{dense_block_forward_nchw.5} parent=5 // pred_fallthru
      _
    %p224 = scmp.lt.s32.totalorder %s13, 2
    // Predicated region
    $region37: #{dense_block_forward_nchw.5} parent=5 // pred_check
      %p225 = pneg %p224
    $region38: #{dense_block_forward_nchw.5} parent=5 // pred_check_branch
      %227 = sbr.rel (%p225) target = $region40
    $region39: #{dense_block_forward_nchw.5} parent=5 // pred_region
      // Predicated region
      $region41: #{dense_block_forward_nchw.5} parent=39 // pred_check
        %p228 = pneg %p33
      $region42: #{dense_block_forward_nchw.5} parent=39 // pred_check_branch
        %230 = sbr.rel (%p228) target = $region44
      $region43: #{dense_block_forward_nchw.5} parent=39 // pred_region
        %p231 = scmp.lt.s32.totalorder %s13, 1
        %s232 = scalar_select %p231, %s13, 1
        %s233 = smul.addr %s232, 32
        %s234 = smul.addr %s233, 8
        %s235 = scalar_lea.vmem %s0, %s234
      $region44: #{dense_block_forward_nchw.5} parent=39 // pred_fallthru
        _
    $region40: #{dense_block_forward_nchw.5} parent=5 // pred_fallthru
      _
    %p236 = scmp.le.s32.totalorder 1, %s13
    %p237 = scmp.lt.s32.totalorder %s13, 3
    %p238 = pnand %p236, %p237
    %p239 = pneg %p238
    // Predicated region
    $region45: #{dense_block_forward_nchw.5} parent=5 // pred_check
      _
    $region46: #{dense_block_forward_nchw.5} parent=5 // pred_check_branch
      %241 = sbr.rel (%p238) target = $region48
    $region47: #{dense_block_forward_nchw.5} parent=5 // pred_region
      %s242 = ssub.s32 %s13, 1
      %p243 = scmp.lt.s32.totalorder %s18, 1
      %s244 = scalar_select %p243, %s18, 1
      %s245 = smul.addr %s244, 32
      %s246 = smul.addr %s245, 8
      %s247 = scalar_lea.vmem %s0, %s246
      %p248 = pneg %p39
      %p249 = pneg %p36
      %p250 = pneg %p60
      %p251 = pneg %p57
      %p252 = pneg %p81
      %p253 = pneg %p78
      %p254 = pneg %p102
      %p255 = pneg %p99
      %p256 = pneg %p123
      %p257 = pneg %p120
      %p258 = pneg %p144
      %p259 = pneg %p141
      %p260 = pneg %p165
      %p261 = pneg %p162
      %p262 = pneg %p191
      %p263 = pneg %p188
      %p264 = scmp.lt.s32.totalorder %s18, 1
      %s265 = scalar_select %p264, %s18, 1
      %s266 = smul.addr %s265, 32
      %s267 = smul.addr %s266, 8
      %s268 = scalar_lea.vmem %s7, %s267
      %p269 = scmp.lt.s32.totalorder %s18, 1
      %s270 = scalar_select %p269, %s18, 1
      %s271 = smul.addr %s270, 32
      %s272 = smul.addr %s271, 8
      %s273 = scalar_lea.vmem %s0, %s272
      %p274 = scmp.lt.s32.totalorder %s18, 1
      %s275 = scalar_select %p274, %s18, 1
      %s276 = smul.addr %s275, 32
      %s277 = smul.addr %s276, 8
      %s278 = scalar_lea.vmem %s7, %s277
      %v280 = vld [vmem:[%s273] sm:$0xff]
      %v281 = vld [vmem:[%s273 + $0x8] sm:$0xff]
      %v282 = vld [vmem:[%s273 + $0x10] sm:$0xff]
      %v283 = vld [vmem:[%s273 + $0x18] sm:$0xff]
      %v284 = vld [vmem:[%s273 + $0x20] sm:$0xff]
      %v285 = vld [vmem:[%s273 + $0x28] sm:$0xff]
      %v286 = vld [vmem:[%s273 + $0x30] sm:$0xff]
      %v287 = vld [vmem:[%s273 + $0x38] sm:$0xff]
      %v288 = vld [vmem:[%s273 + $0x40] sm:$0xff]
      %v289 = vld [vmem:[%s273 + $0x48] sm:$0xff]
      %v290 = vld [vmem:[%s273 + $0x50] sm:$0xff]
      %v291 = vld [vmem:[%s273 + $0x58] sm:$0xff]
      %v292 = vld [vmem:[%s273 + $0x60] sm:$0xff]
      %v293 = vld [vmem:[%s273 + $0x68] sm:$0xff]
      %v294 = vld [vmem:[%s273 + $0x70] sm:$0xff]
      %v295 = vld [vmem:[%s273 + $0x78] sm:$0xff]
      %v296 = vld [vmem:[%s273 + $0x80] sm:$0xff]
      %v297 = vld [vmem:[%s273 + $0x88] sm:$0xff]
      %v298 = vld [vmem:[%s273 + $0x90] sm:$0xff]
      %v299 = vld [vmem:[%s273 + $0x98] sm:$0xff]
      %v300 = vld [vmem:[%s273 + $0xa0] sm:$0xff]
      %v301 = vld [vmem:[%s273 + $0xa8] sm:$0xff]
      %v302 = vld [vmem:[%s273 + $0xb0] sm:$0xff]
      %v303 = vld [vmem:[%s273 + $0xb8] sm:$0xff]
      %v304 = vld [vmem:[%s273 + $0xc0] sm:$0xff]
      %v305 = vld [vmem:[%s273 + $0xc8] sm:$0xff]
      %v306 = vld [vmem:[%s273 + $0xd0] sm:$0xff]
      %v307 = vld [vmem:[%s273 + $0xd8] sm:$0xff]
      %v308 = vld [vmem:[%s273 + $0xe0] sm:$0xff]
      %v309 = vld [vmem:[%s273 + $0xe8] sm:$0xff]
      %v310 = vld [vmem:[%s273 + $0xf0] sm:$0xff]
      %v311 = vld [vmem:[%s273 + $0xf8] sm:$0xff]
      %v312 = vld [vmem:[%s1] sm:$0x1]
      %v314 = vlaneseq
      %v315 = vshrl.u32 %v314, 7
      %v316 = vsub.s32 0, %v315
      %v317 = vrot.slane %v312, %v316
      %v319 = vmul.f32 %v280, %v317
      %v320 = vmul.f32 %v281, %v317
      %v321 = vmul.f32 %v282, %v317
      %v322 = vmul.f32 %v283, %v317
      %v323 = vmul.f32 %v284, %v317
      %v324 = vmul.f32 %v285, %v317
      %v325 = vmul.f32 %v286, %v317
      %v326 = vmul.f32 %v287, %v317
      %v327 = vmul.f32 %v288, %v317
      %v328 = vmul.f32 %v289, %v317
      %v329 = vmul.f32 %v290, %v317
      %v330 = vmul.f32 %v291, %v317
      %v331 = vmul.f32 %v292, %v317
      %v332 = vmul.f32 %v293, %v317
      %v333 = vmul.f32 %v294, %v317
      %v334 = vmul.f32 %v295, %v317
      %v335 = vmul.f32 %v296, %v317
      %v336 = vmul.f32 %v297, %v317
      %v337 = vmul.f32 %v298, %v317
      %v338 = vmul.f32 %v299, %v317
      %v339 = vmul.f32 %v300, %v317
      %v340 = vmul.f32 %v301, %v317
      %v341 = vmul.f32 %v302, %v317
      %v342 = vmul.f32 %v303, %v317
      %v343 = vmul.f32 %v304, %v317
      %v344 = vmul.f32 %v305, %v317
      %v345 = vmul.f32 %v306, %v317
      %v346 = vmul.f32 %v307, %v317
      %v347 = vmul.f32 %v308, %v317
      %v348 = vmul.f32 %v309, %v317
      %v349 = vmul.f32 %v310, %v317
      %v350 = vmul.f32 %v311, %v317
      %v351 = vld [vmem:[%s2] sm:$0x1]
      %v353 = vlaneseq
      %v354 = vshrl.u32 %v353, 7
      %v355 = vsub.s32 0, %v354
      %v356 = vrot.slane %v351, %v355
      %v358 = vadd.f32 %v319, %v356
      %v359 = vadd.f32 %v320, %v356
      %v360 = vadd.f32 %v321, %v356
      %v361 = vadd.f32 %v322, %v356
      %v362 = vadd.f32 %v323, %v356
      %v363 = vadd.f32 %v324, %v356
      %v364 = vadd.f32 %v325, %v356
      %v365 = vadd.f32 %v326, %v356
      %v366 = vadd.f32 %v327, %v356
      %v367 = vadd.f32 %v328, %v356
      %v368 = vadd.f32 %v329, %v356
      %v369 = vadd.f32 %v330, %v356
      %v370 = vadd.f32 %v331, %v356
      %v371 = vadd.f32 %v332, %v356
      %v372 = vadd.f32 %v333, %v356
      %v373 = vadd.f32 %v334, %v356
      %v374 = vadd.f32 %v335, %v356
      %v375 = vadd.f32 %v336, %v356
      %v376 = vadd.f32 %v337, %v356
      %v377 = vadd.f32 %v338, %v356
      %v378 = vadd.f32 %v339, %v356
      %v379 = vadd.f32 %v340, %v356
      %v380 = vadd.f32 %v341, %v356
      %v381 = vadd.f32 %v342, %v356
      %v382 = vadd.f32 %v343, %v356
      %v383 = vadd.f32 %v344, %v356
      %v384 = vadd.f32 %v345, %v356
      %v385 = vadd.f32 %v346, %v356
      %v386 = vadd.f32 %v347, %v356
      %v387 = vadd.f32 %v348, %v356
      %v388 = vadd.f32 %v349, %v356
      %v389 = vadd.f32 %v350, %v356
      %v390 = vmax.f32 %v358, 0.0
      %v391 = vmax.f32 %v359, 0.0
      %v392 = vmax.f32 %v360, 0.0
      %v393 = vmax.f32 %v361, 0.0
      %v394 = vmax.f32 %v362, 0.0
      %v395 = vmax.f32 %v363, 0.0
      %v396 = vmax.f32 %v364, 0.0
      %v397 = vmax.f32 %v365, 0.0
      %v398 = vmax.f32 %v366, 0.0
      %v399 = vmax.f32 %v367, 0.0
      %v400 = vmax.f32 %v368, 0.0
      %v401 = vmax.f32 %v369, 0.0
      %v402 = vmax.f32 %v370, 0.0
      %v403 = vmax.f32 %v371, 0.0
      %v404 = vmax.f32 %v372, 0.0
      %v405 = vmax.f32 %v373, 0.0
      %v406 = vmax.f32 %v374, 0.0
      %v407 = vmax.f32 %v375, 0.0
      %v408 = vmax.f32 %v376, 0.0
      %v409 = vmax.f32 %v377, 0.0
      %v410 = vmax.f32 %v378, 0.0
      %v411 = vmax.f32 %v379, 0.0
      %v412 = vmax.f32 %v380, 0.0
      %v413 = vmax.f32 %v381, 0.0
      %v414 = vmax.f32 %v382, 0.0
      %v415 = vmax.f32 %v383, 0.0
      %v416 = vmax.f32 %v384, 0.0
      %v417 = vmax.f32 %v385, 0.0
      %v418 = vmax.f32 %v386, 0.0
      %v419 = vmax.f32 %v387, 0.0
      %v420 = vmax.f32 %v388, 0.0
      %v421 = vmax.f32 %v389, 0.0
      %v422 = vpack.c.bf16 %v391, %v390
      %v423 = vpack.c.bf16 %v393, %v392
      %v424 = vpack.c.bf16 %v395, %v394
      %v425 = vpack.c.bf16 %v397, %v396
      %v426 = vpack.c.bf16 %v399, %v398
      %v427 = vpack.c.bf16 %v401, %v400
      %v428 = vpack.c.bf16 %v403, %v402
      %v429 = vpack.c.bf16 %v405, %v404
      %v430 = vpack.c.bf16 %v407, %v406
      %v431 = vpack.c.bf16 %v409, %v408
      %v432 = vpack.c.bf16 %v411, %v410
      %v433 = vpack.c.bf16 %v413, %v412
      %v434 = vpack.c.bf16 %v415, %v414
      %v435 = vpack.c.bf16 %v417, %v416
      %v436 = vpack.c.bf16 %v419, %v418
      %v437 = vpack.c.bf16 %v421, %v420
      %v438 = vld [vmem:[%s3] sm:$0xf]
      %v439 = vld [vmem:[%s3 + $0x4] sm:$0x3]
      %v440 = vld [vmem:[%s4] sm:$0x1]
      %v442 = vlaneseq
      %v443 = vshrl.u32 %v442, 7
      %v444 = vsub.s32 0, %v443
      %v445 = vrot.slane %v440, %v444
      %v449 = vunpack.c.l.b16 %v438
      %v450 = vunpack.c.l.b16 %v439
      %v451 = vpack.c.b16 %v450, %v449
      %vm452 = vcmask 97280
      %v454 = vsel %vm452, %v422, 0
      %v457 = vsel %vm452, %v423, 0
      %v460 = vsel %vm452, %v424, 0
      %v463 = vsel %vm452, %v425, 0
      %v466 = vsel %vm452, %v426, 0
      %v469 = vsel %vm452, %v427, 0
      %v472 = vsel %vm452, %v428, 0
      %v475 = vsel %vm452, %v429, 0
      %v478 = vsel %vm452, %v430, 0
      %v481 = vsel %vm452, %v431, 0
      %v484 = vsel %vm452, %v432, 0
      %v487 = vsel %vm452, %v433, 0
      %v490 = vsel %vm452, %v434, 0
      %v493 = vsel %vm452, %v435, 0
      %v496 = vsel %vm452, %v436, 0
      %v499 = vsel %vm452, %v437, 0
      %vm501 = vcmask 1045504
      %v503 = vsel %vm501, %v451, 0
      %505 = vmatprep.subr.bf16.mxu0 0
      %506 = vmatpush1.bf16.msra.mxu0 0
      %507 = vmatprep.subr.bf16.mxu0 0
      %508 = vmatpush1.bf16.msra.mxu0 0
      %509 = vmatprep.subr.bf16.mxu0 0
      %510 = vmatpush1.bf16.msra.mxu0 0
      %511 = vmatprep.subr.bf16.mxu0 0
      %512 = vmatpush1.bf16.msra.mxu0 0
      %513 = vmatprep.subr.bf16.mxu0 0
      %514 = vmatpush1.bf16.msra.mxu0 0
      %515 = vmatprep.subr.bf16.mxu0 0
      %516 = vmatpush1.bf16.msra.mxu0 0
      %517 = vmatprep.subr.bf16.mxu0 0
      %518 = vmatpush1.bf16.msra.mxu0 0
      %519 = vmatprep.subr.bf16.mxu0 0
      %520 = vmatpush1.bf16.msra.mxu0 %v503
      %521 = vmatprep.subr.bf16.mxu0 0
      %522 = vmatpush2.bf16.msra.mxu0 0
      %523 = vmatprep.subr.bf16.mxu0 0
      %524 = vmatpush2.bf16.msra.mxu0 0
      %525 = vmatprep.subr.bf16.mxu0 0
      %526 = vmatpush2.bf16.msra.mxu0 0
      %527 = vmatprep.subr.bf16.mxu0 0
      %528 = vmatpush2.bf16.msra.mxu0 0
      %529 = vmatprep.subr.bf16.mxu0 0
      %530 = vmatpush2.bf16.msra.mxu0 0
      %531 = vmatprep.subr.bf16.mxu0 0
      %532 = vmatpush2.bf16.msra.mxu0 0
      %533 = vmatprep.subr.bf16.mxu0 0
      %534 = vmatpush2.bf16.msra.mxu0 0
      %535 = vmatprep.subr.bf16.mxu0 0
      %536 = vmatpush2.bf16.msra.mxu0 0
      %537 = vmatprep.mubr.bf16.mxu0 0
      %538 = vmatmul.mubr.bf16.gmra.mxu0 %v454
      %v539 = vpop.f32.mrf.mxu0
      %v540 = vadd.f32 %v445, %v539
      %v541 = vpop.f32.mrf.mxu0
      %v542 = vpop.f32.mrf.mxu0
      %v543 = vadd.f32 %v445, %v542
      %v544 = vpop.f32.mrf.mxu0
      %545 = vmatprep.mubr.bf16.mxu0 0
      %546 = vmatmul.mubr.bf16.gmra.mxu0 %v457
      %v547 = vpop.f32.mrf.mxu0
      %v548 = vadd.f32 %v445, %v547
      %v549 = vpop.f32.mrf.mxu0
      %v550 = vpop.f32.mrf.mxu0
      %v551 = vadd.f32 %v445, %v550
      %v552 = vpop.f32.mrf.mxu0
      %553 = vmatprep.mubr.bf16.mxu0 0
      %554 = vmatmul.mubr.bf16.gmra.mxu0 %v460
      %v555 = vpop.f32.mrf.mxu0
      %v556 = vadd.f32 %v445, %v555
      %v557 = vpop.f32.mrf.mxu0
      %v558 = vpop.f32.mrf.mxu0
      %v559 = vadd.f32 %v445, %v558
      %v560 = vpop.f32.mrf.mxu0
      %561 = vmatprep.mubr.bf16.mxu0 0
      %562 = vmatmul.mubr.bf16.gmra.mxu0 %v463
      %v563 = vpop.f32.mrf.mxu0
      %v564 = vadd.f32 %v445, %v563
      %v565 = vpop.f32.mrf.mxu0
      %v566 = vpop.f32.mrf.mxu0
      %v567 = vadd.f32 %v445, %v566
      %v568 = vpop.f32.mrf.mxu0
      %569 = vmatprep.mubr.bf16.mxu0 0
      %570 = vmatmul.mubr.bf16.gmra.mxu0 %v466
      %v571 = vpop.f32.mrf.mxu0
      %v572 = vadd.f32 %v445, %v571
      %v573 = vpop.f32.mrf.mxu0
      %v574 = vpop.f32.mrf.mxu0
      %v575 = vadd.f32 %v445, %v574
      %v576 = vpop.f32.mrf.mxu0
      %577 = vmatprep.mubr.bf16.mxu0 0
      %578 = vmatmul.mubr.bf16.gmra.mxu0 %v469
      %v579 = vpop.f32.mrf.mxu0
      %v580 = vadd.f32 %v445, %v579
      %v581 = vpop.f32.mrf.mxu0
      %v582 = vpop.f32.mrf.mxu0
      %v583 = vadd.f32 %v445, %v582
      %v584 = vpop.f32.mrf.mxu0
      %585 = vmatprep.mubr.bf16.mxu0 0
      %586 = vmatmul.mubr.bf16.gmra.mxu0 %v472
      %v587 = vpop.f32.mrf.mxu0
      %v588 = vadd.f32 %v445, %v587
      %v589 = vpop.f32.mrf.mxu0
      %v590 = vpop.f32.mrf.mxu0
      %v591 = vadd.f32 %v445, %v590
      %v592 = vpop.f32.mrf.mxu0
      %593 = vmatprep.mubr.bf16.mxu0 0
      %594 = vmatmul.mubr.bf16.gmra.mxu0 %v475
      %v595 = vpop.f32.mrf.mxu0
      %v596 = vadd.f32 %v445, %v595
      %v597 = vpop.f32.mrf.mxu0
      %v598 = vpop.f32.mrf.mxu0
      %v599 = vadd.f32 %v445, %v598
      %v600 = vpop.f32.mrf.mxu0
      %601 = vmatprep.mubr.bf16.mxu0 0
      %602 = vmatmul.mubr.bf16.gmra.mxu0 %v478
      %v603 = vpop.f32.mrf.mxu0
      %v604 = vadd.f32 %v445, %v603
      %v605 = vpop.f32.mrf.mxu0
      %v606 = vpop.f32.mrf.mxu0
      %v607 = vadd.f32 %v445, %v606
      %v608 = vpop.f32.mrf.mxu0
      %609 = vmatprep.mubr.bf16.mxu0 0
      %610 = vmatmul.mubr.bf16.gmra.mxu0 %v481
      %v611 = vpop.f32.mrf.mxu0
      %v612 = vadd.f32 %v445, %v611
      %v613 = vpop.f32.mrf.mxu0
      %v614 = vpop.f32.mrf.mxu0
      %v615 = vadd.f32 %v445, %v614
      %v616 = vpop.f32.mrf.mxu0
      %617 = vmatprep.mubr.bf16.mxu0 0
      %618 = vmatmul.mubr.bf16.gmra.mxu0 %v484
      %v619 = vpop.f32.mrf.mxu0
      %v620 = vadd.f32 %v445, %v619
      %v621 = vpop.f32.mrf.mxu0
      %v622 = vpop.f32.mrf.mxu0
      %v623 = vadd.f32 %v445, %v622
      %v624 = vpop.f32.mrf.mxu0
      %625 = vmatprep.mubr.bf16.mxu0 0
      %626 = vmatmul.mubr.bf16.gmra.mxu0 %v487
      %v627 = vpop.f32.mrf.mxu0
      %v628 = vadd.f32 %v445, %v627
      %v629 = vpop.f32.mrf.mxu0
      %v630 = vpop.f32.mrf.mxu0
      %v631 = vadd.f32 %v445, %v630
      %v632 = vpop.f32.mrf.mxu0
      %633 = vmatprep.mubr.bf16.mxu0 0
      %634 = vmatmul.mubr.bf16.gmra.mxu0 %v490
      %v635 = vpop.f32.mrf.mxu0
      %v636 = vadd.f32 %v445, %v635
      %v637 = vpop.f32.mrf.mxu0
      %v638 = vpop.f32.mrf.mxu0
      %v639 = vadd.f32 %v445, %v638
      %v640 = vpop.f32.mrf.mxu0
      %641 = vmatprep.mubr.bf16.mxu0 0
      %642 = vmatmul.mubr.bf16.gmra.mxu0 %v493
      %v643 = vpop.f32.mrf.mxu0
      %v644 = vadd.f32 %v445, %v643
      %v645 = vpop.f32.mrf.mxu0
      %v646 = vpop.f32.mrf.mxu0
      %v647 = vadd.f32 %v445, %v646
      %v648 = vpop.f32.mrf.mxu0
      %649 = vmatprep.mubr.bf16.mxu0 0
      %650 = vmatmul.mubr.bf16.gmra.mxu0 %v496
      %v651 = vpop.f32.mrf.mxu0
      %v652 = vadd.f32 %v445, %v651
      %v653 = vpop.f32.mrf.mxu0
      %v654 = vpop.f32.mrf.mxu0
      %v655 = vadd.f32 %v445, %v654
      %v656 = vpop.f32.mrf.mxu0
      %657 = vmatprep.mubr.bf16.mxu0 0
      %658 = vmatmul.mubr.bf16.gmra.mxu0 %v499
      %v659 = vpop.f32.mrf.mxu0
      %v660 = vadd.f32 %v445, %v659
      %v661 = vpop.f32.mrf.mxu0
      %v662 = vpop.f32.mrf.mxu0
      %v663 = vadd.f32 %v445, %v662
      %v664 = vpop.f32.mrf.mxu0
      %665 = vdwg.mxu0
      %v666 = vmax.f32 %v540, 0.0
      %v667 = vmax.f32 %v543, 0.0
      %v668 = vmax.f32 %v548, 0.0
      %v669 = vmax.f32 %v551, 0.0
      %v670 = vmax.f32 %v556, 0.0
      %v671 = vmax.f32 %v559, 0.0
      %v672 = vmax.f32 %v564, 0.0
      %v673 = vmax.f32 %v567, 0.0
      %v674 = vmax.f32 %v572, 0.0
      %v675 = vmax.f32 %v575, 0.0
      %v676 = vmax.f32 %v580, 0.0
      %v677 = vmax.f32 %v583, 0.0
      %v678 = vmax.f32 %v588, 0.0
      %v679 = vmax.f32 %v591, 0.0
      %v680 = vmax.f32 %v596, 0.0
      %v681 = vmax.f32 %v599, 0.0
      %v682 = vmax.f32 %v604, 0.0
      %v683 = vmax.f32 %v607, 0.0
      %v684 = vmax.f32 %v612, 0.0
      %v685 = vmax.f32 %v615, 0.0
      %v686 = vmax.f32 %v620, 0.0
      %v687 = vmax.f32 %v623, 0.0
      %v688 = vmax.f32 %v628, 0.0
      %v689 = vmax.f32 %v631, 0.0
      %v690 = vmax.f32 %v636, 0.0
      %v691 = vmax.f32 %v639, 0.0
      %v692 = vmax.f32 %v644, 0.0
      %v693 = vmax.f32 %v647, 0.0
      %v694 = vmax.f32 %v652, 0.0
      %v695 = vmax.f32 %v655, 0.0
      %v696 = vmax.f32 %v660, 0.0
      %v697 = vmax.f32 %v663, 0.0
      %vm731 = vcmask 1040384
      %v732 = vrot.slane 0.0, 7
      %v733 = vsel %vm731, %v732, %v732
      %v734 = vrot.slane %v666, 7
      %v735 = vrot.slane %v667, 7
      %v736 = vsel %vm731, %v734, %v735
      %v737 = vrot.slane %v668, 7
      %v738 = vrot.slane %v669, 7
      %v739 = vsel %vm731, %v737, %v738
      %v740 = vrot.slane %v670, 7
      %v741 = vrot.slane %v671, 7
      %v742 = vsel %vm731, %v740, %v741
      %v743 = vrot.slane %v672, 7
      %v744 = vrot.slane %v673, 7
      %v745 = vsel %vm731, %v743, %v744
      %v746 = vrot.slane %v674, 7
      %v747 = vrot.slane %v675, 7
      %v748 = vsel %vm731, %v746, %v747
      %v749 = vrot.slane %v676, 7
      %v750 = vrot.slane %v677, 7
      %v751 = vsel %vm731, %v749, %v750
      %v752 = vrot.slane %v678, 7
      %v753 = vrot.slane %v679, 7
      %v754 = vsel %vm731, %v752, %v753
      %v755 = vrot.slane %v680, 7
      %v756 = vrot.slane %v681, 7
      %v757 = vsel %vm731, %v755, %v756
      %v758 = vrot.slane %v682, 7
      %v759 = vrot.slane %v683, 7
      %v760 = vsel %vm731, %v758, %v759
      %v761 = vrot.slane %v684, 7
      %v762 = vrot.slane %v685, 7
      %v763 = vsel %vm731, %v761, %v762
      %v764 = vrot.slane %v686, 7
      %v765 = vrot.slane %v687, 7
      %v766 = vsel %vm731, %v764, %v765
      %v767 = vrot.slane %v688, 7
      %v768 = vrot.slane %v689, 7
      %v769 = vsel %vm731, %v767, %v768
      %v770 = vrot.slane %v690, 7
      %v771 = vrot.slane %v691, 7
      %v772 = vsel %vm731, %v770, %v771
      %v773 = vrot.slane %v692, 7
      %v774 = vrot.slane %v693, 7
      %v775 = vsel %vm731, %v773, %v774
      %v776 = vrot.slane %v694, 7
      %v777 = vrot.slane %v695, 7
      %v778 = vsel %vm731, %v776, %v777
      %v779 = vrot.slane %v696, 7
      %v780 = vrot.slane %v697, 7
      %v781 = vsel %vm731, %v779, %v780
      %v831 = vsel %vm731, 0.0, %v732
      %v832 = vsel %vm731, 0.0, %v734
      %v833 = vsel %vm731, 0.0, %v737
      %v834 = vsel %vm731, 0.0, %v740
      %v835 = vsel %vm731, 0.0, %v743
      %v836 = vsel %vm731, 0.0, %v746
      %v837 = vsel %vm731, 0.0, %v749
      %v838 = vsel %vm731, 0.0, %v752
      %v839 = vsel %vm731, 0.0, %v755
      %v840 = vsel %vm731, 0.0, %v758
      %v841 = vsel %vm731, 0.0, %v761
      %v842 = vsel %vm731, 0.0, %v764
      %v843 = vsel %vm731, 0.0, %v767
      %v844 = vsel %vm731, 0.0, %v770
      %v845 = vsel %vm731, 0.0, %v773
      %v846 = vsel %vm731, 0.0, %v776
      %v847 = vsel %vm731, 0.0, %v779
      %v848 = vsel %vm731, %v732, 0.0
      %v849 = vsel %vm731, %v735, 0.0
      %v850 = vsel %vm731, %v738, 0.0
      %v851 = vsel %vm731, %v741, 0.0
      %v852 = vsel %vm731, %v744, 0.0
      %v853 = vsel %vm731, %v747, 0.0
      %v854 = vsel %vm731, %v750, 0.0
      %v855 = vsel %vm731, %v753, 0.0
      %v856 = vsel %vm731, %v756, 0.0
      %v857 = vsel %vm731, %v759, 0.0
      %v858 = vsel %vm731, %v762, 0.0
      %v859 = vsel %vm731, %v765, 0.0
      %v860 = vsel %vm731, %v768, 0.0
      %v861 = vsel %vm731, %v771, 0.0
      %v862 = vsel %vm731, %v774, 0.0
      %v863 = vsel %vm731, %v777, 0.0
      %v864 = vsel %vm731, %v780, 0.0
      %vm897 = vcmask 1046528
      %v898 = vrot.slane %v831, 1
      %v899 = vrot.slane %v733, 1
      %v900 = vsel %vm897, %v898, %v899
      %v901 = vrot.slane %v848, 1
      %v902 = vsel %vm897, %v899, %v901
      %v903 = vrot.slane %v832, 1
      %v904 = vrot.slane %v736, 1
      %v905 = vsel %vm897, %v903, %v904
      %v906 = vrot.slane %v849, 1
      %v907 = vsel %vm897, %v904, %v906
      %v908 = vrot.slane %v833, 1
      %v909 = vrot.slane %v739, 1
      %v910 = vsel %vm897, %v908, %v909
      %v911 = vrot.slane %v850, 1
      %v912 = vsel %vm897, %v909, %v911
      %v913 = vrot.slane %v834, 1
      %v914 = vrot.slane %v742, 1
      %v915 = vsel %vm897, %v913, %v914
      %v916 = vrot.slane %v851, 1
      %v917 = vsel %vm897, %v914, %v916
      %v918 = vrot.slane %v835, 1
      %v919 = vrot.slane %v745, 1
      %v920 = vsel %vm897, %v918, %v919
      %v921 = vrot.slane %v852, 1
      %v922 = vsel %vm897, %v919, %v921
      %v923 = vrot.slane %v836, 1
      %v924 = vrot.slane %v748, 1
      %v925 = vsel %vm897, %v923, %v924
      %v926 = vrot.slane %v853, 1
      %v927 = vsel %vm897, %v924, %v926
      %v928 = vrot.slane %v837, 1
      %v929 = vrot.slane %v751, 1
      %v930 = vsel %vm897, %v928, %v929
      %v931 = vrot.slane %v854, 1
      %v932 = vsel %vm897, %v929, %v931
      %v933 = vrot.slane %v838, 1
      %v934 = vrot.slane %v754, 1
      %v935 = vsel %vm897, %v933, %v934
      %v936 = vrot.slane %v855, 1
      %v937 = vsel %vm897, %v934, %v936
      %v938 = vrot.slane %v839, 1
      %v939 = vrot.slane %v757, 1
      %v940 = vsel %vm897, %v938, %v939
      %v941 = vrot.slane %v856, 1
      %v942 = vsel %vm897, %v939, %v941
      %v943 = vrot.slane %v840, 1
      %v944 = vrot.slane %v760, 1
      %v945 = vsel %vm897, %v943, %v944
      %v946 = vrot.slane %v857, 1
      %v947 = vsel %vm897, %v944, %v946
      %v948 = vrot.slane %v841, 1
      %v949 = vrot.slane %v763, 1
      %v950 = vsel %vm897, %v948, %v949
      %v951 = vrot.slane %v858, 1
      %v952 = vsel %vm897, %v949, %v951
      %v953 = vrot.slane %v842, 1
      %v954 = vrot.slane %v766, 1
      %v955 = vsel %vm897, %v953, %v954
      %v956 = vrot.slane %v859, 1
      %v957 = vsel %vm897, %v954, %v956
      %v958 = vrot.slane %v843, 1
      %v959 = vrot.slane %v769, 1
      %v960 = vsel %vm897, %v958, %v959
      %v961 = vrot.slane %v860, 1
      %v962 = vsel %vm897, %v959, %v961
      %v963 = vrot.slane %v844, 1
      %v964 = vrot.slane %v772, 1
      %v965 = vsel %vm897, %v963, %v964
      %v966 = vrot.slane %v861, 1
      %v967 = vsel %vm897, %v964, %v966
      %v968 = vrot.slane %v845, 1
      %v969 = vrot.slane %v775, 1
      %v970 = vsel %vm897, %v968, %v969
      %v971 = vrot.slane %v862, 1
      %v972 = vsel %vm897, %v969, %v971
      %v973 = vrot.slane %v846, 1
      %v974 = vrot.slane %v778, 1
      %v975 = vsel %vm897, %v973, %v974
      %v976 = vrot.slane %v863, 1
      %v977 = vsel %vm897, %v974, %v976
      %v978 = vrot.slane %v831, 2
      %v979 = vrot.slane %v733, 2
      %v980 = vsel %vm501, %v978, %v979
      %v981 = vrot.slane %v848, 2
      %v982 = vsel %vm501, %v979, %v981
      %v983 = vrot.slane %v832, 2
      %v984 = vrot.slane %v736, 2
      %v985 = vsel %vm501, %v983, %v984
      %v986 = vrot.slane %v849, 2
      %v987 = vsel %vm501, %v984, %v986
      %v988 = vrot.slane %v833, 2
      %v989 = vrot.slane %v739, 2
      %v990 = vsel %vm501, %v988, %v989
      %v991 = vrot.slane %v850, 2
      %v992 = vsel %vm501, %v989, %v991
      %v993 = vrot.slane %v834, 2
      %v994 = vrot.slane %v742, 2
      %v995 = vsel %vm501, %v993, %v994
      %v996 = vrot.slane %v851, 2
      %v997 = vsel %vm501, %v994, %v996
      %v998 = vrot.slane %v835, 2
      %v999 = vrot.slane %v745, 2
      %v1000 = vsel %vm501, %v998, %v999
      %v1001 = vrot.slane %v852, 2
      %v1002 = vsel %vm501, %v999, %v1001
      %v1003 = vrot.slane %v836, 2
      %v1004 = vrot.slane %v748, 2
      %v1005 = vsel %vm501, %v1003, %v1004
      %v1006 = vrot.slane %v853, 2
      %v1007 = vsel %vm501, %v1004, %v1006
      %v1008 = vrot.slane %v837, 2
      %v1009 = vrot.slane %v751, 2
      %v1010 = vsel %vm501, %v1008, %v1009
      %v1011 = vrot.slane %v854, 2
      %v1012 = vsel %vm501, %v1009, %v1011
      %v1013 = vrot.slane %v838, 2
      %v1014 = vrot.slane %v754, 2
      %v1015 = vsel %vm501, %v1013, %v1014
      %v1016 = vrot.slane %v855, 2
      %v1017 = vsel %vm501, %v1014, %v1016
      %v1018 = vrot.slane %v839, 2
      %v1019 = vrot.slane %v757, 2
      %v1020 = vsel %vm501, %v1018, %v1019
      %v1021 = vrot.slane %v856, 2
      %v1022 = vsel %vm501, %v1019, %v1021
      %v1023 = vrot.slane %v840, 2
      %v1024 = vrot.slane %v760, 2
      %v1025 = vsel %vm501, %v1023, %v1024
      %v1026 = vrot.slane %v857, 2
      %v1027 = vsel %vm501, %v1024, %v1026
      %v1028 = vrot.slane %v841, 2
      %v1029 = vrot.slane %v763, 2
      %v1030 = vsel %vm501, %v1028, %v1029
      %v1031 = vrot.slane %v858, 2
      %v1032 = vsel %vm501, %v1029, %v1031
      %v1033 = vrot.slane %v842, 2
      %v1034 = vrot.slane %v766, 2
      %v1035 = vsel %vm501, %v1033, %v1034
      %v1036 = vrot.slane %v859, 2
      %v1037 = vsel %vm501, %v1034, %v1036
      %v1038 = vrot.slane %v843, 2
      %v1039 = vrot.slane %v769, 2
      %v1040 = vsel %vm501, %v1038, %v1039
      %v1041 = vrot.slane %v860, 2
      %v1042 = vsel %vm501, %v1039, %v1041
      %v1043 = vrot.slane %v844, 2
      %v1044 = vrot.slane %v772, 2
      %v1045 = vsel %vm501, %v1043, %v1044
      %v1046 = vrot.slane %v861, 2
      %v1047 = vsel %vm501, %v1044, %v1046
      %v1048 = vrot.slane %v845, 2
      %v1049 = vrot.slane %v775, 2
      %v1050 = vsel %vm501, %v1048, %v1049
      %v1051 = vrot.slane %v862, 2
      %v1052 = vsel %vm501, %v1049, %v1051
      %v1053 = vrot.slane %v846, 2
      %v1054 = vrot.slane %v778, 2
      %v1055 = vsel %vm501, %v1053, %v1054
      %v1056 = vrot.slane %v863, 2
      %v1057 = vsel %vm501, %v1054, %v1056
      %v1060 = vrot.slane %v847, 1
      %v1061 = vrot.slane %v781, 1
      %v1062 = vsel %vm897, %v1060, %v1061
      %v1063 = vrot.slane %v864, 1
      %v1064 = vsel %vm897, %v1061, %v1063
      %v1065 = vrot.slane %v847, 2
      %v1066 = vrot.slane %v781, 2
      %v1067 = vsel %vm501, %v1065, %v1066
      %v1068 = vrot.slane %v864, 2
      %v1069 = vsel %vm501, %v1066, %v1068
      %1102 = vrot.lane.b32.xlu0 %v900, 16
      %v1103 = vpop.permute.xlu0 %1102
      %1104 = vrot.lane.b32.xlu0 %v902, 16
      %v1105 = vpop.permute.xlu0 %1104
      %1106 = vrot.lane.b32.xlu0 %v905, 16
      %v1107 = vpop.permute.xlu0 %1106
      %1108 = vrot.lane.b32.xlu0 %v907, 16
      %v1109 = vpop.permute.xlu0 %1108
      %1110 = vrot.lane.b32.xlu0 %v910, 16
      %v1111 = vpop.permute.xlu0 %1110
      %1112 = vrot.lane.b32.xlu0 %v912, 16
      %v1113 = vpop.permute.xlu0 %1112
      %1114 = vrot.lane.b32.xlu0 %v915, 16
      %v1115 = vpop.permute.xlu0 %1114
      %1116 = vrot.lane.b32.xlu0 %v917, 16
      %v1117 = vpop.permute.xlu0 %1116
      %1118 = vrot.lane.b32.xlu0 %v920, 16
      %v1119 = vpop.permute.xlu0 %1118
      %1120 = vrot.lane.b32.xlu0 %v922, 16
      %v1121 = vpop.permute.xlu0 %1120
      %1122 = vrot.lane.b32.xlu0 %v925, 16
      %v1123 = vpop.permute.xlu0 %1122
      %1124 = vrot.lane.b32.xlu0 %v927, 16
      %v1125 = vpop.permute.xlu0 %1124
      %1126 = vrot.lane.b32.xlu0 %v930, 16
      %v1127 = vpop.permute.xlu0 %1126
      %1128 = vrot.lane.b32.xlu0 %v932, 16
      %v1129 = vpop.permute.xlu0 %1128
      %1130 = vrot.lane.b32.xlu0 %v935, 16
      %v1131 = vpop.permute.xlu0 %1130
      %1132 = vrot.lane.b32.xlu0 %v937, 16
      %v1133 = vpop.permute.xlu0 %1132
      %1134 = vrot.lane.b32.xlu0 %v940, 16
      %v1135 = vpop.permute.xlu0 %1134
      %1136 = vrot.lane.b32.xlu0 %v942, 16
      %v1137 = vpop.permute.xlu0 %1136
      %1138 = vrot.lane.b32.xlu0 %v945, 16
      %v1139 = vpop.permute.xlu0 %1138
      %1140 = vrot.lane.b32.xlu0 %v947, 16
      %v1141 = vpop.permute.xlu0 %1140
      %1142 = vrot.lane.b32.xlu0 %v950, 16
      %v1143 = vpop.permute.xlu0 %1142
      %1144 = vrot.lane.b32.xlu0 %v952, 16
      %v1145 = vpop.permute.xlu0 %1144
      %1146 = vrot.lane.b32.xlu0 %v955, 16
      %v1147 = vpop.permute.xlu0 %1146
      %1148 = vrot.lane.b32.xlu0 %v957, 16
      %v1149 = vpop.permute.xlu0 %1148
      %1150 = vrot.lane.b32.xlu0 %v960, 16
      %v1151 = vpop.permute.xlu0 %1150
      %1152 = vrot.lane.b32.xlu0 %v962, 16
      %v1153 = vpop.permute.xlu0 %1152
      %1154 = vrot.lane.b32.xlu0 %v965, 16
      %v1155 = vpop.permute.xlu0 %1154
      %1156 = vrot.lane.b32.xlu0 %v967, 16
      %v1157 = vpop.permute.xlu0 %1156
      %1158 = vrot.lane.b32.xlu0 %v970, 16
      %v1159 = vpop.permute.xlu0 %1158
      %1160 = vrot.lane.b32.xlu0 %v972, 16
      %v1161 = vpop.permute.xlu0 %1160
      %1162 = vrot.lane.b32.xlu0 %v975, 16
      %v1163 = vpop.permute.xlu0 %1162
      %1164 = vrot.lane.b32.xlu0 %v977, 16
      %v1165 = vpop.permute.xlu0 %1164
      %1198 = vrot.lane.b32.xlu0 %v980, 32
      %v1199 = vpop.permute.xlu0 %1198
      %1200 = vrot.lane.b32.xlu0 %v982, 32
      %v1201 = vpop.permute.xlu0 %1200
      %1202 = vrot.lane.b32.xlu0 %v985, 32
      %v1203 = vpop.permute.xlu0 %1202
      %1204 = vrot.lane.b32.xlu0 %v987, 32
      %v1205 = vpop.permute.xlu0 %1204
      %1206 = vrot.lane.b32.xlu0 %v990, 32
      %v1207 = vpop.permute.xlu0 %1206
      %1208 = vrot.lane.b32.xlu0 %v992, 32
      %v1209 = vpop.permute.xlu0 %1208
      %1210 = vrot.lane.b32.xlu0 %v995, 32
      %v1211 = vpop.permute.xlu0 %1210
      %1212 = vrot.lane.b32.xlu0 %v997, 32
      %v1213 = vpop.permute.xlu0 %1212
      %1214 = vrot.lane.b32.xlu0 %v1000, 32
      %v1215 = vpop.permute.xlu0 %1214
      %1216 = vrot.lane.b32.xlu0 %v1002, 32
      %v1217 = vpop.permute.xlu0 %1216
      %1218 = vrot.lane.b32.xlu0 %v1005, 32
      %v1219 = vpop.permute.xlu0 %1218
      %1220 = vrot.lane.b32.xlu0 %v1007, 32
      %v1221 = vpop.permute.xlu0 %1220
      %1222 = vrot.lane.b32.xlu0 %v1010, 32
      %v1223 = vpop.permute.xlu0 %1222
      %1224 = vrot.lane.b32.xlu0 %v1012, 32
      %v1225 = vpop.permute.xlu0 %1224
      %1226 = vrot.lane.b32.xlu0 %v1015, 32
      %v1227 = vpop.permute.xlu0 %1226
      %1228 = vrot.lane.b32.xlu0 %v1017, 32
      %v1229 = vpop.permute.xlu0 %1228
      %1230 = vrot.lane.b32.xlu0 %v1020, 32
      %v1231 = vpop.permute.xlu0 %1230
      %1232 = vrot.lane.b32.xlu0 %v1022, 32
      %v1233 = vpop.permute.xlu0 %1232
      %1234 = vrot.lane.b32.xlu0 %v1025, 32
      %v1235 = vpop.permute.xlu0 %1234
      %1236 = vrot.lane.b32.xlu0 %v1027, 32
      %v1237 = vpop.permute.xlu0 %1236
      %1238 = vrot.lane.b32.xlu0 %v1030, 32
      %v1239 = vpop.permute.xlu0 %1238
      %1240 = vrot.lane.b32.xlu0 %v1032, 32
      %v1241 = vpop.permute.xlu0 %1240
      %1242 = vrot.lane.b32.xlu0 %v1035, 32
      %v1243 = vpop.permute.xlu0 %1242
      %1244 = vrot.lane.b32.xlu0 %v1037, 32
      %v1245 = vpop.permute.xlu0 %1244
      %1246 = vrot.lane.b32.xlu0 %v1040, 32
      %v1247 = vpop.permute.xlu0 %1246
      %1248 = vrot.lane.b32.xlu0 %v1042, 32
      %v1249 = vpop.permute.xlu0 %1248
      %1250 = vrot.lane.b32.xlu0 %v1045, 32
      %v1251 = vpop.permute.xlu0 %1250
      %1252 = vrot.lane.b32.xlu0 %v1047, 32
      %v1253 = vpop.permute.xlu0 %1252
      %1254 = vrot.lane.b32.xlu0 %v1050, 32
      %v1255 = vpop.permute.xlu0 %1254
      %1256 = vrot.lane.b32.xlu0 %v1052, 32
      %v1257 = vpop.permute.xlu0 %1256
      %1258 = vrot.lane.b32.xlu0 %v1055, 32
      %v1259 = vpop.permute.xlu0 %1258
      %1260 = vrot.lane.b32.xlu0 %v1057, 32
      %v1261 = vpop.permute.xlu0 %1260
      %1294 = vrot.lane.b32.xlu0 %v832, 48
      %v1295 = vpop.permute.xlu0 %1294
      %1296 = vrot.lane.b32.xlu0 %v736, 48
      %v1297 = vpop.permute.xlu0 %1296
      %1298 = vrot.lane.b32.xlu0 %v833, 48
      %v1299 = vpop.permute.xlu0 %1298
      %1300 = vrot.lane.b32.xlu0 %v739, 48
      %v1301 = vpop.permute.xlu0 %1300
      %1302 = vrot.lane.b32.xlu0 %v834, 48
      %v1303 = vpop.permute.xlu0 %1302
      %1304 = vrot.lane.b32.xlu0 %v742, 48
      %v1305 = vpop.permute.xlu0 %1304
      %1306 = vrot.lane.b32.xlu0 %v835, 48
      %v1307 = vpop.permute.xlu0 %1306
      %1308 = vrot.lane.b32.xlu0 %v745, 48
      %v1309 = vpop.permute.xlu0 %1308
      %1310 = vrot.lane.b32.xlu0 %v836, 48
      %v1311 = vpop.permute.xlu0 %1310
      %1312 = vrot.lane.b32.xlu0 %v748, 48
      %v1313 = vpop.permute.xlu0 %1312
      %1314 = vrot.lane.b32.xlu0 %v837, 48
      %v1315 = vpop.permute.xlu0 %1314
      %1316 = vrot.lane.b32.xlu0 %v751, 48
      %v1317 = vpop.permute.xlu0 %1316
      %1318 = vrot.lane.b32.xlu0 %v838, 48
      %v1319 = vpop.permute.xlu0 %1318
      %1320 = vrot.lane.b32.xlu0 %v754, 48
      %v1321 = vpop.permute.xlu0 %1320
      %1322 = vrot.lane.b32.xlu0 %v839, 48
      %v1323 = vpop.permute.xlu0 %1322
      %1324 = vrot.lane.b32.xlu0 %v757, 48
      %v1325 = vpop.permute.xlu0 %1324
      %1326 = vrot.lane.b32.xlu0 %v840, 48
      %v1327 = vpop.permute.xlu0 %1326
      %1328 = vrot.lane.b32.xlu0 %v760, 48
      %v1329 = vpop.permute.xlu0 %1328
      %1330 = vrot.lane.b32.xlu0 %v841, 48
      %v1331 = vpop.permute.xlu0 %1330
      %1332 = vrot.lane.b32.xlu0 %v763, 48
      %v1333 = vpop.permute.xlu0 %1332
      %1334 = vrot.lane.b32.xlu0 %v842, 48
      %v1335 = vpop.permute.xlu0 %1334
      %1336 = vrot.lane.b32.xlu0 %v766, 48
      %v1337 = vpop.permute.xlu0 %1336
      %1338 = vrot.lane.b32.xlu0 %v843, 48
      %v1339 = vpop.permute.xlu0 %1338
      %1340 = vrot.lane.b32.xlu0 %v769, 48
      %v1341 = vpop.permute.xlu0 %1340
      %1342 = vrot.lane.b32.xlu0 %v844, 48
      %v1343 = vpop.permute.xlu0 %1342
      %1344 = vrot.lane.b32.xlu0 %v772, 48
      %v1345 = vpop.permute.xlu0 %1344
      %1346 = vrot.lane.b32.xlu0 %v845, 48
      %v1347 = vpop.permute.xlu0 %1346
      %1348 = vrot.lane.b32.xlu0 %v775, 48
      %v1349 = vpop.permute.xlu0 %1348
      %1350 = vrot.lane.b32.xlu0 %v846, 48
      %v1351 = vpop.permute.xlu0 %1350
      %1352 = vrot.lane.b32.xlu0 %v778, 48
      %v1353 = vpop.permute.xlu0 %1352
      %1354 = vrot.lane.b32.xlu0 %v847, 48
      %v1355 = vpop.permute.xlu0 %1354
      %1356 = vrot.lane.b32.xlu0 %v781, 48
      %v1357 = vpop.permute.xlu0 %1356
      %1390 = vrot.lane.b32.xlu0 %v905, 64
      %v1391 = vpop.permute.xlu0 %1390
      %1392 = vrot.lane.b32.xlu0 %v907, 64
      %v1393 = vpop.permute.xlu0 %1392
      %1394 = vrot.lane.b32.xlu0 %v910, 64
      %v1395 = vpop.permute.xlu0 %1394
      %1396 = vrot.lane.b32.xlu0 %v912, 64
      %v1397 = vpop.permute.xlu0 %1396
      %1398 = vrot.lane.b32.xlu0 %v915, 64
      %v1399 = vpop.permute.xlu0 %1398
      %1400 = vrot.lane.b32.xlu0 %v917, 64
      %v1401 = vpop.permute.xlu0 %1400
      %1402 = vrot.lane.b32.xlu0 %v920, 64
      %v1403 = vpop.permute.xlu0 %1402
      %1404 = vrot.lane.b32.xlu0 %v922, 64
      %v1405 = vpop.permute.xlu0 %1404
      %1406 = vrot.lane.b32.xlu0 %v925, 64
      %v1407 = vpop.permute.xlu0 %1406
      %1408 = vrot.lane.b32.xlu0 %v927, 64
      %v1409 = vpop.permute.xlu0 %1408
      %1410 = vrot.lane.b32.xlu0 %v930, 64
      %v1411 = vpop.permute.xlu0 %1410
      %1412 = vrot.lane.b32.xlu0 %v932, 64
      %v1413 = vpop.permute.xlu0 %1412
      %1414 = vrot.lane.b32.xlu0 %v935, 64
      %v1415 = vpop.permute.xlu0 %1414
      %1416 = vrot.lane.b32.xlu0 %v937, 64
      %v1417 = vpop.permute.xlu0 %1416
      %1418 = vrot.lane.b32.xlu0 %v940, 64
      %v1419 = vpop.permute.xlu0 %1418
      %1420 = vrot.lane.b32.xlu0 %v942, 64
      %v1421 = vpop.permute.xlu0 %1420
      %1422 = vrot.lane.b32.xlu0 %v945, 64
      %v1423 = vpop.permute.xlu0 %1422
      %1424 = vrot.lane.b32.xlu0 %v947, 64
      %v1425 = vpop.permute.xlu0 %1424
      %1426 = vrot.lane.b32.xlu0 %v950, 64
      %v1427 = vpop.permute.xlu0 %1426
      %1428 = vrot.lane.b32.xlu0 %v952, 64
      %v1429 = vpop.permute.xlu0 %1428
      %1430 = vrot.lane.b32.xlu0 %v955, 64
      %v1431 = vpop.permute.xlu0 %1430
      %1432 = vrot.lane.b32.xlu0 %v957, 64
      %v1433 = vpop.permute.xlu0 %1432
      %1434 = vrot.lane.b32.xlu0 %v960, 64
      %v1435 = vpop.permute.xlu0 %1434
      %1436 = vrot.lane.b32.xlu0 %v962, 64
      %v1437 = vpop.permute.xlu0 %1436
      %1438 = vrot.lane.b32.xlu0 %v965, 64
      %v1439 = vpop.permute.xlu0 %1438
      %1440 = vrot.lane.b32.xlu0 %v967, 64
      %v1441 = vpop.permute.xlu0 %1440
      %1442 = vrot.lane.b32.xlu0 %v970, 64
      %v1443 = vpop.permute.xlu0 %1442
      %1444 = vrot.lane.b32.xlu0 %v972, 64
      %v1445 = vpop.permute.xlu0 %1444
      %1446 = vrot.lane.b32.xlu0 %v975, 64
      %v1447 = vpop.permute.xlu0 %1446
      %1448 = vrot.lane.b32.xlu0 %v977, 64
      %v1449 = vpop.permute.xlu0 %1448
      %1450 = vrot.lane.b32.xlu0 %v1062, 64
      %v1451 = vpop.permute.xlu0 %1450
      %1452 = vrot.lane.b32.xlu0 %v1064, 64
      %v1453 = vpop.permute.xlu0 %1452
      %1486 = vrot.lane.b32.xlu0 %v985, 80
      %v1487 = vpop.permute.xlu0 %1486
      %1488 = vrot.lane.b32.xlu0 %v987, 80
      %v1489 = vpop.permute.xlu0 %1488
      %1490 = vrot.lane.b32.xlu0 %v990, 80
      %v1491 = vpop.permute.xlu0 %1490
      %1492 = vrot.lane.b32.xlu0 %v992, 80
      %v1493 = vpop.permute.xlu0 %1492
      %1494 = vrot.lane.b32.xlu0 %v995, 80
      %v1495 = vpop.permute.xlu0 %1494
      %1496 = vrot.lane.b32.xlu0 %v997, 80
      %v1497 = vpop.permute.xlu0 %1496
      %1498 = vrot.lane.b32.xlu0 %v1000, 80
      %v1499 = vpop.permute.xlu0 %1498
      %1500 = vrot.lane.b32.xlu0 %v1002, 80
      %v1501 = vpop.permute.xlu0 %1500
      %1502 = vrot.lane.b32.xlu0 %v1005, 80
      %v1503 = vpop.permute.xlu0 %1502
      %1504 = vrot.lane.b32.xlu0 %v1007, 80
      %v1505 = vpop.permute.xlu0 %1504
      %1506 = vrot.lane.b32.xlu0 %v1010, 80
      %v1507 = vpop.permute.xlu0 %1506
      %1508 = vrot.lane.b32.xlu0 %v1012, 80
      %v1509 = vpop.permute.xlu0 %1508
      %1510 = vrot.lane.b32.xlu0 %v1015, 80
      %v1511 = vpop.permute.xlu0 %1510
      %1512 = vrot.lane.b32.xlu0 %v1017, 80
      %v1513 = vpop.permute.xlu0 %1512
      %1514 = vrot.lane.b32.xlu0 %v1020, 80
      %v1515 = vpop.permute.xlu0 %1514
      %1516 = vrot.lane.b32.xlu0 %v1022, 80
      %v1517 = vpop.permute.xlu0 %1516
      %1518 = vrot.lane.b32.xlu0 %v1025, 80
      %v1519 = vpop.permute.xlu0 %1518
      %1520 = vrot.lane.b32.xlu0 %v1027, 80
      %v1521 = vpop.permute.xlu0 %1520
      %1522 = vrot.lane.b32.xlu0 %v1030, 80
      %v1523 = vpop.permute.xlu0 %1522
      %1524 = vrot.lane.b32.xlu0 %v1032, 80
      %v1525 = vpop.permute.xlu0 %1524
      %1526 = vrot.lane.b32.xlu0 %v1035, 80
      %v1527 = vpop.permute.xlu0 %1526
      %1528 = vrot.lane.b32.xlu0 %v1037, 80
      %v1529 = vpop.permute.xlu0 %1528
      %1530 = vrot.lane.b32.xlu0 %v1040, 80
      %v1531 = vpop.permute.xlu0 %1530
      %1532 = vrot.lane.b32.xlu0 %v1042, 80
      %v1533 = vpop.permute.xlu0 %1532
      %1534 = vrot.lane.b32.xlu0 %v1045, 80
      %v1535 = vpop.permute.xlu0 %1534
      %1536 = vrot.lane.b32.xlu0 %v1047, 80
      %v1537 = vpop.permute.xlu0 %1536
      %1538 = vrot.lane.b32.xlu0 %v1050, 80
      %v1539 = vpop.permute.xlu0 %1538
      %1540 = vrot.lane.b32.xlu0 %v1052, 80
      %v1541 = vpop.permute.xlu0 %1540
      %1542 = vrot.lane.b32.xlu0 %v1055, 80
      %v1543 = vpop.permute.xlu0 %1542
      %1544 = vrot.lane.b32.xlu0 %v1057, 80
      %v1545 = vpop.permute.xlu0 %1544
      %1546 = vrot.lane.b32.xlu0 %v1067, 80
      %v1547 = vpop.permute.xlu0 %1546
      %1548 = vrot.lane.b32.xlu0 %v1069, 80
      %v1549 = vpop.permute.xlu0 %1548
      %1582 = vrot.lane.b32.xlu0 %v833, 96
      %v1583 = vpop.permute.xlu0 %1582
      %1584 = vrot.lane.b32.xlu0 %v739, 96
      %v1585 = vpop.permute.xlu0 %1584
      %1586 = vrot.lane.b32.xlu0 %v834, 96
      %v1587 = vpop.permute.xlu0 %1586
      %1588 = vrot.lane.b32.xlu0 %v742, 96
      %v1589 = vpop.permute.xlu0 %1588
      %1590 = vrot.lane.b32.xlu0 %v835, 96
      %v1591 = vpop.permute.xlu0 %1590
      %1592 = vrot.lane.b32.xlu0 %v745, 96
      %v1593 = vpop.permute.xlu0 %1592
      %1594 = vrot.lane.b32.xlu0 %v836, 96
      %v1595 = vpop.permute.xlu0 %1594
      %1596 = vrot.lane.b32.xlu0 %v748, 96
      %v1597 = vpop.permute.xlu0 %1596
      %1598 = vrot.lane.b32.xlu0 %v837, 96
      %v1599 = vpop.permute.xlu0 %1598
      %1600 = vrot.lane.b32.xlu0 %v751, 96
      %v1601 = vpop.permute.xlu0 %1600
      %1602 = vrot.lane.b32.xlu0 %v838, 96
      %v1603 = vpop.permute.xlu0 %1602
      %1604 = vrot.lane.b32.xlu0 %v754, 96
      %v1605 = vpop.permute.xlu0 %1604
      %1606 = vrot.lane.b32.xlu0 %v839, 96
      %v1607 = vpop.permute.xlu0 %1606
      %1608 = vrot.lane.b32.xlu0 %v757, 96
      %v1609 = vpop.permute.xlu0 %1608
      %1610 = vrot.lane.b32.xlu0 %v840, 96
      %v1611 = vpop.permute.xlu0 %1610
      %1612 = vrot.lane.b32.xlu0 %v760, 96
      %v1613 = vpop.permute.xlu0 %1612
      %1614 = vrot.lane.b32.xlu0 %v841, 96
      %v1615 = vpop.permute.xlu0 %1614
      %1616 = vrot.lane.b32.xlu0 %v763, 96
      %v1617 = vpop.permute.xlu0 %1616
      %1618 = vrot.lane.b32.xlu0 %v842, 96
      %v1619 = vpop.permute.xlu0 %1618
      %1620 = vrot.lane.b32.xlu0 %v766, 96
      %v1621 = vpop.permute.xlu0 %1620
      %1622 = vrot.lane.b32.xlu0 %v843, 96
      %v1623 = vpop.permute.xlu0 %1622
      %1624 = vrot.lane.b32.xlu0 %v769, 96
      %v1625 = vpop.permute.xlu0 %1624
      %1626 = vrot.lane.b32.xlu0 %v844, 96
      %v1627 = vpop.permute.xlu0 %1626
      %1628 = vrot.lane.b32.xlu0 %v772, 96
      %v1629 = vpop.permute.xlu0 %1628
      %1630 = vrot.lane.b32.xlu0 %v845, 96
      %v1631 = vpop.permute.xlu0 %1630
      %1632 = vrot.lane.b32.xlu0 %v775, 96
      %v1633 = vpop.permute.xlu0 %1632
      %1634 = vrot.lane.b32.xlu0 %v846, 96
      %v1635 = vpop.permute.xlu0 %1634
      %1636 = vrot.lane.b32.xlu0 %v778, 96
      %v1637 = vpop.permute.xlu0 %1636
      %1638 = vrot.lane.b32.xlu0 %v847, 96
      %v1639 = vpop.permute.xlu0 %1638
      %1640 = vrot.lane.b32.xlu0 %v781, 96
      %v1641 = vpop.permute.xlu0 %1640
      %1642 = vrot.lane.b32.xlu0 %v831, 96
      %v1643 = vpop.permute.xlu0 %1642
      %1644 = vrot.lane.b32.xlu0 %v733, 96
      %v1645 = vpop.permute.xlu0 %1644
      %1678 = vrot.lane.b32.xlu0 %v910, 112
      %v1679 = vpop.permute.xlu0 %1678
      %1680 = vrot.lane.b32.xlu0 %v912, 112
      %v1681 = vpop.permute.xlu0 %1680
      %1682 = vrot.lane.b32.xlu0 %v915, 112
      %v1683 = vpop.permute.xlu0 %1682
      %1684 = vrot.lane.b32.xlu0 %v917, 112
      %v1685 = vpop.permute.xlu0 %1684
      %1686 = vrot.lane.b32.xlu0 %v920, 112
      %v1687 = vpop.permute.xlu0 %1686
      %1688 = vrot.lane.b32.xlu0 %v922, 112
      %v1689 = vpop.permute.xlu0 %1688
      %1690 = vrot.lane.b32.xlu0 %v925, 112
      %v1691 = vpop.permute.xlu0 %1690
      %1692 = vrot.lane.b32.xlu0 %v927, 112
      %v1693 = vpop.permute.xlu0 %1692
      %1694 = vrot.lane.b32.xlu0 %v930, 112
      %v1695 = vpop.permute.xlu0 %1694
      %1696 = vrot.lane.b32.xlu0 %v932, 112
      %v1697 = vpop.permute.xlu0 %1696
      %1698 = vrot.lane.b32.xlu0 %v935, 112
      %v1699 = vpop.permute.xlu0 %1698
      %1700 = vrot.lane.b32.xlu0 %v937, 112
      %v1701 = vpop.permute.xlu0 %1700
      %1702 = vrot.lane.b32.xlu0 %v940, 112
      %v1703 = vpop.permute.xlu0 %1702
      %1704 = vrot.lane.b32.xlu0 %v942, 112
      %v1705 = vpop.permute.xlu0 %1704
      %1706 = vrot.lane.b32.xlu0 %v945, 112
      %v1707 = vpop.permute.xlu0 %1706
      %1708 = vrot.lane.b32.xlu0 %v947, 112
      %v1709 = vpop.permute.xlu0 %1708
      %1710 = vrot.lane.b32.xlu0 %v950, 112
      %v1711 = vpop.permute.xlu0 %1710
      %1712 = vrot.lane.b32.xlu0 %v952, 112
      %v1713 = vpop.permute.xlu0 %1712
      %1714 = vrot.lane.b32.xlu0 %v955, 112
      %v1715 = vpop.permute.xlu0 %1714
      %1716 = vrot.lane.b32.xlu0 %v957, 112
      %v1717 = vpop.permute.xlu0 %1716
      %1718 = vrot.lane.b32.xlu0 %v960, 112
      %v1719 = vpop.permute.xlu0 %1718
      %1720 = vrot.lane.b32.xlu0 %v962, 112
      %v1721 = vpop.permute.xlu0 %1720
      %1722 = vrot.lane.b32.xlu0 %v965, 112
      %v1723 = vpop.permute.xlu0 %1722
      %1724 = vrot.lane.b32.xlu0 %v967, 112
      %v1725 = vpop.permute.xlu0 %1724
      %1726 = vrot.lane.b32.xlu0 %v970, 112
      %v1727 = vpop.permute.xlu0 %1726
      %1728 = vrot.lane.b32.xlu0 %v972, 112
      %v1729 = vpop.permute.xlu0 %1728
      %1730 = vrot.lane.b32.xlu0 %v975, 112
      %v1731 = vpop.permute.xlu0 %1730
      %1732 = vrot.lane.b32.xlu0 %v977, 112
      %v1733 = vpop.permute.xlu0 %1732
      %1734 = vrot.lane.b32.xlu0 %v1062, 112
      %v1735 = vpop.permute.xlu0 %1734
      %1736 = vrot.lane.b32.xlu0 %v1064, 112
      %v1737 = vpop.permute.xlu0 %1736
      %1738 = vrot.lane.b32.xlu0 %v900, 112
      %v1739 = vpop.permute.xlu0 %1738
      %1740 = vrot.lane.b32.xlu0 %v902, 112
      %v1741 = vpop.permute.xlu0 %1740
      %vm1774 = vcmask 130048
      %v1775 = vsel %vm1774, %v831, %v1103
      %v1776 = vsel %vm1774, %v733, %v1105
      %v1777 = vsel %vm1774, %v832, %v1107
      %v1778 = vsel %vm1774, %v736, %v1109
      %v1779 = vsel %vm1774, %v833, %v1111
      %v1780 = vsel %vm1774, %v739, %v1113
      %v1781 = vsel %vm1774, %v834, %v1115
      %v1782 = vsel %vm1774, %v742, %v1117
      %v1783 = vsel %vm1774, %v835, %v1119
      %v1784 = vsel %vm1774, %v745, %v1121
      %v1785 = vsel %vm1774, %v836, %v1123
      %v1786 = vsel %vm1774, %v748, %v1125
      %v1787 = vsel %vm1774, %v837, %v1127
      %v1788 = vsel %vm1774, %v751, %v1129
      %v1789 = vsel %vm1774, %v838, %v1131
      %v1790 = vsel %vm1774, %v754, %v1133
      %v1791 = vsel %vm1774, %v839, %v1135
      %v1792 = vsel %vm1774, %v757, %v1137
      %v1793 = vsel %vm1774, %v840, %v1139
      %v1794 = vsel %vm1774, %v760, %v1141
      %v1795 = vsel %vm1774, %v841, %v1143
      %v1796 = vsel %vm1774, %v763, %v1145
      %v1797 = vsel %vm1774, %v842, %v1147
      %v1798 = vsel %vm1774, %v766, %v1149
      %v1799 = vsel %vm1774, %v843, %v1151
      %v1800 = vsel %vm1774, %v769, %v1153
      %v1801 = vsel %vm1774, %v844, %v1155
      %v1802 = vsel %vm1774, %v772, %v1157
      %v1803 = vsel %vm1774, %v845, %v1159
      %v1804 = vsel %vm1774, %v775, %v1161
      %v1805 = vsel %vm1774, %v846, %v1163
      %v1806 = vsel %vm1774, %v778, %v1165
      %vm1807 = vcmask 261120
      %v1808 = vsel %vm1807, %v1775, %v1199
      %v1809 = vsel %vm1807, %v1776, %v1201
      %v1810 = vsel %vm1807, %v1777, %v1203
      %v1811 = vsel %vm1807, %v1778, %v1205
      %v1812 = vsel %vm1807, %v1779, %v1207
      %v1813 = vsel %vm1807, %v1780, %v1209
      %v1814 = vsel %vm1807, %v1781, %v1211
      %v1815 = vsel %vm1807, %v1782, %v1213
      %v1816 = vsel %vm1807, %v1783, %v1215
      %v1817 = vsel %vm1807, %v1784, %v1217
      %v1818 = vsel %vm1807, %v1785, %v1219
      %v1819 = vsel %vm1807, %v1786, %v1221
      %v1820 = vsel %vm1807, %v1787, %v1223
      %v1821 = vsel %vm1807, %v1788, %v1225
      %v1822 = vsel %vm1807, %v1789, %v1227
      %v1823 = vsel %vm1807, %v1790, %v1229
      %v1824 = vsel %vm1807, %v1791, %v1231
      %v1825 = vsel %vm1807, %v1792, %v1233
      %v1826 = vsel %vm1807, %v1793, %v1235
      %v1827 = vsel %vm1807, %v1794, %v1237
      %v1828 = vsel %vm1807, %v1795, %v1239
      %v1829 = vsel %vm1807, %v1796, %v1241
      %v1830 = vsel %vm1807, %v1797, %v1243
      %v1831 = vsel %vm1807, %v1798, %v1245
      %v1832 = vsel %vm1807, %v1799, %v1247
      %v1833 = vsel %vm1807, %v1800, %v1249
      %v1834 = vsel %vm1807, %v1801, %v1251
      %v1835 = vsel %vm1807, %v1802, %v1253
      %v1836 = vsel %vm1807, %v1803, %v1255
      %v1837 = vsel %vm1807, %v1804, %v1257
      %v1838 = vsel %vm1807, %v1805, %v1259
      %v1839 = vsel %vm1807, %v1806, %v1261
      %vm1840 = vcmask 392192
      %v1841 = vsel %vm1840, %v1808, %v1295
      %v1842 = vsel %vm1840, %v1809, %v1297
      %v1843 = vsel %vm1840, %v1810, %v1299
      %v1844 = vsel %vm1840, %v1811, %v1301
      %v1845 = vsel %vm1840, %v1812, %v1303
      %v1846 = vsel %vm1840, %v1813, %v1305
      %v1847 = vsel %vm1840, %v1814, %v1307
      %v1848 = vsel %vm1840, %v1815, %v1309
      %v1849 = vsel %vm1840, %v1816, %v1311
      %v1850 = vsel %vm1840, %v1817, %v1313
      %v1851 = vsel %vm1840, %v1818, %v1315
      %v1852 = vsel %vm1840, %v1819, %v1317
      %v1853 = vsel %vm1840, %v1820, %v1319
      %v1854 = vsel %vm1840, %v1821, %v1321
      %v1855 = vsel %vm1840, %v1822, %v1323
      %v1856 = vsel %vm1840, %v1823, %v1325
      %v1857 = vsel %vm1840, %v1824, %v1327
      %v1858 = vsel %vm1840, %v1825, %v1329
      %v1859 = vsel %vm1840, %v1826, %v1331
      %v1860 = vsel %vm1840, %v1827, %v1333
      %v1861 = vsel %vm1840, %v1828, %v1335
      %v1862 = vsel %vm1840, %v1829, %v1337
      %v1863 = vsel %vm1840, %v1830, %v1339
      %v1864 = vsel %vm1840, %v1831, %v1341
      %v1865 = vsel %vm1840, %v1832, %v1343
      %v1866 = vsel %vm1840, %v1833, %v1345
      %v1867 = vsel %vm1840, %v1834, %v1347
      %v1868 = vsel %vm1840, %v1835, %v1349
      %v1869 = vsel %vm1840, %v1836, %v1351
      %v1870 = vsel %vm1840, %v1837, %v1353
      %v1871 = vsel %vm1840, %v1838, %v1355
      %v1872 = vsel %vm1840, %v1839, %v1357
      %vm1873 = vcmask 523264
      %v1874 = vsel %vm1873, %v1841, %v1391
      %v1875 = vsel %vm1873, %v1842, %v1393
      %v1876 = vsel %vm1873, %v1843, %v1395
      %v1877 = vsel %vm1873, %v1844, %v1397
      %v1878 = vsel %vm1873, %v1845, %v1399
      %v1879 = vsel %vm1873, %v1846, %v1401
      %v1880 = vsel %vm1873, %v1847, %v1403
      %v1881 = vsel %vm1873, %v1848, %v1405
      %v1882 = vsel %vm1873, %v1849, %v1407
      %v1883 = vsel %vm1873, %v1850, %v1409
      %v1884 = vsel %vm1873, %v1851, %v1411
      %v1885 = vsel %vm1873, %v1852, %v1413
      %v1886 = vsel %vm1873, %v1853, %v1415
      %v1887 = vsel %vm1873, %v1854, %v1417
      %v1888 = vsel %vm1873, %v1855, %v1419
      %v1889 = vsel %vm1873, %v1856, %v1421
      %v1890 = vsel %vm1873, %v1857, %v1423
      %v1891 = vsel %vm1873, %v1858, %v1425
      %v1892 = vsel %vm1873, %v1859, %v1427
      %v1893 = vsel %vm1873, %v1860, %v1429
      %v1894 = vsel %vm1873, %v1861, %v1431
      %v1895 = vsel %vm1873, %v1862, %v1433
      %v1896 = vsel %vm1873, %v1863, %v1435
      %v1897 = vsel %vm1873, %v1864, %v1437
      %v1898 = vsel %vm1873, %v1865, %v1439
      %v1899 = vsel %vm1873, %v1866, %v1441
      %v1900 = vsel %vm1873, %v1867, %v1443
      %v1901 = vsel %vm1873, %v1868, %v1445
      %v1902 = vsel %vm1873, %v1869, %v1447
      %v1903 = vsel %vm1873, %v1870, %v1449
      %v1904 = vsel %vm1873, %v1871, %v1451
      %v1905 = vsel %vm1873, %v1872, %v1453
      %vm1906 = vcmask 654336
      %v1907 = vsel %vm1906, %v1874, %v1487
      %v1908 = vsel %vm1906, %v1875, %v1489
      %v1909 = vsel %vm1906, %v1876, %v1491
      %v1910 = vsel %vm1906, %v1877, %v1493
      %v1911 = vsel %vm1906, %v1878, %v1495
      %v1912 = vsel %vm1906, %v1879, %v1497
      %v1913 = vsel %vm1906, %v1880, %v1499
      %v1914 = vsel %vm1906, %v1881, %v1501
      %v1915 = vsel %vm1906, %v1882, %v1503
      %v1916 = vsel %vm1906, %v1883, %v1505
      %v1917 = vsel %vm1906, %v1884, %v1507
      %v1918 = vsel %vm1906, %v1885, %v1509
      %v1919 = vsel %vm1906, %v1886, %v1511
      %v1920 = vsel %vm1906, %v1887, %v1513
      %v1921 = vsel %vm1906, %v1888, %v1515
      %v1922 = vsel %vm1906, %v1889, %v1517
      %v1923 = vsel %vm1906, %v1890, %v1519
      %v1924 = vsel %vm1906, %v1891, %v1521
      %v1925 = vsel %vm1906, %v1892, %v1523
      %v1926 = vsel %vm1906, %v1893, %v1525
      %v1927 = vsel %vm1906, %v1894, %v1527
      %v1928 = vsel %vm1906, %v1895, %v1529
      %v1929 = vsel %vm1906, %v1896, %v1531
      %v1930 = vsel %vm1906, %v1897, %v1533
      %v1931 = vsel %vm1906, %v1898, %v1535
      %v1932 = vsel %vm1906, %v1899, %v1537
      %v1933 = vsel %vm1906, %v1900, %v1539
      %v1934 = vsel %vm1906, %v1901, %v1541
      %v1935 = vsel %vm1906, %v1902, %v1543
      %v1936 = vsel %vm1906, %v1903, %v1545
      %v1937 = vsel %vm1906, %v1904, %v1547
      %v1938 = vsel %vm1906, %v1905, %v1549
      %vm1939 = vcmask 785408
      %v1940 = vsel %vm1939, %v1907, %v1583
      %v1941 = vsel %vm1939, %v1908, %v1585
      %v1942 = vsel %vm1939, %v1909, %v1587
      %v1943 = vsel %vm1939, %v1910, %v1589
      %v1944 = vsel %vm1939, %v1911, %v1591
      %v1945 = vsel %vm1939, %v1912, %v1593
      %v1946 = vsel %vm1939, %v1913, %v1595
      %v1947 = vsel %vm1939, %v1914, %v1597
      %v1948 = vsel %vm1939, %v1915, %v1599
      %v1949 = vsel %vm1939, %v1916, %v1601
      %v1950 = vsel %vm1939, %v1917, %v1603
      %v1951 = vsel %vm1939, %v1918, %v1605
      %v1952 = vsel %vm1939, %v1919, %v1607
      %v1953 = vsel %vm1939, %v1920, %v1609
      %v1954 = vsel %vm1939, %v1921, %v1611
      %v1955 = vsel %vm1939, %v1922, %v1613
      %v1956 = vsel %vm1939, %v1923, %v1615
      %v1957 = vsel %vm1939, %v1924, %v1617
      %v1958 = vsel %vm1939, %v1925, %v1619
      %v1959 = vsel %vm1939, %v1926, %v1621
      %v1960 = vsel %vm1939, %v1927, %v1623
      %v1961 = vsel %vm1939, %v1928, %v1625
      %v1962 = vsel %vm1939, %v1929, %v1627
      %v1963 = vsel %vm1939, %v1930, %v1629
      %v1964 = vsel %vm1939, %v1931, %v1631
      %v1965 = vsel %vm1939, %v1932, %v1633
      %v1966 = vsel %vm1939, %v1933, %v1635
      %v1967 = vsel %vm1939, %v1934, %v1637
      %v1968 = vsel %vm1939, %v1935, %v1639
      %v1969 = vsel %vm1939, %v1936, %v1641
      %v1970 = vsel %vm1939, %v1937, %v1643
      %v1971 = vsel %vm1939, %v1938, %v1645
      %vm1972 = vcmask 916480
      %v1973 = vsel %vm1972, %v1940, %v1679
      %v1974 = vsel %vm1972, %v1941, %v1681
      %v1975 = vsel %vm1972, %v1942, %v1683
      %v1976 = vsel %vm1972, %v1943, %v1685
      %v1977 = vsel %vm1972, %v1944, %v1687
      %v1978 = vsel %vm1972, %v1945, %v1689
      %v1979 = vsel %vm1972, %v1946, %v1691
      %v1980 = vsel %vm1972, %v1947, %v1693
      %v1981 = vsel %vm1972, %v1948, %v1695
      %v1982 = vsel %vm1972, %v1949, %v1697
      %v1983 = vsel %vm1972, %v1950, %v1699
      %v1984 = vsel %vm1972, %v1951, %v1701
      %v1985 = vsel %vm1972, %v1952, %v1703
      %v1986 = vsel %vm1972, %v1953, %v1705
      %v1987 = vsel %vm1972, %v1954, %v1707
      %v1988 = vsel %vm1972, %v1955, %v1709
      %v1989 = vsel %vm1972, %v1956, %v1711
      %v1990 = vsel %vm1972, %v1957, %v1713
      %v1991 = vsel %vm1972, %v1958, %v1715
      %v1992 = vsel %vm1972, %v1959, %v1717
      %v1993 = vsel %vm1972, %v1960, %v1719
      %v1994 = vsel %vm1972, %v1961, %v1721
      %v1995 = vsel %vm1972, %v1962, %v1723
      %v1996 = vsel %vm1972, %v1963, %v1725
      %v1997 = vsel %vm1972, %v1964, %v1727
      %v1998 = vsel %vm1972, %v1965, %v1729
      %v1999 = vsel %vm1972, %v1966, %v1731
      %v2000 = vsel %vm1972, %v1967, %v1733
      %v2001 = vsel %vm1972, %v1968, %v1735
      %v2002 = vsel %vm1972, %v1969, %v1737
      %v2003 = vsel %vm1972, %v1970, %v1739
      %v2004 = vsel %vm1972, %v1971, %v1741
      %v2005 = vpack.c.bf16 %v1974, %v1973
      %v2006 = vpack.c.bf16 %v992, %v990
      %v2007 = vpack.c.bf16 %v1976, %v1975
      %v2008 = vpack.c.bf16 %v997, %v995
      %v2009 = vpack.c.bf16 %v1978, %v1977
      %v2010 = vpack.c.bf16 %v1002, %v1000
      %v2011 = vpack.c.bf16 %v1980, %v1979
      %v2012 = vpack.c.bf16 %v1007, %v1005
      %v2013 = vpack.c.bf16 %v1982, %v1981
      %v2014 = vpack.c.bf16 %v1012, %v1010
      %v2015 = vpack.c.bf16 %v1984, %v1983
      %v2016 = vpack.c.bf16 %v1017, %v1015
      %v2017 = vpack.c.bf16 %v1986, %v1985
      %v2018 = vpack.c.bf16 %v1022, %v1020
      %v2019 = vpack.c.bf16 %v1988, %v1987
      %v2020 = vpack.c.bf16 %v1027, %v1025
      %v2021 = vpack.c.bf16 %v1990, %v1989
      %v2022 = vpack.c.bf16 %v1032, %v1030
      %v2023 = vpack.c.bf16 %v1992, %v1991
      %v2024 = vpack.c.bf16 %v1037, %v1035
      %v2025 = vpack.c.bf16 %v1994, %v1993
      %v2026 = vpack.c.bf16 %v1042, %v1040
      %v2027 = vpack.c.bf16 %v1996, %v1995
      %v2028 = vpack.c.bf16 %v1047, %v1045
      %v2029 = vpack.c.bf16 %v1998, %v1997
      %v2030 = vpack.c.bf16 %v1052, %v1050
      %v2031 = vpack.c.bf16 %v2000, %v1999
      %v2032 = vpack.c.bf16 %v1057, %v1055
      %v2033 = vpack.c.bf16 %v2002, %v2001
      %v2034 = vpack.c.bf16 %v1069, %v1067
      %v2035 = vpack.c.bf16 %v2004, %v2003
      %v2036 = vpack.c.bf16 %v982, %v980
      %v2037 = vld [vmem:[%s5] sm:$0xf]
      %v2038 = vld [vmem:[%s5 + $0x4] sm:$0xf]
      %v2039 = vld [vmem:[%s5 + $0x8] sm:$0xf]
      %v2040 = vld [vmem:[%s5 + $0xc] sm:$0xf]
      %v2041 = vld [vmem:[%s5 + $0x10] sm:$0xf]
      %v2042 = vld [vmem:[%s5 + $0x14] sm:$0xf]
      %v2043 = vld [vmem:[%s5 + $0x18] sm:$0xf]
      %v2044 = vld [vmem:[%s5 + $0x1c] sm:$0xf]
      %v2045 = vld [vmem:[%s5 + $0x20] sm:$0xf]
      %v2046 = vld [vmem:[%s5 + $0x24] sm:$0xf]
      %v2047 = vld [vmem:[%s5 + $0x28] sm:$0xf]
      %v2048 = vld [vmem:[%s5 + $0x2c] sm:$0xf]
      %v2049 = vld [vmem:[%s5 + $0x30] sm:$0xf]
      %v2050 = vld [vmem:[%s5 + $0x34] sm:$0xf]
      %v2051 = vld [vmem:[%s5 + $0x38] sm:$0xf]
      %v2052 = vld [vmem:[%s5 + $0x3c] sm:$0xf]
      %v2053 = vld [vmem:[%s5 + $0x40] sm:$0xf]
      %v2054 = vld [vmem:[%s5 + $0x44] sm:$0xf]
      %v2055 = vld [vmem:[%s6] sm:$0x1]
      %v2057 = vlaneseq
      %v2058 = vshrl.u32 %v2057, 7
      %v2059 = vsub.s32 0, %v2058
      %v2060 = vrot.slane %v2055, %v2059
      %v2080 = vunpack.c.l.b16 %v2037
      %v2081 = vunpack.c.l.b16 %v2038
      %v2082 = vunpack.c.l.b16 %v2039
      %v2083 = vunpack.c.l.b16 %v2040
      %v2084 = vunpack.c.l.b16 %v2041
      %v2085 = vunpack.c.l.b16 %v2042
      %v2086 = vunpack.c.l.b16 %v2043
      %v2087 = vunpack.c.l.b16 %v2044
      %v2088 = vunpack.c.l.b16 %v2045
      %v2089 = vunpack.c.l.b16 %v2046
      %v2090 = vunpack.c.l.b16 %v2047
      %v2091 = vunpack.c.l.b16 %v2048
      %v2092 = vunpack.c.l.b16 %v2049
      %v2093 = vunpack.c.l.b16 %v2050
      %v2094 = vunpack.c.l.b16 %v2051
      %v2095 = vunpack.c.l.b16 %v2052
      %v2096 = vunpack.c.l.b16 %v2053
      %v2097 = vunpack.c.l.b16 %v2054
      %v2098 = vpack.c.b16 %v2081, %v2080
      %v2099 = vpack.c.b16 %v2083, %v2082
      %v2100 = vpack.c.b16 %v2085, %v2084
      %v2101 = vpack.c.b16 %v2087, %v2086
      %v2102 = vpack.c.b16 %v2089, %v2088
      %v2103 = vpack.c.b16 %v2091, %v2090
      %v2104 = vpack.c.b16 %v2093, %v2092
      %v2105 = vpack.c.b16 %v2095, %v2094
      %v2106 = vpack.c.b16 %v2097, %v2096
      %v2117 = vsel %vm1774, %v2006, 0
      %v2120 = vsel %vm1774, %v2008, 0
      %v2123 = vsel %vm1774, %v2010, 0
      %v2126 = vsel %vm1774, %v2012, 0
      %v2129 = vsel %vm1774, %v2014, 0
      %v2132 = vsel %vm1774, %v2016, 0
      %v2135 = vsel %vm1774, %v2018, 0
      %v2138 = vsel %vm1774, %v2020, 0
      %v2141 = vsel %vm1774, %v2022, 0
      %v2144 = vsel %vm1774, %v2024, 0
      %v2147 = vsel %vm1774, %v2026, 0
      %v2150 = vsel %vm1774, %v2028, 0
      %v2153 = vsel %vm1774, %v2030, 0
      %v2156 = vsel %vm1774, %v2032, 0
      %v2159 = vsel %vm1774, %v2034, 0
      %v2162 = vsel %vm1774, %v2036, 0
      %2164 = vmatprep.subr.bf16.mxu0 0
      %2165 = vmatpush1.bf16.msra.mxu0 %v2105
      %2166 = vmatprep.subr.bf16.mxu0 0
      %2167 = vmatpush1.bf16.msra.mxu0 %v2104
      %2168 = vmatprep.subr.bf16.mxu0 0
      %2169 = vmatpush1.bf16.msra.mxu0 %v2103
      %2170 = vmatprep.subr.bf16.mxu0 0
      %2171 = vmatpush1.bf16.msra.mxu0 %v2102
      %2172 = vmatprep.subr.bf16.mxu0 0
      %2173 = vmatpush1.bf16.msra.mxu0 %v2101
      %2174 = vmatprep.subr.bf16.mxu0 0
      %2175 = vmatpush1.bf16.msra.mxu0 %v2100
      %2176 = vmatprep.subr.bf16.mxu0 0
      %2177 = vmatpush1.bf16.msra.mxu0 %v2099
      %2178 = vmatprep.subr.bf16.mxu0 0
      %2179 = vmatpush1.bf16.msra.mxu0 %v2098
      %2180 = vmatprep.subr.bf16.mxu0 0
      %2181 = vmatpush2.bf16.msra.mxu0 0
      %2182 = vmatprep.subr.bf16.mxu0 0
      %2183 = vmatpush2.bf16.msra.mxu0 0
      %2184 = vmatprep.subr.bf16.mxu0 0
      %2185 = vmatpush2.bf16.msra.mxu0 0
      %2186 = vmatprep.subr.bf16.mxu0 0
      %2187 = vmatpush2.bf16.msra.mxu0 0
      %2188 = vmatprep.subr.bf16.mxu0 0
      %2189 = vmatpush2.bf16.msra.mxu0 0
      %2190 = vmatprep.subr.bf16.mxu0 0
      %2191 = vmatpush2.bf16.msra.mxu0 0
      %2192 = vmatprep.subr.bf16.mxu0 0
      %2193 = vmatpush2.bf16.msra.mxu0 0
      %2194 = vmatprep.subr.bf16.mxu0 0
      %2195 = vmatpush2.bf16.msra.mxu0 %v2106
      %2196 = vmatprep.mubr.bf16.mxu0 %v2117
      %2197 = vmatmul.mubr.bf16.gmra.mxu0 %v2005
      %v2198 = vpop.f32.mrf.mxu0
      %v2199 = vadd.f32 %v2060, %v2198
      %v2200 = vpop.f32.mrf.mxu0
      %v2201 = vpop.f32.mrf.mxu0
      %v2202 = vadd.f32 %v2060, %v2201
      %v2203 = vpop.f32.mrf.mxu0
      %2204 = vmatprep.mubr.bf16.mxu0 %v2120
      %2205 = vmatmul.mubr.bf16.gmra.mxu0 %v2007
      %v2206 = vpop.f32.mrf.mxu0
      %v2207 = vadd.f32 %v2060, %v2206
      %v2208 = vpop.f32.mrf.mxu0
      %v2209 = vpop.f32.mrf.mxu0
      %v2210 = vadd.f32 %v2060, %v2209
      %v2211 = vpop.f32.mrf.mxu0
      %2212 = vmatprep.mubr.bf16.mxu0 %v2123
      %2213 = vmatmul.mubr.bf16.gmra.mxu0 %v2009
      %v2214 = vpop.f32.mrf.mxu0
      %v2215 = vadd.f32 %v2060, %v2214
      %v2216 = vpop.f32.mrf.mxu0
      %v2217 = vpop.f32.mrf.mxu0
      %v2218 = vadd.f32 %v2060, %v2217
      %v2219 = vpop.f32.mrf.mxu0
      %2220 = vmatprep.mubr.bf16.mxu0 %v2126
      %2221 = vmatmul.mubr.bf16.gmra.mxu0 %v2011
      %v2222 = vpop.f32.mrf.mxu0
      %v2223 = vadd.f32 %v2060, %v2222
      %v2224 = vpop.f32.mrf.mxu0
      %v2225 = vpop.f32.mrf.mxu0
      %v2226 = vadd.f32 %v2060, %v2225
      %v2227 = vpop.f32.mrf.mxu0
      %2228 = vmatprep.mubr.bf16.mxu0 %v2129
      %2229 = vmatmul.mubr.bf16.gmra.mxu0 %v2013
      %v2230 = vpop.f32.mrf.mxu0
      %v2231 = vadd.f32 %v2060, %v2230
      %v2232 = vpop.f32.mrf.mxu0
      %v2233 = vpop.f32.mrf.mxu0
      %v2234 = vadd.f32 %v2060, %v2233
      %v2235 = vpop.f32.mrf.mxu0
      %2236 = vmatprep.mubr.bf16.mxu0 %v2132
      %2237 = vmatmul.mubr.bf16.gmra.mxu0 %v2015
      %v2238 = vpop.f32.mrf.mxu0
      %v2239 = vadd.f32 %v2060, %v2238
      %v2240 = vpop.f32.mrf.mxu0
      %v2241 = vpop.f32.mrf.mxu0
      %v2242 = vadd.f32 %v2060, %v2241
      %v2243 = vpop.f32.mrf.mxu0
      %2244 = vmatprep.mubr.bf16.mxu0 %v2135
      %2245 = vmatmul.mubr.bf16.gmra.mxu0 %v2017
      %v2246 = vpop.f32.mrf.mxu0
      %v2247 = vadd.f32 %v2060, %v2246
      %v2248 = vpop.f32.mrf.mxu0
      %v2249 = vpop.f32.mrf.mxu0
      %v2250 = vadd.f32 %v2060, %v2249
      %v2251 = vpop.f32.mrf.mxu0
      %2252 = vmatprep.mubr.bf16.mxu0 %v2138
      %2253 = vmatmul.mubr.bf16.gmra.mxu0 %v2019
      %v2254 = vpop.f32.mrf.mxu0
      %v2255 = vadd.f32 %v2060, %v2254
      %v2256 = vpop.f32.mrf.mxu0
      %v2257 = vpop.f32.mrf.mxu0
      %v2258 = vadd.f32 %v2060, %v2257
      %v2259 = vpop.f32.mrf.mxu0
      %2260 = vmatprep.mubr.bf16.mxu0 %v2141
      %2261 = vmatmul.mubr.bf16.gmra.mxu0 %v2021
      %v2262 = vpop.f32.mrf.mxu0
      %v2263 = vadd.f32 %v2060, %v2262
      %v2264 = vpop.f32.mrf.mxu0
      %v2265 = vpop.f32.mrf.mxu0
      %v2266 = vadd.f32 %v2060, %v2265
      %v2267 = vpop.f32.mrf.mxu0
      %2268 = vmatprep.mubr.bf16.mxu0 %v2144
      %2269 = vmatmul.mubr.bf16.gmra.mxu0 %v2023
      %v2270 = vpop.f32.mrf.mxu0
      %v2271 = vadd.f32 %v2060, %v2270
      %v2272 = vpop.f32.mrf.mxu0
      %v2273 = vpop.f32.mrf.mxu0
      %v2274 = vadd.f32 %v2060, %v2273
      %v2275 = vpop.f32.mrf.mxu0
      %2276 = vmatprep.mubr.bf16.mxu0 %v2147
      %2277 = vmatmul.mubr.bf16.gmra.mxu0 %v2025
      %v2278 = vpop.f32.mrf.mxu0
      %v2279 = vadd.f32 %v2060, %v2278
      %v2280 = vpop.f32.mrf.mxu0
      %v2281 = vpop.f32.mrf.mxu0
      %v2282 = vadd.f32 %v2060, %v2281
      %v2283 = vpop.f32.mrf.mxu0
      %2284 = vmatprep.mubr.bf16.mxu0 %v2150
      %2285 = vmatmul.mubr.bf16.gmra.mxu0 %v2027
      %v2286 = vpop.f32.mrf.mxu0
      %v2287 = vadd.f32 %v2060, %v2286
      %v2288 = vpop.f32.mrf.mxu0
      %v2289 = vpop.f32.mrf.mxu0
      %v2290 = vadd.f32 %v2060, %v2289
      %v2291 = vpop.f32.mrf.mxu0
      %2292 = vmatprep.mubr.bf16.mxu0 %v2153
      %2293 = vmatmul.mubr.bf16.gmra.mxu0 %v2029
      %v2294 = vpop.f32.mrf.mxu0
      %v2295 = vadd.f32 %v2060, %v2294
      %v2296 = vpop.f32.mrf.mxu0
      %v2297 = vpop.f32.mrf.mxu0
      %v2298 = vadd.f32 %v2060, %v2297
      %v2299 = vpop.f32.mrf.mxu0
      %2300 = vmatprep.mubr.bf16.mxu0 %v2156
      %2301 = vmatmul.mubr.bf16.gmra.mxu0 %v2031
      %v2302 = vpop.f32.mrf.mxu0
      %v2303 = vadd.f32 %v2060, %v2302
      %v2304 = vpop.f32.mrf.mxu0
      %v2305 = vpop.f32.mrf.mxu0
      %v2306 = vadd.f32 %v2060, %v2305
      %v2307 = vpop.f32.mrf.mxu0
      %2308 = vmatprep.mubr.bf16.mxu0 %v2159
      %2309 = vmatmul.mubr.bf16.gmra.mxu0 %v2033
      %v2310 = vpop.f32.mrf.mxu0
      %v2311 = vadd.f32 %v2060, %v2310
      %v2312 = vpop.f32.mrf.mxu0
      %v2313 = vpop.f32.mrf.mxu0
      %v2314 = vadd.f32 %v2060, %v2313
      %v2315 = vpop.f32.mrf.mxu0
      %2316 = vmatprep.mubr.bf16.mxu0 %v2162
      %2317 = vmatmul.mubr.bf16.gmra.mxu0 %v2035
      %v2318 = vpop.f32.mrf.mxu0
      %v2319 = vadd.f32 %v2060, %v2318
      %v2320 = vpop.f32.mrf.mxu0
      %v2321 = vpop.f32.mrf.mxu0
      %v2322 = vadd.f32 %v2060, %v2321
      %v2323 = vpop.f32.mrf.mxu0
      %2324 = vdwg.mxu0
      %2357 = vrot.lane.b32.xlu0 %v280, 4
      %v2358 = vpop.permute.xlu0 %2357
      %2359 = vrot.lane.b32.xlu0 %v281, 4
      %v2360 = vpop.permute.xlu0 %2359
      %2361 = vrot.lane.b32.xlu0 %v282, 4
      %v2362 = vpop.permute.xlu0 %2361
      %2363 = vrot.lane.b32.xlu0 %v283, 4
      %v2364 = vpop.permute.xlu0 %2363
      %2365 = vrot.lane.b32.xlu0 %v284, 4
      %v2366 = vpop.permute.xlu0 %2365
      %2367 = vrot.lane.b32.xlu0 %v285, 4
      %v2368 = vpop.permute.xlu0 %2367
      %2369 = vrot.lane.b32.xlu0 %v286, 4
      %v2370 = vpop.permute.xlu0 %2369
      %2371 = vrot.lane.b32.xlu0 %v287, 4
      %v2372 = vpop.permute.xlu0 %2371
      %2373 = vrot.lane.b32.xlu0 %v288, 4
      %v2374 = vpop.permute.xlu0 %2373
      %2375 = vrot.lane.b32.xlu0 %v289, 4
      %v2376 = vpop.permute.xlu0 %2375
      %2377 = vrot.lane.b32.xlu0 %v290, 4
      %v2378 = vpop.permute.xlu0 %2377
      %2379 = vrot.lane.b32.xlu0 %v291, 4
      %v2380 = vpop.permute.xlu0 %2379
      %2381 = vrot.lane.b32.xlu0 %v292, 4
      %v2382 = vpop.permute.xlu0 %2381
      %2383 = vrot.lane.b32.xlu0 %v293, 4
      %v2384 = vpop.permute.xlu0 %2383
      %2385 = vrot.lane.b32.xlu0 %v294, 4
      %v2386 = vpop.permute.xlu0 %2385
      %2387 = vrot.lane.b32.xlu0 %v295, 4
      %v2388 = vpop.permute.xlu0 %2387
      %2389 = vrot.lane.b32.xlu0 %v296, 4
      %v2390 = vpop.permute.xlu0 %2389
      %2391 = vrot.lane.b32.xlu0 %v297, 4
      %v2392 = vpop.permute.xlu0 %2391
      %2393 = vrot.lane.b32.xlu0 %v298, 4
      %v2394 = vpop.permute.xlu0 %2393
      %2395 = vrot.lane.b32.xlu0 %v299, 4
      %v2396 = vpop.permute.xlu0 %2395
      %2397 = vrot.lane.b32.xlu0 %v300, 4
      %v2398 = vpop.permute.xlu0 %2397
      %2399 = vrot.lane.b32.xlu0 %v301, 4
      %v2400 = vpop.permute.xlu0 %2399
      %2401 = vrot.lane.b32.xlu0 %v302, 4
      %v2402 = vpop.permute.xlu0 %2401
      %2403 = vrot.lane.b32.xlu0 %v303, 4
      %v2404 = vpop.permute.xlu0 %2403
      %2405 = vrot.lane.b32.xlu0 %v304, 4
      %v2406 = vpop.permute.xlu0 %2405
      %2407 = vrot.lane.b32.xlu0 %v305, 4
      %v2408 = vpop.permute.xlu0 %2407
      %2409 = vrot.lane.b32.xlu0 %v306, 4
      %v2410 = vpop.permute.xlu0 %2409
      %2411 = vrot.lane.b32.xlu0 %v307, 4
      %v2412 = vpop.permute.xlu0 %2411
      %2413 = vrot.lane.b32.xlu0 %v308, 4
      %v2414 = vpop.permute.xlu0 %2413
      %2415 = vrot.lane.b32.xlu0 %v309, 4
      %v2416 = vpop.permute.xlu0 %2415
      %2417 = vrot.lane.b32.xlu0 %v310, 4
      %v2418 = vpop.permute.xlu0 %2417
      %2419 = vrot.lane.b32.xlu0 %v311, 4
      %v2420 = vpop.permute.xlu0 %2419
      %vm2453 = vcmask 31744
      %v2454 = vsel %vm2453, %v2199, %v2358
      %v2455 = vsel %vm2453, %v2202, %v2360
      %v2456 = vsel %vm2453, %v2207, %v2362
      %v2457 = vsel %vm2453, %v2210, %v2364
      %v2458 = vsel %vm2453, %v2215, %v2366
      %v2459 = vsel %vm2453, %v2218, %v2368
      %v2460 = vsel %vm2453, %v2223, %v2370
      %v2461 = vsel %vm2453, %v2226, %v2372
      %v2462 = vsel %vm2453, %v2231, %v2374
      %v2463 = vsel %vm2453, %v2234, %v2376
      %v2464 = vsel %vm2453, %v2239, %v2378
      %v2465 = vsel %vm2453, %v2242, %v2380
      %v2466 = vsel %vm2453, %v2247, %v2382
      %v2467 = vsel %vm2453, %v2250, %v2384
      %v2468 = vsel %vm2453, %v2255, %v2386
      %v2469 = vsel %vm2453, %v2258, %v2388
      %v2470 = vsel %vm2453, %v2263, %v2390
      %v2471 = vsel %vm2453, %v2266, %v2392
      %v2472 = vsel %vm2453, %v2271, %v2394
      %v2473 = vsel %vm2453, %v2274, %v2396
      %v2474 = vsel %vm2453, %v2279, %v2398
      %v2475 = vsel %vm2453, %v2282, %v2400
      %v2476 = vsel %vm2453, %v2287, %v2402
      %v2477 = vsel %vm2453, %v2290, %v2404
      %v2478 = vsel %vm2453, %v2295, %v2406
      %v2479 = vsel %vm2453, %v2298, %v2408
      %v2480 = vsel %vm2453, %v2303, %v2410
      %v2481 = vsel %vm2453, %v2306, %v2412
      %v2482 = vsel %vm2453, %v2311, %v2414
      %v2483 = vsel %vm2453, %v2314, %v2416
      %v2484 = vsel %vm2453, %v2319, %v2418
      %v2485 = vsel %vm2453, %v2322, %v2420
      %2486 = vst.msk [vmem:[%s278] sm:$0xff] %vm1774, %v2454
      %2487 = vst.msk [vmem:[%s278 + $0x8] sm:$0xff] %vm1774, %v2455
      %2488 = vst.msk [vmem:[%s278 + $0x10] sm:$0xff] %vm1774, %v2456
      %2489 = vst.msk [vmem:[%s278 + $0x18] sm:$0xff] %vm1774, %v2457
      %2490 = vst.msk [vmem:[%s278 + $0x20] sm:$0xff] %vm1774, %v2458
      %2491 = vst.msk [vmem:[%s278 + $0x28] sm:$0xff] %vm1774, %v2459
      %2492 = vst.msk [vmem:[%s278 + $0x30] sm:$0xff] %vm1774, %v2460
      %2493 = vst.msk [vmem:[%s278 + $0x38] sm:$0xff] %vm1774, %v2461
      %2494 = vst.msk [vmem:[%s278 + $0x40] sm:$0xff] %vm1774, %v2462
      %2495 = vst.msk [vmem:[%s278 + $0x48] sm:$0xff] %vm1774, %v2463
      %2496 = vst.msk [vmem:[%s278 + $0x50] sm:$0xff] %vm1774, %v2464
      %2497 = vst.msk [vmem:[%s278 + $0x58] sm:$0xff] %vm1774, %v2465
      %2498 = vst.msk [vmem:[%s278 + $0x60] sm:$0xff] %vm1774, %v2466
      %2499 = vst.msk [vmem:[%s278 + $0x68] sm:$0xff] %vm1774, %v2467
      %2500 = vst.msk [vmem:[%s278 + $0x70] sm:$0xff] %vm1774, %v2468
      %2501 = vst.msk [vmem:[%s278 + $0x78] sm:$0xff] %vm1774, %v2469
      %2502 = vst.msk [vmem:[%s278 + $0x80] sm:$0xff] %vm1774, %v2470
      %2503 = vst.msk [vmem:[%s278 + $0x88] sm:$0xff] %vm1774, %v2471
      %2504 = vst.msk [vmem:[%s278 + $0x90] sm:$0xff] %vm1774, %v2472
      %2505 = vst.msk [vmem:[%s278 + $0x98] sm:$0xff] %vm1774, %v2473
      %2506 = vst.msk [vmem:[%s278 + $0xa0] sm:$0xff] %vm1774, %v2474
      %2507 = vst.msk [vmem:[%s278 + $0xa8] sm:$0xff] %vm1774, %v2475
      %2508 = vst.msk [vmem:[%s278 + $0xb0] sm:$0xff] %vm1774, %v2476
      %2509 = vst.msk [vmem:[%s278 + $0xb8] sm:$0xff] %vm1774, %v2477
      %2510 = vst.msk [vmem:[%s278 + $0xc0] sm:$0xff] %vm1774, %v2478
      %2511 = vst.msk [vmem:[%s278 + $0xc8] sm:$0xff] %vm1774, %v2479
      %2512 = vst.msk [vmem:[%s278 + $0xd0] sm:$0xff] %vm1774, %v2480
      %2513 = vst.msk [vmem:[%s278 + $0xd8] sm:$0xff] %vm1774, %v2481
      %2514 = vst.msk [vmem:[%s278 + $0xe0] sm:$0xff] %vm1774, %v2482
      %2515 = vst.msk [vmem:[%s278 + $0xe8] sm:$0xff] %vm1774, %v2483
      %2516 = vst.msk [vmem:[%s278 + $0xf0] sm:$0xff] %vm1774, %v2484
      %2517 = vst.msk [vmem:[%s278 + $0xf8] sm:$0xff] %vm1774, %v2485
      %p2518 = scmp.lt.s32.totalorder %s18, 1
      %s2519 = scalar_select %p2518, %s18, 1
      %s2520 = smul.addr %s2519, 32
      %s2521 = smul.addr %s2520, 8
      %s2522 = scalar_lea.vmem %s7, %s2521
      // Predicated region
      $region49: #{dense_block_forward_nchw.5} parent=47 // pred_check
        %p2523 = pneg %p188
      $region50: #{dense_block_forward_nchw.5} parent=47 // pred_check_branch
        %2525 = sbr.rel (%p2523) target = $region52
      $region51: #{dense_block_forward_nchw.5} parent=47 // pred_region
        _
      $region52: #{dense_block_forward_nchw.5} parent=47 // pred_fallthru
        _
    $region48: #{dense_block_forward_nchw.5} parent=5 // pred_fallthru
      _
    %p2526 = scmp.le.s32.totalorder 2, %s13
    // Predicated region
    $region53: #{dense_block_forward_nchw.5} parent=5 // pred_check
      %p2527 = pneg %p2526
    $region54: #{dense_block_forward_nchw.5} parent=5 // pred_check_branch
      %2529 = sbr.rel (%p2527) target = $region56
    $region55: #{dense_block_forward_nchw.5} parent=5 // pred_region
      %s2530 = ssub.s32 %s13, 2
      // Predicated region
      $region57: #{dense_block_forward_nchw.5} parent=55 // pred_check
        %p2531 = pneg %p194
      $region58: #{dense_block_forward_nchw.5} parent=55 // pred_check_branch
        %2533 = sbr.rel (%p2531) target = $region60
      $region59: #{dense_block_forward_nchw.5} parent=55 // pred_region
        %p2534 = scmp.lt.s32.totalorder %s19, 1
        %s2535 = scalar_select %p2534, %s19, 1
        %s2536 = smul.addr %s2535, 32
        %s2537 = smul.addr %s2536, 8
        %s2538 = scalar_lea.vmem %s7, %s2537
      $region60: #{dense_block_forward_nchw.5} parent=55 // pred_fallthru
        _
    $region56: #{dense_block_forward_nchw.5} parent=5 // pred_fallthru
      _
  $region6: #{dense_block_forward_nchw.5} parent=0 // loop_footer
    %s17 = sadd.s32 1, %s13
  $region7: #{dense_block_forward_nchw.5} parent=0 // loop_footer_branch
    %12 = sbr.rel target = $region3
  $region8: #{dense_block_forward_nchw.5} parent=0 // loop_exit
    _

</llo_original>
